<compile_context>
chip_gen: v7x
topology: tpu7x:2x2x1
jax: 0.10.0
libtpu: 0.0.40
codegen_flags: <defaults>
</compile_context>

<pallas_src>
import jax
import jax.numpy as jnp
from jax.experimental import pallas as pl
from jax.experimental.pallas import tpu as pltpu

F32 = jnp.float32
BN_EPS = 1e-5

EMO_DIM = 7     # emotion logits live in output lanes [0:7]
SENT_DIM = 3    # sentiment logits live in output lanes [64:67]
SENT_OFF = 64


# ------------------------------ small helpers ------------------------------ #

def _round_up(x, m):
    return ((x + m - 1) // m) * m


def _nbytes(x):
    n = 1
    for d in x.shape:
        n *= d
    return n * x.dtype.itemsize


def _vmem_capacity_bytes():
    try:
        return int(pltpu.get_tpu_info().vmem_capacity_bytes)
    except Exception:
        return 64 << 20   # conservative default (v7x per-TensorCore VMEM)


def _pick_batch_tile(B, S, TC, Lh):
    """Largest 8-aligned batch tile whose double-buffered input slabs fit a VMEM budget."""
    per_row = (S * 768 * 2      # bf16 text embeddings
               + S * 4          # f32 attention mask
               + TC * 4         # f32 pre-pooled video
               + Lh * 128 * 2   # bf16 interleaved audio
               + 128 * 4)       # f32 output slab
    budget = max(_vmem_capacity_bytes() // 4, 8 << 20)   # leave room for weights/scratch
    tb = budget // (2 * per_row)                          # 2 pipeline buffers per input
    tb = max(8, min(256, (tb // 8) * 8))                  # 8-aligned, cap at MXU-friendly 256
    return min(tb, _round_up(B, 8))


def _vmem_limit_bytes(weight_nbytes, step_nbytes):
    cap = _vmem_capacity_bytes()
    est = 2 * weight_nbytes + 4 * step_nbytes + (8 << 20)
    return int(min(cap - (8 << 20), max(est, 32 << 20)))


# ------------------------------- fused kernel ------------------------------ #

def fused_kernel(emb_ref, mask_ref, vid_ref, aud_ref,
                 t_wpool_ref, t_wproj_ref,
                 v_wstub_ref, v_wfc_ref,
                 a_w1_ref, a_w2_ref, a_wp_ref,
                 f_w_ref, c_w1_ref, c_w2_ref,
                 bwide_ref, b128_ref,
                 out_ref):
    """Whole model forward for one batch tile; intermediates stay in VMEM/vregs.

    b128_ref rows (128 lanes each, f32):
      0 text-projection bias   1 video-fc bias
      2 audio conv1 bias (BN folded, tiled x2 for the interleaved pair layout)
      3 audio conv2 bias (BN folded)   4 audio projection bias
      5 packed classifier hidden bias  6 packed classifier logit bias
    bwide_ref rows (768 lanes, f32):
      0 text pooler bias (768)   1 video stub bias (512 + pad)
      2 fusion bias (BN folded, 256 + pad)
    """
    bf16 = jnp.bfloat16
    TB = emb_ref.shape[0]
    Lh = aud_ref.shape[0] // TB           # audio pool-pair count (= L // 2)
    J = Lh - 1                            # MaxPool1d(2) output length
    L3 = J - 2                            # conv2 output length

    # ---- text encoder ------------------------------------------------------ #
    # TODO(synk): BERT replaced by masked mean-pool + tanh "pooler" stub.
    emb = emb_ref[...].astype(F32)                              # (TB, S, 768)
    mask = mask_ref[...]                                        # (TB, S)
    summed = jnp.sum(emb * mask[:, :, None], axis=1)            # (TB, 768)
    cnt = jnp.maximum(jnp.sum(mask, axis=1, keepdims=True), 1.0)
    pooled = summed * pl.reciprocal(cnt, approx=True)           # divide on EUP
    pooler = jnp.tanh(
        jnp.dot(pooled.astype(bf16), t_wpool_ref[...],
                preferred_element_type=F32) + bwide_ref[0:1, :])
    # projection: Linear(768, 128) (no activation)
    text_feat = (jnp.dot(pooler.astype(bf16), t_wproj_ref[...],
                         preferred_element_type=F32) + b128_ref[0])      # (TB,128)

    # ---- video encoder ----------------------------------------------------- #
    # TODO(synk): r3d_18 backbone replaced by (pre-reduced spatial mean) + Linear stub.
    vfeat = jnp.maximum(
        jnp.dot(vid_ref[...].astype(bf16), v_wstub_ref[...],
                preferred_element_type=F32) + bwide_ref[1:2, 0:512], 0.0)  # (TB,512)
    # replaced fc head: Linear(512, 128) + ReLU (+ Dropout = identity in eval)
    video_feat = jnp.maximum(
        jnp.dot(vfeat.astype(bf16), v_wfc_ref[...],
                preferred_element_type=F32) + b128_ref[1], 0.0)            # (TB,128)

    # ---- audio encoder ----------------------------------------------------- #
    # aud_ref rows are batch-major pool pairs: row b*Lh+j = [x[b,:,2j] | x[b,:,2j+1]].
    # Conv1d(64->64,k=3) + folded BN + ReLU fused with MaxPool1d(2): two partial
    # dots against the row-halves of the packed (256,128) weight, one pair-row apart.
    a_flat = aud_ref[...]                                       # (TB*Lh, 128) bf16
    za = jnp.dot(a_flat, a_w1_ref[0:128, :],
                 preferred_element_type=F32).reshape(TB, Lh, 128)
    zb = jnp.dot(a_flat, a_w1_ref[128:256, :],
                 preferred_element_type=F32).reshape(TB, Lh, 128)
    z = jnp.maximum(za[:, 0:J, :] + zb[:, 1:Lh, :] + b128_ref[2], 0.0)   # (TB, J, 128)
    # MaxPool1d(2): one max of the two interleaved 64-lane halves.
    y1p = jnp.maximum(z[:, :, 0:64], z[:, :, 64:128]).astype(bf16)       # (TB, J, 64)

    # Conv1d(64->128,k=3) + folded BN + ReLU: three partial dots against the
    # (64,128) tap blocks; the k-shift uses sublane output slices (no lane concat).
    y1f = y1p.reshape(TB * J, 64)
    y2a = jnp.dot(y1f, a_w2_ref[0:64, :],
                  preferred_element_type=F32).reshape(TB, J, 128)
    y2b = jnp.dot(y1f, a_w2_ref[64:128, :],
                  preferred_element_type=F32).reshape(TB, J, 128)
    y2c = jnp.dot(y1f, a_w2_ref[128:192, :],
                  preferred_element_type=F32).reshape(TB, J, 128)
    y2 = jnp.maximum(y2a[:, 0:L3, :] + y2b[:, 1:L3 + 1, :] + y2c[:, 2:L3 + 2, :]
                     + b128_ref[3], 0.0)                                  # (TB, L3, 128)
    afeat = jnp.mean(y2, axis=1)                       # AdaptiveAvgPool1d(1) -> (TB,128)
    # projection: Linear(128,128) + ReLU (+ Dropout = identity in eval)
    audio_feat = jnp.maximum(
        jnp.dot(afeat.astype(bf16), a_wp_ref[...],
                preferred_element_type=F32) + b128_ref[4], 0.0)           # (TB,128)

    # ---- fusion + classification heads ------------------------------------- #
    # concat([t,v,a]) @ W(384,256) as three partial dots (rows [text|video|audio]).
    fused_pre = (
        jnp.dot(text_feat.astype(bf16), f_w_ref[0:128, :],
                preferred_element_type=F32)
        + jnp.dot(video_feat.astype(bf16), f_w_ref[128:256, :],
                  preferred_element_type=F32)
        + jnp.dot(audio_feat.astype(bf16), f_w_ref[256:384, :],
                  preferred_element_type=F32))
    fused = jnp.maximum(fused_pre + bwide_ref[2:3, 0:256], 0.0)           # (TB,256)
    # packed heads: hidden lanes [0:64]=emotion, [64:128]=sentiment; block-diagonal
    # second layer lands logits lane-dense: emotion [0:7], sentiment [64:67].
    hidden = jnp.maximum(
        jnp.dot(fused.astype(bf16), c_w1_ref[...],
                preferred_element_type=F32) + b128_ref[5], 0.0)           # (TB,128)
    out_ref[...] = (jnp.dot(hidden.astype(bf16), c_w2_ref[...],
                            preferred_element_type=F32) + b128_ref[6])


# ------------------------------ parameters --------------------------------- #

def init_params(key, vocab=100, T=4, C=3):
    """Raw (PyTorch-equivalent) parameters.

    Note: conv weights stored (K, Cin, Cout); PyTorch Conv1d is (Cout, Cin, K)
    -> transpose(2, 1, 0) when loading real checkpoints.  Linear weights stored
    (in, out); PyTorch Linear is (out, in) -> transpose when loading.
    """
    ks = jax.random.split(key, 16)

    def w(k, shape, scale=0.05):
        return jax.random.normal(k, shape, dtype=F32) * scale

    p = {}
    # text encoder (BERT stub + projection Linear(768, 128))
    p['emb_table'] = w(ks[0], (vocab, 768), 0.02)
    p['text_wpool'] = w(ks[1], (768, 768), 0.02)
    p['text_bpool'] = jnp.zeros((768,), F32)
    p['text_wproj'] = w(ks[2], (768, 128), 0.02)
    p['text_bproj'] = jnp.zeros((128,), F32)
    # video encoder (backbone stub -> 512, fc head Linear(512, 128))
    p['vid_wstub'] = w(ks[3], (T * C, 512), 0.05)
    p['vid_bstub'] = jnp.zeros((512,), F32)
    p['vid_wfc'] = w(ks[4], (512, 128), 0.05)
    p['vid_bfc'] = jnp.zeros((128,), F32)
    # audio encoder
    p['a_w1'] = w(ks[5], (3, 64, 64), 0.05)
    p['a_b1'] = jnp.zeros((64,), F32)
    p['a_bn1_g'] = jnp.ones((64,), F32)
    p['a_bn1_b'] = jnp.zeros((64,), F32)
    p['a_bn1_m'] = jnp.zeros((64,), F32)
    p['a_bn1_v'] = jnp.ones((64,), F32)
    p['a_w2'] = w(ks[6], (3, 64, 128), 0.05)
    p['a_b2'] = jnp.zeros((128,), F32)
    p['a_bn2_g'] = jnp.ones((128,), F32)
    p['a_bn2_b'] = jnp.zeros((128,), F32)
    p['a_bn2_m'] = jnp.zeros((128,), F32)
    p['a_bn2_v'] = jnp.ones((128,), F32)
    p['a_wp'] = w(ks[7], (128, 128), 0.05)
    p['a_bp'] = jnp.zeros((128,), F32)
    # fusion Linear(384, 256): row-partitioned [text, video, audio] + BatchNorm1d(256)
    p['f_wt'] = w(ks[8], (128, 256), 0.05)
    p['f_wv'] = w(ks[9], (128, 256), 0.05)
    p['f_wa'] = w(ks[10], (128, 256), 0.05)
    p['f_b'] = jnp.zeros((256,), F32)
    p['f_bn_g'] = jnp.ones((256,), F32)
    p['f_bn_b'] = jnp.zeros((256,), F32)
    p['f_bn_m'] = jnp.zeros((256,), F32)
    p['f_bn_v'] = jnp.ones((256,), F32)
    # emotion / sentiment classifiers
    p['e_w1'] = w(ks[11], (256, 64), 0.05)
    p['e_b1'] = jnp.zeros((64,), F32)
    p['e_w2'] = w(ks[12], (64, 7), 0.05)
    p['e_b2'] = jnp.zeros((7,), F32)
    p['s_w1'] = w(ks[13], (256, 64), 0.05)
    p['s_b1'] = jnp.zeros((64,), F32)
    p['s_w2'] = w(ks[14], (64, 3), 0.05)
    p['s_b2'] = jnp.zeros((3,), F32)
    return p


def prepare_params(p):
    """Fold eval-mode BatchNorms, pre-pack/pre-layout weights, cast to bf16."""
    bf16 = jnp.bfloat16

    def bn_fold(g, b, m, v):
        s = g * jax.lax.rsqrt(v + BN_EPS)
        return s, b - m * s

    prep = {'emb_table': p['emb_table']}

    # text
    prep['t_wpool'] = p['text_wpool'].astype(bf16)
    prep['t_wproj'] = p['text_wproj'].astype(bf16)

    # video
    prep['v_wstub'] = p['vid_wstub'].astype(bf16)
    prep['v_wfc'] = p['vid_wfc'].astype(bf16)

    # audio conv1: fold BN1, build interleaved (conv x maxpool-pair) block weight (256,128).
    # Column block [0:64] produces y1[2j], block [64:128] produces y1[2j+1];
    # row blocks correspond to taps x[2j], x[2j+1] (rows 0:128 = W1a applied to pair j)
    # and x[2j+2], x[2j+3] (rows 128:256 = W1b applied to pair j+1).
    s1, t1 = bn_fold(p['a_bn1_g'], p['a_bn1_b'], p['a_bn1_m'], p['a_bn1_v'])
    w1 = p['a_w1'] * s1[None, None, :]                       # (3, 64, 64)
    b1 = p['a_b1'] * s1 + t1                                 # (64,)
    z64 = jnp.zeros((64, 64), F32)
    w1_int = jnp.concatenate([
        jnp.concatenate([w1[0], z64], axis=1),
        jnp.concatenate([w1[1], w1[0]], axis=1),
        jnp.concatenate([w1[2], w1[1]], axis=1),
        jnp.concatenate([z64, w1[2]], axis=1)], axis=0)      # (256, 128)
    prep['a_w1'] = w1_int.astype(bf16)
    b1_int = jnp.concatenate([b1, b1], axis=0)               # (128,)

    # audio conv2: fold BN2, tap-major row blocks -> (192, 128)
    s2, t2 = bn_fold(p['a_bn2_g'], p['a_bn2_b'], p['a_bn2_m'], p['a_bn2_v'])
    w2 = (p['a_w2'] * s2[None, None, :]).reshape(3 * 64, 128)
    b2 = p['a_b2'] * s2 + t2
    prep['a_w2'] = w2.astype(bf16)
    prep['a_wp'] = p['a_wp'].astype(bf16)

    # fusion Linear(384,256): rows ordered [text | video | audio]; BN folded.
    sf, tf = bn_fold(p['f_bn_g'], p['f_bn_b'], p['f_bn_m'], p['f_bn_v'])
    f_w = jnp.concatenate([p['f_wt'], p['f_wv'], p['f_wa']], axis=0) * sf[None, :]
    f_b = p['f_b'] * sf + tf
    prep['f_w'] = f_w.astype(bf16)

    # classifiers packed lane-dense: hidden lanes [0:64]=emotion, [64:128]=sentiment;
    # logits lanes [0:7]=emotion, [64:67]=sentiment (block-diagonal 2nd layer).
    c_w1 = jnp.concatenate([p['e_w1'], p['s_w1']], axis=1)                 # (256,128)
    c_b1 = jnp.concatenate([p['e_b1'], p['s_b1']], axis=0)                 # (128,)
    c_w2 = jnp.concatenate([
        jnp.pad(p['e_w2'], ((0, 0), (0, 128 - EMO_DIM))),
        jnp.pad(p['s_w2'], ((0, 0), (SENT_OFF, 128 - SENT_OFF - SENT_DIM)))],
        axis=0)                                                            # (128,128)
    c_b2 = (jnp.pad(p['e_b2'], (0, 128 - EMO_DIM))
            + jnp.pad(p['s_b2'], (SENT_OFF, 128 - SENT_OFF - SENT_DIM)))   # (128,)
    prep['c_w1'] = c_w1.astype(bf16)
    prep['c_w2'] = c_w2.astype(bf16)

    # narrow (<=128-lane) biases in one (8,128) slab; wide biases in one (8,768) slab.
    prep['bias128'] = jnp.stack([
        p['text_bproj'], p['vid_bfc'], b1_int, b2, p['a_bp'],
        c_b1, c_b2, jnp.zeros((128,), F32)], axis=0)
    bw = jnp.zeros((8, 768), F32)
    bw = bw.at[0, :].set(p['text_bpool'])
    bw = bw.at[1, :512].set(p['vid_bstub'])
    bw = bw.at[2, :256].set(f_b)
    prep['bias_wide'] = bw
    return prep


# ------------------------------ forward ------------------------------------ #

def multimodal_forward(prep, input_ids, attention_mask, video_frames, audio_features):
    B, S = input_ids.shape
    bf16 = jnp.bfloat16

    # ---- glue (XLA): gather / spatial pre-reduce / layout only ------------- #
    # TODO(synk): BERT front-end replaced by an embedding-gather stub; ship bf16.
    emb = jnp.take(prep['emb_table'], input_ids, axis=0).astype(bf16)    # (B,S,768)
    mask = attention_mask.astype(F32)                                     # (B,S)

    # TODO(synk): r3d_18 backbone replaced by spatial-mean + Linear stub; the
    # PyTorch transpose(1,2) permutation is absorbed into the stub weight.
    Bv, T, C, H, W = video_frames.shape
    TC = T * C
    vid_pool = video_frames.reshape(B, TC, H * W).mean(axis=-1)           # (B,TC) f32

    # audio: (B,1,64,L) -> channels-last, pool pairs interleaved on lanes:
    #   a_il[b, j, 0:64] = x[b, :, 2j],  a_il[b, j, 64:128] = x[b, :, 2j+1]
    a = jnp.squeeze(audio_features, axis=1)                               # (B,64,L)
    L = a.shape[-1]
    assert L % 2 == 0 and L >= 8, "audio length must be even and >= 8"
    Lh = L // 2
    a_il = jnp.transpose(a, (0, 2, 1)).reshape(B, Lh, 128).astype(bf16)   # (B,Lh,128)

    # ---- batch tiling (per-generation) ------------------------------------- #
    TB = _pick_batch_tile(B, S, TC, Lh)
    B_pad = _round_up(B, TB)
    if B_pad != B:
        pad = B_pad - B
        emb = jnp.pad(emb, ((0, pad), (0, 0), (0, 0)))
        mask = jnp.pad(mask, ((0, pad), (0, 0)))
        vid_pool = jnp.pad(vid_pool, ((0, pad), (0, 0)))
        a_il = jnp.pad(a_il, ((0, pad), (0, 0), (0, 0)))
    a_flat = a_il.reshape(B_pad * Lh, 128)       # batch-major rows; flattened in XLA

    weights = (prep['t_wpool'], prep['t_wproj'],
               prep['v_wstub'], prep['v_wfc'],
               prep['a_w1'], prep['a_w2'], prep['a_wp'],
               prep['f_w'], prep['c_w1'], prep['c_w2'],
               prep['bias_wide'], prep['bias128'])

    def bmap3(i):
        return (i, 0, 0)

    def bmap2(i):
        return (i, 0)

    def wmap(i):
        return (0, 0)

    in_specs = ([pl.BlockSpec((TB, S, 768), bmap3),
                 pl.BlockSpec((TB, S), bmap2),
                 pl.BlockSpec((TB, TC), bmap2),
                 pl.BlockSpec((TB * Lh, 128), bmap2)]
                + [pl.BlockSpec(w.shape, wmap) for w in weights])

    n_steps = B_pad // TB
    weight_nbytes = sum(_nbytes(w) for w in weights)
    step_nbytes = ((_nbytes(emb) + _nbytes(mask) + _nbytes(vid_pool) + _nbytes(a_flat))
                   // n_steps + TB * 128 * 4)

    logits = pl.pallas_call(
        fused_kernel,
        out_shape=jax.ShapeDtypeStruct((B_pad, 128), F32),
        grid=(n_steps,),
        in_specs=in_specs,
        out_specs=pl.BlockSpec((TB, 128), bmap2),
        compiler_params=pltpu.CompilerParams(
            dimension_semantics=("parallel",),
            vmem_limit_bytes=_vmem_limit_bytes(weight_nbytes, step_nbytes)),
    )(emb, mask, vid_pool, a_flat, *weights)

    return {'emotions': logits[:B, :EMO_DIM],
            'sentiments': logits[:B, SENT_OFF:SENT_OFF + SENT_DIM]}


# -------------------------------- main ------------------------------------- #

if __name__ == "__main__":
    key = jax.random.PRNGKey(0)
    pkey, k1, k2, k3 = jax.random.split(key, 4)

    B, S = 2, 8              # batch, sequence length
    T, C, H, W = 4, 3, 8, 8  # video: frames, channels, spatial
    L = 16                   # audio length (16 -> conv 14 -> pool 7 -> conv 5 -> avg 1)

    params = init_params(pkey, vocab=100, T=T, C=C)
    prep = prepare_params(params)   # fold BN, pack, cast (once, outside the jit)

    input_ids = jax.random.randint(k1, (B, S), 0, 100, dtype=jnp.int32)
    attention_mask = jnp.ones((B, S), dtype=jnp.int32).at[1, 6:].set(0)
    video_frames = jax.random.normal(k2, (B, T, C, H, W), dtype=F32)
    audio_features = jax.random.normal(k3, (B, 1, 64, L), dtype=F32)

    fwd = jax.jit(multimodal_forward)
    out = fwd(prep, input_ids, attention_mask, video_frames, audio_features)
    out = jax.block_until_ready(out)

    assert out['emotions'].shape == (B, 7)
    assert out['sentiments'].shape == (B, 3)
    assert bool(jnp.all(jnp.isfinite(out['emotions'])))
    assert bool(jnp.all(jnp.isfinite(out['sentiments'])))
    print("KERNEL_OK")
</pallas_src>

<mosaic_0001>
module attributes {stable_mosaic.version = 11 : i64} {
  func.func @fused_kernel(%arg0: i32, %arg1: memref<8x8x768xbf16, #tpu.memory_space<vmem>>, %arg2: memref<8x8xf32, #tpu.memory_space<vmem>>, %arg3: memref<8x12xf32, #tpu.memory_space<vmem>>, %arg4: memref<64x128xbf16, #tpu.memory_space<vmem>>, %arg5: memref<768x768xbf16, #tpu.memory_space<vmem>>, %arg6: memref<768x128xbf16, #tpu.memory_space<vmem>>, %arg7: memref<12x512xbf16, #tpu.memory_space<vmem>>, %arg8: memref<512x128xbf16, #tpu.memory_space<vmem>>, %arg9: memref<256x128xbf16, #tpu.memory_space<vmem>>, %arg10: memref<192x128xbf16, #tpu.memory_space<vmem>>, %arg11: memref<128x128xbf16, #tpu.memory_space<vmem>>, %arg12: memref<384x256xbf16, #tpu.memory_space<vmem>>, %arg13: memref<256x128xbf16, #tpu.memory_space<vmem>>, %arg14: memref<128x128xbf16, #tpu.memory_space<vmem>>, %arg15: memref<8x768xf32, #tpu.memory_space<vmem>>, %arg16: memref<8x128xf32, #tpu.memory_space<vmem>>, %arg17: memref<8x128xf32, #tpu.memory_space<vmem>>) attributes {dimension_semantics = [#tpu.dimension_semantics<parallel>], iteration_bounds = array<i64: 1>, scalar_prefetch = 0 : i64, scratch_operands = 0 : i64, tpu.core_type = #tpu.core_type<tc>, window_params = [{transform_indices = @transform_0, window_bounds = array<i64: 8, 8, 768>}, {transform_indices = @transform_1, window_bounds = array<i64: 8, 8>}, {transform_indices = @transform_2, window_bounds = array<i64: 8, 12>}, {transform_indices = @transform_3, window_bounds = array<i64: 64, 128>}, {pipeline_mode = #tpu.pipeline_mode<synchronous>, transform_indices = @transform_4, window_bounds = array<i64: 768, 768>}, {pipeline_mode = #tpu.pipeline_mode<synchronous>, transform_indices = @transform_5, window_bounds = array<i64: 768, 128>}, {pipeline_mode = #tpu.pipeline_mode<synchronous>, transform_indices = @transform_6, window_bounds = array<i64: 12, 512>}, {pipeline_mode = #tpu.pipeline_mode<synchronous>, transform_indices = @transform_7, window_bounds = array<i64: 512, 128>}, {pipeline_mode = #tpu.pipeline_mode<synchronous>, transform_indices = @transform_8, window_bounds = array<i64: 256, 128>}, {pipeline_mode = #tpu.pipeline_mode<synchronous>, transform_indices = @transform_9, window_bounds = array<i64: 192, 128>}, {pipeline_mode = #tpu.pipeline_mode<synchronous>, transform_indices = @transform_10, window_bounds = array<i64: 128, 128>}, {pipeline_mode = #tpu.pipeline_mode<synchronous>, transform_indices = @transform_11, window_bounds = array<i64: 384, 256>}, {pipeline_mode = #tpu.pipeline_mode<synchronous>, transform_indices = @transform_12, window_bounds = array<i64: 256, 128>}, {pipeline_mode = #tpu.pipeline_mode<synchronous>, transform_indices = @transform_13, window_bounds = array<i64: 128, 128>}, {pipeline_mode = #tpu.pipeline_mode<synchronous>, transform_indices = @transform_14, window_bounds = array<i64: 8, 768>}, {pipeline_mode = #tpu.pipeline_mode<synchronous>, transform_indices = @transform_15, window_bounds = array<i64: 8, 128>}, {transform_indices = @transform_16, window_bounds = array<i64: 8, 128>}]} {
    %c0 = arith.constant 0 : index
    %c0_0 = arith.constant 0 : index
    %c0_1 = arith.constant 0 : index
    %0 = vector.load %arg1[%c0, %c0_0, %c0_1] : memref<8x8x768xbf16, #tpu.memory_space<vmem>>, vector<8x8x768xbf16>
    %1 = arith.extf %0 : vector<8x8x768xbf16> to vector<8x8x768xf32>
    %c0_2 = arith.constant 0 : index
    %c0_3 = arith.constant 0 : index
    %2 = vector.load %arg2[%c0_2, %c0_3] : memref<8x8xf32, #tpu.memory_space<vmem>>, vector<8x8xf32>
    %3 = vector.shape_cast %2 : vector<8x8xf32> to vector<8x8x1xf32>
    %4 = vector.broadcast %3 : vector<8x8x1xf32> to vector<8x8x768xf32>
    %5 = arith.mulf %1, %4 : vector<8x8x768xf32>
    %cst = arith.constant dense<0.000000e+00> : vector<8x768xf32>
    %6 = vector.multi_reduction <add>, %5, %cst [1] : vector<8x8x768xf32> to vector<8x768xf32>
    %cst_4 = arith.constant dense<0.000000e+00> : vector<8xf32>
    %7 = vector.multi_reduction <add>, %2, %cst_4 [1] : vector<8x8xf32> to vector<8xf32>
    %8 = vector.shape_cast %7 : vector<8xf32> to vector<8x1xf32>
    %cst_5 = arith.constant 1.000000e+00 : f32
    %9 = vector.broadcast %cst_5 : f32 to vector<8x1xf32>
    %10 = arith.maximumf %8, %9 : vector<8x1xf32>
    %11 = tpu.reciprocal %10 {approx = true} : vector<8x1xf32> -> vector<8x1xf32>
    %12 = vector.broadcast %11 : vector<8x1xf32> to vector<8x768xf32>
    %13 = arith.mulf %6, %12 : vector<8x768xf32>
    %14 = arith.truncf %13 : vector<8x768xf32> to vector<8x768xbf16>
    %c0_6 = arith.constant 0 : index
    %c0_7 = arith.constant 0 : index
    %15 = vector.load %arg5[%c0_6, %c0_7] : memref<768x768xbf16, #tpu.memory_space<vmem>>, vector<768x768xbf16>
    %cst_8 = arith.constant dense<0.000000e+00> : vector<8x768xf32>
    %16 = tpu.matmul %14, %15, %cst_8 {dimension_numbers = #tpu.dot_dimension_numbers<[1], [0], [0], [1], [0, 0, 1, 1], [], []>} : vector<8x768xbf16>, vector<768x768xbf16>, vector<8x768xf32> -> vector<8x768xf32>
    %c0_9 = arith.constant 0 : index
    %c0_10 = arith.constant 0 : index
    %17 = vector.load %arg15[%c0_9, %c0_10] : memref<8x768xf32, #tpu.memory_space<vmem>>, vector<1x768xf32>
    %18 = vector.broadcast %17 : vector<1x768xf32> to vector<8x768xf32>
    %19 = arith.addf %16, %18 : vector<8x768xf32>
    %20 = math.tanh %19 : vector<8x768xf32>
    %21 = arith.truncf %20 : vector<8x768xf32> to vector<8x768xbf16>
    %c0_11 = arith.constant 0 : index
    %c0_12 = arith.constant 0 : index
    %22 = vector.load %arg6[%c0_11, %c0_12] : memref<768x128xbf16, #tpu.memory_space<vmem>>, vector<768x128xbf16>
    %cst_13 = arith.constant dense<0.000000e+00> : vector<8x128xf32>
    %23 = tpu.matmul %21, %22, %cst_13 {dimension_numbers = #tpu.dot_dimension_numbers<[1], [0], [0], [1], [0, 0, 1, 1], [], []>} : vector<8x768xbf16>, vector<768x128xbf16>, vector<8x128xf32> -> vector<8x128xf32>
    %c0_14 = arith.constant 0 : index
    %c0_15 = arith.constant 0 : index
    %24 = vector.load %arg16[%c0_14, %c0_15] : memref<8x128xf32, #tpu.memory_space<vmem>>, vector<1x128xf32>
    %25 = vector.shape_cast %24 : vector<1x128xf32> to vector<128xf32>
    %26 = vector.shape_cast %25 : vector<128xf32> to vector<1x128xf32>
    %27 = vector.broadcast %26 : vector<1x128xf32> to vector<8x128xf32>
    %28 = arith.addf %23, %27 : vector<8x128xf32>
    %c0_16 = arith.constant 0 : index
    %c0_17 = arith.constant 0 : index
    %29 = vector.load %arg3[%c0_16, %c0_17] : memref<8x12xf32, #tpu.memory_space<vmem>>, vector<8x12xf32>
    %30 = arith.truncf %29 : vector<8x12xf32> to vector<8x12xbf16>
    %c0_18 = arith.constant 0 : index
    %c0_19 = arith.constant 0 : index
    %31 = vector.load %arg7[%c0_18, %c0_19] : memref<12x512xbf16, #tpu.memory_space<vmem>>, vector<12x512xbf16>
    %cst_20 = arith.constant dense<0.000000e+00> : vector<8x512xf32>
    %32 = tpu.matmul %30, %31, %cst_20 {dimension_numbers = #tpu.dot_dimension_numbers<[1], [0], [0], [1], [0, 0, 1, 1], [], []>} : vector<8x12xbf16>, vector<12x512xbf16>, vector<8x512xf32> -> vector<8x512xf32>
    %c1 = arith.constant 1 : index
    %c0_21 = arith.constant 0 : index
    %33 = vector.load %arg15[%c1, %c0_21] : memref<8x768xf32, #tpu.memory_space<vmem>>, vector<1x512xf32>
    %34 = vector.broadcast %33 : vector<1x512xf32> to vector<8x512xf32>
    %35 = arith.addf %32, %34 : vector<8x512xf32>
    %cst_22 = arith.constant 0.000000e+00 : f32
    %36 = vector.broadcast %cst_22 : f32 to vector<8x512xf32>
    %37 = arith.maximumf %35, %36 : vector<8x512xf32>
    %38 = arith.truncf %37 : vector<8x512xf32> to vector<8x512xbf16>
    %c0_23 = arith.constant 0 : index
    %c0_24 = arith.constant 0 : index
    %39 = vector.load %arg8[%c0_23, %c0_24] : memref<512x128xbf16, #tpu.memory_space<vmem>>, vector<512x128xbf16>
    %cst_25 = arith.constant dense<0.000000e+00> : vector<8x128xf32>
    %40 = tpu.matmul %38, %39, %cst_25 {dimension_numbers = #tpu.dot_dimension_numbers<[1], [0], [0], [1], [0, 0, 1, 1], [], []>} : vector<8x512xbf16>, vector<512x128xbf16>, vector<8x128xf32> -> vector<8x128xf32>
    %c1_26 = arith.constant 1 : index
    %c0_27 = arith.constant 0 : index
    %41 = vector.load %arg16[%c1_26, %c0_27] : memref<8x128xf32, #tpu.memory_space<vmem>>, vector<1x128xf32>
    %42 = vector.shape_cast %41 : vector<1x128xf32> to vector<128xf32>
    %43 = vector.shape_cast %42 : vector<128xf32> to vector<1x128xf32>
    %44 = vector.broadcast %43 : vector<1x128xf32> to vector<8x128xf32>
    %45 = arith.addf %40, %44 : vector<8x128xf32>
    %cst_28 = arith.constant 0.000000e+00 : f32
    %46 = vector.broadcast %cst_28 : f32 to vector<8x128xf32>
    %47 = arith.maximumf %45, %46 : vector<8x128xf32>
    %c0_29 = arith.constant 0 : index
    %c0_30 = arith.constant 0 : index
    %48 = vector.load %arg4[%c0_29, %c0_30] : memref<64x128xbf16, #tpu.memory_space<vmem>>, vector<64x128xbf16>
    %c0_31 = arith.constant 0 : index
    %c0_32 = arith.constant 0 : index
    %49 = vector.load %arg9[%c0_31, %c0_32] : memref<256x128xbf16, #tpu.memory_space<vmem>>, vector<128x128xbf16>
    %cst_33 = arith.constant dense<0.000000e+00> : vector<64x128xf32>
    %50 = tpu.matmul %48, %49, %cst_33 {dimension_numbers = #tpu.dot_dimension_numbers<[1], [0], [0], [1], [0, 0, 1, 1], [], []>} : vector<64x128xbf16>, vector<128x128xbf16>, vector<64x128xf32> -> vector<64x128xf32>
    %51 = vector.shape_cast %50 : vector<64x128xf32> to vector<8x8x128xf32>
    %c128 = arith.constant 128 : index
    %c0_34 = arith.constant 0 : index
    %52 = vector.load %arg9[%c128, %c0_34] : memref<256x128xbf16, #tpu.memory_space<vmem>>, vector<128x128xbf16>
    %cst_35 = arith.constant dense<0.000000e+00> : vector<64x128xf32>
    %53 = tpu.matmul %48, %52, %cst_35 {dimension_numbers = #tpu.dot_dimension_numbers<[1], [0], [0], [1], [0, 0, 1, 1], [], []>} : vector<64x128xbf16>, vector<128x128xbf16>, vector<64x128xf32> -> vector<64x128xf32>
    %54 = vector.shape_cast %53 : vector<64x128xf32> to vector<8x8x128xf32>
    %55 = vector.extract_strided_slice %51 {offsets = [0, 0, 0], sizes = [8, 7, 128], strides = [1, 1, 1]} : vector<8x8x128xf32> to vector<8x7x128xf32>
    %56 = vector.extract_strided_slice %54 {offsets = [0, 1, 0], sizes = [8, 7, 128], strides = [1, 1, 1]} : vector<8x8x128xf32> to vector<8x7x128xf32>
    %57 = arith.addf %55, %56 : vector<8x7x128xf32>
    %c2 = arith.constant 2 : index
    %c0_36 = arith.constant 0 : index
    %58 = vector.load %arg16[%c2, %c0_36] : memref<8x128xf32, #tpu.memory_space<vmem>>, vector<1x128xf32>
    %59 = vector.shape_cast %58 : vector<1x128xf32> to vector<128xf32>
    %60 = vector.shape_cast %59 : vector<128xf32> to vector<1x1x128xf32>
    %61 = vector.broadcast %60 : vector<1x1x128xf32> to vector<8x7x128xf32>
    %62 = arith.addf %57, %61 : vector<8x7x128xf32>
    %cst_37 = arith.constant 0.000000e+00 : f32
    %63 = vector.broadcast %cst_37 : f32 to vector<8x7x128xf32>
    %64 = arith.maximumf %62, %63 : vector<8x7x128xf32>
    %65 = vector.extract_strided_slice %64 {offsets = [0, 0, 0], sizes = [8, 7, 64], strides = [1, 1, 1]} : vector<8x7x128xf32> to vector<8x7x64xf32>
    %66 = vector.extract_strided_slice %64 {offsets = [0, 0, 64], sizes = [8, 7, 64], strides = [1, 1, 1]} : vector<8x7x128xf32> to vector<8x7x64xf32>
    %67 = arith.maximumf %65, %66 : vector<8x7x64xf32>
    %68 = arith.truncf %67 : vector<8x7x64xf32> to vector<8x7x64xbf16>
    %69 = vector.shape_cast %68 : vector<8x7x64xbf16> to vector<56x64xbf16>
    %c0_38 = arith.constant 0 : index
    %c0_39 = arith.constant 0 : index
    %70 = vector.load %arg10[%c0_38, %c0_39] : memref<192x128xbf16, #tpu.memory_space<vmem>>, vector<64x128xbf16>
    %cst_40 = arith.constant dense<0.000000e+00> : vector<56x128xf32>
    %71 = tpu.matmul %69, %70, %cst_40 {dimension_numbers = #tpu.dot_dimension_numbers<[1], [0], [0], [1], [0, 0, 1, 1], [], []>} : vector<56x64xbf16>, vector<64x128xbf16>, vector<56x128xf32> -> vector<56x128xf32>
    %72 = vector.shape_cast %71 : vector<56x128xf32> to vector<8x7x128xf32>
    %c64 = arith.constant 64 : index
    %c0_41 = arith.constant 0 : index
    %73 = vector.load %arg10[%c64, %c0_41] : memref<192x128xbf16, #tpu.memory_space<vmem>>, vector<64x128xbf16>
    %cst_42 = arith.constant dense<0.000000e+00> : vector<56x128xf32>
    %74 = tpu.matmul %69, %73, %cst_42 {dimension_numbers = #tpu.dot_dimension_numbers<[1], [0], [0], [1], [0, 0, 1, 1], [], []>} : vector<56x64xbf16>, vector<64x128xbf16>, vector<56x128xf32> -> vector<56x128xf32>
    %75 = vector.shape_cast %74 : vector<56x128xf32> to vector<8x7x128xf32>
    %c128_43 = arith.constant 128 : index
    %c0_44 = arith.constant 0 : index
    %76 = vector.load %arg10[%c128_43, %c0_44] : memref<192x128xbf16, #tpu.memory_space<vmem>>, vector<64x128xbf16>
    %cst_45 = arith.constant dense<0.000000e+00> : vector<56x128xf32>
    %77 = tpu.matmul %69, %76, %cst_45 {dimension_numbers = #tpu.dot_dimension_numbers<[1], [0], [0], [1], [0, 0, 1, 1], [], []>} : vector<56x64xbf16>, vector<64x128xbf16>, vector<56x128xf32> -> vector<56x128xf32>
    %78 = vector.shape_cast %77 : vector<56x128xf32> to vector<8x7x128xf32>
    %79 = vector.extract_strided_slice %72 {offsets = [0, 0, 0], sizes = [8, 5, 128], strides = [1, 1, 1]} : vector<8x7x128xf32> to vector<8x5x128xf32>
    %80 = vector.extract_strided_slice %75 {offsets = [0, 1, 0], sizes = [8, 5, 128], strides = [1, 1, 1]} : vector<8x7x128xf32> to vector<8x5x128xf32>
    %81 = arith.addf %79, %80 : vector<8x5x128xf32>
    %82 = vector.extract_strided_slice %78 {offsets = [0, 2, 0], sizes = [8, 5, 128], strides = [1, 1, 1]} : vector<8x7x128xf32> to vector<8x5x128xf32>
    %83 = arith.addf %81, %82 : vector<8x5x128xf32>
    %c3 = arith.constant 3 : index
    %c0_46 = arith.constant 0 : index
    %84 = vector.load %arg16[%c3, %c0_46] : memref<8x128xf32, #tpu.memory_space<vmem>>, vector<1x128xf32>
    %85 = vector.shape_cast %84 : vector<1x128xf32> to vector<128xf32>
    %86 = vector.shape_cast %85 : vector<128xf32> to vector<1x1x128xf32>
    %87 = vector.broadcast %86 : vector<1x1x128xf32> to vector<8x5x128xf32>
    %88 = arith.addf %83, %87 : vector<8x5x128xf32>
    %cst_47 = arith.constant 0.000000e+00 : f32
    %89 = vector.broadcast %cst_47 : f32 to vector<8x5x128xf32>
    %90 = arith.maximumf %88, %89 : vector<8x5x128xf32>
    %cst_48 = arith.constant dense<0.000000e+00> : vector<8x128xf32>
    %91 = vector.multi_reduction <add>, %90, %cst_48 [1] : vector<8x5x128xf32> to vector<8x128xf32>
    %cst_49 = arith.constant 5.000000e+00 : f32
    %92 = vector.broadcast %cst_49 : f32 to vector<8x128xf32>
    %93 = arith.divf %91, %92 : vector<8x128xf32>
    %94 = arith.truncf %93 : vector<8x128xf32> to vector<8x128xbf16>
    %c0_50 = arith.constant 0 : index
    %c0_51 = arith.constant 0 : index
    %95 = vector.load %arg11[%c0_50, %c0_51] : memref<128x128xbf16, #tpu.memory_space<vmem>>, vector<128x128xbf16>
    %cst_52 = arith.constant dense<0.000000e+00> : vector<8x128xf32>
    %96 = tpu.matmul %94, %95, %cst_52 {dimension_numbers = #tpu.dot_dimension_numbers<[1], [0], [0], [1], [0, 0, 1, 1], [], []>} : vector<8x128xbf16>, vector<128x128xbf16>, vector<8x128xf32> -> vector<8x128xf32>
    %c4 = arith.constant 4 : index
    %c0_53 = arith.constant 0 : index
    %97 = vector.load %arg16[%c4, %c0_53] : memref<8x128xf32, #tpu.memory_space<vmem>>, vector<1x128xf32>
    %98 = vector.shape_cast %97 : vector<1x128xf32> to vector<128xf32>
    %99 = vector.shape_cast %98 : vector<128xf32> to vector<1x128xf32>
    %100 = vector.broadcast %99 : vector<1x128xf32> to vector<8x128xf32>
    %101 = arith.addf %96, %100 : vector<8x128xf32>
    %cst_54 = arith.constant 0.000000e+00 : f32
    %102 = vector.broadcast %cst_54 : f32 to vector<8x128xf32>
    %103 = arith.maximumf %101, %102 : vector<8x128xf32>
    %104 = arith.truncf %28 : vector<8x128xf32> to vector<8x128xbf16>
    %c0_55 = arith.constant 0 : index
    %c0_56 = arith.constant 0 : index
    %105 = vector.load %arg12[%c0_55, %c0_56] : memref<384x256xbf16, #tpu.memory_space<vmem>>, vector<128x256xbf16>
    %cst_57 = arith.constant dense<0.000000e+00> : vector<8x256xf32>
    %106 = tpu.matmul %104, %105, %cst_57 {dimension_numbers = #tpu.dot_dimension_numbers<[1], [0], [0], [1], [0, 0, 1, 1], [], []>} : vector<8x128xbf16>, vector<128x256xbf16>, vector<8x256xf32> -> vector<8x256xf32>
    %107 = arith.truncf %47 : vector<8x128xf32> to vector<8x128xbf16>
    %c128_58 = arith.constant 128 : index
    %c0_59 = arith.constant 0 : index
    %108 = vector.load %arg12[%c128_58, %c0_59] : memref<384x256xbf16, #tpu.memory_space<vmem>>, vector<128x256xbf16>
    %cst_60 = arith.constant dense<0.000000e+00> : vector<8x256xf32>
    %109 = tpu.matmul %107, %108, %cst_60 {dimension_numbers = #tpu.dot_dimension_numbers<[1], [0], [0], [1], [0, 0, 1, 1], [], []>} : vector<8x128xbf16>, vector<128x256xbf16>, vector<8x256xf32> -> vector<8x256xf32>
    %110 = arith.addf %106, %109 : vector<8x256xf32>
    %111 = arith.truncf %103 : vector<8x128xf32> to vector<8x128xbf16>
    %c256 = arith.constant 256 : index
    %c0_61 = arith.constant 0 : index
    %112 = vector.load %arg12[%c256, %c0_61] : memref<384x256xbf16, #tpu.memory_space<vmem>>, vector<128x256xbf16>
    %cst_62 = arith.constant dense<0.000000e+00> : vector<8x256xf32>
    %113 = tpu.matmul %111, %112, %cst_62 {dimension_numbers = #tpu.dot_dimension_numbers<[1], [0], [0], [1], [0, 0, 1, 1], [], []>} : vector<8x128xbf16>, vector<128x256xbf16>, vector<8x256xf32> -> vector<8x256xf32>
    %114 = arith.addf %110, %113 : vector<8x256xf32>
    %c2_63 = arith.constant 2 : index
    %c0_64 = arith.constant 0 : index
    %115 = vector.load %arg15[%c2_63, %c0_64] : memref<8x768xf32, #tpu.memory_space<vmem>>, vector<1x256xf32>
    %116 = vector.broadcast %115 : vector<1x256xf32> to vector<8x256xf32>
    %117 = arith.addf %114, %116 : vector<8x256xf32>
    %cst_65 = arith.constant 0.000000e+00 : f32
    %118 = vector.broadcast %cst_65 : f32 to vector<8x256xf32>
    %119 = arith.maximumf %117, %118 : vector<8x256xf32>
    %120 = arith.truncf %119 : vector<8x256xf32> to vector<8x256xbf16>
    %c0_66 = arith.constant 0 : index
    %c0_67 = arith.constant 0 : index
    %121 = vector.load %arg13[%c0_66, %c0_67] : memref<256x128xbf16, #tpu.memory_space<vmem>>, vector<256x128xbf16>
    %cst_68 = arith.constant dense<0.000000e+00> : vector<8x128xf32>
    %122 = tpu.matmul %120, %121, %cst_68 {dimension_numbers = #tpu.dot_dimension_numbers<[1], [0], [0], [1], [0, 0, 1, 1], [], []>} : vector<8x256xbf16>, vector<256x128xbf16>, vector<8x128xf32> -> vector<8x128xf32>
    %c5 = arith.constant 5 : index
    %c0_69 = arith.constant 0 : index
    %123 = vector.load %arg16[%c5, %c0_69] : memref<8x128xf32, #tpu.memory_space<vmem>>, vector<1x128xf32>
    %124 = vector.shape_cast %123 : vector<1x128xf32> to vector<128xf32>
    %125 = vector.shape_cast %124 : vector<128xf32> to vector<1x128xf32>
    %126 = vector.broadcast %125 : vector<1x128xf32> to vector<8x128xf32>
    %127 = arith.addf %122, %126 : vector<8x128xf32>
    %cst_70 = arith.constant 0.000000e+00 : f32
    %128 = vector.broadcast %cst_70 : f32 to vector<8x128xf32>
    %129 = arith.maximumf %127, %128 : vector<8x128xf32>
    %130 = arith.truncf %129 : vector<8x128xf32> to vector<8x128xbf16>
    %c0_71 = arith.constant 0 : index
    %c0_72 = arith.constant 0 : index
    %131 = vector.load %arg14[%c0_71, %c0_72] : memref<128x128xbf16, #tpu.memory_space<vmem>>, vector<128x128xbf16>
    %cst_73 = arith.constant dense<0.000000e+00> : vector<8x128xf32>
    %132 = tpu.matmul %130, %131, %cst_73 {dimension_numbers = #tpu.dot_dimension_numbers<[1], [0], [0], [1], [0, 0, 1, 1], [], []>} : vector<8x128xbf16>, vector<128x128xbf16>, vector<8x128xf32> -> vector<8x128xf32>
    %c6 = arith.constant 6 : index
    %c0_74 = arith.constant 0 : index
    %133 = vector.load %arg16[%c6, %c0_74] : memref<8x128xf32, #tpu.memory_space<vmem>>, vector<1x128xf32>
    %134 = vector.shape_cast %133 : vector<1x128xf32> to vector<128xf32>
    %135 = vector.shape_cast %134 : vector<128xf32> to vector<1x128xf32>
    %136 = vector.broadcast %135 : vector<1x128xf32> to vector<8x128xf32>
    %137 = arith.addf %132, %136 : vector<8x128xf32>
    %c0_75 = arith.constant 0 : index
    %c0_76 = arith.constant 0 : index
    %138 = vector.load %arg17[%c0_75, %c0_76] : memref<8x128xf32, #tpu.memory_space<vmem>>, vector<8x128xf32>
    tpu.vector_store %arg17[%c0_75, %c0_76], %137 {strides = array<i32>} : memref<8x128xf32, #tpu.memory_space<vmem>>, vector<8x128xf32>,
    return
  }
  func.func @transform_0(%arg0: i32) -> (i32, i32, i32) {
    %c0_i32 = arith.constant 0 : i32
    %c0_i32_0 = arith.constant 0 : i32
    %c0_i32_1 = arith.constant 0 : i32
    return %arg0, %c0_i32, %c0_i32_0 : i32, i32, i32
  }
  func.func @transform_1(%arg0: i32) -> (i32, i32) {
    %c0_i32 = arith.constant 0 : i32
    %c0_i32_0 = arith.constant 0 : i32
    return %arg0, %c0_i32 : i32, i32
  }
  func.func @transform_2(%arg0: i32) -> (i32, i32) {
    %c0_i32 = arith.constant 0 : i32
    %c0_i32_0 = arith.constant 0 : i32
    return %arg0, %c0_i32 : i32, i32
  }
  func.func @transform_3(%arg0: i32) -> (i32, i32) {
    %c0_i32 = arith.constant 0 : i32
    %c0_i32_0 = arith.constant 0 : i32
    return %arg0, %c0_i32 : i32, i32
  }
  func.func @transform_4(%arg0: i32) -> (i32, i32) {
    %c0_i32 = arith.constant 0 : i32
    %c0_i32_0 = arith.constant 0 : i32
    %c0_i32_1 = arith.constant 0 : i32
    return %c0_i32, %c0_i32_0 : i32, i32
  }
  func.func @transform_5(%arg0: i32) -> (i32, i32) {
    %c0_i32 = arith.constant 0 : i32
    %c0_i32_0 = arith.constant 0 : i32
    %c0_i32_1 = arith.constant 0 : i32
    return %c0_i32, %c0_i32_0 : i32, i32
  }
  func.func @transform_6(%arg0: i32) -> (i32, i32) {
    %c0_i32 = arith.constant 0 : i32
    %c0_i32_0 = arith.constant 0 : i32
    %c0_i32_1 = arith.constant 0 : i32
    return %c0_i32, %c0_i32_0 : i32, i32
  }
  func.func @transform_7(%arg0: i32) -> (i32, i32) {
    %c0_i32 = arith.constant 0 : i32
    %c0_i32_0 = arith.constant 0 : i32
    %c0_i32_1 = arith.constant 0 : i32
    return %c0_i32, %c0_i32_0 : i32, i32
  }
  func.func @transform_8(%arg0: i32) -> (i32, i32) {
    %c0_i32 = arith.constant 0 : i32
    %c0_i32_0 = arith.constant 0 : i32
    %c0_i32_1 = arith.constant 0 : i32
    return %c0_i32, %c0_i32_0 : i32, i32
  }
  func.func @transform_9(%arg0: i32) -> (i32, i32) {
    %c0_i32 = arith.constant 0 : i32
    %c0_i32_0 = arith.constant 0 : i32
    %c0_i32_1 = arith.constant 0 : i32
    return %c0_i32, %c0_i32_0 : i32, i32
  }
  func.func @transform_10(%arg0: i32) -> (i32, i32) {
    %c0_i32 = arith.constant 0 : i32
    %c0_i32_0 = arith.constant 0 : i32
    %c0_i32_1 = arith.constant 0 : i32
    return %c0_i32, %c0_i32_0 : i32, i32
  }
  func.func @transform_11(%arg0: i32) -> (i32, i32) {
    %c0_i32 = arith.constant 0 : i32
    %c0_i32_0 = arith.constant 0 : i32
    %c0_i32_1 = arith.constant 0 : i32
    return %c0_i32, %c0_i32_0 : i32, i32
  }
  func.func @transform_12(%arg0: i32) -> (i32, i32) {
    %c0_i32 = arith.constant 0 : i32
    %c0_i32_0 = arith.constant 0 : i32
    %c0_i32_1 = arith.constant 0 : i32
    return %c0_i32, %c0_i32_0 : i32, i32
  }
  func.func @transform_13(%arg0: i32) -> (i32, i32) {
    %c0_i32 = arith.constant 0 : i32
    %c0_i32_0 = arith.constant 0 : i32
    %c0_i32_1 = arith.constant 0 : i32
    return %c0_i32, %c0_i32_0 : i32, i32
  }
  func.func @transform_14(%arg0: i32) -> (i32, i32) {
    %c0_i32 = arith.constant 0 : i32
    %c0_i32_0 = arith.constant 0 : i32
    %c0_i32_1 = arith.constant 0 : i32
    return %c0_i32, %c0_i32_0 : i32, i32
  }
  func.func @transform_15(%arg0: i32) -> (i32, i32) {
    %c0_i32 = arith.constant 0 : i32
    %c0_i32_0 = arith.constant 0 : i32
    %c0_i32_1 = arith.constant 0 : i32
    return %c0_i32, %c0_i32_0 : i32, i32
  }
  func.func @transform_16(%arg0: i32) -> (i32, i32) {
    %c0_i32 = arith.constant 0 : i32
    %c0_i32_0 = arith.constant 0 : i32
    return %arg0, %c0_i32 : i32, i32
  }
}

</mosaic_0001>

<llo_original>
// kernel: multimodal_forward.1
$region0: #{multimodal_forward.1}
  #allocation0 [shape = 'u32[]', space=smem, size = 0x4, offset = 0x4, fixed_abs, tag = 'smem constant byte address 0x4 - core index']
  #allocation1 [shape = 'u32[144,128]{1,0:T(1,128)}', space=vmem, size = 0x12000, scoped, tag = 'internal scratch']
  %s0 = inlined_call_operand.vmem [shape: bf16[8,8,768], index: 0, kind: input, shape index: {}]
  %s1 = inlined_call_operand.vmem [shape: f32[8,8], index: 1, kind: input, shape index: {}]
  %s2 = inlined_call_operand.vmem [shape: f32[8,12], index: 2, kind: input, shape index: {}]
  %s3 = inlined_call_operand.vmem [shape: bf16[64,128], index: 3, kind: input, shape index: {}]
  %s4 = inlined_call_operand.hbm [shape: bf16[768,768], index: 4, kind: input, shape index: {}]
  %s5 = inlined_call_operand.hbm [shape: bf16[768,128], index: 5, kind: input, shape index: {}]
  %s6 = inlined_call_operand.hbm [shape: bf16[12,512], index: 6, kind: input, shape index: {}]
  %s7 = inlined_call_operand.hbm [shape: bf16[512,128], index: 7, kind: input, shape index: {}]
  %s8 = inlined_call_operand.hbm [shape: bf16[256,128], index: 8, kind: input, shape index: {}]
  %s9 = inlined_call_operand.hbm [shape: bf16[192,128], index: 9, kind: input, shape index: {}]
  %s10 = inlined_call_operand.hbm [shape: bf16[128,128], index: 10, kind: input, shape index: {}]
  %s11 = inlined_call_operand.hbm [shape: bf16[384,256], index: 11, kind: input, shape index: {}]
  %s12 = inlined_call_operand.hbm [shape: bf16[256,128], index: 12, kind: input, shape index: {}]
  %s13 = inlined_call_operand.hbm [shape: bf16[128,128], index: 13, kind: input, shape index: {}]
  %s14 = inlined_call_operand.hbm [shape: f32[8,768], index: 14, kind: input, shape index: {}]
  %s15 = inlined_call_operand.hbm [shape: f32[8,128], index: 15, kind: input, shape index: {}]
  %s16 = inlined_call_operand.vmem [shape: f32[8,128], index: 16, kind: output, shape index: {}]
  %s17 = sld [smem:[#allocation0]]
  $region122: #{multimodal_forward.1} parent=0
    _
  %s19 = ssub.s32 1, %s17
  %s20 = scalar_select 0, %s19, %s17
  $region1: #{multimodal_forward.1} parent=0
    #allocation2 [shape = 'u8[1179648]{0}', space=vmem, size = 0x120000, scoped, tag = 'input window, operand 4, single buffered']
    #allocation3 [shape = 's32[1]{0}', space=sflag, size = 0x4, scoped, tag = 'scoped memory for multimodal_forward.1']
    #allocation4 [shape = 'u8[196608]{0}', space=vmem, size = 0x30000, scoped, tag = 'input window, operand 5, single buffered']
    #allocation5 [shape = 's32[1]{0}', space=sflag, size = 0x4, scoped, tag = 'scoped memory for multimodal_forward.1']
    #allocation6 [shape = 'u8[16384]{0}', space=vmem, size = 0x4000, scoped, tag = 'input window, operand 6, single buffered']
    #allocation7 [shape = 'u8[131072]{0}', space=vmem, size = 0x20000, scoped, tag = 'input window, operand 7, single buffered']
    #allocation8 [shape = 's32[1]{0}', space=sflag, size = 0x4, scoped, tag = 'scoped memory for multimodal_forward.1']
    #allocation9 [shape = 'u8[65536]{0}', space=vmem, size = 0x10000, scoped, tag = 'input window, operand 8, single buffered']
    #allocation10 [shape = 'u8[49152]{0}', space=vmem, size = 0xc000, scoped, tag = 'input window, operand 9, single buffered']
    #allocation11 [shape = 's32[1]{0}', space=sflag, size = 0x4, scoped, tag = 'scoped memory for multimodal_forward.1']
    #allocation12 [shape = 'u8[32768]{0}', space=vmem, size = 0x8000, scoped, tag = 'input window, operand 10, single buffered']
    #allocation13 [shape = 'u8[196608]{0}', space=vmem, size = 0x30000, scoped, tag = 'input window, operand 11, single buffered']
    #allocation14 [shape = 's32[1]{0}', space=sflag, size = 0x4, scoped, tag = 'scoped memory for multimodal_forward.1']
    #allocation15 [shape = 'u8[65536]{0}', space=vmem, size = 0x10000, scoped, tag = 'input window, operand 12, single buffered']
    #allocation16 [shape = 'u8[32768]{0}', space=vmem, size = 0x8000, scoped, tag = 'input window, operand 13, single buffered']
    #allocation17 [shape = 's32[1]{0}', space=sflag, size = 0x4, scoped, tag = 'scoped memory for multimodal_forward.1']
    #allocation18 [shape = 'u8[24576]{0}', space=vmem, size = 0x6000, scoped, tag = 'input window, operand 14, single buffered']
    #allocation19 [shape = 'u8[4096]{0}', space=vmem, size = 0x1000, scoped, tag = 'input window, operand 15, single buffered']
    #allocation20 [shape = 's32[1]{0}', space=sflag, size = 0x4, scoped, tag = 'scoped memory for multimodal_forward.1']
    %21 = vsyncpa [#allocation3], 0
    %22 = vsyncpa [#allocation5], 0
    %23 = vsyncpa [#allocation8], 0
    %24 = vsyncpa [#allocation11], 0
    %25 = vsyncpa [#allocation14], 0
    %26 = vsyncpa [#allocation17], 0
    %27 = vsyncpa [#allocation20], 0
    // Predicated region
    $region2: #{multimodal_forward.1} parent=1 // pred_check
      _
    $region3: #{multimodal_forward.1} parent=1 // pred_check_branch
      %29 = sbr.rel (0) target = $region5
    $region4: #{multimodal_forward.1} parent=1 // pred_region
      _
    $region5: #{multimodal_forward.1} parent=1 // pred_fallthru
      _
    // Predicated region
    $region6: #{multimodal_forward.1} parent=1 // pred_check
      _
    $region7: #{multimodal_forward.1} parent=1 // pred_check_branch
      %31 = sbr.rel (0) target = $region9
    $region8: #{multimodal_forward.1} parent=1 // pred_region
      _
    $region9: #{multimodal_forward.1} parent=1 // pred_fallthru
      _
    // Predicated region
    $region10: #{multimodal_forward.1} parent=1 // pred_check
      _
    $region11: #{multimodal_forward.1} parent=1 // pred_check_branch
      %33 = sbr.rel (0) target = $region13
    $region12: #{multimodal_forward.1} parent=1 // pred_region
      _
    $region13: #{multimodal_forward.1} parent=1 // pred_fallthru
      _
    // Predicated region
    $region14: #{multimodal_forward.1} parent=1 // pred_check
      _
    $region15: #{multimodal_forward.1} parent=1 // pred_check_branch
      %35 = sbr.rel (0) target = $region17
    $region16: #{multimodal_forward.1} parent=1 // pred_region
      _
    $region17: #{multimodal_forward.1} parent=1 // pred_fallthru
      _
    // Predicated region
    $region18: #{multimodal_forward.1} parent=1 // pred_check
      _
    $region19: #{multimodal_forward.1} parent=1 // pred_check_branch
      %37 = sbr.rel (0) target = $region21
    $region20: #{multimodal_forward.1} parent=1 // pred_region
      %s39 = ssub.s32 36864, 36864
      %40 = vsyncadd [#allocation3], %s39
      %s41 = sshll.u32 [#allocation2], 4
      %s42 = int_to_ptr.vmem [resolvable:$true] %s41
      %47 = dma.hbm_to_vmem [thread:$0]  %s4, 36864, %s42, [#allocation3], 384, 384, 24
    $region21: #{multimodal_forward.1} parent=1 // pred_fallthru
      _
    // Predicated region
    $region22: #{multimodal_forward.1} parent=1 // pred_check
      _
    $region23: #{multimodal_forward.1} parent=1 // pred_check_branch
      %49 = sbr.rel (0) target = $region25
    $region24: #{multimodal_forward.1} parent=1 // pred_region
      %s51 = ssub.s32 6144, 6144
      %52 = vsyncadd [#allocation5], %s51
      %s53 = sshll.u32 [#allocation4], 4
      %s54 = int_to_ptr.vmem [resolvable:$true] %s53
      %59 = dma.hbm_to_vmem [thread:$0]  %s5, 6144, %s54, [#allocation5], 64, 64, 4
    $region25: #{multimodal_forward.1} parent=1 // pred_fallthru
      _
    // Predicated region
    $region26: #{multimodal_forward.1} parent=1 // pred_check
      _
    $region27: #{multimodal_forward.1} parent=1 // pred_check_branch
      %61 = sbr.rel (0) target = $region29
    $region28: #{multimodal_forward.1} parent=1 // pred_region
      %s63 = ssub.s32 512, 512
      %64 = vsyncadd [#allocation5], %s63
      %s65 = sshll.u32 [#allocation6], 4
      %s66 = int_to_ptr.vmem [resolvable:$true] %s65
      %71 = dma.hbm_to_vmem [thread:$0]  %s6, 512, %s66, [#allocation5], 256, 256, 16
    $region29: #{multimodal_forward.1} parent=1 // pred_fallthru
      _
    // Predicated region
    $region30: #{multimodal_forward.1} parent=1 // pred_check
      _
    $region31: #{multimodal_forward.1} parent=1 // pred_check_branch
      %73 = sbr.rel (0) target = $region33
    $region32: #{multimodal_forward.1} parent=1 // pred_region
      %s75 = ssub.s32 4096, 4096
      %76 = vsyncadd [#allocation8], %s75
      %s77 = sshll.u32 [#allocation7], 4
      %s78 = int_to_ptr.vmem [resolvable:$true] %s77
      %83 = dma.hbm_to_vmem [thread:$0]  %s7, 4096, %s78, [#allocation8], 64, 64, 4
    $region33: #{multimodal_forward.1} parent=1 // pred_fallthru
      _
    // Predicated region
    $region34: #{multimodal_forward.1} parent=1 // pred_check
      _
    $region35: #{multimodal_forward.1} parent=1 // pred_check_branch
      %85 = sbr.rel (0) target = $region37
    $region36: #{multimodal_forward.1} parent=1 // pred_region
      %s87 = ssub.s32 2048, 2048
      %88 = vsyncadd [#allocation8], %s87
      %s89 = sshll.u32 [#allocation9], 4
      %s90 = int_to_ptr.vmem [resolvable:$true] %s89
      %95 = dma.hbm_to_vmem [thread:$0]  %s8, 2048, %s90, [#allocation8], 64, 64, 4
    $region37: #{multimodal_forward.1} parent=1 // pred_fallthru
      _
    // Predicated region
    $region38: #{multimodal_forward.1} parent=1 // pred_check
      _
    $region39: #{multimodal_forward.1} parent=1 // pred_check_branch
      %97 = sbr.rel (0) target = $region41
    $region40: #{multimodal_forward.1} parent=1 // pred_region
      %s99 = ssub.s32 1536, 1536
      %100 = vsyncadd [#allocation11], %s99
      %s101 = sshll.u32 [#allocation10], 4
      %s102 = int_to_ptr.vmem [resolvable:$true] %s101
      %107 = dma.hbm_to_vmem [thread:$0]  %s9, 1536, %s102, [#allocation11], 64, 64, 4
    $region41: #{multimodal_forward.1} parent=1 // pred_fallthru
      _
    // Predicated region
    $region42: #{multimodal_forward.1} parent=1 // pred_check
      _
    $region43: #{multimodal_forward.1} parent=1 // pred_check_branch
      %109 = sbr.rel (0) target = $region45
    $region44: #{multimodal_forward.1} parent=1 // pred_region
      %s111 = ssub.s32 1024, 1024
      %112 = vsyncadd [#allocation11], %s111
      %s113 = sshll.u32 [#allocation12], 4
      %s114 = int_to_ptr.vmem [resolvable:$true] %s113
      %119 = dma.hbm_to_vmem [thread:$0]  %s10, 1024, %s114, [#allocation11], 64, 64, 4
    $region45: #{multimodal_forward.1} parent=1 // pred_fallthru
      _
    // Predicated region
    $region46: #{multimodal_forward.1} parent=1 // pred_check
      _
    $region47: #{multimodal_forward.1} parent=1 // pred_check_branch
      %121 = sbr.rel (0) target = $region49
    $region48: #{multimodal_forward.1} parent=1 // pred_region
      %s123 = ssub.s32 6144, 6144
      %124 = vsyncadd [#allocation14], %s123
      %s125 = sshll.u32 [#allocation13], 4
      %s126 = int_to_ptr.vmem [resolvable:$true] %s125
      %131 = dma.hbm_to_vmem [thread:$0]  %s11, 6144, %s126, [#allocation14], 128, 128, 8
    $region49: #{multimodal_forward.1} parent=1 // pred_fallthru
      _
    // Predicated region
    $region50: #{multimodal_forward.1} parent=1 // pred_check
      _
    $region51: #{multimodal_forward.1} parent=1 // pred_check_branch
      %133 = sbr.rel (0) target = $region53
    $region52: #{multimodal_forward.1} parent=1 // pred_region
      %s135 = ssub.s32 2048, 2048
      %136 = vsyncadd [#allocation14], %s135
      %s137 = sshll.u32 [#allocation15], 4
      %s138 = int_to_ptr.vmem [resolvable:$true] %s137
      %143 = dma.hbm_to_vmem [thread:$0]  %s12, 2048, %s138, [#allocation14], 64, 64, 4
    $region53: #{multimodal_forward.1} parent=1 // pred_fallthru
      _
    // Predicated region
    $region54: #{multimodal_forward.1} parent=1 // pred_check
      _
    $region55: #{multimodal_forward.1} parent=1 // pred_check_branch
      %145 = sbr.rel (0) target = $region57
    $region56: #{multimodal_forward.1} parent=1 // pred_region
      %s147 = ssub.s32 1024, 1024
      %148 = vsyncadd [#allocation17], %s147
      %s149 = sshll.u32 [#allocation16], 4
      %s150 = int_to_ptr.vmem [resolvable:$true] %s149
      %155 = dma.hbm_to_vmem [thread:$0]  %s13, 1024, %s150, [#allocation17], 64, 64, 4
    $region57: #{multimodal_forward.1} parent=1 // pred_fallthru
      _
    // Predicated region
    $region58: #{multimodal_forward.1} parent=1 // pred_check
      _
    $region59: #{multimodal_forward.1} parent=1 // pred_check_branch
      %157 = sbr.rel (0) target = $region61
    $region60: #{multimodal_forward.1} parent=1 // pred_region
      %s159 = ssub.s32 768, 768
      %160 = vsyncadd [#allocation17], %s159
      %s162 = sshll.u32 [#allocation18], 4
      %s163 = int_to_ptr.vmem [resolvable:$true] %s162
      %165 = dma.hbm_to_vmem [thread:$0]  %s14, 768, %s163, [#allocation17]
    $region61: #{multimodal_forward.1} parent=1 // pred_fallthru
      _
    // Predicated region
    $region62: #{multimodal_forward.1} parent=1 // pred_check
      _
    $region63: #{multimodal_forward.1} parent=1 // pred_check_branch
      %167 = sbr.rel (0) target = $region65
    $region64: #{multimodal_forward.1} parent=1 // pred_region
      %s169 = ssub.s32 128, 128
      %170 = vsyncadd [#allocation20], %s169
      %s172 = sshll.u32 [#allocation19], 4
      %s173 = int_to_ptr.vmem [resolvable:$true] %s172
      %175 = dma.hbm_to_vmem [thread:$0]  %s15, 128, %s173, [#allocation20]
    $region65: #{multimodal_forward.1} parent=1 // pred_fallthru
      _
    // Predicated region
    $region66: #{multimodal_forward.1} parent=1 // pred_check
      _
    $region67: #{multimodal_forward.1} parent=1 // pred_check_branch
      %177 = sbr.rel (0) target = $region69
    $region68: #{multimodal_forward.1} parent=1 // pred_region
      %178 = dma.done [#allocation3], 36864
    $region69: #{multimodal_forward.1} parent=1 // pred_fallthru
      _
    // Predicated region
    $region70: #{multimodal_forward.1} parent=1 // pred_check
      _
    $region71: #{multimodal_forward.1} parent=1 // pred_check_branch
      %180 = sbr.rel (0) target = $region73
    $region72: #{multimodal_forward.1} parent=1 // pred_region
      %181 = dma.done [#allocation5], 6144
    $region73: #{multimodal_forward.1} parent=1 // pred_fallthru
      _
    // Predicated region
    $region74: #{multimodal_forward.1} parent=1 // pred_check
      _
    $region75: #{multimodal_forward.1} parent=1 // pred_check_branch
      %183 = sbr.rel (0) target = $region77
    $region76: #{multimodal_forward.1} parent=1 // pred_region
      %184 = dma.done [#allocation5], 512
    $region77: #{multimodal_forward.1} parent=1 // pred_fallthru
      _
    // Predicated region
    $region78: #{multimodal_forward.1} parent=1 // pred_check
      _
    $region79: #{multimodal_forward.1} parent=1 // pred_check_branch
      %186 = sbr.rel (0) target = $region81
    $region80: #{multimodal_forward.1} parent=1 // pred_region
      %187 = dma.done [#allocation8], 4096
    $region81: #{multimodal_forward.1} parent=1 // pred_fallthru
      _
    // Predicated region
    $region82: #{multimodal_forward.1} parent=1 // pred_check
      _
    $region83: #{multimodal_forward.1} parent=1 // pred_check_branch
      %189 = sbr.rel (0) target = $region85
    $region84: #{multimodal_forward.1} parent=1 // pred_region
      %190 = dma.done [#allocation8], 2048
    $region85: #{multimodal_forward.1} parent=1 // pred_fallthru
      _
    // Predicated region
    $region86: #{multimodal_forward.1} parent=1 // pred_check
      _
    $region87: #{multimodal_forward.1} parent=1 // pred_check_branch
      %192 = sbr.rel (0) target = $region89
    $region88: #{multimodal_forward.1} parent=1 // pred_region
      %193 = dma.done [#allocation11], 1536
    $region89: #{multimodal_forward.1} parent=1 // pred_fallthru
      _
    // Predicated region
    $region90: #{multimodal_forward.1} parent=1 // pred_check
      _
    $region91: #{multimodal_forward.1} parent=1 // pred_check_branch
      %195 = sbr.rel (0) target = $region93
    $region92: #{multimodal_forward.1} parent=1 // pred_region
      %196 = dma.done [#allocation11], 1024
    $region93: #{multimodal_forward.1} parent=1 // pred_fallthru
      _
    // Predicated region
    $region94: #{multimodal_forward.1} parent=1 // pred_check
      _
    $region95: #{multimodal_forward.1} parent=1 // pred_check_branch
      %198 = sbr.rel (0) target = $region97
    $region96: #{multimodal_forward.1} parent=1 // pred_region
      %199 = dma.done [#allocation14], 6144
    $region97: #{multimodal_forward.1} parent=1 // pred_fallthru
      _
    // Predicated region
    $region98: #{multimodal_forward.1} parent=1 // pred_check
      _
    $region99: #{multimodal_forward.1} parent=1 // pred_check_branch
      %201 = sbr.rel (0) target = $region101
    $region100: #{multimodal_forward.1} parent=1 // pred_region
      %202 = dma.done [#allocation14], 2048
    $region101: #{multimodal_forward.1} parent=1 // pred_fallthru
      _
    // Predicated region
    $region102: #{multimodal_forward.1} parent=1 // pred_check
      _
    $region103: #{multimodal_forward.1} parent=1 // pred_check_branch
      %204 = sbr.rel (0) target = $region105
    $region104: #{multimodal_forward.1} parent=1 // pred_region
      %205 = dma.done [#allocation17], 1024
    $region105: #{multimodal_forward.1} parent=1 // pred_fallthru
      _
    // Predicated region
    $region106: #{multimodal_forward.1} parent=1 // pred_check
      _
    $region107: #{multimodal_forward.1} parent=1 // pred_check_branch
      %207 = sbr.rel (0) target = $region109
    $region108: #{multimodal_forward.1} parent=1 // pred_region
      %208 = dma.done [#allocation17], 768
    $region109: #{multimodal_forward.1} parent=1 // pred_fallthru
      _
    // Predicated region
    $region110: #{multimodal_forward.1} parent=1 // pred_check
      _
    $region111: #{multimodal_forward.1} parent=1 // pred_check_branch
      %210 = sbr.rel (0) target = $region113
    $region112: #{multimodal_forward.1} parent=1 // pred_region
      %211 = dma.done [#allocation20], 128
    $region113: #{multimodal_forward.1} parent=1 // pred_fallthru
      _
    %v213 = vld [vmem:[%s0] sm:$0xff]
    %v214 = vld [vmem:[%s0 + $0x8] sm:$0xff]
    %v215 = vld [vmem:[%s0 + $0x10] sm:$0xff]
    %v216 = vld [vmem:[%s0 + $0x18] sm:$0xff]
    %v217 = vld [vmem:[%s0 + $0x20] sm:$0xff]
    %v218 = vld [vmem:[%s0 + $0x28] sm:$0xff]
    %v219 = vld [vmem:[%s0 + $0x30] sm:$0xff]
    %v220 = vld [vmem:[%s0 + $0x38] sm:$0xff]
    %v221 = vld [vmem:[%s0 + $0x40] sm:$0xff]
    %v222 = vld [vmem:[%s0 + $0x48] sm:$0xff]
    %v223 = vld [vmem:[%s0 + $0x50] sm:$0xff]
    %v224 = vld [vmem:[%s0 + $0x58] sm:$0xff]
    %v225 = vld [vmem:[%s0 + $0x60] sm:$0xff]
    %v226 = vld [vmem:[%s0 + $0x68] sm:$0xff]
    %v227 = vld [vmem:[%s0 + $0x70] sm:$0xff]
    %v228 = vld [vmem:[%s0 + $0x78] sm:$0xff]
    %v229 = vld [vmem:[%s0 + $0x80] sm:$0xff]
    %v230 = vld [vmem:[%s0 + $0x88] sm:$0xff]
    %v231 = vld [vmem:[%s0 + $0x90] sm:$0xff]
    %v232 = vld [vmem:[%s0 + $0x98] sm:$0xff]
    %v233 = vld [vmem:[%s0 + $0xa0] sm:$0xff]
    %v234 = vld [vmem:[%s0 + $0xa8] sm:$0xff]
    %v235 = vld [vmem:[%s0 + $0xb0] sm:$0xff]
    %v236 = vld [vmem:[%s0 + $0xb8] sm:$0xff]
    %v237 = vunpack.c.l.bf16 %v213
    %v238 = vunpack.c.h.bf16 %v213
    %v239 = vunpack.c.l.bf16 %v214
    %v240 = vunpack.c.h.bf16 %v214
    %v241 = vunpack.c.l.bf16 %v215
    %v242 = vunpack.c.h.bf16 %v215
    %v243 = vunpack.c.l.bf16 %v216
    %v244 = vunpack.c.h.bf16 %v216
    %v245 = vunpack.c.l.bf16 %v217
    %v246 = vunpack.c.h.bf16 %v217
    %v247 = vunpack.c.l.bf16 %v218
    %v248 = vunpack.c.h.bf16 %v218
    %v249 = vunpack.c.l.bf16 %v219
    %v250 = vunpack.c.h.bf16 %v219
    %v251 = vunpack.c.l.bf16 %v220
    %v252 = vunpack.c.h.bf16 %v220
    %v253 = vunpack.c.l.bf16 %v221
    %v254 = vunpack.c.h.bf16 %v221
    %v255 = vunpack.c.l.bf16 %v222
    %v256 = vunpack.c.h.bf16 %v222
    %v257 = vunpack.c.l.bf16 %v223
    %v258 = vunpack.c.h.bf16 %v223
    %v259 = vunpack.c.l.bf16 %v224
    %v260 = vunpack.c.h.bf16 %v224
    %v261 = vunpack.c.l.bf16 %v225
    %v262 = vunpack.c.h.bf16 %v225
    %v263 = vunpack.c.l.bf16 %v226
    %v264 = vunpack.c.h.bf16 %v226
    %v265 = vunpack.c.l.bf16 %v227
    %v266 = vunpack.c.h.bf16 %v227
    %v267 = vunpack.c.l.bf16 %v228
    %v268 = vunpack.c.h.bf16 %v228
    %v269 = vunpack.c.l.bf16 %v229
    %v270 = vunpack.c.h.bf16 %v229
    %v271 = vunpack.c.l.bf16 %v230
    %v272 = vunpack.c.h.bf16 %v230
    %v273 = vunpack.c.l.bf16 %v231
    %v274 = vunpack.c.h.bf16 %v231
    %v275 = vunpack.c.l.bf16 %v232
    %v276 = vunpack.c.h.bf16 %v232
    %v277 = vunpack.c.l.bf16 %v233
    %v278 = vunpack.c.h.bf16 %v233
    %v279 = vunpack.c.l.bf16 %v234
    %v280 = vunpack.c.h.bf16 %v234
    %v281 = vunpack.c.l.bf16 %v235
    %v282 = vunpack.c.h.bf16 %v235
    %v283 = vunpack.c.l.bf16 %v236
    %v284 = vunpack.c.h.bf16 %v236
    %v285 = vld [vmem:[%s1] sm:$0xff]
    %v286 = vlaneseq
    %v287 = vshrl.u32 %v286, 7
    %v288 = vsub.s32 0, %v287
    %v289 = vrot.slane %v285, %v288
    %291 = vbcast.lane.b32.xlu0 %v289, 256
    %v292 = vpop.permute.xlu0 %291
    %v293 = vlaneseq
    %v294 = vshrl.u32 %v293, 7
    %v295 = vsub.s32 1, %v294
    %v296 = vrot.slane %v285, %v295
    %298 = vbcast.lane.b32.xlu0 %v296, 256
    %v299 = vpop.permute.xlu0 %298
    %v300 = vlaneseq
    %v301 = vshrl.u32 %v300, 7
    %v302 = vsub.s32 2, %v301
    %v303 = vrot.slane %v285, %v302
    %305 = vbcast.lane.b32.xlu0 %v303, 256
    %v306 = vpop.permute.xlu0 %305
    %v307 = vlaneseq
    %v308 = vshrl.u32 %v307, 7
    %v309 = vsub.s32 3, %v308
    %v310 = vrot.slane %v285, %v309
    %312 = vbcast.lane.b32.xlu0 %v310, 256
    %v313 = vpop.permute.xlu0 %312
    %v314 = vlaneseq
    %v315 = vshrl.u32 %v314, 7
    %v316 = vsub.s32 4, %v315
    %v317 = vrot.slane %v285, %v316
    %319 = vbcast.lane.b32.xlu0 %v317, 256
    %v320 = vpop.permute.xlu0 %319
    %v321 = vlaneseq
    %v322 = vshrl.u32 %v321, 7
    %v323 = vsub.s32 5, %v322
    %v324 = vrot.slane %v285, %v323
    %326 = vbcast.lane.b32.xlu0 %v324, 256
    %v327 = vpop.permute.xlu0 %326
    %v328 = vlaneseq
    %v329 = vshrl.u32 %v328, 7
    %v330 = vsub.s32 6, %v329
    %v331 = vrot.slane %v285, %v330
    %333 = vbcast.lane.b32.xlu0 %v331, 256
    %v334 = vpop.permute.xlu0 %333
    %v335 = vlaneseq
    %v336 = vshrl.u32 %v335, 7
    %v337 = vsub.s32 7, %v336
    %v338 = vrot.slane %v285, %v337
    %340 = vbcast.lane.b32.xlu0 %v338, 256
    %v341 = vpop.permute.xlu0 %340
    %v342 = vmul.f32 %v237, %v292
    %v343 = vmul.f32 %v238, %v292
    %v344 = vmul.f32 %v239, %v292
    %v345 = vmul.f32 %v240, %v292
    %v346 = vmul.f32 %v241, %v292
    %v347 = vmul.f32 %v242, %v292
    %v348 = vmul.f32 %v243, %v299
    %v349 = vmul.f32 %v244, %v299
    %v350 = vmul.f32 %v245, %v299
    %v351 = vmul.f32 %v246, %v299
    %v352 = vmul.f32 %v247, %v299
    %v353 = vmul.f32 %v248, %v299
    %v354 = vmul.f32 %v249, %v306
    %v355 = vmul.f32 %v250, %v306
    %v356 = vmul.f32 %v251, %v306
    %v357 = vmul.f32 %v252, %v306
    %v358 = vmul.f32 %v253, %v306
    %v359 = vmul.f32 %v254, %v306
    %v360 = vmul.f32 %v255, %v313
    %v361 = vmul.f32 %v256, %v313
    %v362 = vmul.f32 %v257, %v313
    %v363 = vmul.f32 %v258, %v313
    %v364 = vmul.f32 %v259, %v313
    %v365 = vmul.f32 %v260, %v313
    %v366 = vmul.f32 %v261, %v320
    %v367 = vmul.f32 %v262, %v320
    %v368 = vmul.f32 %v263, %v320
    %v369 = vmul.f32 %v264, %v320
    %v370 = vmul.f32 %v265, %v320
    %v371 = vmul.f32 %v266, %v320
    %v372 = vmul.f32 %v267, %v327
    %v373 = vmul.f32 %v268, %v327
    %v374 = vmul.f32 %v269, %v327
    %v375 = vmul.f32 %v270, %v327
    %v376 = vmul.f32 %v271, %v327
    %v377 = vmul.f32 %v272, %v327
    %v378 = vmul.f32 %v273, %v334
    %v379 = vmul.f32 %v274, %v334
    %v380 = vmul.f32 %v275, %v334
    %v381 = vmul.f32 %v276, %v334
    %v382 = vmul.f32 %v277, %v334
    %v383 = vmul.f32 %v278, %v334
    %v384 = vmul.f32 %v279, %v341
    %v385 = vmul.f32 %v280, %v341
    %v386 = vmul.f32 %v281, %v341
    %v387 = vmul.f32 %v282, %v341
    %v388 = vmul.f32 %v283, %v341
    %v389 = vmul.f32 %v284, %v341
    %v390 = vrot.slane %v342, 4
    %v391 = vadd.f32 %v342, %v390
    %v392 = vrot.slane %v391, 2
    %v393 = vadd.f32 %v391, %v392
    %v394 = vrot.slane %v393, 1
    %v395 = vadd.f32 %v393, %v394
    %v396 = vrot.slane %v343, 4
    %v397 = vadd.f32 %v343, %v396
    %v398 = vrot.slane %v397, 2
    %v399 = vadd.f32 %v397, %v398
    %v400 = vrot.slane %v399, 1
    %v401 = vadd.f32 %v399, %v400
    %v402 = vrot.slane %v344, 4
    %v403 = vadd.f32 %v344, %v402
    %v404 = vrot.slane %v403, 2
    %v405 = vadd.f32 %v403, %v404
    %v406 = vrot.slane %v405, 1
    %v407 = vadd.f32 %v405, %v406
    %v408 = vrot.slane %v345, 4
    %v409 = vadd.f32 %v345, %v408
    %v410 = vrot.slane %v409, 2
    %v411 = vadd.f32 %v409, %v410
    %v412 = vrot.slane %v411, 1
    %v413 = vadd.f32 %v411, %v412
    %v414 = vrot.slane %v346, 4
    %v415 = vadd.f32 %v346, %v414
    %v416 = vrot.slane %v415, 2
    %v417 = vadd.f32 %v415, %v416
    %v418 = vrot.slane %v417, 1
    %v419 = vadd.f32 %v417, %v418
    %v420 = vrot.slane %v347, 4
    %v421 = vadd.f32 %v347, %v420
    %v422 = vrot.slane %v421, 2
    %v423 = vadd.f32 %v421, %v422
    %v424 = vrot.slane %v423, 1
    %v425 = vadd.f32 %v423, %v424
    %v426 = vrot.slane %v348, 4
    %v427 = vadd.f32 %v348, %v426
    %v428 = vrot.slane %v427, 2
    %v429 = vadd.f32 %v427, %v428
    %v430 = vrot.slane %v429, 1
    %v431 = vadd.f32 %v429, %v430
    %v432 = vrot.slane %v349, 4
    %v433 = vadd.f32 %v349, %v432
    %v434 = vrot.slane %v433, 2
    %v435 = vadd.f32 %v433, %v434
    %v436 = vrot.slane %v435, 1
    %v437 = vadd.f32 %v435, %v436
    %v438 = vrot.slane %v350, 4
    %v439 = vadd.f32 %v350, %v438
    %v440 = vrot.slane %v439, 2
    %v441 = vadd.f32 %v439, %v440
    %v442 = vrot.slane %v441, 1
    %v443 = vadd.f32 %v441, %v442
    %v444 = vrot.slane %v351, 4
    %v445 = vadd.f32 %v351, %v444
    %v446 = vrot.slane %v445, 2
    %v447 = vadd.f32 %v445, %v446
    %v448 = vrot.slane %v447, 1
    %v449 = vadd.f32 %v447, %v448
    %v450 = vrot.slane %v352, 4
    %v451 = vadd.f32 %v352, %v450
    %v452 = vrot.slane %v451, 2
    %v453 = vadd.f32 %v451, %v452
    %v454 = vrot.slane %v453, 1
    %v455 = vadd.f32 %v453, %v454
    %v456 = vrot.slane %v353, 4
    %v457 = vadd.f32 %v353, %v456
    %v458 = vrot.slane %v457, 2
    %v459 = vadd.f32 %v457, %v458
    %v460 = vrot.slane %v459, 1
    %v461 = vadd.f32 %v459, %v460
    %v462 = vrot.slane %v354, 4
    %v463 = vadd.f32 %v354, %v462
    %v464 = vrot.slane %v463, 2
    %v465 = vadd.f32 %v463, %v464
    %v466 = vrot.slane %v465, 1
    %v467 = vadd.f32 %v465, %v466
    %v468 = vrot.slane %v355, 4
    %v469 = vadd.f32 %v355, %v468
    %v470 = vrot.slane %v469, 2
    %v471 = vadd.f32 %v469, %v470
    %v472 = vrot.slane %v471, 1
    %v473 = vadd.f32 %v471, %v472
    %v474 = vrot.slane %v356, 4
    %v475 = vadd.f32 %v356, %v474
    %v476 = vrot.slane %v475, 2
    %v477 = vadd.f32 %v475, %v476
    %v478 = vrot.slane %v477, 1
    %v479 = vadd.f32 %v477, %v478
    %v480 = vrot.slane %v357, 4
    %v481 = vadd.f32 %v357, %v480
    %v482 = vrot.slane %v481, 2
    %v483 = vadd.f32 %v481, %v482
    %v484 = vrot.slane %v483, 1
    %v485 = vadd.f32 %v483, %v484
    %v486 = vrot.slane %v358, 4
    %v487 = vadd.f32 %v358, %v486
    %v488 = vrot.slane %v487, 2
    %v489 = vadd.f32 %v487, %v488
    %v490 = vrot.slane %v489, 1
    %v491 = vadd.f32 %v489, %v490
    %v492 = vrot.slane %v359, 4
    %v493 = vadd.f32 %v359, %v492
    %v494 = vrot.slane %v493, 2
    %v495 = vadd.f32 %v493, %v494
    %v496 = vrot.slane %v495, 1
    %v497 = vadd.f32 %v495, %v496
    %v498 = vrot.slane %v360, 4
    %v499 = vadd.f32 %v360, %v498
    %v500 = vrot.slane %v499, 2
    %v501 = vadd.f32 %v499, %v500
    %v502 = vrot.slane %v501, 1
    %v503 = vadd.f32 %v501, %v502
    %v504 = vrot.slane %v361, 4
    %v505 = vadd.f32 %v361, %v504
    %v506 = vrot.slane %v505, 2
    %v507 = vadd.f32 %v505, %v506
    %v508 = vrot.slane %v507, 1
    %v509 = vadd.f32 %v507, %v508
    %v510 = vrot.slane %v362, 4
    %v511 = vadd.f32 %v362, %v510
    %v512 = vrot.slane %v511, 2
    %v513 = vadd.f32 %v511, %v512
    %v514 = vrot.slane %v513, 1
    %v515 = vadd.f32 %v513, %v514
    %v516 = vrot.slane %v363, 4
    %v517 = vadd.f32 %v363, %v516
    %v518 = vrot.slane %v517, 2
    %v519 = vadd.f32 %v517, %v518
    %v520 = vrot.slane %v519, 1
    %v521 = vadd.f32 %v519, %v520
    %v522 = vrot.slane %v364, 4
    %v523 = vadd.f32 %v364, %v522
    %v524 = vrot.slane %v523, 2
    %v525 = vadd.f32 %v523, %v524
    %v526 = vrot.slane %v525, 1
    %v527 = vadd.f32 %v525, %v526
    %v528 = vrot.slane %v365, 4
    %v529 = vadd.f32 %v365, %v528
    %v530 = vrot.slane %v529, 2
    %v531 = vadd.f32 %v529, %v530
    %v532 = vrot.slane %v531, 1
    %v533 = vadd.f32 %v531, %v532
    %v534 = vrot.slane %v366, 4
    %v535 = vadd.f32 %v366, %v534
    %v536 = vrot.slane %v535, 2
    %v537 = vadd.f32 %v535, %v536
    %v538 = vrot.slane %v537, 1
    %v539 = vadd.f32 %v537, %v538
    %v540 = vrot.slane %v367, 4
    %v541 = vadd.f32 %v367, %v540
    %v542 = vrot.slane %v541, 2
    %v543 = vadd.f32 %v541, %v542
    %v544 = vrot.slane %v543, 1
    %v545 = vadd.f32 %v543, %v544
    %v546 = vrot.slane %v368, 4
    %v547 = vadd.f32 %v368, %v546
    %v548 = vrot.slane %v547, 2
    %v549 = vadd.f32 %v547, %v548
    %v550 = vrot.slane %v549, 1
    %v551 = vadd.f32 %v549, %v550
    %v552 = vrot.slane %v369, 4
    %v553 = vadd.f32 %v369, %v552
    %v554 = vrot.slane %v553, 2
    %v555 = vadd.f32 %v553, %v554
    %v556 = vrot.slane %v555, 1
    %v557 = vadd.f32 %v555, %v556
    %v558 = vrot.slane %v370, 4
    %v559 = vadd.f32 %v370, %v558
    %v560 = vrot.slane %v559, 2
    %v561 = vadd.f32 %v559, %v560
    %v562 = vrot.slane %v561, 1
    %v563 = vadd.f32 %v561, %v562
    %v564 = vrot.slane %v371, 4
    %v565 = vadd.f32 %v371, %v564
    %v566 = vrot.slane %v565, 2
    %v567 = vadd.f32 %v565, %v566
    %v568 = vrot.slane %v567, 1
    %v569 = vadd.f32 %v567, %v568
    %v570 = vrot.slane %v372, 4
    %v571 = vadd.f32 %v372, %v570
    %v572 = vrot.slane %v571, 2
    %v573 = vadd.f32 %v571, %v572
    %v574 = vrot.slane %v573, 1
    %v575 = vadd.f32 %v573, %v574
    %v576 = vrot.slane %v373, 4
    %v577 = vadd.f32 %v373, %v576
    %v578 = vrot.slane %v577, 2
    %v579 = vadd.f32 %v577, %v578
    %v580 = vrot.slane %v579, 1
    %v581 = vadd.f32 %v579, %v580
    %v582 = vrot.slane %v374, 4
    %v583 = vadd.f32 %v374, %v582
    %v584 = vrot.slane %v583, 2
    %v585 = vadd.f32 %v583, %v584
    %v586 = vrot.slane %v585, 1
    %v587 = vadd.f32 %v585, %v586
    %v588 = vrot.slane %v375, 4
    %v589 = vadd.f32 %v375, %v588
    %v590 = vrot.slane %v589, 2
    %v591 = vadd.f32 %v589, %v590
    %v592 = vrot.slane %v591, 1
    %v593 = vadd.f32 %v591, %v592
    %v594 = vrot.slane %v376, 4
    %v595 = vadd.f32 %v376, %v594
    %v596 = vrot.slane %v595, 2
    %v597 = vadd.f32 %v595, %v596
    %v598 = vrot.slane %v597, 1
    %v599 = vadd.f32 %v597, %v598
    %v600 = vrot.slane %v377, 4
    %v601 = vadd.f32 %v377, %v600
    %v602 = vrot.slane %v601, 2
    %v603 = vadd.f32 %v601, %v602
    %v604 = vrot.slane %v603, 1
    %v605 = vadd.f32 %v603, %v604
    %v606 = vrot.slane %v378, 4
    %v607 = vadd.f32 %v378, %v606
    %v608 = vrot.slane %v607, 2
    %v609 = vadd.f32 %v607, %v608
    %v610 = vrot.slane %v609, 1
    %v611 = vadd.f32 %v609, %v610
    %v612 = vrot.slane %v379, 4
    %v613 = vadd.f32 %v379, %v612
    %v614 = vrot.slane %v613, 2
    %v615 = vadd.f32 %v613, %v614
    %v616 = vrot.slane %v615, 1
    %v617 = vadd.f32 %v615, %v616
    %v618 = vrot.slane %v380, 4
    %v619 = vadd.f32 %v380, %v618
    %v620 = vrot.slane %v619, 2
    %v621 = vadd.f32 %v619, %v620
    %v622 = vrot.slane %v621, 1
    %v623 = vadd.f32 %v621, %v622
    %v624 = vrot.slane %v381, 4
    %v625 = vadd.f32 %v381, %v624
    %v626 = vrot.slane %v625, 2
    %v627 = vadd.f32 %v625, %v626
    %v628 = vrot.slane %v627, 1
    %v629 = vadd.f32 %v627, %v628
    %v630 = vrot.slane %v382, 4
    %v631 = vadd.f32 %v382, %v630
    %v632 = vrot.slane %v631, 2
    %v633 = vadd.f32 %v631, %v632
    %v634 = vrot.slane %v633, 1
    %v635 = vadd.f32 %v633, %v634
    %v636 = vrot.slane %v383, 4
    %v637 = vadd.f32 %v383, %v636
    %v638 = vrot.slane %v637, 2
    %v639 = vadd.f32 %v637, %v638
    %v640 = vrot.slane %v639, 1
    %v641 = vadd.f32 %v639, %v640
    %v642 = vrot.slane %v384, 4
    %v643 = vadd.f32 %v384, %v642
    %v644 = vrot.slane %v643, 2
    %v645 = vadd.f32 %v643, %v644
    %v646 = vrot.slane %v645, 1
    %v647 = vadd.f32 %v645, %v646
    %v648 = vrot.slane %v385, 4
    %v649 = vadd.f32 %v385, %v648
    %v650 = vrot.slane %v649, 2
    %v651 = vadd.f32 %v649, %v650
    %v652 = vrot.slane %v651, 1
    %v653 = vadd.f32 %v651, %v652
    %v654 = vrot.slane %v386, 4
    %v655 = vadd.f32 %v386, %v654
    %v656 = vrot.slane %v655, 2
    %v657 = vadd.f32 %v655, %v656
    %v658 = vrot.slane %v657, 1
    %v659 = vadd.f32 %v657, %v658
    %v660 = vrot.slane %v387, 4
    %v661 = vadd.f32 %v387, %v660
    %v662 = vrot.slane %v661, 2
    %v663 = vadd.f32 %v661, %v662
    %v664 = vrot.slane %v663, 1
    %v665 = vadd.f32 %v663, %v664
    %v666 = vrot.slane %v388, 4
    %v667 = vadd.f32 %v388, %v666
    %v668 = vrot.slane %v667, 2
    %v669 = vadd.f32 %v667, %v668
    %v670 = vrot.slane %v669, 1
    %v671 = vadd.f32 %v669, %v670
    %v672 = vrot.slane %v389, 4
    %v673 = vadd.f32 %v389, %v672
    %v674 = vrot.slane %v673, 2
    %v675 = vadd.f32 %v673, %v674
    %v676 = vrot.slane %v675, 1
    %v677 = vadd.f32 %v675, %v676
    %vm678 = vcmask 64512
    %v679 = vsel %vm678, %v285, 0.0
    %680 = vadd.xlane.f32.xlu0 %v679
    %v681 = vpop.xlane.xlu0 %680
    %v682 = vmax.f32 %v681, 1.0
    %v683 = vrcp.pop %v682
    %v685 = vrot.slane %v683, 1
    %v686 = vrot.slane %v683, 2
    %v687 = vrot.slane %v683, 3
    %v688 = vrot.slane %v683, 4
    %v689 = vrot.slane %v683, 5
    %v690 = vrot.slane %v683, 6
    %v691 = vrot.slane %v683, 7
    %v700 = vmul.f32 %v395, %v683
    %v701 = vmul.f32 %v401, %v683
    %v702 = vmul.f32 %v407, %v683
    %v703 = vmul.f32 %v413, %v683
    %v704 = vmul.f32 %v419, %v683
    %v705 = vmul.f32 %v425, %v683
    %v706 = vmul.f32 %v431, %v685
    %v707 = vmul.f32 %v437, %v685
    %v708 = vmul.f32 %v443, %v685
    %v709 = vmul.f32 %v449, %v685
    %v710 = vmul.f32 %v455, %v685
    %v711 = vmul.f32 %v461, %v685
    %v712 = vmul.f32 %v467, %v686
    %v713 = vmul.f32 %v473, %v686
    %v714 = vmul.f32 %v479, %v686
    %v715 = vmul.f32 %v485, %v686
    %v716 = vmul.f32 %v491, %v686
    %v717 = vmul.f32 %v497, %v686
    %v718 = vmul.f32 %v503, %v687
    %v719 = vmul.f32 %v509, %v687
    %v720 = vmul.f32 %v515, %v687
    %v721 = vmul.f32 %v521, %v687
    %v722 = vmul.f32 %v527, %v687
    %v723 = vmul.f32 %v533, %v687
    %v724 = vmul.f32 %v539, %v688
    %v725 = vmul.f32 %v545, %v688
    %v726 = vmul.f32 %v551, %v688
    %v727 = vmul.f32 %v557, %v688
    %v728 = vmul.f32 %v563, %v688
    %v729 = vmul.f32 %v569, %v688
    %v730 = vmul.f32 %v575, %v689
    %v731 = vmul.f32 %v581, %v689
    %v732 = vmul.f32 %v587, %v689
    %v733 = vmul.f32 %v593, %v689
    %v734 = vmul.f32 %v599, %v689
    %v735 = vmul.f32 %v605, %v689
    %v736 = vmul.f32 %v611, %v690
    %v737 = vmul.f32 %v617, %v690
    %v738 = vmul.f32 %v623, %v690
    %v739 = vmul.f32 %v629, %v690
    %v740 = vmul.f32 %v635, %v690
    %v741 = vmul.f32 %v641, %v690
    %v742 = vmul.f32 %v647, %v691
    %v743 = vmul.f32 %v653, %v691
    %v744 = vmul.f32 %v659, %v691
    %v745 = vmul.f32 %v665, %v691
    %v746 = vmul.f32 %v671, %v691
    %v747 = vmul.f32 %v677, %v691
    %v748 = vpack.c.bf16 %v700, %v700
    %v749 = vpack.c.bf16 %v701, %v701
    %v750 = vpack.c.bf16 %v702, %v702
    %v751 = vpack.c.bf16 %v703, %v703
    %v752 = vpack.c.bf16 %v704, %v704
    %v753 = vpack.c.bf16 %v705, %v705
    %v754 = vpack.c.bf16 %v706, %v706
    %v755 = vpack.c.bf16 %v707, %v707
    %v756 = vpack.c.bf16 %v708, %v708
    %v757 = vpack.c.bf16 %v709, %v709
    %v758 = vpack.c.bf16 %v710, %v710
    %v759 = vpack.c.bf16 %v711, %v711
    %v760 = vpack.c.bf16 %v712, %v712
    %v761 = vpack.c.bf16 %v713, %v713
    %v762 = vpack.c.bf16 %v714, %v714
    %v763 = vpack.c.bf16 %v715, %v715
    %v764 = vpack.c.bf16 %v716, %v716
    %v765 = vpack.c.bf16 %v717, %v717
    %v766 = vpack.c.bf16 %v718, %v718
    %v767 = vpack.c.bf16 %v719, %v719
    %v768 = vpack.c.bf16 %v720, %v720
    %v769 = vpack.c.bf16 %v721, %v721
    %v770 = vpack.c.bf16 %v722, %v722
    %v771 = vpack.c.bf16 %v723, %v723
    %v772 = vpack.c.bf16 %v724, %v724
    %v773 = vpack.c.bf16 %v725, %v725
    %v774 = vpack.c.bf16 %v726, %v726
    %v775 = vpack.c.bf16 %v727, %v727
    %v776 = vpack.c.bf16 %v728, %v728
    %v777 = vpack.c.bf16 %v729, %v729
    %v778 = vpack.c.bf16 %v730, %v730
    %v779 = vpack.c.bf16 %v731, %v731
    %v780 = vpack.c.bf16 %v732, %v732
    %v781 = vpack.c.bf16 %v733, %v733
    %v782 = vpack.c.bf16 %v734, %v734
    %v783 = vpack.c.bf16 %v735, %v735
    %v784 = vpack.c.bf16 %v736, %v736
    %v785 = vpack.c.bf16 %v737, %v737
    %v786 = vpack.c.bf16 %v738, %v738
    %v787 = vpack.c.bf16 %v739, %v739
    %v788 = vpack.c.bf16 %v740, %v740
    %v789 = vpack.c.bf16 %v741, %v741
    %v790 = vpack.c.bf16 %v742, %v742
    %v791 = vpack.c.bf16 %v743, %v743
    %v792 = vpack.c.bf16 %v744, %v744
    %v793 = vpack.c.bf16 %v745, %v745
    %v794 = vpack.c.bf16 %v746, %v746
    %v795 = vpack.c.bf16 %v747, %v747
    %v796 = vld [vmem:[#allocation2] sm:$0xff]
    %v797 = vld [vmem:[#allocation2 + $0x8] sm:$0xff]
    %v798 = vld [vmem:[#allocation2 + $0x10] sm:$0xff]
    %v799 = vld [vmem:[#allocation2 + $0x18] sm:$0xff]
    %v800 = vld [vmem:[#allocation2 + $0x20] sm:$0xff]
    %v801 = vld [vmem:[#allocation2 + $0x28] sm:$0xff]
    %v802 = vld [vmem:[#allocation2 + $0x30] sm:$0xff]
    %v803 = vld [vmem:[#allocation2 + $0x38] sm:$0xff]
    %v804 = vld [vmem:[#allocation2 + $0x40] sm:$0xff]
    %v805 = vld [vmem:[#allocation2 + $0x48] sm:$0xff]
    %v806 = vld [vmem:[#allocation2 + $0x50] sm:$0xff]
    %v807 = vld [vmem:[#allocation2 + $0x58] sm:$0xff]
    %v808 = vld [vmem:[#allocation2 + $0x60] sm:$0xff]
    %v809 = vld [vmem:[#allocation2 + $0x68] sm:$0xff]
    %v810 = vld [vmem:[#allocation2 + $0x70] sm:$0xff]
    %v811 = vld [vmem:[#allocation2 + $0x78] sm:$0xff]
    %v812 = vld [vmem:[#allocation2 + $0x80] sm:$0xff]
    %v813 = vld [vmem:[#allocation2 + $0x88] sm:$0xff]
    %v814 = vld [vmem:[#allocation2 + $0x90] sm:$0xff]
    %v815 = vld [vmem:[#allocation2 + $0x98] sm:$0xff]
    %v816 = vld [vmem:[#allocation2 + $0xa0] sm:$0xff]
    %v817 = vld [vmem:[#allocation2 + $0xa8] sm:$0xff]
    %v818 = vld [vmem:[#allocation2 + $0xb0] sm:$0xff]
    %v819 = vld [vmem:[#allocation2 + $0xb8] sm:$0xff]
    %v820 = vld [vmem:[#allocation2 + $0xc0] sm:$0xff]
    %v821 = vld [vmem:[#allocation2 + $0xc8] sm:$0xff]
    %v822 = vld [vmem:[#allocation2 + $0xd0] sm:$0xff]
    %v823 = vld [vmem:[#allocation2 + $0xd8] sm:$0xff]
    %v824 = vld [vmem:[#allocation2 + $0xe0] sm:$0xff]
    %v825 = vld [vmem:[#allocation2 + $0xe8] sm:$0xff]
    %v826 = vld [vmem:[#allocation2 + $0xf0] sm:$0xff]
    %v827 = vld [vmem:[#allocation2 + $0xf8] sm:$0xff]
    %v828 = vld [vmem:[#allocation2 + $0x100] sm:$0xff]
    %v829 = vld [vmem:[#allocation2 + $0x108] sm:$0xff]
    %v830 = vld [vmem:[#allocation2 + $0x110] sm:$0xff]
    %v831 = vld [vmem:[#allocation2 + $0x118] sm:$0xff]
    %v832 = vld [vmem:[#allocation2 + $0x120] sm:$0xff]
    %v833 = vld [vmem:[#allocation2 + $0x128] sm:$0xff]
    %v834 = vld [vmem:[#allocation2 + $0x130] sm:$0xff]
    %v835 = vld [vmem:[#allocation2 + $0x138] sm:$0xff]
    %v836 = vld [vmem:[#allocation2 + $0x140] sm:$0xff]
    %v837 = vld [vmem:[#allocation2 + $0x148] sm:$0xff]
    %v838 = vld [vmem:[#allocation2 + $0x150] sm:$0xff]
    %v839 = vld [vmem:[#allocation2 + $0x158] sm:$0xff]
    %v840 = vld [vmem:[#allocation2 + $0x160] sm:$0xff]
    %v841 = vld [vmem:[#allocation2 + $0x168] sm:$0xff]
    %v842 = vld [vmem:[#allocation2 + $0x170] sm:$0xff]
    %v843 = vld [vmem:[#allocation2 + $0x178] sm:$0xff]
    %v844 = vld [vmem:[#allocation2 + $0x180] sm:$0xff]
    %v845 = vld [vmem:[#allocation2 + $0x188] sm:$0xff]
    %v846 = vld [vmem:[#allocation2 + $0x190] sm:$0xff]
    %v847 = vld [vmem:[#allocation2 + $0x198] sm:$0xff]
    %v848 = vld [vmem:[#allocation2 + $0x1a0] sm:$0xff]
    %v849 = vld [vmem:[#allocation2 + $0x1a8] sm:$0xff]
    %v850 = vld [vmem:[#allocation2 + $0x1b0] sm:$0xff]
    %v851 = vld [vmem:[#allocation2 + $0x1b8] sm:$0xff]
    %v852 = vld [vmem:[#allocation2 + $0x1c0] sm:$0xff]
    %v853 = vld [vmem:[#allocation2 + $0x1c8] sm:$0xff]
    %v854 = vld [vmem:[#allocation2 + $0x1d0] sm:$0xff]
    %v855 = vld [vmem:[#allocation2 + $0x1d8] sm:$0xff]
    %v856 = vld [vmem:[#allocation2 + $0x1e0] sm:$0xff]
    %v857 = vld [vmem:[#allocation2 + $0x1e8] sm:$0xff]
    %v858 = vld [vmem:[#allocation2 + $0x1f0] sm:$0xff]
    %v859 = vld [vmem:[#allocation2 + $0x1f8] sm:$0xff]
    %v860 = vld [vmem:[#allocation2 + $0x200] sm:$0xff]
    %v861 = vld [vmem:[#allocation2 + $0x208] sm:$0xff]
    %v862 = vld [vmem:[#allocation2 + $0x210] sm:$0xff]
    %v863 = vld [vmem:[#allocation2 + $0x218] sm:$0xff]
    %v864 = vld [vmem:[#allocation2 + $0x220] sm:$0xff]
    %v865 = vld [vmem:[#allocation2 + $0x228] sm:$0xff]
    %v866 = vld [vmem:[#allocation2 + $0x230] sm:$0xff]
    %v867 = vld [vmem:[#allocation2 + $0x238] sm:$0xff]
    %v868 = vld [vmem:[#allocation2 + $0x240] sm:$0xff]
    %v869 = vld [vmem:[#allocation2 + $0x248] sm:$0xff]
    %v870 = vld [vmem:[#allocation2 + $0x250] sm:$0xff]
    %v871 = vld [vmem:[#allocation2 + $0x258] sm:$0xff]
    %v872 = vld [vmem:[#allocation2 + $0x260] sm:$0xff]
    %v873 = vld [vmem:[#allocation2 + $0x268] sm:$0xff]
    %v874 = vld [vmem:[#allocation2 + $0x270] sm:$0xff]
    %v875 = vld [vmem:[#allocation2 + $0x278] sm:$0xff]
    %v876 = vld [vmem:[#allocation2 + $0x280] sm:$0xff]
    %v877 = vld [vmem:[#allocation2 + $0x288] sm:$0xff]
    %v878 = vld [vmem:[#allocation2 + $0x290] sm:$0xff]
    %v879 = vld [vmem:[#allocation2 + $0x298] sm:$0xff]
    %v880 = vld [vmem:[#allocation2 + $0x2a0] sm:$0xff]
    %v881 = vld [vmem:[#allocation2 + $0x2a8] sm:$0xff]
    %v882 = vld [vmem:[#allocation2 + $0x2b0] sm:$0xff]
    %v883 = vld [vmem:[#allocation2 + $0x2b8] sm:$0xff]
    %v884 = vld [vmem:[#allocation2 + $0x2c0] sm:$0xff]
    %v885 = vld [vmem:[#allocation2 + $0x2c8] sm:$0xff]
    %v886 = vld [vmem:[#allocation2 + $0x2d0] sm:$0xff]
    %v887 = vld [vmem:[#allocation2 + $0x2d8] sm:$0xff]
    %v888 = vld [vmem:[#allocation2 + $0x2e0] sm:$0xff]
    %v889 = vld [vmem:[#allocation2 + $0x2e8] sm:$0xff]
    %v890 = vld [vmem:[#allocation2 + $0x2f0] sm:$0xff]
    %v891 = vld [vmem:[#allocation2 + $0x2f8] sm:$0xff]
    %v892 = vld [vmem:[#allocation2 + $0x300] sm:$0xff]
    %v893 = vld [vmem:[#allocation2 + $0x308] sm:$0xff]
    %v894 = vld [vmem:[#allocation2 + $0x310] sm:$0xff]
    %v895 = vld [vmem:[#allocation2 + $0x318] sm:$0xff]
    %v896 = vld [vmem:[#allocation2 + $0x320] sm:$0xff]
    %v897 = vld [vmem:[#allocation2 + $0x328] sm:$0xff]
    %v898 = vld [vmem:[#allocation2 + $0x330] sm:$0xff]
    %v899 = vld [vmem:[#allocation2 + $0x338] sm:$0xff]
    %v900 = vld [vmem:[#allocation2 + $0x340] sm:$0xff]
    %v901 = vld [vmem:[#allocation2 + $0x348] sm:$0xff]
    %v902 = vld [vmem:[#allocation2 + $0x350] sm:$0xff]
    %v903 = vld [vmem:[#allocation2 + $0x358] sm:$0xff]
    %v904 = vld [vmem:[#allocation2 + $0x360] sm:$0xff]
    %v905 = vld [vmem:[#allocation2 + $0x368] sm:$0xff]
    %v906 = vld [vmem:[#allocation2 + $0x370] sm:$0xff]
    %v907 = vld [vmem:[#allocation2 + $0x378] sm:$0xff]
    %v908 = vld [vmem:[#allocation2 + $0x380] sm:$0xff]
    %v909 = vld [vmem:[#allocation2 + $0x388] sm:$0xff]
    %v910 = vld [vmem:[#allocation2 + $0x390] sm:$0xff]
    %v911 = vld [vmem:[#allocation2 + $0x398] sm:$0xff]
    %v912 = vld [vmem:[#allocation2 + $0x3a0] sm:$0xff]
    %v913 = vld [vmem:[#allocation2 + $0x3a8] sm:$0xff]
    %v914 = vld [vmem:[#allocation2 + $0x3b0] sm:$0xff]
    %v915 = vld [vmem:[#allocation2 + $0x3b8] sm:$0xff]
    %v916 = vld [vmem:[#allocation2 + $0x3c0] sm:$0xff]
    %v917 = vld [vmem:[#allocation2 + $0x3c8] sm:$0xff]
    %v918 = vld [vmem:[#allocation2 + $0x3d0] sm:$0xff]
    %v919 = vld [vmem:[#allocation2 + $0x3d8] sm:$0xff]
    %v920 = vld [vmem:[#allocation2 + $0x3e0] sm:$0xff]
    %v921 = vld [vmem:[#allocation2 + $0x3e8] sm:$0xff]
    %v922 = vld [vmem:[#allocation2 + $0x3f0] sm:$0xff]
    %v923 = vld [vmem:[#allocation2 + $0x3f8] sm:$0xff]
    %v924 = vld [vmem:[#allocation2 + $0x400] sm:$0xff]
    %v925 = vld [vmem:[#allocation2 + $0x408] sm:$0xff]
    %v926 = vld [vmem:[#allocation2 + $0x410] sm:$0xff]
    %v927 = vld [vmem:[#allocation2 + $0x418] sm:$0xff]
    %v928 = vld [vmem:[#allocation2 + $0x420] sm:$0xff]
    %v929 = vld [vmem:[#allocation2 + $0x428] sm:$0xff]
    %v930 = vld [vmem:[#allocation2 + $0x430] sm:$0xff]
    %v931 = vld [vmem:[#allocation2 + $0x438] sm:$0xff]
    %v932 = vld [vmem:[#allocation2 + $0x440] sm:$0xff]
    %v933 = vld [vmem:[#allocation2 + $0x448] sm:$0xff]
    %v934 = vld [vmem:[#allocation2 + $0x450] sm:$0xff]
    %v935 = vld [vmem:[#allocation2 + $0x458] sm:$0xff]
    %v936 = vld [vmem:[#allocation2 + $0x460] sm:$0xff]
    %v937 = vld [vmem:[#allocation2 + $0x468] sm:$0xff]
    %v938 = vld [vmem:[#allocation2 + $0x470] sm:$0xff]
    %v939 = vld [vmem:[#allocation2 + $0x478] sm:$0xff]
    %v940 = vld [vmem:[#allocation2 + $0x480] sm:$0xff]
    %v941 = vld [vmem:[#allocation2 + $0x488] sm:$0xff]
    %v942 = vld [vmem:[#allocation2 + $0x490] sm:$0xff]
    %v943 = vld [vmem:[#allocation2 + $0x498] sm:$0xff]
    %v944 = vld [vmem:[#allocation2 + $0x4a0] sm:$0xff]
    %v945 = vld [vmem:[#allocation2 + $0x4a8] sm:$0xff]
    %v946 = vld [vmem:[#allocation2 + $0x4b0] sm:$0xff]
    %v947 = vld [vmem:[#allocation2 + $0x4b8] sm:$0xff]
    %v948 = vld [vmem:[#allocation2 + $0x4c0] sm:$0xff]
    %v949 = vld [vmem:[#allocation2 + $0x4c8] sm:$0xff]
    %v950 = vld [vmem:[#allocation2 + $0x4d0] sm:$0xff]
    %v951 = vld [vmem:[#allocation2 + $0x4d8] sm:$0xff]
    %v952 = vld [vmem:[#allocation2 + $0x4e0] sm:$0xff]
    %v953 = vld [vmem:[#allocation2 + $0x4e8] sm:$0xff]
    %v954 = vld [vmem:[#allocation2 + $0x4f0] sm:$0xff]
    %v955 = vld [vmem:[#allocation2 + $0x4f8] sm:$0xff]
    %v956 = vld [vmem:[#allocation2 + $0x500] sm:$0xff]
    %v957 = vld [vmem:[#allocation2 + $0x508] sm:$0xff]
    %v958 = vld [vmem:[#allocation2 + $0x510] sm:$0xff]
    %v959 = vld [vmem:[#allocation2 + $0x518] sm:$0xff]
    %v960 = vld [vmem:[#allocation2 + $0x520] sm:$0xff]
    %v961 = vld [vmem:[#allocation2 + $0x528] sm:$0xff]
    %v962 = vld [vmem:[#allocation2 + $0x530] sm:$0xff]
    %v963 = vld [vmem:[#allocation2 + $0x538] sm:$0xff]
    %v964 = vld [vmem:[#allocation2 + $0x540] sm:$0xff]
    %v965 = vld [vmem:[#allocation2 + $0x548] sm:$0xff]
    %v966 = vld [vmem:[#allocation2 + $0x550] sm:$0xff]
    %v967 = vld [vmem:[#allocation2 + $0x558] sm:$0xff]
    %v968 = vld [vmem:[#allocation2 + $0x560] sm:$0xff]
    %v969 = vld [vmem:[#allocation2 + $0x568] sm:$0xff]
    %v970 = vld [vmem:[#allocation2 + $0x570] sm:$0xff]
    %v971 = vld [vmem:[#allocation2 + $0x578] sm:$0xff]
    %v972 = vld [vmem:[#allocation2 + $0x580] sm:$0xff]
    %v973 = vld [vmem:[#allocation2 + $0x588] sm:$0xff]
    %v974 = vld [vmem:[#allocation2 + $0x590] sm:$0xff]
    %v975 = vld [vmem:[#allocation2 + $0x598] sm:$0xff]
    %v976 = vld [vmem:[#allocation2 + $0x5a0] sm:$0xff]
    %v977 = vld [vmem:[#allocation2 + $0x5a8] sm:$0xff]
    %v978 = vld [vmem:[#allocation2 + $0x5b0] sm:$0xff]
    %v979 = vld [vmem:[#allocation2 + $0x5b8] sm:$0xff]
    %v980 = vld [vmem:[#allocation2 + $0x5c0] sm:$0xff]
    %v981 = vld [vmem:[#allocation2 + $0x5c8] sm:$0xff]
    %v982 = vld [vmem:[#allocation2 + $0x5d0] sm:$0xff]
    %v983 = vld [vmem:[#allocation2 + $0x5d8] sm:$0xff]
    %v984 = vld [vmem:[#allocation2 + $0x5e0] sm:$0xff]
    %v985 = vld [vmem:[#allocation2 + $0x5e8] sm:$0xff]
    %v986 = vld [vmem:[#allocation2 + $0x5f0] sm:$0xff]
    %v987 = vld [vmem:[#allocation2 + $0x5f8] sm:$0xff]
    %v988 = vld [vmem:[#allocation2 + $0x600] sm:$0xff]
    %v989 = vld [vmem:[#allocation2 + $0x608] sm:$0xff]
    %v990 = vld [vmem:[#allocation2 + $0x610] sm:$0xff]
    %v991 = vld [vmem:[#allocation2 + $0x618] sm:$0xff]
    %v992 = vld [vmem:[#allocation2 + $0x620] sm:$0xff]
    %v993 = vld [vmem:[#allocation2 + $0x628] sm:$0xff]
    %v994 = vld [vmem:[#allocation2 + $0x630] sm:$0xff]
    %v995 = vld [vmem:[#allocation2 + $0x638] sm:$0xff]
    %v996 = vld [vmem:[#allocation2 + $0x640] sm:$0xff]
    %v997 = vld [vmem:[#allocation2 + $0x648] sm:$0xff]
    %v998 = vld [vmem:[#allocation2 + $0x650] sm:$0xff]
    %v999 = vld [vmem:[#allocation2 + $0x658] sm:$0xff]
    %v1000 = vld [vmem:[#allocation2 + $0x660] sm:$0xff]
    %v1001 = vld [vmem:[#allocation2 + $0x668] sm:$0xff]
    %v1002 = vld [vmem:[#allocation2 + $0x670] sm:$0xff]
    %v1003 = vld [vmem:[#allocation2 + $0x678] sm:$0xff]
    %v1004 = vld [vmem:[#allocation2 + $0x680] sm:$0xff]
    %v1005 = vld [vmem:[#allocation2 + $0x688] sm:$0xff]
    %v1006 = vld [vmem:[#allocation2 + $0x690] sm:$0xff]
    %v1007 = vld [vmem:[#allocation2 + $0x698] sm:$0xff]
    %v1008 = vld [vmem:[#allocation2 + $0x6a0] sm:$0xff]
    %v1009 = vld [vmem:[#allocation2 + $0x6a8] sm:$0xff]
    %v1010 = vld [vmem:[#allocation2 + $0x6b0] sm:$0xff]
    %v1011 = vld [vmem:[#allocation2 + $0x6b8] sm:$0xff]
    %v1012 = vld [vmem:[#allocation2 + $0x6c0] sm:$0xff]
    %v1013 = vld [vmem:[#allocation2 + $0x6c8] sm:$0xff]
    %v1014 = vld [vmem:[#allocation2 + $0x6d0] sm:$0xff]
    %v1015 = vld [vmem:[#allocation2 + $0x6d8] sm:$0xff]
    %v1016 = vld [vmem:[#allocation2 + $0x6e0] sm:$0xff]
    %v1017 = vld [vmem:[#allocation2 + $0x6e8] sm:$0xff]
    %v1018 = vld [vmem:[#allocation2 + $0x6f0] sm:$0xff]
    %v1019 = vld [vmem:[#allocation2 + $0x6f8] sm:$0xff]
    %v1020 = vld [vmem:[#allocation2 + $0x700] sm:$0xff]
    %v1021 = vld [vmem:[#allocation2 + $0x708] sm:$0xff]
    %v1022 = vld [vmem:[#allocation2 + $0x710] sm:$0xff]
    %v1023 = vld [vmem:[#allocation2 + $0x718] sm:$0xff]
    %v1024 = vld [vmem:[#allocation2 + $0x720] sm:$0xff]
    %v1025 = vld [vmem:[#allocation2 + $0x728] sm:$0xff]
    %v1026 = vld [vmem:[#allocation2 + $0x730] sm:$0xff]
    %v1027 = vld [vmem:[#allocation2 + $0x738] sm:$0xff]
    %v1028 = vld [vmem:[#allocation2 + $0x740] sm:$0xff]
    %v1029 = vld [vmem:[#allocation2 + $0x748] sm:$0xff]
    %v1030 = vld [vmem:[#allocation2 + $0x750] sm:$0xff]
    %v1031 = vld [vmem:[#allocation2 + $0x758] sm:$0xff]
    %v1032 = vld [vmem:[#allocation2 + $0x760] sm:$0xff]
    %v1033 = vld [vmem:[#allocation2 + $0x768] sm:$0xff]
    %v1034 = vld [vmem:[#allocation2 + $0x770] sm:$0xff]
    %v1035 = vld [vmem:[#allocation2 + $0x778] sm:$0xff]
    %v1036 = vld [vmem:[#allocation2 + $0x780] sm:$0xff]
    %v1037 = vld [vmem:[#allocation2 + $0x788] sm:$0xff]
    %v1038 = vld [vmem:[#allocation2 + $0x790] sm:$0xff]
    %v1039 = vld [vmem:[#allocation2 + $0x798] sm:$0xff]
    %v1040 = vld [vmem:[#allocation2 + $0x7a0] sm:$0xff]
    %v1041 = vld [vmem:[#allocation2 + $0x7a8] sm:$0xff]
    %v1042 = vld [vmem:[#allocation2 + $0x7b0] sm:$0xff]
    %v1043 = vld [vmem:[#allocation2 + $0x7b8] sm:$0xff]
    %v1044 = vld [vmem:[#allocation2 + $0x7c0] sm:$0xff]
    %v1045 = vld [vmem:[#allocation2 + $0x7c8] sm:$0xff]
    %v1046 = vld [vmem:[#allocation2 + $0x7d0] sm:$0xff]
    %v1047 = vld [vmem:[#allocation2 + $0x7d8] sm:$0xff]
    %v1048 = vld [vmem:[#allocation2 + $0x7e0] sm:$0xff]
    %v1049 = vld [vmem:[#allocation2 + $0x7e8] sm:$0xff]
    %v1050 = vld [vmem:[#allocation2 + $0x7f0] sm:$0xff]
    %v1051 = vld [vmem:[#allocation2 + $0x7f8] sm:$0xff]
    %v1052 = vld [vmem:[#allocation2 + $0x800] sm:$0xff]
    %v1053 = vld [vmem:[#allocation2 + $0x808] sm:$0xff]
    %v1054 = vld [vmem:[#allocation2 + $0x810] sm:$0xff]
    %v1055 = vld [vmem:[#allocation2 + $0x818] sm:$0xff]
    %v1056 = vld [vmem:[#allocation2 + $0x820] sm:$0xff]
    %v1057 = vld [vmem:[#allocation2 + $0x828] sm:$0xff]
    %v1058 = vld [vmem:[#allocation2 + $0x830] sm:$0xff]
    %v1059 = vld [vmem:[#allocation2 + $0x838] sm:$0xff]
    %v1060 = vld [vmem:[#allocation2 + $0x840] sm:$0xff]
    %v1061 = vld [vmem:[#allocation2 + $0x848] sm:$0xff]
    %v1062 = vld [vmem:[#allocation2 + $0x850] sm:$0xff]
    %v1063 = vld [vmem:[#allocation2 + $0x858] sm:$0xff]
    %v1064 = vld [vmem:[#allocation2 + $0x860] sm:$0xff]
    %v1065 = vld [vmem:[#allocation2 + $0x868] sm:$0xff]
    %v1066 = vld [vmem:[#allocation2 + $0x870] sm:$0xff]
    %v1067 = vld [vmem:[#allocation2 + $0x878] sm:$0xff]
    %v1068 = vld [vmem:[#allocation2 + $0x880] sm:$0xff]
    %v1069 = vld [vmem:[#allocation2 + $0x888] sm:$0xff]
    %v1070 = vld [vmem:[#allocation2 + $0x890] sm:$0xff]
    %v1071 = vld [vmem:[#allocation2 + $0x898] sm:$0xff]
    %v1072 = vld [vmem:[#allocation2 + $0x8a0] sm:$0xff]
    %v1073 = vld [vmem:[#allocation2 + $0x8a8] sm:$0xff]
    %v1074 = vld [vmem:[#allocation2 + $0x8b0] sm:$0xff]
    %v1075 = vld [vmem:[#allocation2 + $0x8b8] sm:$0xff]
    %v1076 = vld [vmem:[#allocation2 + $0x8c0] sm:$0xff]
    %v1077 = vld [vmem:[#allocation2 + $0x8c8] sm:$0xff]
    %v1078 = vld [vmem:[#allocation2 + $0x8d0] sm:$0xff]
    %v1079 = vld [vmem:[#allocation2 + $0x8d8] sm:$0xff]
    %v1080 = vld [vmem:[#allocation2 + $0x8e0] sm:$0xff]
    %v1081 = vld [vmem:[#allocation2 + $0x8e8] sm:$0xff]
    %v1082 = vld [vmem:[#allocation2 + $0x8f0] sm:$0xff]
    %v1083 = vld [vmem:[#allocation2 + $0x8f8] sm:$0xff]
    %v1084 = vld [vmem:[#allocation18] ss:$8 sm:$0xf]
    %v1085 = vld [vmem:[#allocation18] ss:$8 sm:$0x30]
    %v1086 = vor.u32 %v1084, %v1085
    %v1088 = vlaneseq
    %v1089 = vshrl.u32 %v1088, 7
    %v1090 = vsub.s32 0, %v1089
    %v1091 = vrot.slane %v1086, %v1090
    %v1092 = vlaneseq
    %v1093 = vshrl.u32 %v1092, 7
    %v1094 = vsub.s32 1, %v1093
    %v1095 = vrot.slane %v1086, %v1094
    %v1096 = vlaneseq
    %v1097 = vshrl.u32 %v1096, 7
    %v1098 = vsub.s32 2, %v1097
    %v1099 = vrot.slane %v1086, %v1098
    %v1100 = vlaneseq
    %v1101 = vshrl.u32 %v1100, 7
    %v1102 = vsub.s32 3, %v1101
    %v1103 = vrot.slane %v1086, %v1102
    %v1104 = vlaneseq
    %v1105 = vshrl.u32 %v1104, 7
    %v1106 = vsub.s32 4, %v1105
    %v1107 = vrot.slane %v1086, %v1106
    %v1108 = vlaneseq
    %v1109 = vshrl.u32 %v1108, 7
    %v1110 = vsub.s32 5, %v1109
    %v1111 = vrot.slane %v1086, %v1110
    %v1166 = vunpack.c.l.b16 %v748
    %v1167 = vunpack.c.l.b16 %v749
    %v1168 = vunpack.c.l.b16 %v750
    %v1169 = vunpack.c.l.b16 %v751
    %v1170 = vunpack.c.l.b16 %v752
    %v1171 = vunpack.c.l.b16 %v753
    %v1172 = vunpack.c.l.b16 %v754
    %v1173 = vunpack.c.l.b16 %v755
    %v1174 = vunpack.c.l.b16 %v756
    %v1175 = vunpack.c.l.b16 %v757
    %v1176 = vunpack.c.l.b16 %v758
    %v1177 = vunpack.c.l.b16 %v759
    %v1178 = vunpack.c.l.b16 %v760
    %v1179 = vunpack.c.l.b16 %v761
    %v1180 = vunpack.c.l.b16 %v762
    %v1181 = vunpack.c.l.b16 %v763
    %v1182 = vunpack.c.l.b16 %v764
    %v1183 = vunpack.c.l.b16 %v765
    %v1184 = vunpack.c.l.b16 %v766
    %v1185 = vunpack.c.l.b16 %v767
    %v1186 = vunpack.c.l.b16 %v768
    %v1187 = vunpack.c.l.b16 %v769
    %v1188 = vunpack.c.l.b16 %v770
    %v1189 = vunpack.c.l.b16 %v771
    %v1190 = vunpack.c.l.b16 %v772
    %v1191 = vunpack.c.l.b16 %v773
    %v1192 = vunpack.c.l.b16 %v774
    %v1193 = vunpack.c.l.b16 %v775
    %v1194 = vunpack.c.l.b16 %v776
    %v1195 = vunpack.c.l.b16 %v777
    %v1196 = vunpack.c.l.b16 %v778
    %v1197 = vunpack.c.l.b16 %v779
    %v1198 = vunpack.c.l.b16 %v780
    %v1199 = vunpack.c.l.b16 %v781
    %v1200 = vunpack.c.l.b16 %v782
    %v1201 = vunpack.c.l.b16 %v783
    %v1202 = vunpack.c.l.b16 %v784
    %v1203 = vunpack.c.l.b16 %v785
    %v1204 = vunpack.c.l.b16 %v786
    %v1205 = vunpack.c.l.b16 %v787
    %v1206 = vunpack.c.l.b16 %v788
    %v1207 = vunpack.c.l.b16 %v789
    %v1208 = vunpack.c.l.b16 %v790
    %v1209 = vunpack.c.l.b16 %v791
    %v1210 = vunpack.c.l.b16 %v792
    %v1211 = vunpack.c.l.b16 %v793
    %v1212 = vunpack.c.l.b16 %v794
    %v1213 = vunpack.c.l.b16 %v795
    %v1214 = vrot.slane %v1172, 7
    %vm1215 = vcmask 1041409
    %v1216 = vsel %vm1215, %v1214, %v1166
    %v1217 = vrot.slane %v1178, 6
    %vm1218 = vcmask 1042434
    %v1219 = vsel %vm1218, %v1217, %v1216
    %v1220 = vrot.slane %v1184, 5
    %vm1221 = vcmask 1043459
    %v1222 = vsel %vm1221, %v1220, %v1219
    %v1223 = vrot.slane %v1190, 4
    %vm1224 = vcmask 1044484
    %v1225 = vsel %vm1224, %v1223, %v1222
    %v1226 = vrot.slane %v1196, 3
    %vm1227 = vcmask 1045509
    %v1228 = vsel %vm1227, %v1226, %v1225
    %v1229 = vrot.slane %v1202, 2
    %vm1230 = vcmask 1046534
    %v1231 = vsel %vm1230, %v1229, %v1228
    %v1232 = vrot.slane %v1208, 1
    %vm1233 = vcmask 1047559
    %v1234 = vsel %vm1233, %v1232, %v1231
    %v1235 = vrot.slane %v1173, 7
    %v1236 = vsel %vm1215, %v1235, %v1167
    %v1237 = vrot.slane %v1179, 6
    %v1238 = vsel %vm1218, %v1237, %v1236
    %v1239 = vrot.slane %v1185, 5
    %v1240 = vsel %vm1221, %v1239, %v1238
    %v1241 = vrot.slane %v1191, 4
    %v1242 = vsel %vm1224, %v1241, %v1240
    %v1243 = vrot.slane %v1197, 3
    %v1244 = vsel %vm1227, %v1243, %v1242
    %v1245 = vrot.slane %v1203, 2
    %v1246 = vsel %vm1230, %v1245, %v1244
    %v1247 = vrot.slane %v1209, 1
    %v1248 = vsel %vm1233, %v1247, %v1246
    %v1249 = vrot.slane %v1174, 7
    %v1250 = vsel %vm1215, %v1249, %v1168
    %v1251 = vrot.slane %v1180, 6
    %v1252 = vsel %vm1218, %v1251, %v1250
    %v1253 = vrot.slane %v1186, 5
    %v1254 = vsel %vm1221, %v1253, %v1252
    %v1255 = vrot.slane %v1192, 4
    %v1256 = vsel %vm1224, %v1255, %v1254
    %v1257 = vrot.slane %v1198, 3
    %v1258 = vsel %vm1227, %v1257, %v1256
    %v1259 = vrot.slane %v1204, 2
    %v1260 = vsel %vm1230, %v1259, %v1258
    %v1261 = vrot.slane %v1210, 1
    %v1262 = vsel %vm1233, %v1261, %v1260
    %v1263 = vrot.slane %v1175, 7
    %v1264 = vsel %vm1215, %v1263, %v1169
    %v1265 = vrot.slane %v1181, 6
    %v1266 = vsel %vm1218, %v1265, %v1264
    %v1267 = vrot.slane %v1187, 5
    %v1268 = vsel %vm1221, %v1267, %v1266
    %v1269 = vrot.slane %v1193, 4
    %v1270 = vsel %vm1224, %v1269, %v1268
    %v1271 = vrot.slane %v1199, 3
    %v1272 = vsel %vm1227, %v1271, %v1270
    %v1273 = vrot.slane %v1205, 2
    %v1274 = vsel %vm1230, %v1273, %v1272
    %v1275 = vrot.slane %v1211, 1
    %v1276 = vsel %vm1233, %v1275, %v1274
    %v1277 = vrot.slane %v1176, 7
    %v1278 = vsel %vm1215, %v1277, %v1170
    %v1279 = vrot.slane %v1182, 6
    %v1280 = vsel %vm1218, %v1279, %v1278
    %v1281 = vrot.slane %v1188, 5
    %v1282 = vsel %vm1221, %v1281, %v1280
    %v1283 = vrot.slane %v1194, 4
    %v1284 = vsel %vm1224, %v1283, %v1282
    %v1285 = vrot.slane %v1200, 3
    %v1286 = vsel %vm1227, %v1285, %v1284
    %v1287 = vrot.slane %v1206, 2
    %v1288 = vsel %vm1230, %v1287, %v1286
    %v1289 = vrot.slane %v1212, 1
    %v1290 = vsel %vm1233, %v1289, %v1288
    %v1291 = vrot.slane %v1177, 7
    %v1292 = vsel %vm1215, %v1291, %v1171
    %v1293 = vrot.slane %v1183, 6
    %v1294 = vsel %vm1218, %v1293, %v1292
    %v1295 = vrot.slane %v1189, 5
    %v1296 = vsel %vm1221, %v1295, %v1294
    %v1297 = vrot.slane %v1195, 4
    %v1298 = vsel %vm1224, %v1297, %v1296
    %v1299 = vrot.slane %v1201, 3
    %v1300 = vsel %vm1227, %v1299, %v1298
    %v1301 = vrot.slane %v1207, 2
    %v1302 = vsel %vm1230, %v1301, %v1300
    %v1303 = vrot.slane %v1213, 1
    %v1304 = vsel %vm1233, %v1303, %v1302
    %v1305 = vpack.c.b16 %v1234, %v1234
    %v1306 = vpack.c.b16 %v1248, %v1248
    %v1307 = vpack.c.b16 %v1262, %v1262
    %v1308 = vpack.c.b16 %v1276, %v1276
    %v1309 = vpack.c.b16 %v1290, %v1290
    %v1310 = vpack.c.b16 %v1304, %v1304
    %v1605 = vunpack.c.l.b16 %v796
    %v1606 = vunpack.c.h.b16 %v796
    %v1607 = vunpack.c.l.b16 %v797
    %v1608 = vunpack.c.h.b16 %v797
    %v1609 = vunpack.c.l.b16 %v798
    %v1610 = vunpack.c.h.b16 %v798
    %v1611 = vunpack.c.l.b16 %v799
    %v1612 = vunpack.c.h.b16 %v799
    %v1613 = vunpack.c.l.b16 %v800
    %v1614 = vunpack.c.h.b16 %v800
    %v1615 = vunpack.c.l.b16 %v801
    %v1616 = vunpack.c.h.b16 %v801
    %v1617 = vunpack.c.l.b16 %v802
    %v1618 = vunpack.c.h.b16 %v802
    %v1619 = vunpack.c.l.b16 %v803
    %v1620 = vunpack.c.h.b16 %v803
    %v1621 = vunpack.c.l.b16 %v804
    %v1622 = vunpack.c.h.b16 %v804
    %v1623 = vunpack.c.l.b16 %v805
    %v1624 = vunpack.c.h.b16 %v805
    %v1625 = vunpack.c.l.b16 %v806
    %v1626 = vunpack.c.h.b16 %v806
    %v1627 = vunpack.c.l.b16 %v807
    %v1628 = vunpack.c.h.b16 %v807
    %v1629 = vunpack.c.l.b16 %v808
    %v1630 = vunpack.c.h.b16 %v808
    %v1631 = vunpack.c.l.b16 %v809
    %v1632 = vunpack.c.h.b16 %v809
    %v1633 = vunpack.c.l.b16 %v810
    %v1634 = vunpack.c.h.b16 %v810
    %v1635 = vunpack.c.l.b16 %v811
    %v1636 = vunpack.c.h.b16 %v811
    %v1637 = vunpack.c.l.b16 %v812
    %v1638 = vunpack.c.h.b16 %v812
    %v1639 = vunpack.c.l.b16 %v813
    %v1640 = vunpack.c.h.b16 %v813
    %v1641 = vunpack.c.l.b16 %v814
    %v1642 = vunpack.c.h.b16 %v814
    %v1643 = vunpack.c.l.b16 %v815
    %v1644 = vunpack.c.h.b16 %v815
    %v1645 = vunpack.c.l.b16 %v816
    %v1646 = vunpack.c.h.b16 %v816
    %v1647 = vunpack.c.l.b16 %v817
    %v1648 = vunpack.c.h.b16 %v817
    %v1649 = vunpack.c.l.b16 %v818
    %v1650 = vunpack.c.h.b16 %v818
    %v1651 = vunpack.c.l.b16 %v819
    %v1652 = vunpack.c.h.b16 %v819
    %v1653 = vunpack.c.l.b16 %v820
    %v1654 = vunpack.c.h.b16 %v820
    %v1655 = vunpack.c.l.b16 %v821
    %v1656 = vunpack.c.h.b16 %v821
    %v1657 = vunpack.c.l.b16 %v822
    %v1658 = vunpack.c.h.b16 %v822
    %v1659 = vunpack.c.l.b16 %v823
    %v1660 = vunpack.c.h.b16 %v823
    %v1661 = vunpack.c.l.b16 %v824
    %v1662 = vunpack.c.h.b16 %v824
    %v1663 = vunpack.c.l.b16 %v825
    %v1664 = vunpack.c.h.b16 %v825
    %v1665 = vunpack.c.l.b16 %v826
    %v1666 = vunpack.c.h.b16 %v826
    %v1667 = vunpack.c.l.b16 %v827
    %v1668 = vunpack.c.h.b16 %v827
    %v1669 = vunpack.c.l.b16 %v828
    %v1670 = vunpack.c.h.b16 %v828
    %v1671 = vunpack.c.l.b16 %v829
    %v1672 = vunpack.c.h.b16 %v829
    %v1673 = vunpack.c.l.b16 %v830
    %v1674 = vunpack.c.h.b16 %v830
    %v1675 = vunpack.c.l.b16 %v831
    %v1676 = vunpack.c.h.b16 %v831
    %v1677 = vunpack.c.l.b16 %v832
    %v1678 = vunpack.c.h.b16 %v832
    %v1679 = vunpack.c.l.b16 %v833
    %v1680 = vunpack.c.h.b16 %v833
    %v1681 = vunpack.c.l.b16 %v834
    %v1682 = vunpack.c.h.b16 %v834
    %v1683 = vunpack.c.l.b16 %v835
    %v1684 = vunpack.c.h.b16 %v835
    %v1685 = vunpack.c.l.b16 %v836
    %v1686 = vunpack.c.h.b16 %v836
    %v1687 = vunpack.c.l.b16 %v837
    %v1688 = vunpack.c.h.b16 %v837
    %v1689 = vunpack.c.l.b16 %v838
    %v1690 = vunpack.c.h.b16 %v838
    %v1691 = vunpack.c.l.b16 %v839
    %v1692 = vunpack.c.h.b16 %v839
    %v1693 = vunpack.c.l.b16 %v840
    %v1694 = vunpack.c.h.b16 %v840
    %v1695 = vunpack.c.l.b16 %v841
    %v1696 = vunpack.c.h.b16 %v841
    %v1697 = vunpack.c.l.b16 %v842
    %v1698 = vunpack.c.h.b16 %v842
    %v1699 = vunpack.c.l.b16 %v843
    %v1700 = vunpack.c.h.b16 %v843
    %v1701 = vunpack.c.l.b16 %v844
    %v1702 = vunpack.c.h.b16 %v844
    %v1703 = vunpack.c.l.b16 %v845
    %v1704 = vunpack.c.h.b16 %v845
    %v1705 = vunpack.c.l.b16 %v846
    %v1706 = vunpack.c.h.b16 %v846
    %v1707 = vunpack.c.l.b16 %v847
    %v1708 = vunpack.c.h.b16 %v847
    %v1709 = vunpack.c.l.b16 %v848
    %v1710 = vunpack.c.h.b16 %v848
    %v1711 = vunpack.c.l.b16 %v849
    %v1712 = vunpack.c.h.b16 %v849
    %v1713 = vunpack.c.l.b16 %v850
    %v1714 = vunpack.c.h.b16 %v850
    %v1715 = vunpack.c.l.b16 %v851
    %v1716 = vunpack.c.h.b16 %v851
    %v1717 = vunpack.c.l.b16 %v852
    %v1718 = vunpack.c.h.b16 %v852
    %v1719 = vunpack.c.l.b16 %v853
    %v1720 = vunpack.c.h.b16 %v853
    %v1721 = vunpack.c.l.b16 %v854
    %v1722 = vunpack.c.h.b16 %v854
    %v1723 = vunpack.c.l.b16 %v855
    %v1724 = vunpack.c.h.b16 %v855
    %v1725 = vunpack.c.l.b16 %v856
    %v1726 = vunpack.c.h.b16 %v856
    %v1727 = vunpack.c.l.b16 %v857
    %v1728 = vunpack.c.h.b16 %v857
    %v1729 = vunpack.c.l.b16 %v858
    %v1730 = vunpack.c.h.b16 %v858
    %v1731 = vunpack.c.l.b16 %v859
    %v1732 = vunpack.c.h.b16 %v859
    %v1733 = vunpack.c.l.b16 %v860
    %v1734 = vunpack.c.h.b16 %v860
    %v1735 = vunpack.c.l.b16 %v861
    %v1736 = vunpack.c.h.b16 %v861
    %v1737 = vunpack.c.l.b16 %v862
    %v1738 = vunpack.c.h.b16 %v862
    %v1739 = vunpack.c.l.b16 %v863
    %v1740 = vunpack.c.h.b16 %v863
    %v1741 = vunpack.c.l.b16 %v864
    %v1742 = vunpack.c.h.b16 %v864
    %v1743 = vunpack.c.l.b16 %v865
    %v1744 = vunpack.c.h.b16 %v865
    %v1745 = vunpack.c.l.b16 %v866
    %v1746 = vunpack.c.h.b16 %v866
    %v1747 = vunpack.c.l.b16 %v867
    %v1748 = vunpack.c.h.b16 %v867
    %v1749 = vunpack.c.l.b16 %v868
    %v1750 = vunpack.c.h.b16 %v868
    %v1751 = vunpack.c.l.b16 %v869
    %v1752 = vunpack.c.h.b16 %v869
    %v1753 = vunpack.c.l.b16 %v870
    %v1754 = vunpack.c.h.b16 %v870
    %v1755 = vunpack.c.l.b16 %v871
    %v1756 = vunpack.c.h.b16 %v871
    %v1757 = vunpack.c.l.b16 %v872
    %v1758 = vunpack.c.h.b16 %v872
    %v1759 = vunpack.c.l.b16 %v873
    %v1760 = vunpack.c.h.b16 %v873
    %v1761 = vunpack.c.l.b16 %v874
    %v1762 = vunpack.c.h.b16 %v874
    %v1763 = vunpack.c.l.b16 %v875
    %v1764 = vunpack.c.h.b16 %v875
    %v1765 = vunpack.c.l.b16 %v876
    %v1766 = vunpack.c.h.b16 %v876
    %v1767 = vunpack.c.l.b16 %v877
    %v1768 = vunpack.c.h.b16 %v877
    %v1769 = vunpack.c.l.b16 %v878
    %v1770 = vunpack.c.h.b16 %v878
    %v1771 = vunpack.c.l.b16 %v879
    %v1772 = vunpack.c.h.b16 %v879
    %v1773 = vunpack.c.l.b16 %v880
    %v1774 = vunpack.c.h.b16 %v880
    %v1775 = vunpack.c.l.b16 %v881
    %v1776 = vunpack.c.h.b16 %v881
    %v1777 = vunpack.c.l.b16 %v882
    %v1778 = vunpack.c.h.b16 %v882
    %v1779 = vunpack.c.l.b16 %v883
    %v1780 = vunpack.c.h.b16 %v883
    %v1781 = vunpack.c.l.b16 %v884
    %v1782 = vunpack.c.h.b16 %v884
    %v1783 = vunpack.c.l.b16 %v885
    %v1784 = vunpack.c.h.b16 %v885
    %v1785 = vunpack.c.l.b16 %v886
    %v1786 = vunpack.c.h.b16 %v886
    %v1787 = vunpack.c.l.b16 %v887
    %v1788 = vunpack.c.h.b16 %v887
    %v1789 = vunpack.c.l.b16 %v888
    %v1790 = vunpack.c.h.b16 %v888
    %v1791 = vunpack.c.l.b16 %v889
    %v1792 = vunpack.c.h.b16 %v889
    %v1793 = vunpack.c.l.b16 %v890
    %v1794 = vunpack.c.h.b16 %v890
    %v1795 = vunpack.c.l.b16 %v891
    %v1796 = vunpack.c.h.b16 %v891
    %v1797 = vunpack.c.l.b16 %v892
    %v1798 = vunpack.c.h.b16 %v892
    %v1799 = vunpack.c.l.b16 %v893
    %v1800 = vunpack.c.h.b16 %v893
    %v1801 = vunpack.c.l.b16 %v894
    %v1802 = vunpack.c.h.b16 %v894
    %v1803 = vunpack.c.l.b16 %v895
    %v1804 = vunpack.c.h.b16 %v895
    %v1805 = vunpack.c.l.b16 %v896
    %v1806 = vunpack.c.h.b16 %v896
    %v1807 = vunpack.c.l.b16 %v897
    %v1808 = vunpack.c.h.b16 %v897
    %v1809 = vunpack.c.l.b16 %v898
    %v1810 = vunpack.c.h.b16 %v898
    %v1811 = vunpack.c.l.b16 %v899
    %v1812 = vunpack.c.h.b16 %v899
    %v1813 = vunpack.c.l.b16 %v900
    %v1814 = vunpack.c.h.b16 %v900
    %v1815 = vunpack.c.l.b16 %v901
    %v1816 = vunpack.c.h.b16 %v901
    %v1817 = vunpack.c.l.b16 %v902
    %v1818 = vunpack.c.h.b16 %v902
    %v1819 = vunpack.c.l.b16 %v903
    %v1820 = vunpack.c.h.b16 %v903
    %v1821 = vunpack.c.l.b16 %v904
    %v1822 = vunpack.c.h.b16 %v904
    %v1823 = vunpack.c.l.b16 %v905
    %v1824 = vunpack.c.h.b16 %v905
    %v1825 = vunpack.c.l.b16 %v906
    %v1826 = vunpack.c.h.b16 %v906
    %v1827 = vunpack.c.l.b16 %v907
    %v1828 = vunpack.c.h.b16 %v907
    %v1829 = vunpack.c.l.b16 %v908
    %v1830 = vunpack.c.h.b16 %v908
    %v1831 = vunpack.c.l.b16 %v909
    %v1832 = vunpack.c.h.b16 %v909
    %v1833 = vunpack.c.l.b16 %v910
    %v1834 = vunpack.c.h.b16 %v910
    %v1835 = vunpack.c.l.b16 %v911
    %v1836 = vunpack.c.h.b16 %v911
    %v1837 = vunpack.c.l.b16 %v912
    %v1838 = vunpack.c.h.b16 %v912
    %v1839 = vunpack.c.l.b16 %v913
    %v1840 = vunpack.c.h.b16 %v913
    %v1841 = vunpack.c.l.b16 %v914
    %v1842 = vunpack.c.h.b16 %v914
    %v1843 = vunpack.c.l.b16 %v915
    %v1844 = vunpack.c.h.b16 %v915
    %v1845 = vunpack.c.l.b16 %v916
    %v1846 = vunpack.c.h.b16 %v916
    %v1847 = vunpack.c.l.b16 %v917
    %v1848 = vunpack.c.h.b16 %v917
    %v1849 = vunpack.c.l.b16 %v918
    %v1850 = vunpack.c.h.b16 %v918
    %v1851 = vunpack.c.l.b16 %v919
    %v1852 = vunpack.c.h.b16 %v919
    %v1853 = vunpack.c.l.b16 %v920
    %v1854 = vunpack.c.h.b16 %v920
    %v1855 = vunpack.c.l.b16 %v921
    %v1856 = vunpack.c.h.b16 %v921
    %v1857 = vunpack.c.l.b16 %v922
    %v1858 = vunpack.c.h.b16 %v922
    %v1859 = vunpack.c.l.b16 %v923
    %v1860 = vunpack.c.h.b16 %v923
    %v1861 = vunpack.c.l.b16 %v924
    %v1862 = vunpack.c.h.b16 %v924
    %v1863 = vunpack.c.l.b16 %v925
    %v1864 = vunpack.c.h.b16 %v925
    %v1865 = vunpack.c.l.b16 %v926
    %v1866 = vunpack.c.h.b16 %v926
    %v1867 = vunpack.c.l.b16 %v927
    %v1868 = vunpack.c.h.b16 %v927
    %v1869 = vunpack.c.l.b16 %v928
    %v1870 = vunpack.c.h.b16 %v928
    %v1871 = vunpack.c.l.b16 %v929
    %v1872 = vunpack.c.h.b16 %v929
    %v1873 = vunpack.c.l.b16 %v930
    %v1874 = vunpack.c.h.b16 %v930
    %v1875 = vunpack.c.l.b16 %v931
    %v1876 = vunpack.c.h.b16 %v931
    %v1877 = vunpack.c.l.b16 %v932
    %v1878 = vunpack.c.h.b16 %v932
    %v1879 = vunpack.c.l.b16 %v933
    %v1880 = vunpack.c.h.b16 %v933
    %v1881 = vunpack.c.l.b16 %v934
    %v1882 = vunpack.c.h.b16 %v934
    %v1883 = vunpack.c.l.b16 %v935
    %v1884 = vunpack.c.h.b16 %v935
    %v1885 = vunpack.c.l.b16 %v936
    %v1886 = vunpack.c.h.b16 %v936
    %v1887 = vunpack.c.l.b16 %v937
    %v1888 = vunpack.c.h.b16 %v937
    %v1889 = vunpack.c.l.b16 %v938
    %v1890 = vunpack.c.h.b16 %v938
    %v1891 = vunpack.c.l.b16 %v939
    %v1892 = vunpack.c.h.b16 %v939
    %v1893 = vunpack.c.l.b16 %v940
    %v1894 = vunpack.c.h.b16 %v940
    %v1895 = vunpack.c.l.b16 %v941
    %v1896 = vunpack.c.h.b16 %v941
    %v1897 = vunpack.c.l.b16 %v942
    %v1898 = vunpack.c.h.b16 %v942
    %v1899 = vunpack.c.l.b16 %v943
    %v1900 = vunpack.c.h.b16 %v943
    %v1901 = vunpack.c.l.b16 %v944
    %v1902 = vunpack.c.h.b16 %v944
    %v1903 = vunpack.c.l.b16 %v945
    %v1904 = vunpack.c.h.b16 %v945
    %v1905 = vunpack.c.l.b16 %v946
    %v1906 = vunpack.c.h.b16 %v946
    %v1907 = vunpack.c.l.b16 %v947
    %v1908 = vunpack.c.h.b16 %v947
    %v1909 = vunpack.c.l.b16 %v948
    %v1910 = vunpack.c.h.b16 %v948
    %v1911 = vunpack.c.l.b16 %v949
    %v1912 = vunpack.c.h.b16 %v949
    %v1913 = vunpack.c.l.b16 %v950
    %v1914 = vunpack.c.h.b16 %v950
    %v1915 = vunpack.c.l.b16 %v951
    %v1916 = vunpack.c.h.b16 %v951
    %v1917 = vunpack.c.l.b16 %v952
    %v1918 = vunpack.c.h.b16 %v952
    %v1919 = vunpack.c.l.b16 %v953
    %v1920 = vunpack.c.h.b16 %v953
    %v1921 = vunpack.c.l.b16 %v954
    %v1922 = vunpack.c.h.b16 %v954
    %v1923 = vunpack.c.l.b16 %v955
    %v1924 = vunpack.c.h.b16 %v955
    %v1925 = vunpack.c.l.b16 %v956
    %v1926 = vunpack.c.h.b16 %v956
    %v1927 = vunpack.c.l.b16 %v957
    %v1928 = vunpack.c.h.b16 %v957
    %v1929 = vunpack.c.l.b16 %v958
    %v1930 = vunpack.c.h.b16 %v958
    %v1931 = vunpack.c.l.b16 %v959
    %v1932 = vunpack.c.h.b16 %v959
    %v1933 = vunpack.c.l.b16 %v960
    %v1934 = vunpack.c.h.b16 %v960
    %v1935 = vunpack.c.l.b16 %v961
    %v1936 = vunpack.c.h.b16 %v961
    %v1937 = vunpack.c.l.b16 %v962
    %v1938 = vunpack.c.h.b16 %v962
    %v1939 = vunpack.c.l.b16 %v963
    %v1940 = vunpack.c.h.b16 %v963
    %v1941 = vunpack.c.l.b16 %v964
    %v1942 = vunpack.c.h.b16 %v964
    %v1943 = vunpack.c.l.b16 %v965
    %v1944 = vunpack.c.h.b16 %v965
    %v1945 = vunpack.c.l.b16 %v966
    %v1946 = vunpack.c.h.b16 %v966
    %v1947 = vunpack.c.l.b16 %v967
    %v1948 = vunpack.c.h.b16 %v967
    %v1949 = vunpack.c.l.b16 %v968
    %v1950 = vunpack.c.h.b16 %v968
    %v1951 = vunpack.c.l.b16 %v969
    %v1952 = vunpack.c.h.b16 %v969
    %v1953 = vunpack.c.l.b16 %v970
    %v1954 = vunpack.c.h.b16 %v970
    %v1955 = vunpack.c.l.b16 %v971
    %v1956 = vunpack.c.h.b16 %v971
    %v1957 = vunpack.c.l.b16 %v972
    %v1958 = vunpack.c.h.b16 %v972
    %v1959 = vunpack.c.l.b16 %v973
    %v1960 = vunpack.c.h.b16 %v973
    %v1961 = vunpack.c.l.b16 %v974
    %v1962 = vunpack.c.h.b16 %v974
    %v1963 = vunpack.c.l.b16 %v975
    %v1964 = vunpack.c.h.b16 %v975
    %v1965 = vunpack.c.l.b16 %v976
    %v1966 = vunpack.c.h.b16 %v976
    %v1967 = vunpack.c.l.b16 %v977
    %v1968 = vunpack.c.h.b16 %v977
    %v1969 = vunpack.c.l.b16 %v978
    %v1970 = vunpack.c.h.b16 %v978
    %v1971 = vunpack.c.l.b16 %v979
    %v1972 = vunpack.c.h.b16 %v979
    %v1973 = vunpack.c.l.b16 %v980
    %v1974 = vunpack.c.h.b16 %v980
    %v1975 = vunpack.c.l.b16 %v981
    %v1976 = vunpack.c.h.b16 %v981
    %v1977 = vunpack.c.l.b16 %v982
    %v1978 = vunpack.c.h.b16 %v982
    %v1979 = vunpack.c.l.b16 %v983
    %v1980 = vunpack.c.h.b16 %v983
    %v1981 = vunpack.c.l.b16 %v984
    %v1982 = vunpack.c.h.b16 %v984
    %v1983 = vunpack.c.l.b16 %v985
    %v1984 = vunpack.c.h.b16 %v985
    %v1985 = vunpack.c.l.b16 %v986
    %v1986 = vunpack.c.h.b16 %v986
    %v1987 = vunpack.c.l.b16 %v987
    %v1988 = vunpack.c.h.b16 %v987
    %v1989 = vunpack.c.l.b16 %v988
    %v1990 = vunpack.c.h.b16 %v988
    %v1991 = vunpack.c.l.b16 %v989
    %v1992 = vunpack.c.h.b16 %v989
    %v1993 = vunpack.c.l.b16 %v990
    %v1994 = vunpack.c.h.b16 %v990
    %v1995 = vunpack.c.l.b16 %v991
    %v1996 = vunpack.c.h.b16 %v991
    %v1997 = vunpack.c.l.b16 %v992
    %v1998 = vunpack.c.h.b16 %v992
    %v1999 = vunpack.c.l.b16 %v993
    %v2000 = vunpack.c.h.b16 %v993
    %v2001 = vunpack.c.l.b16 %v994
    %v2002 = vunpack.c.h.b16 %v994
    %v2003 = vunpack.c.l.b16 %v995
    %v2004 = vunpack.c.h.b16 %v995
    %v2005 = vunpack.c.l.b16 %v996
    %v2006 = vunpack.c.h.b16 %v996
    %v2007 = vunpack.c.l.b16 %v997
    %v2008 = vunpack.c.h.b16 %v997
    %v2009 = vunpack.c.l.b16 %v998
    %v2010 = vunpack.c.h.b16 %v998
    %v2011 = vunpack.c.l.b16 %v999
    %v2012 = vunpack.c.h.b16 %v999
    %v2013 = vunpack.c.l.b16 %v1000
    %v2014 = vunpack.c.h.b16 %v1000
    %v2015 = vunpack.c.l.b16 %v1001
    %v2016 = vunpack.c.h.b16 %v1001
    %v2017 = vunpack.c.l.b16 %v1002
    %v2018 = vunpack.c.h.b16 %v1002
    %v2019 = vunpack.c.l.b16 %v1003
    %v2020 = vunpack.c.h.b16 %v1003
    %v2021 = vunpack.c.l.b16 %v1004
    %v2022 = vunpack.c.h.b16 %v1004
    %v2023 = vunpack.c.l.b16 %v1005
    %v2024 = vunpack.c.h.b16 %v1005
    %v2025 = vunpack.c.l.b16 %v1006
    %v2026 = vunpack.c.h.b16 %v1006
    %v2027 = vunpack.c.l.b16 %v1007
    %v2028 = vunpack.c.h.b16 %v1007
    %v2029 = vunpack.c.l.b16 %v1008
    %v2030 = vunpack.c.h.b16 %v1008
    %v2031 = vunpack.c.l.b16 %v1009
    %v2032 = vunpack.c.h.b16 %v1009
    %v2033 = vunpack.c.l.b16 %v1010
    %v2034 = vunpack.c.h.b16 %v1010
    %v2035 = vunpack.c.l.b16 %v1011
    %v2036 = vunpack.c.h.b16 %v1011
    %v2037 = vunpack.c.l.b16 %v1012
    %v2038 = vunpack.c.h.b16 %v1012
    %v2039 = vunpack.c.l.b16 %v1013
    %v2040 = vunpack.c.h.b16 %v1013
    %v2041 = vunpack.c.l.b16 %v1014
    %v2042 = vunpack.c.h.b16 %v1014
    %v2043 = vunpack.c.l.b16 %v1015
    %v2044 = vunpack.c.h.b16 %v1015
    %v2045 = vunpack.c.l.b16 %v1016
    %v2046 = vunpack.c.h.b16 %v1016
    %v2047 = vunpack.c.l.b16 %v1017
    %v2048 = vunpack.c.h.b16 %v1017
    %v2049 = vunpack.c.l.b16 %v1018
    %v2050 = vunpack.c.h.b16 %v1018
    %v2051 = vunpack.c.l.b16 %v1019
    %v2052 = vunpack.c.h.b16 %v1019
    %v2053 = vunpack.c.l.b16 %v1020
    %v2054 = vunpack.c.h.b16 %v1020
    %v2055 = vunpack.c.l.b16 %v1021
    %v2056 = vunpack.c.h.b16 %v1021
    %v2057 = vunpack.c.l.b16 %v1022
    %v2058 = vunpack.c.h.b16 %v1022
    %v2059 = vunpack.c.l.b16 %v1023
    %v2060 = vunpack.c.h.b16 %v1023
    %v2061 = vunpack.c.l.b16 %v1024
    %v2062 = vunpack.c.h.b16 %v1024
    %v2063 = vunpack.c.l.b16 %v1025
    %v2064 = vunpack.c.h.b16 %v1025
    %v2065 = vunpack.c.l.b16 %v1026
    %v2066 = vunpack.c.h.b16 %v1026
    %v2067 = vunpack.c.l.b16 %v1027
    %v2068 = vunpack.c.h.b16 %v1027
    %v2069 = vunpack.c.l.b16 %v1028
    %v2070 = vunpack.c.h.b16 %v1028
    %v2071 = vunpack.c.l.b16 %v1029
    %v2072 = vunpack.c.h.b16 %v1029
    %v2073 = vunpack.c.l.b16 %v1030
    %v2074 = vunpack.c.h.b16 %v1030
    %v2075 = vunpack.c.l.b16 %v1031
    %v2076 = vunpack.c.h.b16 %v1031
    %v2077 = vunpack.c.l.b16 %v1032
    %v2078 = vunpack.c.h.b16 %v1032
    %v2079 = vunpack.c.l.b16 %v1033
    %v2080 = vunpack.c.h.b16 %v1033
    %v2081 = vunpack.c.l.b16 %v1034
    %v2082 = vunpack.c.h.b16 %v1034
    %v2083 = vunpack.c.l.b16 %v1035
    %v2084 = vunpack.c.h.b16 %v1035
    %v2085 = vunpack.c.l.b16 %v1036
    %v2086 = vunpack.c.h.b16 %v1036
    %v2087 = vunpack.c.l.b16 %v1037
    %v2088 = vunpack.c.h.b16 %v1037
    %v2089 = vunpack.c.l.b16 %v1038
    %v2090 = vunpack.c.h.b16 %v1038
    %v2091 = vunpack.c.l.b16 %v1039
    %v2092 = vunpack.c.h.b16 %v1039
    %v2093 = vunpack.c.l.b16 %v1040
    %v2094 = vunpack.c.h.b16 %v1040
    %v2095 = vunpack.c.l.b16 %v1041
    %v2096 = vunpack.c.h.b16 %v1041
    %v2097 = vunpack.c.l.b16 %v1042
    %v2098 = vunpack.c.h.b16 %v1042
    %v2099 = vunpack.c.l.b16 %v1043
    %v2100 = vunpack.c.h.b16 %v1043
    %v2101 = vunpack.c.l.b16 %v1044
    %v2102 = vunpack.c.h.b16 %v1044
    %v2103 = vunpack.c.l.b16 %v1045
    %v2104 = vunpack.c.h.b16 %v1045
    %v2105 = vunpack.c.l.b16 %v1046
    %v2106 = vunpack.c.h.b16 %v1046
    %v2107 = vunpack.c.l.b16 %v1047
    %v2108 = vunpack.c.h.b16 %v1047
    %v2109 = vunpack.c.l.b16 %v1048
    %v2110 = vunpack.c.h.b16 %v1048
    %v2111 = vunpack.c.l.b16 %v1049
    %v2112 = vunpack.c.h.b16 %v1049
    %v2113 = vunpack.c.l.b16 %v1050
    %v2114 = vunpack.c.h.b16 %v1050
    %v2115 = vunpack.c.l.b16 %v1051
    %v2116 = vunpack.c.h.b16 %v1051
    %v2117 = vunpack.c.l.b16 %v1052
    %v2118 = vunpack.c.h.b16 %v1052
    %v2119 = vunpack.c.l.b16 %v1053
    %v2120 = vunpack.c.h.b16 %v1053
    %v2121 = vunpack.c.l.b16 %v1054
    %v2122 = vunpack.c.h.b16 %v1054
    %v2123 = vunpack.c.l.b16 %v1055
    %v2124 = vunpack.c.h.b16 %v1055
    %v2125 = vunpack.c.l.b16 %v1056
    %v2126 = vunpack.c.h.b16 %v1056
    %v2127 = vunpack.c.l.b16 %v1057
    %v2128 = vunpack.c.h.b16 %v1057
    %v2129 = vunpack.c.l.b16 %v1058
    %v2130 = vunpack.c.h.b16 %v1058
    %v2131 = vunpack.c.l.b16 %v1059
    %v2132 = vunpack.c.h.b16 %v1059
    %v2133 = vunpack.c.l.b16 %v1060
    %v2134 = vunpack.c.h.b16 %v1060
    %v2135 = vunpack.c.l.b16 %v1061
    %v2136 = vunpack.c.h.b16 %v1061
    %v2137 = vunpack.c.l.b16 %v1062
    %v2138 = vunpack.c.h.b16 %v1062
    %v2139 = vunpack.c.l.b16 %v1063
    %v2140 = vunpack.c.h.b16 %v1063
    %v2141 = vunpack.c.l.b16 %v1064
    %v2142 = vunpack.c.h.b16 %v1064
    %v2143 = vunpack.c.l.b16 %v1065
    %v2144 = vunpack.c.h.b16 %v1065
    %v2145 = vunpack.c.l.b16 %v1066
    %v2146 = vunpack.c.h.b16 %v1066
    %v2147 = vunpack.c.l.b16 %v1067
    %v2148 = vunpack.c.h.b16 %v1067
    %v2149 = vunpack.c.l.b16 %v1068
    %v2150 = vunpack.c.h.b16 %v1068
    %v2151 = vunpack.c.l.b16 %v1069
    %v2152 = vunpack.c.h.b16 %v1069
    %v2153 = vunpack.c.l.b16 %v1070
    %v2154 = vunpack.c.h.b16 %v1070
    %v2155 = vunpack.c.l.b16 %v1071
    %v2156 = vunpack.c.h.b16 %v1071
    %v2157 = vunpack.c.l.b16 %v1072
    %v2158 = vunpack.c.h.b16 %v1072
    %v2159 = vunpack.c.l.b16 %v1073
    %v2160 = vunpack.c.h.b16 %v1073
    %v2161 = vunpack.c.l.b16 %v1074
    %v2162 = vunpack.c.h.b16 %v1074
    %v2163 = vunpack.c.l.b16 %v1075
    %v2164 = vunpack.c.h.b16 %v1075
    %v2165 = vunpack.c.l.b16 %v1076
    %v2166 = vunpack.c.h.b16 %v1076
    %v2167 = vunpack.c.l.b16 %v1077
    %v2168 = vunpack.c.h.b16 %v1077
    %v2169 = vunpack.c.l.b16 %v1078
    %v2170 = vunpack.c.h.b16 %v1078
    %v2171 = vunpack.c.l.b16 %v1079
    %v2172 = vunpack.c.h.b16 %v1079
    %v2173 = vunpack.c.l.b16 %v1080
    %v2174 = vunpack.c.h.b16 %v1080
    %v2175 = vunpack.c.l.b16 %v1081
    %v2176 = vunpack.c.h.b16 %v1081
    %v2177 = vunpack.c.l.b16 %v1082
    %v2178 = vunpack.c.h.b16 %v1082
    %v2179 = vunpack.c.l.b16 %v1083
    %v2180 = vunpack.c.h.b16 %v1083
    %v2181 = vpack.c.b16 %v1611, %v1605
    %v2182 = vpack.c.b16 %v1612, %v1606
    %v2183 = vpack.c.b16 %v1613, %v1607
    %v2184 = vpack.c.b16 %v1614, %v1608
    %v2185 = vpack.c.b16 %v1615, %v1609
    %v2186 = vpack.c.b16 %v1616, %v1610
    %v2187 = vpack.c.b16 %v1623, %v1617
    %v2188 = vpack.c.b16 %v1624, %v1618
    %v2189 = vpack.c.b16 %v1625, %v1619
    %v2190 = vpack.c.b16 %v1626, %v1620
    %v2191 = vpack.c.b16 %v1627, %v1621
    %v2192 = vpack.c.b16 %v1628, %v1622
    %v2193 = vpack.c.b16 %v1635, %v1629
    %v2194 = vpack.c.b16 %v1636, %v1630
    %v2195 = vpack.c.b16 %v1637, %v1631
    %v2196 = vpack.c.b16 %v1638, %v1632
    %v2197 = vpack.c.b16 %v1639, %v1633
    %v2198 = vpack.c.b16 %v1640, %v1634
    %v2199 = vpack.c.b16 %v1647, %v1641
    %v2200 = vpack.c.b16 %v1648, %v1642
    %v2201 = vpack.c.b16 %v1649, %v1643
    %v2202 = vpack.c.b16 %v1650, %v1644
    %v2203 = vpack.c.b16 %v1651, %v1645
    %v2204 = vpack.c.b16 %v1652, %v1646
    %v2205 = vpack.c.b16 %v1659, %v1653
    %v2206 = vpack.c.b16 %v1660, %v1654
    %v2207 = vpack.c.b16 %v1661, %v1655
    %v2208 = vpack.c.b16 %v1662, %v1656
    %v2209 = vpack.c.b16 %v1663, %v1657
    %v2210 = vpack.c.b16 %v1664, %v1658
    %v2211 = vpack.c.b16 %v1671, %v1665
    %v2212 = vpack.c.b16 %v1672, %v1666
    %v2213 = vpack.c.b16 %v1673, %v1667
    %v2214 = vpack.c.b16 %v1674, %v1668
    %v2215 = vpack.c.b16 %v1675, %v1669
    %v2216 = vpack.c.b16 %v1676, %v1670
    %v2217 = vpack.c.b16 %v1683, %v1677
    %v2218 = vpack.c.b16 %v1684, %v1678
    %v2219 = vpack.c.b16 %v1685, %v1679
    %v2220 = vpack.c.b16 %v1686, %v1680
    %v2221 = vpack.c.b16 %v1687, %v1681
    %v2222 = vpack.c.b16 %v1688, %v1682
    %v2223 = vpack.c.b16 %v1695, %v1689
    %v2224 = vpack.c.b16 %v1696, %v1690
    %v2225 = vpack.c.b16 %v1697, %v1691
    %v2226 = vpack.c.b16 %v1698, %v1692
    %v2227 = vpack.c.b16 %v1699, %v1693
    %v2228 = vpack.c.b16 %v1700, %v1694
    %v2229 = vpack.c.b16 %v1707, %v1701
    %v2230 = vpack.c.b16 %v1708, %v1702
    %v2231 = vpack.c.b16 %v1709, %v1703
    %v2232 = vpack.c.b16 %v1710, %v1704
    %v2233 = vpack.c.b16 %v1711, %v1705
    %v2234 = vpack.c.b16 %v1712, %v1706
    %v2235 = vpack.c.b16 %v1719, %v1713
    %v2236 = vpack.c.b16 %v1720, %v1714
    %v2237 = vpack.c.b16 %v1721, %v1715
    %v2238 = vpack.c.b16 %v1722, %v1716
    %v2239 = vpack.c.b16 %v1723, %v1717
    %v2240 = vpack.c.b16 %v1724, %v1718
    %v2241 = vpack.c.b16 %v1731, %v1725
    %v2242 = vpack.c.b16 %v1732, %v1726
    %v2243 = vpack.c.b16 %v1733, %v1727
    %v2244 = vpack.c.b16 %v1734, %v1728
    %v2245 = vpack.c.b16 %v1735, %v1729
    %v2246 = vpack.c.b16 %v1736, %v1730
    %v2247 = vpack.c.b16 %v1743, %v1737
    %v2248 = vpack.c.b16 %v1744, %v1738
    %v2249 = vpack.c.b16 %v1745, %v1739
    %v2250 = vpack.c.b16 %v1746, %v1740
    %v2251 = vpack.c.b16 %v1747, %v1741
    %v2252 = vpack.c.b16 %v1748, %v1742
    %v2253 = vpack.c.b16 %v1755, %v1749
    %v2254 = vpack.c.b16 %v1756, %v1750
    %v2255 = vpack.c.b16 %v1757, %v1751
    %v2256 = vpack.c.b16 %v1758, %v1752
    %v2257 = vpack.c.b16 %v1759, %v1753
    %v2258 = vpack.c.b16 %v1760, %v1754
    %v2259 = vpack.c.b16 %v1767, %v1761
    %v2260 = vpack.c.b16 %v1768, %v1762
    %v2261 = vpack.c.b16 %v1769, %v1763
    %v2262 = vpack.c.b16 %v1770, %v1764
    %v2263 = vpack.c.b16 %v1771, %v1765
    %v2264 = vpack.c.b16 %v1772, %v1766
    %v2265 = vpack.c.b16 %v1779, %v1773
    %v2266 = vpack.c.b16 %v1780, %v1774
    %v2267 = vpack.c.b16 %v1781, %v1775
    %v2268 = vpack.c.b16 %v1782, %v1776
    %v2269 = vpack.c.b16 %v1783, %v1777
    %v2270 = vpack.c.b16 %v1784, %v1778
    %v2271 = vpack.c.b16 %v1791, %v1785
    %v2272 = vpack.c.b16 %v1792, %v1786
    %v2273 = vpack.c.b16 %v1793, %v1787
    %v2274 = vpack.c.b16 %v1794, %v1788
    %v2275 = vpack.c.b16 %v1795, %v1789
    %v2276 = vpack.c.b16 %v1796, %v1790
    %v2277 = vpack.c.b16 %v1803, %v1797
    %v2278 = vpack.c.b16 %v1804, %v1798
    %v2279 = vpack.c.b16 %v1805, %v1799
    %v2280 = vpack.c.b16 %v1806, %v1800
    %v2281 = vpack.c.b16 %v1807, %v1801
    %v2282 = vpack.c.b16 %v1808, %v1802
    %v2283 = vpack.c.b16 %v1815, %v1809
    %v2284 = vpack.c.b16 %v1816, %v1810
    %v2285 = vpack.c.b16 %v1817, %v1811
    %v2286 = vpack.c.b16 %v1818, %v1812
    %v2287 = vpack.c.b16 %v1819, %v1813
    %v2288 = vpack.c.b16 %v1820, %v1814
    %v2289 = vpack.c.b16 %v1827, %v1821
    %v2290 = vpack.c.b16 %v1828, %v1822
    %v2291 = vpack.c.b16 %v1829, %v1823
    %v2292 = vpack.c.b16 %v1830, %v1824
    %v2293 = vpack.c.b16 %v1831, %v1825
    %v2294 = vpack.c.b16 %v1832, %v1826
    %v2295 = vpack.c.b16 %v1839, %v1833
    %v2296 = vpack.c.b16 %v1840, %v1834
    %v2297 = vpack.c.b16 %v1841, %v1835
    %v2298 = vpack.c.b16 %v1842, %v1836
    %v2299 = vpack.c.b16 %v1843, %v1837
    %v2300 = vpack.c.b16 %v1844, %v1838
    %v2301 = vpack.c.b16 %v1851, %v1845
    %v2302 = vpack.c.b16 %v1852, %v1846
    %v2303 = vpack.c.b16 %v1853, %v1847
    %v2304 = vpack.c.b16 %v1854, %v1848
    %v2305 = vpack.c.b16 %v1855, %v1849
    %v2306 = vpack.c.b16 %v1856, %v1850
    %v2307 = vpack.c.b16 %v1863, %v1857
    %v2308 = vpack.c.b16 %v1864, %v1858
    %v2309 = vpack.c.b16 %v1865, %v1859
    %v2310 = vpack.c.b16 %v1866, %v1860
    %v2311 = vpack.c.b16 %v1867, %v1861
    %v2312 = vpack.c.b16 %v1868, %v1862
    %v2313 = vpack.c.b16 %v1875, %v1869
    %v2314 = vpack.c.b16 %v1876, %v1870
    %v2315 = vpack.c.b16 %v1877, %v1871
    %v2316 = vpack.c.b16 %v1878, %v1872
    %v2317 = vpack.c.b16 %v1879, %v1873
    %v2318 = vpack.c.b16 %v1880, %v1874
    %v2319 = vpack.c.b16 %v1887, %v1881
    %v2320 = vpack.c.b16 %v1888, %v1882
    %v2321 = vpack.c.b16 %v1889, %v1883
    %v2322 = vpack.c.b16 %v1890, %v1884
    %v2323 = vpack.c.b16 %v1891, %v1885
    %v2324 = vpack.c.b16 %v1892, %v1886
    %v2325 = vpack.c.b16 %v1899, %v1893
    %v2326 = vpack.c.b16 %v1900, %v1894
    %v2327 = vpack.c.b16 %v1901, %v1895
    %v2328 = vpack.c.b16 %v1902, %v1896
    %v2329 = vpack.c.b16 %v1903, %v1897
    %v2330 = vpack.c.b16 %v1904, %v1898
    %v2331 = vpack.c.b16 %v1911, %v1905
    %v2332 = vpack.c.b16 %v1912, %v1906
    %v2333 = vpack.c.b16 %v1913, %v1907
    %v2334 = vpack.c.b16 %v1914, %v1908
    %v2335 = vpack.c.b16 %v1915, %v1909
    %v2336 = vpack.c.b16 %v1916, %v1910
    %v2337 = vpack.c.b16 %v1923, %v1917
    %v2338 = vpack.c.b16 %v1924, %v1918
    %v2339 = vpack.c.b16 %v1925, %v1919
    %v2340 = vpack.c.b16 %v1926, %v1920
    %v2341 = vpack.c.b16 %v1927, %v1921
    %v2342 = vpack.c.b16 %v1928, %v1922
    %v2343 = vpack.c.b16 %v1935, %v1929
    %v2344 = vpack.c.b16 %v1936, %v1930
    %v2345 = vpack.c.b16 %v1937, %v1931
    %v2346 = vpack.c.b16 %v1938, %v1932
    %v2347 = vpack.c.b16 %v1939, %v1933
    %v2348 = vpack.c.b16 %v1940, %v1934
    %v2349 = vpack.c.b16 %v1947, %v1941
    %v2350 = vpack.c.b16 %v1948, %v1942
    %v2351 = vpack.c.b16 %v1949, %v1943
    %v2352 = vpack.c.b16 %v1950, %v1944
    %v2353 = vpack.c.b16 %v1951, %v1945
    %v2354 = vpack.c.b16 %v1952, %v1946
    %v2355 = vpack.c.b16 %v1959, %v1953
    %v2356 = vpack.c.b16 %v1960, %v1954
    %v2357 = vpack.c.b16 %v1961, %v1955
    %v2358 = vpack.c.b16 %v1962, %v1956
    %v2359 = vpack.c.b16 %v1963, %v1957
    %v2360 = vpack.c.b16 %v1964, %v1958
    %v2361 = vpack.c.b16 %v1971, %v1965
    %v2362 = vpack.c.b16 %v1972, %v1966
    %v2363 = vpack.c.b16 %v1973, %v1967
    %v2364 = vpack.c.b16 %v1974, %v1968
    %v2365 = vpack.c.b16 %v1975, %v1969
    %v2366 = vpack.c.b16 %v1976, %v1970
    %v2367 = vpack.c.b16 %v1983, %v1977
    %v2368 = vpack.c.b16 %v1984, %v1978
    %v2369 = vpack.c.b16 %v1985, %v1979
    %v2370 = vpack.c.b16 %v1986, %v1980
    %v2371 = vpack.c.b16 %v1987, %v1981
    %v2372 = vpack.c.b16 %v1988, %v1982
    %v2373 = vpack.c.b16 %v1995, %v1989
    %v2374 = vpack.c.b16 %v1996, %v1990
    %v2375 = vpack.c.b16 %v1997, %v1991
    %v2376 = vpack.c.b16 %v1998, %v1992
    %v2377 = vpack.c.b16 %v1999, %v1993
    %v2378 = vpack.c.b16 %v2000, %v1994
    %v2379 = vpack.c.b16 %v2007, %v2001
    %v2380 = vpack.c.b16 %v2008, %v2002
    %v2381 = vpack.c.b16 %v2009, %v2003
    %v2382 = vpack.c.b16 %v2010, %v2004
    %v2383 = vpack.c.b16 %v2011, %v2005
    %v2384 = vpack.c.b16 %v2012, %v2006
    %v2385 = vpack.c.b16 %v2019, %v2013
    %v2386 = vpack.c.b16 %v2020, %v2014
    %v2387 = vpack.c.b16 %v2021, %v2015
    %v2388 = vpack.c.b16 %v2022, %v2016
    %v2389 = vpack.c.b16 %v2023, %v2017
    %v2390 = vpack.c.b16 %v2024, %v2018
    %v2391 = vpack.c.b16 %v2031, %v2025
    %v2392 = vpack.c.b16 %v2032, %v2026
    %v2393 = vpack.c.b16 %v2033, %v2027
    %v2394 = vpack.c.b16 %v2034, %v2028
    %v2395 = vpack.c.b16 %v2035, %v2029
    %v2396 = vpack.c.b16 %v2036, %v2030
    %v2397 = vpack.c.b16 %v2043, %v2037
    %v2398 = vpack.c.b16 %v2044, %v2038
    %v2399 = vpack.c.b16 %v2045, %v2039
    %v2400 = vpack.c.b16 %v2046, %v2040
    %v2401 = vpack.c.b16 %v2047, %v2041
    %v2402 = vpack.c.b16 %v2048, %v2042
    %v2403 = vpack.c.b16 %v2055, %v2049
    %v2404 = vpack.c.b16 %v2056, %v2050
    %v2405 = vpack.c.b16 %v2057, %v2051
    %v2406 = vpack.c.b16 %v2058, %v2052
    %v2407 = vpack.c.b16 %v2059, %v2053
    %v2408 = vpack.c.b16 %v2060, %v2054
    %v2409 = vpack.c.b16 %v2067, %v2061
    %v2410 = vpack.c.b16 %v2068, %v2062
    %v2411 = vpack.c.b16 %v2069, %v2063
    %v2412 = vpack.c.b16 %v2070, %v2064
    %v2413 = vpack.c.b16 %v2071, %v2065
    %v2414 = vpack.c.b16 %v2072, %v2066
    %v2415 = vpack.c.b16 %v2079, %v2073
    %v2416 = vpack.c.b16 %v2080, %v2074
    %v2417 = vpack.c.b16 %v2081, %v2075
    %v2418 = vpack.c.b16 %v2082, %v2076
    %v2419 = vpack.c.b16 %v2083, %v2077
    %v2420 = vpack.c.b16 %v2084, %v2078
    %v2421 = vpack.c.b16 %v2091, %v2085
    %v2422 = vpack.c.b16 %v2092, %v2086
    %v2423 = vpack.c.b16 %v2093, %v2087
    %v2424 = vpack.c.b16 %v2094, %v2088
    %v2425 = vpack.c.b16 %v2095, %v2089
    %v2426 = vpack.c.b16 %v2096, %v2090
    %v2427 = vpack.c.b16 %v2103, %v2097
    %v2428 = vpack.c.b16 %v2104, %v2098
    %v2429 = vpack.c.b16 %v2105, %v2099
    %v2430 = vpack.c.b16 %v2106, %v2100
    %v2431 = vpack.c.b16 %v2107, %v2101
    %v2432 = vpack.c.b16 %v2108, %v2102
    %v2433 = vpack.c.b16 %v2115, %v2109
    %v2434 = vpack.c.b16 %v2116, %v2110
    %v2435 = vpack.c.b16 %v2117, %v2111
    %v2436 = vpack.c.b16 %v2118, %v2112
    %v2437 = vpack.c.b16 %v2119, %v2113
    %v2438 = vpack.c.b16 %v2120, %v2114
    %v2439 = vpack.c.b16 %v2127, %v2121
    %v2440 = vpack.c.b16 %v2128, %v2122
    %v2441 = vpack.c.b16 %v2129, %v2123
    %v2442 = vpack.c.b16 %v2130, %v2124
    %v2443 = vpack.c.b16 %v2131, %v2125
    %v2444 = vpack.c.b16 %v2132, %v2126
    %v2445 = vpack.c.b16 %v2139, %v2133
    %v2446 = vpack.c.b16 %v2140, %v2134
    %v2447 = vpack.c.b16 %v2141, %v2135
    %v2448 = vpack.c.b16 %v2142, %v2136
    %v2449 = vpack.c.b16 %v2143, %v2137
    %v2450 = vpack.c.b16 %v2144, %v2138
    %v2451 = vpack.c.b16 %v2151, %v2145
    %v2452 = vpack.c.b16 %v2152, %v2146
    %v2453 = vpack.c.b16 %v2153, %v2147
    %v2454 = vpack.c.b16 %v2154, %v2148
    %v2455 = vpack.c.b16 %v2155, %v2149
    %v2456 = vpack.c.b16 %v2156, %v2150
    %v2457 = vpack.c.b16 %v2163, %v2157
    %v2458 = vpack.c.b16 %v2164, %v2158
    %v2459 = vpack.c.b16 %v2165, %v2159
    %v2460 = vpack.c.b16 %v2166, %v2160
    %v2461 = vpack.c.b16 %v2167, %v2161
    %v2462 = vpack.c.b16 %v2168, %v2162
    %v2463 = vpack.c.b16 %v2175, %v2169
    %v2464 = vpack.c.b16 %v2176, %v2170
    %v2465 = vpack.c.b16 %v2177, %v2171
    %v2466 = vpack.c.b16 %v2178, %v2172
    %v2467 = vpack.c.b16 %v2179, %v2173
    %v2468 = vpack.c.b16 %v2180, %v2174
    %2757 = vmatprep.subr.bf16.mxu0 %v2182
    %2758 = vmatpush1.bf16.msra.mxu0 %v2181
    %2759 = vmatprep.subr.bf16.mxu0 %v2188
    %2760 = vmatpush1.bf16.msra.mxu0 %v2187
    %2761 = vmatprep.subr.bf16.mxu0 %v2194
    %2762 = vmatpush1.bf16.msra.mxu0 %v2193
    %2763 = vmatprep.subr.bf16.mxu0 %v2200
    %2764 = vmatpush1.bf16.msra.mxu0 %v2199
    %2765 = vmatprep.subr.bf16.mxu0 %v2206
    %2766 = vmatpush1.bf16.msra.mxu0 %v2205
    %2767 = vmatprep.subr.bf16.mxu0 %v2212
    %2768 = vmatpush1.bf16.msra.mxu0 %v2211
    %2769 = vmatprep.subr.bf16.mxu0 %v2218
    %2770 = vmatpush1.bf16.msra.mxu0 %v2217
    %2771 = vmatprep.subr.bf16.mxu0 %v2224
    %2772 = vmatpush1.bf16.msra.mxu0 %v2223
    %2773 = vmatprep.subr.bf16.mxu0 %v2230
    %2774 = vmatpush1.bf16.msra.mxu0 %v2229
    %2775 = vmatprep.subr.bf16.mxu0 %v2236
    %2776 = vmatpush1.bf16.msra.mxu0 %v2235
    %2777 = vmatprep.subr.bf16.mxu0 %v2242
    %2778 = vmatpush1.bf16.msra.mxu0 %v2241
    %2779 = vmatprep.subr.bf16.mxu0 %v2248
    %2780 = vmatpush1.bf16.msra.mxu0 %v2247
    %2781 = vmatprep.subr.bf16.mxu0 %v2254
    %2782 = vmatpush1.bf16.msra.mxu0 %v2253
    %2783 = vmatprep.subr.bf16.mxu0 %v2260
    %2784 = vmatpush1.bf16.msra.mxu0 %v2259
    %2785 = vmatprep.subr.bf16.mxu0 %v2266
    %2786 = vmatpush1.bf16.msra.mxu0 %v2265
    %2787 = vmatprep.subr.bf16.mxu0 %v2272
    %2788 = vmatpush1.bf16.msra.mxu0 %v2271
    %2789 = vmatprep.mubr.bf16.mxu0 %v1306
    %2790 = vmatmul.mubr.bf16.gmra.mrb[0].mxu0 %v1305
    %v2791 = vpop.f32.mrb[0].mxu0
    %v2792 = vadd.f32 %v1091, %v2791
    %v2793 = vpop.f32.mrb[0].mxu0
    %v2794 = vadd.f32 %v1095, %v2793
    %v2795 = vpop.f32.mrb[0].mxu0
    %v2796 = vpop.f32.mrb[0].mxu0
    %2797 = vdwg.mxu0
    %2798 = vmatprep.subr.bf16.mxu0 %v2278
    %2799 = vmatpush1.bf16.msra.mxu0 %v2277
    %2800 = vmatprep.subr.bf16.mxu0 %v2284
    %2801 = vmatpush1.bf16.msra.mxu0 %v2283
    %2802 = vmatprep.subr.bf16.mxu0 %v2290
    %2803 = vmatpush1.bf16.msra.mxu0 %v2289
    %2804 = vmatprep.subr.bf16.mxu0 %v2296
    %2805 = vmatpush1.bf16.msra.mxu0 %v2295
    %2806 = vmatprep.subr.bf16.mxu0 %v2302
    %2807 = vmatpush1.bf16.msra.mxu0 %v2301
    %2808 = vmatprep.subr.bf16.mxu0 %v2308
    %2809 = vmatpush1.bf16.msra.mxu0 %v2307
    %2810 = vmatprep.subr.bf16.mxu0 %v2314
    %2811 = vmatpush1.bf16.msra.mxu0 %v2313
    %2812 = vmatprep.subr.bf16.mxu0 %v2320
    %2813 = vmatpush1.bf16.msra.mxu0 %v2319
    %2814 = vmatprep.subr.bf16.mxu0 %v2326
    %2815 = vmatpush1.bf16.msra.mxu0 %v2325
    %2816 = vmatprep.subr.bf16.mxu0 %v2332
    %2817 = vmatpush1.bf16.msra.mxu0 %v2331
    %2818 = vmatprep.subr.bf16.mxu0 %v2338
    %2819 = vmatpush1.bf16.msra.mxu0 %v2337
    %2820 = vmatprep.subr.bf16.mxu0 %v2344
    %2821 = vmatpush1.bf16.msra.mxu0 %v2343
    %2822 = vmatprep.subr.bf16.mxu0 %v2350
    %2823 = vmatpush1.bf16.msra.mxu0 %v2349
    %2824 = vmatprep.subr.bf16.mxu0 %v2356
    %2825 = vmatpush1.bf16.msra.mxu0 %v2355
    %2826 = vmatprep.subr.bf16.mxu0 %v2362
    %2827 = vmatpush1.bf16.msra.mxu0 %v2361
    %2828 = vmatprep.subr.bf16.mxu0 %v2368
    %2829 = vmatpush1.bf16.msra.mxu0 %v2367
    %2830 = vmatprep.mubr.bf16.mxu0 %v1308
    %2831 = vmatmul.mubr.bf16.gmra.mrb[0].mxu0 %v1307
    %v2832 = vpop.f32.mrb[0].mxu0
    %v2833 = vadd.f32 %v2792, %v2832
    %v2834 = vpop.f32.mrb[0].mxu0
    %v2835 = vadd.f32 %v2794, %v2834
    %v2836 = vpop.f32.mrb[0].mxu0
    %v2837 = vpop.f32.mrb[0].mxu0
    %2838 = vdwg.mxu0
    %2839 = vmatprep.subr.bf16.mxu0 %v2374
    %2840 = vmatpush1.bf16.msra.mxu0 %v2373
    %2841 = vmatprep.subr.bf16.mxu0 %v2380
    %2842 = vmatpush1.bf16.msra.mxu0 %v2379
    %2843 = vmatprep.subr.bf16.mxu0 %v2386
    %2844 = vmatpush1.bf16.msra.mxu0 %v2385
    %2845 = vmatprep.subr.bf16.mxu0 %v2392
    %2846 = vmatpush1.bf16.msra.mxu0 %v2391
    %2847 = vmatprep.subr.bf16.mxu0 %v2398
    %2848 = vmatpush1.bf16.msra.mxu0 %v2397
    %2849 = vmatprep.subr.bf16.mxu0 %v2404
    %2850 = vmatpush1.bf16.msra.mxu0 %v2403
    %2851 = vmatprep.subr.bf16.mxu0 %v2410
    %2852 = vmatpush1.bf16.msra.mxu0 %v2409
    %2853 = vmatprep.subr.bf16.mxu0 %v2416
    %2854 = vmatpush1.bf16.msra.mxu0 %v2415
    %2855 = vmatprep.subr.bf16.mxu0 %v2422
    %2856 = vmatpush1.bf16.msra.mxu0 %v2421
    %2857 = vmatprep.subr.bf16.mxu0 %v2428
    %2858 = vmatpush1.bf16.msra.mxu0 %v2427
    %2859 = vmatprep.subr.bf16.mxu0 %v2434
    %2860 = vmatpush1.bf16.msra.mxu0 %v2433
    %2861 = vmatprep.subr.bf16.mxu0 %v2440
    %2862 = vmatpush1.bf16.msra.mxu0 %v2439
    %2863 = vmatprep.subr.bf16.mxu0 %v2446
    %2864 = vmatpush1.bf16.msra.mxu0 %v2445
    %2865 = vmatprep.subr.bf16.mxu0 %v2452
    %2866 = vmatpush1.bf16.msra.mxu0 %v2451
    %2867 = vmatprep.subr.bf16.mxu0 %v2458
    %2868 = vmatpush1.bf16.msra.mxu0 %v2457
    %2869 = vmatprep.subr.bf16.mxu0 %v2464
    %2870 = vmatpush1.bf16.msra.mxu0 %v2463
    %2871 = vmatprep.mubr.bf16.mxu0 %v1310
    %2872 = vmatmul.mubr.bf16.gmra.mrb[0].mxu0 %v1309
    %v2873 = vpop.f32.mrb[0].mxu0
    %v2874 = vadd.f32 %v2833, %v2873
    %v2875 = vpop.f32.mrb[0].mxu0
    %v2876 = vadd.f32 %v2835, %v2875
    %v2877 = vpop.f32.mrb[0].mxu0
    %v2878 = vpop.f32.mrb[0].mxu0
    %2879 = vdwg.mxu0
    %2880 = vmatprep.subr.bf16.mxu0 %v2184
    %2881 = vmatpush1.bf16.msra.mxu0 %v2183
    %2882 = vmatprep.subr.bf16.mxu0 %v2190
    %2883 = vmatpush1.bf16.msra.mxu0 %v2189
    %2884 = vmatprep.subr.bf16.mxu0 %v2196
    %2885 = vmatpush1.bf16.msra.mxu0 %v2195
    %2886 = vmatprep.subr.bf16.mxu0 %v2202
    %2887 = vmatpush1.bf16.msra.mxu0 %v2201
    %2888 = vmatprep.subr.bf16.mxu0 %v2208
    %2889 = vmatpush1.bf16.msra.mxu0 %v2207
    %2890 = vmatprep.subr.bf16.mxu0 %v2214
    %2891 = vmatpush1.bf16.msra.mxu0 %v2213
    %2892 = vmatprep.subr.bf16.mxu0 %v2220
    %2893 = vmatpush1.bf16.msra.mxu0 %v2219
    %2894 = vmatprep.subr.bf16.mxu0 %v2226
    %2895 = vmatpush1.bf16.msra.mxu0 %v2225
    %2896 = vmatprep.subr.bf16.mxu0 %v2232
    %2897 = vmatpush1.bf16.msra.mxu0 %v2231
    %2898 = vmatprep.subr.bf16.mxu0 %v2238
    %2899 = vmatpush1.bf16.msra.mxu0 %v2237
    %2900 = vmatprep.subr.bf16.mxu0 %v2244
    %2901 = vmatpush1.bf16.msra.mxu0 %v2243
    %2902 = vmatprep.subr.bf16.mxu0 %v2250
    %2903 = vmatpush1.bf16.msra.mxu0 %v2249
    %2904 = vmatprep.subr.bf16.mxu0 %v2256
    %2905 = vmatpush1.bf16.msra.mxu0 %v2255
    %2906 = vmatprep.subr.bf16.mxu0 %v2262
    %2907 = vmatpush1.bf16.msra.mxu0 %v2261
    %2908 = vmatprep.subr.bf16.mxu0 %v2268
    %2909 = vmatpush1.bf16.msra.mxu0 %v2267
    %2910 = vmatprep.subr.bf16.mxu0 %v2274
    %2911 = vmatpush1.bf16.msra.mxu0 %v2273
    %2912 = vmatprep.mubr.bf16.mxu0 %v1306
    %2913 = vmatmul.mubr.bf16.gmra.mrb[0].mxu0 %v1305
    %v2914 = vpop.f32.mrb[0].mxu0
    %v2915 = vadd.f32 %v1099, %v2914
    %v2916 = vpop.f32.mrb[0].mxu0
    %v2917 = vadd.f32 %v1103, %v2916
    %v2918 = vpop.f32.mrb[0].mxu0
    %v2919 = vpop.f32.mrb[0].mxu0
    %2920 = vdwg.mxu0
    %2921 = vmatprep.subr.bf16.mxu0 %v2280
    %2922 = vmatpush1.bf16.msra.mxu0 %v2279
    %2923 = vmatprep.subr.bf16.mxu0 %v2286
    %2924 = vmatpush1.bf16.msra.mxu0 %v2285
    %2925 = vmatprep.subr.bf16.mxu0 %v2292
    %2926 = vmatpush1.bf16.msra.mxu0 %v2291
    %2927 = vmatprep.subr.bf16.mxu0 %v2298
    %2928 = vmatpush1.bf16.msra.mxu0 %v2297
    %2929 = vmatprep.subr.bf16.mxu0 %v2304
    %2930 = vmatpush1.bf16.msra.mxu0 %v2303
    %2931 = vmatprep.subr.bf16.mxu0 %v2310
    %2932 = vmatpush1.bf16.msra.mxu0 %v2309
    %2933 = vmatprep.subr.bf16.mxu0 %v2316
    %2934 = vmatpush1.bf16.msra.mxu0 %v2315
    %2935 = vmatprep.subr.bf16.mxu0 %v2322
    %2936 = vmatpush1.bf16.msra.mxu0 %v2321
    %2937 = vmatprep.subr.bf16.mxu0 %v2328
    %2938 = vmatpush1.bf16.msra.mxu0 %v2327
    %2939 = vmatprep.subr.bf16.mxu0 %v2334
    %2940 = vmatpush1.bf16.msra.mxu0 %v2333
    %2941 = vmatprep.subr.bf16.mxu0 %v2340
    %2942 = vmatpush1.bf16.msra.mxu0 %v2339
    %2943 = vmatprep.subr.bf16.mxu0 %v2346
    %2944 = vmatpush1.bf16.msra.mxu0 %v2345
    %2945 = vmatprep.subr.bf16.mxu0 %v2352
    %2946 = vmatpush1.bf16.msra.mxu0 %v2351
    %2947 = vmatprep.subr.bf16.mxu0 %v2358
    %2948 = vmatpush1.bf16.msra.mxu0 %v2357
    %2949 = vmatprep.subr.bf16.mxu0 %v2364
    %2950 = vmatpush1.bf16.msra.mxu0 %v2363
    %2951 = vmatprep.subr.bf16.mxu0 %v2370
    %2952 = vmatpush1.bf16.msra.mxu0 %v2369
    %2953 = vmatprep.mubr.bf16.mxu0 %v1308
    %2954 = vmatmul.mubr.bf16.gmra.mrb[0].mxu0 %v1307
    %v2955 = vpop.f32.mrb[0].mxu0
    %v2956 = vadd.f32 %v2915, %v2955
    %v2957 = vpop.f32.mrb[0].mxu0
    %v2958 = vadd.f32 %v2917, %v2957
    %v2959 = vpop.f32.mrb[0].mxu0
    %v2960 = vpop.f32.mrb[0].mxu0
    %2961 = vdwg.mxu0
    %2962 = vmatprep.subr.bf16.mxu0 %v2376
    %2963 = vmatpush1.bf16.msra.mxu0 %v2375
    %2964 = vmatprep.subr.bf16.mxu0 %v2382
    %2965 = vmatpush1.bf16.msra.mxu0 %v2381
    %2966 = vmatprep.subr.bf16.mxu0 %v2388
    %2967 = vmatpush1.bf16.msra.mxu0 %v2387
    %2968 = vmatprep.subr.bf16.mxu0 %v2394
    %2969 = vmatpush1.bf16.msra.mxu0 %v2393
    %2970 = vmatprep.subr.bf16.mxu0 %v2400
    %2971 = vmatpush1.bf16.msra.mxu0 %v2399
    %2972 = vmatprep.subr.bf16.mxu0 %v2406
    %2973 = vmatpush1.bf16.msra.mxu0 %v2405
    %2974 = vmatprep.subr.bf16.mxu0 %v2412
    %2975 = vmatpush1.bf16.msra.mxu0 %v2411
    %2976 = vmatprep.subr.bf16.mxu0 %v2418
    %2977 = vmatpush1.bf16.msra.mxu0 %v2417
    %2978 = vmatprep.subr.bf16.mxu0 %v2424
    %2979 = vmatpush1.bf16.msra.mxu0 %v2423
    %2980 = vmatprep.subr.bf16.mxu0 %v2430
    %2981 = vmatpush1.bf16.msra.mxu0 %v2429
    %2982 = vmatprep.subr.bf16.mxu0 %v2436
    %2983 = vmatpush1.bf16.msra.mxu0 %v2435
    %2984 = vmatprep.subr.bf16.mxu0 %v2442
    %2985 = vmatpush1.bf16.msra.mxu0 %v2441
    %2986 = vmatprep.subr.bf16.mxu0 %v2448
    %2987 = vmatpush1.bf16.msra.mxu0 %v2447
    %2988 = vmatprep.subr.bf16.mxu0 %v2454
    %2989 = vmatpush1.bf16.msra.mxu0 %v2453
    %2990 = vmatprep.subr.bf16.mxu0 %v2460
    %2991 = vmatpush1.bf16.msra.mxu0 %v2459
    %2992 = vmatprep.subr.bf16.mxu0 %v2466
    %2993 = vmatpush1.bf16.msra.mxu0 %v2465
    %2994 = vmatprep.mubr.bf16.mxu0 %v1310
    %2995 = vmatmul.mubr.bf16.gmra.mrb[0].mxu0 %v1309
    %v2996 = vpop.f32.mrb[0].mxu0
    %v2997 = vadd.f32 %v2956, %v2996
    %v2998 = vpop.f32.mrb[0].mxu0
    %v2999 = vadd.f32 %v2958, %v2998
    %v3000 = vpop.f32.mrb[0].mxu0
    %v3001 = vpop.f32.mrb[0].mxu0
    %3002 = vdwg.mxu0
    %3003 = vmatprep.subr.bf16.mxu0 %v2186
    %3004 = vmatpush1.bf16.msra.mxu0 %v2185
    %3005 = vmatprep.subr.bf16.mxu0 %v2192
    %3006 = vmatpush1.bf16.msra.mxu0 %v2191
    %3007 = vmatprep.subr.bf16.mxu0 %v2198
    %3008 = vmatpush1.bf16.msra.mxu0 %v2197
    %3009 = vmatprep.subr.bf16.mxu0 %v2204
    %3010 = vmatpush1.bf16.msra.mxu0 %v2203
    %3011 = vmatprep.subr.bf16.mxu0 %v2210
    %3012 = vmatpush1.bf16.msra.mxu0 %v2209
    %3013 = vmatprep.subr.bf16.mxu0 %v2216
    %3014 = vmatpush1.bf16.msra.mxu0 %v2215
    %3015 = vmatprep.subr.bf16.mxu0 %v2222
    %3016 = vmatpush1.bf16.msra.mxu0 %v2221
    %3017 = vmatprep.subr.bf16.mxu0 %v2228
    %3018 = vmatpush1.bf16.msra.mxu0 %v2227
    %3019 = vmatprep.subr.bf16.mxu0 %v2234
    %3020 = vmatpush1.bf16.msra.mxu0 %v2233
    %3021 = vmatprep.subr.bf16.mxu0 %v2240
    %3022 = vmatpush1.bf16.msra.mxu0 %v2239
    %3023 = vmatprep.subr.bf16.mxu0 %v2246
    %3024 = vmatpush1.bf16.msra.mxu0 %v2245
    %3025 = vmatprep.subr.bf16.mxu0 %v2252
    %3026 = vmatpush1.bf16.msra.mxu0 %v2251
    %3027 = vmatprep.subr.bf16.mxu0 %v2258
    %3028 = vmatpush1.bf16.msra.mxu0 %v2257
    %3029 = vmatprep.subr.bf16.mxu0 %v2264
    %3030 = vmatpush1.bf16.msra.mxu0 %v2263
    %3031 = vmatprep.subr.bf16.mxu0 %v2270
    %3032 = vmatpush1.bf16.msra.mxu0 %v2269
    %3033 = vmatprep.subr.bf16.mxu0 %v2276
    %3034 = vmatpush1.bf16.msra.mxu0 %v2275
    %3035 = vmatprep.mubr.bf16.mxu0 %v1306
    %3036 = vmatmul.mubr.bf16.gmra.mrb[0].mxu0 %v1305
    %v3037 = vpop.f32.mrb[0].mxu0
    %v3038 = vadd.f32 %v1107, %v3037
    %v3039 = vpop.f32.mrb[0].mxu0
    %v3040 = vadd.f32 %v1111, %v3039
    %v3041 = vpop.f32.mrb[0].mxu0
    %v3042 = vpop.f32.mrb[0].mxu0
    %3043 = vdwg.mxu0
    %3044 = vmatprep.subr.bf16.mxu0 %v2282
    %3045 = vmatpush1.bf16.msra.mxu0 %v2281
    %3046 = vmatprep.subr.bf16.mxu0 %v2288
    %3047 = vmatpush1.bf16.msra.mxu0 %v2287
    %3048 = vmatprep.subr.bf16.mxu0 %v2294
    %3049 = vmatpush1.bf16.msra.mxu0 %v2293
    %3050 = vmatprep.subr.bf16.mxu0 %v2300
    %3051 = vmatpush1.bf16.msra.mxu0 %v2299
    %3052 = vmatprep.subr.bf16.mxu0 %v2306
    %3053 = vmatpush1.bf16.msra.mxu0 %v2305
    %3054 = vmatprep.subr.bf16.mxu0 %v2312
    %3055 = vmatpush1.bf16.msra.mxu0 %v2311
    %3056 = vmatprep.subr.bf16.mxu0 %v2318
    %3057 = vmatpush1.bf16.msra.mxu0 %v2317
    %3058 = vmatprep.subr.bf16.mxu0 %v2324
    %3059 = vmatpush1.bf16.msra.mxu0 %v2323
    %3060 = vmatprep.subr.bf16.mxu0 %v2330
    %3061 = vmatpush1.bf16.msra.mxu0 %v2329
    %3062 = vmatprep.subr.bf16.mxu0 %v2336
    %3063 = vmatpush1.bf16.msra.mxu0 %v2335
    %3064 = vmatprep.subr.bf16.mxu0 %v2342
    %3065 = vmatpush1.bf16.msra.mxu0 %v2341
    %3066 = vmatprep.subr.bf16.mxu0 %v2348
    %3067 = vmatpush1.bf16.msra.mxu0 %v2347
    %3068 = vmatprep.subr.bf16.mxu0 %v2354
    %3069 = vmatpush1.bf16.msra.mxu0 %v2353
    %3070 = vmatprep.subr.bf16.mxu0 %v2360
    %3071 = vmatpush1.bf16.msra.mxu0 %v2359
    %3072 = vmatprep.subr.bf16.mxu0 %v2366
    %3073 = vmatpush1.bf16.msra.mxu0 %v2365
    %3074 = vmatprep.subr.bf16.mxu0 %v2372
    %3075 = vmatpush1.bf16.msra.mxu0 %v2371
    %3076 = vmatprep.mubr.bf16.mxu0 %v1308
    %3077 = vmatmul.mubr.bf16.gmra.mrb[0].mxu0 %v1307
    %v3078 = vpop.f32.mrb[0].mxu0
    %v3079 = vadd.f32 %v3038, %v3078
    %v3080 = vpop.f32.mrb[0].mxu0
    %v3081 = vadd.f32 %v3040, %v3080
    %v3082 = vpop.f32.mrb[0].mxu0
    %v3083 = vpop.f32.mrb[0].mxu0
    %3084 = vdwg.mxu0
    %3085 = vmatprep.subr.bf16.mxu0 %v2378
    %3086 = vmatpush1.bf16.msra.mxu0 %v2377
    %3087 = vmatprep.subr.bf16.mxu0 %v2384
    %3088 = vmatpush1.bf16.msra.mxu0 %v2383
    %3089 = vmatprep.subr.bf16.mxu0 %v2390
    %3090 = vmatpush1.bf16.msra.mxu0 %v2389
    %3091 = vmatprep.subr.bf16.mxu0 %v2396
    %3092 = vmatpush1.bf16.msra.mxu0 %v2395
    %3093 = vmatprep.subr.bf16.mxu0 %v2402
    %3094 = vmatpush1.bf16.msra.mxu0 %v2401
    %3095 = vmatprep.subr.bf16.mxu0 %v2408
    %3096 = vmatpush1.bf16.msra.mxu0 %v2407
    %3097 = vmatprep.subr.bf16.mxu0 %v2414
    %3098 = vmatpush1.bf16.msra.mxu0 %v2413
    %3099 = vmatprep.subr.bf16.mxu0 %v2420
    %3100 = vmatpush1.bf16.msra.mxu0 %v2419
    %3101 = vmatprep.subr.bf16.mxu0 %v2426
    %3102 = vmatpush1.bf16.msra.mxu0 %v2425
    %3103 = vmatprep.subr.bf16.mxu0 %v2432
    %3104 = vmatpush1.bf16.msra.mxu0 %v2431
    %3105 = vmatprep.subr.bf16.mxu0 %v2438
    %3106 = vmatpush1.bf16.msra.mxu0 %v2437
    %3107 = vmatprep.subr.bf16.mxu0 %v2444
    %3108 = vmatpush1.bf16.msra.mxu0 %v2443
    %3109 = vmatprep.subr.bf16.mxu0 %v2450
    %3110 = vmatpush1.bf16.msra.mxu0 %v2449
    %3111 = vmatprep.subr.bf16.mxu0 %v2456
    %3112 = vmatpush1.bf16.msra.mxu0 %v2455
    %3113 = vmatprep.subr.bf16.mxu0 %v2462
    %3114 = vmatpush1.bf16.msra.mxu0 %v2461
    %3115 = vmatprep.subr.bf16.mxu0 %v2468
    %3116 = vmatpush1.bf16.msra.mxu0 %v2467
    %3117 = vmatprep.mubr.bf16.mxu0 %v1310
    %3118 = vmatmul.mubr.bf16.gmra.mrb[0].mxu0 %v1309
    %v3119 = vpop.f32.mrb[0].mxu0
    %v3120 = vadd.f32 %v3079, %v3119
    %v3121 = vpop.f32.mrb[0].mxu0
    %v3122 = vadd.f32 %v3081, %v3121
    %v3123 = vpop.f32.mrb[0].mxu0
    %v3124 = vpop.f32.mrb[0].mxu0
    %3125 = vdwg.mxu0
    %v3126 = vtanh.pop %v2874
    %v3127 = vtanh.pop %v2876
    %v3128 = vtanh.pop %v2997
    %v3129 = vtanh.pop %v2999
    %v3130 = vtanh.pop %v3120
    %v3131 = vtanh.pop %v3122
    %v3132 = vpack.c.bf16 %v3126, %v3126
    %v3133 = vpack.c.bf16 %v3127, %v3127
    %v3134 = vpack.c.bf16 %v3128, %v3128
    %v3135 = vpack.c.bf16 %v3129, %v3129
    %v3136 = vpack.c.bf16 %v3130, %v3130
    %v3137 = vpack.c.bf16 %v3131, %v3131
    %v3138 = vld [vmem:[#allocation4] sm:$0xf]
    %v3139 = vld [vmem:[#allocation4 + $0x4] sm:$0xf]
    %v3140 = vld [vmem:[#allocation4 + $0x8] sm:$0xf]
    %v3141 = vld [vmem:[#allocation4 + $0xc] sm:$0xf]
    %v3142 = vld [vmem:[#allocation4 + $0x10] sm:$0xf]
    %v3143 = vld [vmem:[#allocation4 + $0x14] sm:$0xf]
    %v3144 = vld [vmem:[#allocation4 + $0x18] sm:$0xf]
    %v3145 = vld [vmem:[#allocation4 + $0x1c] sm:$0xf]
    %v3146 = vld [vmem:[#allocation4 + $0x20] sm:$0xf]
    %v3147 = vld [vmem:[#allocation4 + $0x24] sm:$0xf]
    %v3148 = vld [vmem:[#allocation4 + $0x28] sm:$0xf]
    %v3149 = vld [vmem:[#allocation4 + $0x2c] sm:$0xf]
    %v3150 = vld [vmem:[#allocation4 + $0x30] sm:$0xf]
    %v3151 = vld [vmem:[#allocation4 + $0x34] sm:$0xf]
    %v3152 = vld [vmem:[#allocation4 + $0x38] sm:$0xf]
    %v3153 = vld [vmem:[#allocation4 + $0x3c] sm:$0xf]
    %v3154 = vld [vmem:[#allocation4 + $0x40] sm:$0xf]
    %v3155 = vld [vmem:[#allocation4 + $0x44] sm:$0xf]
    %v3156 = vld [vmem:[#allocation4 + $0x48] sm:$0xf]
    %v3157 = vld [vmem:[#allocation4 + $0x4c] sm:$0xf]
    %v3158 = vld [vmem:[#allocation4 + $0x50] sm:$0xf]
    %v3159 = vld [vmem:[#allocation4 + $0x54] sm:$0xf]
    %v3160 = vld [vmem:[#allocation4 + $0x58] sm:$0xf]
    %v3161 = vld [vmem:[#allocation4 + $0x5c] sm:$0xf]
    %v3162 = vld [vmem:[#allocation4 + $0x60] sm:$0xf]
    %v3163 = vld [vmem:[#allocation4 + $0x64] sm:$0xf]
    %v3164 = vld [vmem:[#allocation4 + $0x68] sm:$0xf]
    %v3165 = vld [vmem:[#allocation4 + $0x6c] sm:$0xf]
    %v3166 = vld [vmem:[#allocation4 + $0x70] sm:$0xf]
    %v3167 = vld [vmem:[#allocation4 + $0x74] sm:$0xf]
    %v3168 = vld [vmem:[#allocation4 + $0x78] sm:$0xf]
    %v3169 = vld [vmem:[#allocation4 + $0x7c] sm:$0xf]
    %v3170 = vld [vmem:[#allocation4 + $0x80] sm:$0xf]
    %v3171 = vld [vmem:[#allocation4 + $0x84] sm:$0xf]
    %v3172 = vld [vmem:[#allocation4 + $0x88] sm:$0xf]
    %v3173 = vld [vmem:[#allocation4 + $0x8c] sm:$0xf]
    %v3174 = vld [vmem:[#allocation4 + $0x90] sm:$0xf]
    %v3175 = vld [vmem:[#allocation4 + $0x94] sm:$0xf]
    %v3176 = vld [vmem:[#allocation4 + $0x98] sm:$0xf]
    %v3177 = vld [vmem:[#allocation4 + $0x9c] sm:$0xf]
    %v3178 = vld [vmem:[#allocation4 + $0xa0] sm:$0xf]
    %v3179 = vld [vmem:[#allocation4 + $0xa4] sm:$0xf]
    %v3180 = vld [vmem:[#allocation4 + $0xa8] sm:$0xf]
    %v3181 = vld [vmem:[#allocation4 + $0xac] sm:$0xf]
    %v3182 = vld [vmem:[#allocation4 + $0xb0] sm:$0xf]
    %v3183 = vld [vmem:[#allocation4 + $0xb4] sm:$0xf]
    %v3184 = vld [vmem:[#allocation4 + $0xb8] sm:$0xf]
    %v3185 = vld [vmem:[#allocation4 + $0xbc] sm:$0xf]
    %v3186 = vld [vmem:[#allocation4 + $0xc0] sm:$0xf]
    %v3187 = vld [vmem:[#allocation4 + $0xc4] sm:$0xf]
    %v3188 = vld [vmem:[#allocation4 + $0xc8] sm:$0xf]
    %v3189 = vld [vmem:[#allocation4 + $0xcc] sm:$0xf]
    %v3190 = vld [vmem:[#allocation4 + $0xd0] sm:$0xf]
    %v3191 = vld [vmem:[#allocation4 + $0xd4] sm:$0xf]
    %v3192 = vld [vmem:[#allocation4 + $0xd8] sm:$0xf]
    %v3193 = vld [vmem:[#allocation4 + $0xdc] sm:$0xf]
    %v3194 = vld [vmem:[#allocation4 + $0xe0] sm:$0xf]
    %v3195 = vld [vmem:[#allocation4 + $0xe4] sm:$0xf]
    %v3196 = vld [vmem:[#allocation4 + $0xe8] sm:$0xf]
    %v3197 = vld [vmem:[#allocation4 + $0xec] sm:$0xf]
    %v3198 = vld [vmem:[#allocation4 + $0xf0] sm:$0xf]
    %v3199 = vld [vmem:[#allocation4 + $0xf4] sm:$0xf]
    %v3200 = vld [vmem:[#allocation4 + $0xf8] sm:$0xf]
    %v3201 = vld [vmem:[#allocation4 + $0xfc] sm:$0xf]
    %v3202 = vld [vmem:[#allocation4 + $0x100] sm:$0xf]
    %v3203 = vld [vmem:[#allocation4 + $0x104] sm:$0xf]
    %v3204 = vld [vmem:[#allocation4 + $0x108] sm:$0xf]
    %v3205 = vld [vmem:[#allocation4 + $0x10c] sm:$0xf]
    %v3206 = vld [vmem:[#allocation4 + $0x110] sm:$0xf]
    %v3207 = vld [vmem:[#allocation4 + $0x114] sm:$0xf]
    %v3208 = vld [vmem:[#allocation4 + $0x118] sm:$0xf]
    %v3209 = vld [vmem:[#allocation4 + $0x11c] sm:$0xf]
    %v3210 = vld [vmem:[#allocation4 + $0x120] sm:$0xf]
    %v3211 = vld [vmem:[#allocation4 + $0x124] sm:$0xf]
    %v3212 = vld [vmem:[#allocation4 + $0x128] sm:$0xf]
    %v3213 = vld [vmem:[#allocation4 + $0x12c] sm:$0xf]
    %v3214 = vld [vmem:[#allocation4 + $0x130] sm:$0xf]
    %v3215 = vld [vmem:[#allocation4 + $0x134] sm:$0xf]
    %v3216 = vld [vmem:[#allocation4 + $0x138] sm:$0xf]
    %v3217 = vld [vmem:[#allocation4 + $0x13c] sm:$0xf]
    %v3218 = vld [vmem:[#allocation4 + $0x140] sm:$0xf]
    %v3219 = vld [vmem:[#allocation4 + $0x144] sm:$0xf]
    %v3220 = vld [vmem:[#allocation4 + $0x148] sm:$0xf]
    %v3221 = vld [vmem:[#allocation4 + $0x14c] sm:$0xf]
    %v3222 = vld [vmem:[#allocation4 + $0x150] sm:$0xf]
    %v3223 = vld [vmem:[#allocation4 + $0x154] sm:$0xf]
    %v3224 = vld [vmem:[#allocation4 + $0x158] sm:$0xf]
    %v3225 = vld [vmem:[#allocation4 + $0x15c] sm:$0xf]
    %v3226 = vld [vmem:[#allocation4 + $0x160] sm:$0xf]
    %v3227 = vld [vmem:[#allocation4 + $0x164] sm:$0xf]
    %v3228 = vld [vmem:[#allocation4 + $0x168] sm:$0xf]
    %v3229 = vld [vmem:[#allocation4 + $0x16c] sm:$0xf]
    %v3230 = vld [vmem:[#allocation4 + $0x170] sm:$0xf]
    %v3231 = vld [vmem:[#allocation4 + $0x174] sm:$0xf]
    %v3232 = vld [vmem:[#allocation4 + $0x178] sm:$0xf]
    %v3233 = vld [vmem:[#allocation4 + $0x17c] sm:$0xf]
    %v3234 = vld [vmem:[#allocation19] sm:$0x1]
    %v3235 = vlaneseq
    %v3236 = vshrl.u32 %v3235, 7
    %v3237 = vsub.s32 0, %v3236
    %v3238 = vrot.slane %v3234, %v3237
    %v3335 = vunpack.c.l.b16 %v3138
    %v3336 = vunpack.c.l.b16 %v3139
    %v3337 = vunpack.c.l.b16 %v3140
    %v3338 = vunpack.c.l.b16 %v3141
    %v3339 = vunpack.c.l.b16 %v3142
    %v3340 = vunpack.c.l.b16 %v3143
    %v3341 = vunpack.c.l.b16 %v3144
    %v3342 = vunpack.c.l.b16 %v3145
    %v3343 = vunpack.c.l.b16 %v3146
    %v3344 = vunpack.c.l.b16 %v3147
    %v3345 = vunpack.c.l.b16 %v3148
    %v3346 = vunpack.c.l.b16 %v3149
    %v3347 = vunpack.c.l.b16 %v3150
    %v3348 = vunpack.c.l.b16 %v3151
    %v3349 = vunpack.c.l.b16 %v3152
    %v3350 = vunpack.c.l.b16 %v3153
    %v3351 = vunpack.c.l.b16 %v3154
    %v3352 = vunpack.c.l.b16 %v3155
    %v3353 = vunpack.c.l.b16 %v3156
    %v3354 = vunpack.c.l.b16 %v3157
    %v3355 = vunpack.c.l.b16 %v3158
    %v3356 = vunpack.c.l.b16 %v3159
    %v3357 = vunpack.c.l.b16 %v3160
    %v3358 = vunpack.c.l.b16 %v3161
    %v3359 = vunpack.c.l.b16 %v3162
    %v3360 = vunpack.c.l.b16 %v3163
    %v3361 = vunpack.c.l.b16 %v3164
    %v3362 = vunpack.c.l.b16 %v3165
    %v3363 = vunpack.c.l.b16 %v3166
    %v3364 = vunpack.c.l.b16 %v3167
    %v3365 = vunpack.c.l.b16 %v3168
    %v3366 = vunpack.c.l.b16 %v3169
    %v3367 = vunpack.c.l.b16 %v3170
    %v3368 = vunpack.c.l.b16 %v3171
    %v3369 = vunpack.c.l.b16 %v3172
    %v3370 = vunpack.c.l.b16 %v3173
    %v3371 = vunpack.c.l.b16 %v3174
    %v3372 = vunpack.c.l.b16 %v3175
    %v3373 = vunpack.c.l.b16 %v3176
    %v3374 = vunpack.c.l.b16 %v3177
    %v3375 = vunpack.c.l.b16 %v3178
    %v3376 = vunpack.c.l.b16 %v3179
    %v3377 = vunpack.c.l.b16 %v3180
    %v3378 = vunpack.c.l.b16 %v3181
    %v3379 = vunpack.c.l.b16 %v3182
    %v3380 = vunpack.c.l.b16 %v3183
    %v3381 = vunpack.c.l.b16 %v3184
    %v3382 = vunpack.c.l.b16 %v3185
    %v3383 = vunpack.c.l.b16 %v3186
    %v3384 = vunpack.c.l.b16 %v3187
    %v3385 = vunpack.c.l.b16 %v3188
    %v3386 = vunpack.c.l.b16 %v3189
    %v3387 = vunpack.c.l.b16 %v3190
    %v3388 = vunpack.c.l.b16 %v3191
    %v3389 = vunpack.c.l.b16 %v3192
    %v3390 = vunpack.c.l.b16 %v3193
    %v3391 = vunpack.c.l.b16 %v3194
    %v3392 = vunpack.c.l.b16 %v3195
    %v3393 = vunpack.c.l.b16 %v3196
    %v3394 = vunpack.c.l.b16 %v3197
    %v3395 = vunpack.c.l.b16 %v3198
    %v3396 = vunpack.c.l.b16 %v3199
    %v3397 = vunpack.c.l.b16 %v3200
    %v3398 = vunpack.c.l.b16 %v3201
    %v3399 = vunpack.c.l.b16 %v3202
    %v3400 = vunpack.c.l.b16 %v3203
    %v3401 = vunpack.c.l.b16 %v3204
    %v3402 = vunpack.c.l.b16 %v3205
    %v3403 = vunpack.c.l.b16 %v3206
    %v3404 = vunpack.c.l.b16 %v3207
    %v3405 = vunpack.c.l.b16 %v3208
    %v3406 = vunpack.c.l.b16 %v3209
    %v3407 = vunpack.c.l.b16 %v3210
    %v3408 = vunpack.c.l.b16 %v3211
    %v3409 = vunpack.c.l.b16 %v3212
    %v3410 = vunpack.c.l.b16 %v3213
    %v3411 = vunpack.c.l.b16 %v3214
    %v3412 = vunpack.c.l.b16 %v3215
    %v3413 = vunpack.c.l.b16 %v3216
    %v3414 = vunpack.c.l.b16 %v3217
    %v3415 = vunpack.c.l.b16 %v3218
    %v3416 = vunpack.c.l.b16 %v3219
    %v3417 = vunpack.c.l.b16 %v3220
    %v3418 = vunpack.c.l.b16 %v3221
    %v3419 = vunpack.c.l.b16 %v3222
    %v3420 = vunpack.c.l.b16 %v3223
    %v3421 = vunpack.c.l.b16 %v3224
    %v3422 = vunpack.c.l.b16 %v3225
    %v3423 = vunpack.c.l.b16 %v3226
    %v3424 = vunpack.c.l.b16 %v3227
    %v3425 = vunpack.c.l.b16 %v3228
    %v3426 = vunpack.c.l.b16 %v3229
    %v3427 = vunpack.c.l.b16 %v3230
    %v3428 = vunpack.c.l.b16 %v3231
    %v3429 = vunpack.c.l.b16 %v3232
    %v3430 = vunpack.c.l.b16 %v3233
    %v3431 = vpack.c.b16 %v3336, %v3335
    %v3432 = vpack.c.b16 %v3338, %v3337
    %v3433 = vpack.c.b16 %v3340, %v3339
    %v3434 = vpack.c.b16 %v3342, %v3341
    %v3435 = vpack.c.b16 %v3344, %v3343
    %v3436 = vpack.c.b16 %v3346, %v3345
    %v3437 = vpack.c.b16 %v3348, %v3347
    %v3438 = vpack.c.b16 %v3350, %v3349
    %v3439 = vpack.c.b16 %v3352, %v3351
    %v3440 = vpack.c.b16 %v3354, %v3353
    %v3441 = vpack.c.b16 %v3356, %v3355
    %v3442 = vpack.c.b16 %v3358, %v3357
    %v3443 = vpack.c.b16 %v3360, %v3359
    %v3444 = vpack.c.b16 %v3362, %v3361
    %v3445 = vpack.c.b16 %v3364, %v3363
    %v3446 = vpack.c.b16 %v3366, %v3365
    %v3447 = vpack.c.b16 %v3368, %v3367
    %v3448 = vpack.c.b16 %v3370, %v3369
    %v3449 = vpack.c.b16 %v3372, %v3371
    %v3450 = vpack.c.b16 %v3374, %v3373
    %v3451 = vpack.c.b16 %v3376, %v3375
    %v3452 = vpack.c.b16 %v3378, %v3377
    %v3453 = vpack.c.b16 %v3380, %v3379
    %v3454 = vpack.c.b16 %v3382, %v3381
    %v3455 = vpack.c.b16 %v3384, %v3383
    %v3456 = vpack.c.b16 %v3386, %v3385
    %v3457 = vpack.c.b16 %v3388, %v3387
    %v3458 = vpack.c.b16 %v3390, %v3389
    %v3459 = vpack.c.b16 %v3392, %v3391
    %v3460 = vpack.c.b16 %v3394, %v3393
    %v3461 = vpack.c.b16 %v3396, %v3395
    %v3462 = vpack.c.b16 %v3398, %v3397
    %v3463 = vpack.c.b16 %v3400, %v3399
    %v3464 = vpack.c.b16 %v3402, %v3401
    %v3465 = vpack.c.b16 %v3404, %v3403
    %v3466 = vpack.c.b16 %v3406, %v3405
    %v3467 = vpack.c.b16 %v3408, %v3407
    %v3468 = vpack.c.b16 %v3410, %v3409
    %v3469 = vpack.c.b16 %v3412, %v3411
    %v3470 = vpack.c.b16 %v3414, %v3413
    %v3471 = vpack.c.b16 %v3416, %v3415
    %v3472 = vpack.c.b16 %v3418, %v3417
    %v3473 = vpack.c.b16 %v3420, %v3419
    %v3474 = vpack.c.b16 %v3422, %v3421
    %v3475 = vpack.c.b16 %v3424, %v3423
    %v3476 = vpack.c.b16 %v3426, %v3425
    %v3477 = vpack.c.b16 %v3428, %v3427
    %v3478 = vpack.c.b16 %v3430, %v3429
    %3527 = vmatprep.subr.bf16.mxu0 0
    %3528 = vmatpush1.bf16.msra.mxu0 %v3431
    %3529 = vmatprep.subr.bf16.mxu0 0
    %3530 = vmatpush1.bf16.msra.mxu0 %v3432
    %3531 = vmatprep.subr.bf16.mxu0 0
    %3532 = vmatpush1.bf16.msra.mxu0 %v3433
    %3533 = vmatprep.subr.bf16.mxu0 0
    %3534 = vmatpush1.bf16.msra.mxu0 %v3434
    %3535 = vmatprep.subr.bf16.mxu0 0
    %3536 = vmatpush1.bf16.msra.mxu0 %v3435
    %3537 = vmatprep.subr.bf16.mxu0 0
    %3538 = vmatpush1.bf16.msra.mxu0 %v3436
    %3539 = vmatprep.subr.bf16.mxu0 0
    %3540 = vmatpush1.bf16.msra.mxu0 %v3437
    %3541 = vmatprep.subr.bf16.mxu0 0
    %3542 = vmatpush1.bf16.msra.mxu0 %v3438
    %3543 = vmatprep.subr.bf16.mxu0 0
    %3544 = vmatpush1.bf16.msra.mxu0 %v3439
    %3545 = vmatprep.subr.bf16.mxu0 0
    %3546 = vmatpush1.bf16.msra.mxu0 %v3440
    %3547 = vmatprep.subr.bf16.mxu0 0
    %3548 = vmatpush1.bf16.msra.mxu0 %v3441
    %3549 = vmatprep.subr.bf16.mxu0 0
    %3550 = vmatpush1.bf16.msra.mxu0 %v3442
    %3551 = vmatprep.subr.bf16.mxu0 0
    %3552 = vmatpush1.bf16.msra.mxu0 %v3443
    %3553 = vmatprep.subr.bf16.mxu0 0
    %3554 = vmatpush1.bf16.msra.mxu0 %v3444
    %3555 = vmatprep.subr.bf16.mxu0 0
    %3556 = vmatpush1.bf16.msra.mxu0 %v3445
    %3557 = vmatprep.subr.bf16.mxu0 0
    %3558 = vmatpush1.bf16.msra.mxu0 %v3446
    %3559 = vmatprep.mubr.bf16.mxu0 %v3133
    %3560 = vmatmul.mubr.bf16.gmra.mrb[0].mxu0 %v3132
    %v3561 = vpop.f32.mrb[0].mxu0
    %v3562 = vadd.f32 %v3238, %v3561
    %v3563 = vpop.f32.mrb[0].mxu0
    %v3564 = vpop.f32.mrb[0].mxu0
    %v3565 = vpop.f32.mrb[0].mxu0
    %3566 = vdwg.mxu0
    %3567 = vmatprep.subr.bf16.mxu0 0
    %3568 = vmatpush1.bf16.msra.mxu0 %v3447
    %3569 = vmatprep.subr.bf16.mxu0 0
    %3570 = vmatpush1.bf16.msra.mxu0 %v3448
    %3571 = vmatprep.subr.bf16.mxu0 0
    %3572 = vmatpush1.bf16.msra.mxu0 %v3449
    %3573 = vmatprep.subr.bf16.mxu0 0
    %3574 = vmatpush1.bf16.msra.mxu0 %v3450
    %3575 = vmatprep.subr.bf16.mxu0 0
    %3576 = vmatpush1.bf16.msra.mxu0 %v3451
    %3577 = vmatprep.subr.bf16.mxu0 0
    %3578 = vmatpush1.bf16.msra.mxu0 %v3452
    %3579 = vmatprep.subr.bf16.mxu0 0
    %3580 = vmatpush1.bf16.msra.mxu0 %v3453
    %3581 = vmatprep.subr.bf16.mxu0 0
    %3582 = vmatpush1.bf16.msra.mxu0 %v3454
    %3583 = vmatprep.subr.bf16.mxu0 0
    %3584 = vmatpush1.bf16.msra.mxu0 %v3455
    %3585 = vmatprep.subr.bf16.mxu0 0
    %3586 = vmatpush1.bf16.msra.mxu0 %v3456
    %3587 = vmatprep.subr.bf16.mxu0 0
    %3588 = vmatpush1.bf16.msra.mxu0 %v3457
    %3589 = vmatprep.subr.bf16.mxu0 0
    %3590 = vmatpush1.bf16.msra.mxu0 %v3458
    %3591 = vmatprep.subr.bf16.mxu0 0
    %3592 = vmatpush1.bf16.msra.mxu0 %v3459
    %3593 = vmatprep.subr.bf16.mxu0 0
    %3594 = vmatpush1.bf16.msra.mxu0 %v3460
    %3595 = vmatprep.subr.bf16.mxu0 0
    %3596 = vmatpush1.bf16.msra.mxu0 %v3461
    %3597 = vmatprep.subr.bf16.mxu0 0
    %3598 = vmatpush1.bf16.msra.mxu0 %v3462
    %3599 = vmatprep.mubr.bf16.mxu0 %v3135
    %3600 = vmatmul.mubr.bf16.gmra.mrb[0].mxu0 %v3134
    %v3601 = vpop.f32.mrb[0].mxu0
    %v3602 = vadd.f32 %v3562, %v3601
    %v3603 = vpop.f32.mrb[0].mxu0
    %v3604 = vpop.f32.mrb[0].mxu0
    %v3605 = vpop.f32.mrb[0].mxu0
    %3606 = vdwg.mxu0
    %3607 = vmatprep.subr.bf16.mxu0 0
    %3608 = vmatpush1.bf16.msra.mxu0 %v3463
    %3609 = vmatprep.subr.bf16.mxu0 0
    %3610 = vmatpush1.bf16.msra.mxu0 %v3464
    %3611 = vmatprep.subr.bf16.mxu0 0
    %3612 = vmatpush1.bf16.msra.mxu0 %v3465
    %3613 = vmatprep.subr.bf16.mxu0 0
    %3614 = vmatpush1.bf16.msra.mxu0 %v3466
    %3615 = vmatprep.subr.bf16.mxu0 0
    %3616 = vmatpush1.bf16.msra.mxu0 %v3467
    %3617 = vmatprep.subr.bf16.mxu0 0
    %3618 = vmatpush1.bf16.msra.mxu0 %v3468
    %3619 = vmatprep.subr.bf16.mxu0 0
    %3620 = vmatpush1.bf16.msra.mxu0 %v3469
    %3621 = vmatprep.subr.bf16.mxu0 0
    %3622 = vmatpush1.bf16.msra.mxu0 %v3470
    %3623 = vmatprep.subr.bf16.mxu0 0
    %3624 = vmatpush1.bf16.msra.mxu0 %v3471
    %3625 = vmatprep.subr.bf16.mxu0 0
    %3626 = vmatpush1.bf16.msra.mxu0 %v3472
    %3627 = vmatprep.subr.bf16.mxu0 0
    %3628 = vmatpush1.bf16.msra.mxu0 %v3473
    %3629 = vmatprep.subr.bf16.mxu0 0
    %3630 = vmatpush1.bf16.msra.mxu0 %v3474
    %3631 = vmatprep.subr.bf16.mxu0 0
    %3632 = vmatpush1.bf16.msra.mxu0 %v3475
    %3633 = vmatprep.subr.bf16.mxu0 0
    %3634 = vmatpush1.bf16.msra.mxu0 %v3476
    %3635 = vmatprep.subr.bf16.mxu0 0
    %3636 = vmatpush1.bf16.msra.mxu0 %v3477
    %3637 = vmatprep.subr.bf16.mxu0 0
    %3638 = vmatpush1.bf16.msra.mxu0 %v3478
    %3639 = vmatprep.mubr.bf16.mxu0 %v3137
    %3640 = vmatmul.mubr.bf16.gmra.mrb[0].mxu0 %v3136
    %v3641 = vpop.f32.mrb[0].mxu0
    %v3642 = vadd.f32 %v3602, %v3641
    %v3643 = vpop.f32.mrb[0].mxu0
    %v3644 = vpop.f32.mrb[0].mxu0
    %v3645 = vpop.f32.mrb[0].mxu0
    %3646 = vdwg.mxu0
    %v3647 = vld [vmem:[%s2] sm:$0xff]
    %v3648 = vpack.c.bf16 %v3647, %v3647
    %v3649 = vld [vmem:[#allocation6] sm:$0xff]
    %v3650 = vld [vmem:[#allocation6 + $0x8] sm:$0xff]
    %v3651 = vld [vmem:[#allocation6 + $0x10] sm:$0x33]
    %v3652 = vld [vmem:[#allocation6 + $0x18] sm:$0x33]
    %s3653 = scalar_lea.vmem [#allocation18], 1
    %v3654 = vld [vmem:[%s3653] ss:$8 sm:$0xf]
    %v3656 = vlaneseq
    %v3657 = vshrl.u32 %v3656, 7
    %v3658 = vsub.s32 0, %v3657
    %v3659 = vrot.slane %v3654, %v3658
    %v3660 = vlaneseq
    %v3661 = vshrl.u32 %v3660, 7
    %v3662 = vsub.s32 1, %v3661
    %v3663 = vrot.slane %v3654, %v3662
    %v3664 = vlaneseq
    %v3665 = vshrl.u32 %v3664, 7
    %v3666 = vsub.s32 2, %v3665
    %v3667 = vrot.slane %v3654, %v3666
    %v3668 = vlaneseq
    %v3669 = vshrl.u32 %v3668, 7
    %v3670 = vsub.s32 3, %v3669
    %v3671 = vrot.slane %v3654, %v3670
    %v3680 = vunpack.c.l.b16 %v3649
    %v3681 = vunpack.c.h.b16 %v3649
    %v3682 = vunpack.c.l.b16 %v3650
    %v3683 = vunpack.c.h.b16 %v3650
    %v3684 = vunpack.c.l.b16 %v3651
    %v3685 = vunpack.c.h.b16 %v3651
    %v3686 = vunpack.c.l.b16 %v3652
    %v3687 = vunpack.c.h.b16 %v3652
    %v3688 = vpack.c.b16 %v3684, %v3680
    %v3689 = vpack.c.b16 %v3685, %v3681
    %v3690 = vpack.c.b16 %v3686, %v3682
    %v3691 = vpack.c.b16 %v3687, %v3683
    %vm3692 = vcmask 97280
    %v3694 = vsel %vm3692, %v3648, 0
    %vm3696 = vcmask 1045504
    %v3698 = vsel %vm3696, %v3688, 0
    %v3701 = vsel %vm3696, %v3689, 0
    %v3704 = vsel %vm3696, %v3690, 0
    %v3707 = vsel %vm3696, %v3691, 0
    %3709 = vmatprep.subr.bf16.mxu0 %v3701
    %3710 = vmatpush1.bf16.msra.mxu0 %v3698
    %3711 = vmatprep.subr.bf16.mxu0 0
    %3712 = vmatpush1.bf16.msra.mxu0 0
    %3713 = vmatprep.subr.bf16.mxu0 0
    %3714 = vmatpush1.bf16.msra.mxu0 0
    %3715 = vmatprep.subr.bf16.mxu0 0
    %3716 = vmatpush1.bf16.msra.mxu0 0
    %3717 = vmatprep.subr.bf16.mxu0 0
    %3718 = vmatpush1.bf16.msra.mxu0 0
    %3719 = vmatprep.subr.bf16.mxu0 0
    %3720 = vmatpush1.bf16.msra.mxu0 0
    %3721 = vmatprep.subr.bf16.mxu0 0
    %3722 = vmatpush1.bf16.msra.mxu0 0
    %3723 = vmatprep.subr.bf16.mxu0 0
    %3724 = vmatpush1.bf16.msra.mxu0 0
    %3725 = vmatprep.subr.bf16.mxu0 0
    %3726 = vmatpush1.bf16.msra.mxu0 0
    %3727 = vmatprep.subr.bf16.mxu0 0
    %3728 = vmatpush1.bf16.msra.mxu0 0
    %3729 = vmatprep.subr.bf16.mxu0 0
    %3730 = vmatpush1.bf16.msra.mxu0 0
    %3731 = vmatprep.subr.bf16.mxu0 0
    %3732 = vmatpush1.bf16.msra.mxu0 0
    %3733 = vmatprep.subr.bf16.mxu0 0
    %3734 = vmatpush1.bf16.msra.mxu0 0
    %3735 = vmatprep.subr.bf16.mxu0 0
    %3736 = vmatpush1.bf16.msra.mxu0 0
    %3737 = vmatprep.subr.bf16.mxu0 0
    %3738 = vmatpush1.bf16.msra.mxu0 0
    %3739 = vmatprep.subr.bf16.mxu0 0
    %3740 = vmatpush1.bf16.msra.mxu0 0
    %3741 = vmatprep.mubr.bf16.mxu0 0
    %3742 = vmatmul.mubr.bf16.gmra.mrb[0].mxu0 %v3694
    %v3743 = vpop.f32.mrb[0].mxu0
    %v3744 = vadd.f32 %v3659, %v3743
    %v3745 = vpop.f32.mrb[0].mxu0
    %v3746 = vadd.f32 %v3663, %v3745
    %v3747 = vpop.f32.mrb[0].mxu0
    %v3748 = vpop.f32.mrb[0].mxu0
    %3749 = vdwg.mxu0
    %3750 = vmatprep.subr.bf16.mxu0 %v3707
    %3751 = vmatpush1.bf16.msra.mxu0 %v3704
    %3752 = vmatprep.subr.bf16.mxu0 0
    %3753 = vmatpush1.bf16.msra.mxu0 0
    %3754 = vmatprep.subr.bf16.mxu0 0
    %3755 = vmatpush1.bf16.msra.mxu0 0
    %3756 = vmatprep.subr.bf16.mxu0 0
    %3757 = vmatpush1.bf16.msra.mxu0 0
    %3758 = vmatprep.subr.bf16.mxu0 0
    %3759 = vmatpush1.bf16.msra.mxu0 0
    %3760 = vmatprep.subr.bf16.mxu0 0
    %3761 = vmatpush1.bf16.msra.mxu0 0
    %3762 = vmatprep.subr.bf16.mxu0 0
    %3763 = vmatpush1.bf16.msra.mxu0 0
    %3764 = vmatprep.subr.bf16.mxu0 0
    %3765 = vmatpush1.bf16.msra.mxu0 0
    %3766 = vmatprep.subr.bf16.mxu0 0
    %3767 = vmatpush1.bf16.msra.mxu0 0
    %3768 = vmatprep.subr.bf16.mxu0 0
    %3769 = vmatpush1.bf16.msra.mxu0 0
    %3770 = vmatprep.subr.bf16.mxu0 0
    %3771 = vmatpush1.bf16.msra.mxu0 0
    %3772 = vmatprep.subr.bf16.mxu0 0
    %3773 = vmatpush1.bf16.msra.mxu0 0
    %3774 = vmatprep.subr.bf16.mxu0 0
    %3775 = vmatpush1.bf16.msra.mxu0 0
    %3776 = vmatprep.subr.bf16.mxu0 0
    %3777 = vmatpush1.bf16.msra.mxu0 0
    %3778 = vmatprep.subr.bf16.mxu0 0
    %3779 = vmatpush1.bf16.msra.mxu0 0
    %3780 = vmatprep.subr.bf16.mxu0 0
    %3781 = vmatpush1.bf16.msra.mxu0 0
    %3782 = vmatprep.mubr.bf16.mxu0 0
    %3783 = vmatmul.mubr.bf16.gmra.mrb[0].mxu0 %v3694
    %v3784 = vpop.f32.mrb[0].mxu0
    %v3785 = vadd.f32 %v3667, %v3784
    %v3786 = vpop.f32.mrb[0].mxu0
    %v3787 = vadd.f32 %v3671, %v3786
    %v3788 = vpop.f32.mrb[0].mxu0
    %v3789 = vpop.f32.mrb[0].mxu0
    %3790 = vdwg.mxu0
    %v3791 = vmax.f32 %v3744, 0.0
    %v3792 = vmax.f32 %v3746, 0.0
    %v3793 = vmax.f32 %v3785, 0.0
    %v3794 = vmax.f32 %v3787, 0.0
    %v3795 = vpack.c.bf16 %v3791, %v3791
    %v3796 = vpack.c.bf16 %v3792, %v3792
    %v3797 = vpack.c.bf16 %v3793, %v3793
    %v3798 = vpack.c.bf16 %v3794, %v3794
    %v3799 = vld [vmem:[#allocation7] sm:$0xf]
    %v3800 = vld [vmem:[#allocation7 + $0x4] sm:$0xf]
    %v3801 = vld [vmem:[#allocation7 + $0x8] sm:$0xf]
    %v3802 = vld [vmem:[#allocation7 + $0xc] sm:$0xf]
    %v3803 = vld [vmem:[#allocation7 + $0x10] sm:$0xf]
    %v3804 = vld [vmem:[#allocation7 + $0x14] sm:$0xf]
    %v3805 = vld [vmem:[#allocation7 + $0x18] sm:$0xf]
    %v3806 = vld [vmem:[#allocation7 + $0x1c] sm:$0xf]
    %v3807 = vld [vmem:[#allocation7 + $0x20] sm:$0xf]
    %v3808 = vld [vmem:[#allocation7 + $0x24] sm:$0xf]
    %v3809 = vld [vmem:[#allocation7 + $0x28] sm:$0xf]
    %v3810 = vld [vmem:[#allocation7 + $0x2c] sm:$0xf]
    %v3811 = vld [vmem:[#allocation7 + $0x30] sm:$0xf]
    %v3812 = vld [vmem:[#allocation7 + $0x34] sm:$0xf]
    %v3813 = vld [vmem:[#allocation7 + $0x38] sm:$0xf]
    %v3814 = vld [vmem:[#allocation7 + $0x3c] sm:$0xf]
    %v3815 = vld [vmem:[#allocation7 + $0x40] sm:$0xf]
    %v3816 = vld [vmem:[#allocation7 + $0x44] sm:$0xf]
    %v3817 = vld [vmem:[#allocation7 + $0x48] sm:$0xf]
    %v3818 = vld [vmem:[#allocation7 + $0x4c] sm:$0xf]
    %v3819 = vld [vmem:[#allocation7 + $0x50] sm:$0xf]
    %v3820 = vld [vmem:[#allocation7 + $0x54] sm:$0xf]
    %v3821 = vld [vmem:[#allocation7 + $0x58] sm:$0xf]
    %v3822 = vld [vmem:[#allocation7 + $0x5c] sm:$0xf]
    %v3823 = vld [vmem:[#allocation7 + $0x60] sm:$0xf]
    %v3824 = vld [vmem:[#allocation7 + $0x64] sm:$0xf]
    %v3825 = vld [vmem:[#allocation7 + $0x68] sm:$0xf]
    %v3826 = vld [vmem:[#allocation7 + $0x6c] sm:$0xf]
    %v3827 = vld [vmem:[#allocation7 + $0x70] sm:$0xf]
    %v3828 = vld [vmem:[#allocation7 + $0x74] sm:$0xf]
    %v3829 = vld [vmem:[#allocation7 + $0x78] sm:$0xf]
    %v3830 = vld [vmem:[#allocation7 + $0x7c] sm:$0xf]
    %v3831 = vld [vmem:[#allocation7 + $0x80] sm:$0xf]
    %v3832 = vld [vmem:[#allocation7 + $0x84] sm:$0xf]
    %v3833 = vld [vmem:[#allocation7 + $0x88] sm:$0xf]
    %v3834 = vld [vmem:[#allocation7 + $0x8c] sm:$0xf]
    %v3835 = vld [vmem:[#allocation7 + $0x90] sm:$0xf]
    %v3836 = vld [vmem:[#allocation7 + $0x94] sm:$0xf]
    %v3837 = vld [vmem:[#allocation7 + $0x98] sm:$0xf]
    %v3838 = vld [vmem:[#allocation7 + $0x9c] sm:$0xf]
    %v3839 = vld [vmem:[#allocation7 + $0xa0] sm:$0xf]
    %v3840 = vld [vmem:[#allocation7 + $0xa4] sm:$0xf]
    %v3841 = vld [vmem:[#allocation7 + $0xa8] sm:$0xf]
    %v3842 = vld [vmem:[#allocation7 + $0xac] sm:$0xf]
    %v3843 = vld [vmem:[#allocation7 + $0xb0] sm:$0xf]
    %v3844 = vld [vmem:[#allocation7 + $0xb4] sm:$0xf]
    %v3845 = vld [vmem:[#allocation7 + $0xb8] sm:$0xf]
    %v3846 = vld [vmem:[#allocation7 + $0xbc] sm:$0xf]
    %v3847 = vld [vmem:[#allocation7 + $0xc0] sm:$0xf]
    %v3848 = vld [vmem:[#allocation7 + $0xc4] sm:$0xf]
    %v3849 = vld [vmem:[#allocation7 + $0xc8] sm:$0xf]
    %v3850 = vld [vmem:[#allocation7 + $0xcc] sm:$0xf]
    %v3851 = vld [vmem:[#allocation7 + $0xd0] sm:$0xf]
    %v3852 = vld [vmem:[#allocation7 + $0xd4] sm:$0xf]
    %v3853 = vld [vmem:[#allocation7 + $0xd8] sm:$0xf]
    %v3854 = vld [vmem:[#allocation7 + $0xdc] sm:$0xf]
    %v3855 = vld [vmem:[#allocation7 + $0xe0] sm:$0xf]
    %v3856 = vld [vmem:[#allocation7 + $0xe4] sm:$0xf]
    %v3857 = vld [vmem:[#allocation7 + $0xe8] sm:$0xf]
    %v3858 = vld [vmem:[#allocation7 + $0xec] sm:$0xf]
    %v3859 = vld [vmem:[#allocation7 + $0xf0] sm:$0xf]
    %v3860 = vld [vmem:[#allocation7 + $0xf4] sm:$0xf]
    %v3861 = vld [vmem:[#allocation7 + $0xf8] sm:$0xf]
    %v3862 = vld [vmem:[#allocation7 + $0xfc] sm:$0xf]
    %v3863 = vld [vmem:[#allocation19 + $0x1] sm:$0x1]
    %v3864 = vlaneseq
    %v3865 = vshrl.u32 %v3864, 7
    %v3866 = vsub.s32 0, %v3865
    %v3867 = vrot.slane %v3863, %v3866
    %v3932 = vunpack.c.l.b16 %v3799
    %v3933 = vunpack.c.l.b16 %v3800
    %v3934 = vunpack.c.l.b16 %v3801
    %v3935 = vunpack.c.l.b16 %v3802
    %v3936 = vunpack.c.l.b16 %v3803
    %v3937 = vunpack.c.l.b16 %v3804
    %v3938 = vunpack.c.l.b16 %v3805
    %v3939 = vunpack.c.l.b16 %v3806
    %v3940 = vunpack.c.l.b16 %v3807
    %v3941 = vunpack.c.l.b16 %v3808
    %v3942 = vunpack.c.l.b16 %v3809
    %v3943 = vunpack.c.l.b16 %v3810
    %v3944 = vunpack.c.l.b16 %v3811
    %v3945 = vunpack.c.l.b16 %v3812
    %v3946 = vunpack.c.l.b16 %v3813
    %v3947 = vunpack.c.l.b16 %v3814
    %v3948 = vunpack.c.l.b16 %v3815
    %v3949 = vunpack.c.l.b16 %v3816
    %v3950 = vunpack.c.l.b16 %v3817
    %v3951 = vunpack.c.l.b16 %v3818
    %v3952 = vunpack.c.l.b16 %v3819
    %v3953 = vunpack.c.l.b16 %v3820
    %v3954 = vunpack.c.l.b16 %v3821
    %v3955 = vunpack.c.l.b16 %v3822
    %v3956 = vunpack.c.l.b16 %v3823
    %v3957 = vunpack.c.l.b16 %v3824
    %v3958 = vunpack.c.l.b16 %v3825
    %v3959 = vunpack.c.l.b16 %v3826
    %v3960 = vunpack.c.l.b16 %v3827
    %v3961 = vunpack.c.l.b16 %v3828
    %v3962 = vunpack.c.l.b16 %v3829
    %v3963 = vunpack.c.l.b16 %v3830
    %v3964 = vunpack.c.l.b16 %v3831
    %v3965 = vunpack.c.l.b16 %v3832
    %v3966 = vunpack.c.l.b16 %v3833
    %v3967 = vunpack.c.l.b16 %v3834
    %v3968 = vunpack.c.l.b16 %v3835
    %v3969 = vunpack.c.l.b16 %v3836
    %v3970 = vunpack.c.l.b16 %v3837
    %v3971 = vunpack.c.l.b16 %v3838
    %v3972 = vunpack.c.l.b16 %v3839
    %v3973 = vunpack.c.l.b16 %v3840
    %v3974 = vunpack.c.l.b16 %v3841
    %v3975 = vunpack.c.l.b16 %v3842
    %v3976 = vunpack.c.l.b16 %v3843
    %v3977 = vunpack.c.l.b16 %v3844
    %v3978 = vunpack.c.l.b16 %v3845
    %v3979 = vunpack.c.l.b16 %v3846
    %v3980 = vunpack.c.l.b16 %v3847
    %v3981 = vunpack.c.l.b16 %v3848
    %v3982 = vunpack.c.l.b16 %v3849
    %v3983 = vunpack.c.l.b16 %v3850
    %v3984 = vunpack.c.l.b16 %v3851
    %v3985 = vunpack.c.l.b16 %v3852
    %v3986 = vunpack.c.l.b16 %v3853
    %v3987 = vunpack.c.l.b16 %v3854
    %v3988 = vunpack.c.l.b16 %v3855
    %v3989 = vunpack.c.l.b16 %v3856
    %v3990 = vunpack.c.l.b16 %v3857
    %v3991 = vunpack.c.l.b16 %v3858
    %v3992 = vunpack.c.l.b16 %v3859
    %v3993 = vunpack.c.l.b16 %v3860
    %v3994 = vunpack.c.l.b16 %v3861
    %v3995 = vunpack.c.l.b16 %v3862
    %v3996 = vpack.c.b16 %v3933, %v3932
    %v3997 = vpack.c.b16 %v3935, %v3934
    %v3998 = vpack.c.b16 %v3937, %v3936
    %v3999 = vpack.c.b16 %v3939, %v3938
    %v4000 = vpack.c.b16 %v3941, %v3940
    %v4001 = vpack.c.b16 %v3943, %v3942
    %v4002 = vpack.c.b16 %v3945, %v3944
    %v4003 = vpack.c.b16 %v3947, %v3946
    %v4004 = vpack.c.b16 %v3949, %v3948
    %v4005 = vpack.c.b16 %v3951, %v3950
    %v4006 = vpack.c.b16 %v3953, %v3952
    %v4007 = vpack.c.b16 %v3955, %v3954
    %v4008 = vpack.c.b16 %v3957, %v3956
    %v4009 = vpack.c.b16 %v3959, %v3958
    %v4010 = vpack.c.b16 %v3961, %v3960
    %v4011 = vpack.c.b16 %v3963, %v3962
    %v4012 = vpack.c.b16 %v3965, %v3964
    %v4013 = vpack.c.b16 %v3967, %v3966
    %v4014 = vpack.c.b16 %v3969, %v3968
    %v4015 = vpack.c.b16 %v3971, %v3970
    %v4016 = vpack.c.b16 %v3973, %v3972
    %v4017 = vpack.c.b16 %v3975, %v3974
    %v4018 = vpack.c.b16 %v3977, %v3976
    %v4019 = vpack.c.b16 %v3979, %v3978
    %v4020 = vpack.c.b16 %v3981, %v3980
    %v4021 = vpack.c.b16 %v3983, %v3982
    %v4022 = vpack.c.b16 %v3985, %v3984
    %v4023 = vpack.c.b16 %v3987, %v3986
    %v4024 = vpack.c.b16 %v3989, %v3988
    %v4025 = vpack.c.b16 %v3991, %v3990
    %v4026 = vpack.c.b16 %v3993, %v3992
    %v4027 = vpack.c.b16 %v3995, %v3994
    %4060 = vmatprep.subr.bf16.mxu0 0
    %4061 = vmatpush1.bf16.msra.mxu0 %v3996
    %4062 = vmatprep.subr.bf16.mxu0 0
    %4063 = vmatpush1.bf16.msra.mxu0 %v3997
    %4064 = vmatprep.subr.bf16.mxu0 0
    %4065 = vmatpush1.bf16.msra.mxu0 %v3998
    %4066 = vmatprep.subr.bf16.mxu0 0
    %4067 = vmatpush1.bf16.msra.mxu0 %v3999
    %4068 = vmatprep.subr.bf16.mxu0 0
    %4069 = vmatpush1.bf16.msra.mxu0 %v4000
    %4070 = vmatprep.subr.bf16.mxu0 0
    %4071 = vmatpush1.bf16.msra.mxu0 %v4001
    %4072 = vmatprep.subr.bf16.mxu0 0
    %4073 = vmatpush1.bf16.msra.mxu0 %v4002
    %4074 = vmatprep.subr.bf16.mxu0 0
    %4075 = vmatpush1.bf16.msra.mxu0 %v4003
    %4076 = vmatprep.subr.bf16.mxu0 0
    %4077 = vmatpush1.bf16.msra.mxu0 %v4004
    %4078 = vmatprep.subr.bf16.mxu0 0
    %4079 = vmatpush1.bf16.msra.mxu0 %v4005
    %4080 = vmatprep.subr.bf16.mxu0 0
    %4081 = vmatpush1.bf16.msra.mxu0 %v4006
    %4082 = vmatprep.subr.bf16.mxu0 0
    %4083 = vmatpush1.bf16.msra.mxu0 %v4007
    %4084 = vmatprep.subr.bf16.mxu0 0
    %4085 = vmatpush1.bf16.msra.mxu0 %v4008
    %4086 = vmatprep.subr.bf16.mxu0 0
    %4087 = vmatpush1.bf16.msra.mxu0 %v4009
    %4088 = vmatprep.subr.bf16.mxu0 0
    %4089 = vmatpush1.bf16.msra.mxu0 %v4010
    %4090 = vmatprep.subr.bf16.mxu0 0
    %4091 = vmatpush1.bf16.msra.mxu0 %v4011
    %4092 = vmatprep.mubr.bf16.mxu0 %v3796
    %4093 = vmatmul.mubr.bf16.gmra.mrb[0].mxu0 %v3795
    %v4094 = vpop.f32.mrb[0].mxu0
    %v4095 = vadd.f32 %v3867, %v4094
    %v4096 = vpop.f32.mrb[0].mxu0
    %v4097 = vpop.f32.mrb[0].mxu0
    %v4098 = vpop.f32.mrb[0].mxu0
    %4099 = vdwg.mxu0
    %4100 = vmatprep.subr.bf16.mxu0 0
    %4101 = vmatpush1.bf16.msra.mxu0 %v4012
    %4102 = vmatprep.subr.bf16.mxu0 0
    %4103 = vmatpush1.bf16.msra.mxu0 %v4013
    %4104 = vmatprep.subr.bf16.mxu0 0
    %4105 = vmatpush1.bf16.msra.mxu0 %v4014
    %4106 = vmatprep.subr.bf16.mxu0 0
    %4107 = vmatpush1.bf16.msra.mxu0 %v4015
    %4108 = vmatprep.subr.bf16.mxu0 0
    %4109 = vmatpush1.bf16.msra.mxu0 %v4016
    %4110 = vmatprep.subr.bf16.mxu0 0
    %4111 = vmatpush1.bf16.msra.mxu0 %v4017
    %4112 = vmatprep.subr.bf16.mxu0 0
    %4113 = vmatpush1.bf16.msra.mxu0 %v4018
    %4114 = vmatprep.subr.bf16.mxu0 0
    %4115 = vmatpush1.bf16.msra.mxu0 %v4019
    %4116 = vmatprep.subr.bf16.mxu0 0
    %4117 = vmatpush1.bf16.msra.mxu0 %v4020
    %4118 = vmatprep.subr.bf16.mxu0 0
    %4119 = vmatpush1.bf16.msra.mxu0 %v4021
    %4120 = vmatprep.subr.bf16.mxu0 0
    %4121 = vmatpush1.bf16.msra.mxu0 %v4022
    %4122 = vmatprep.subr.bf16.mxu0 0
    %4123 = vmatpush1.bf16.msra.mxu0 %v4023
    %4124 = vmatprep.subr.bf16.mxu0 0
    %4125 = vmatpush1.bf16.msra.mxu0 %v4024
    %4126 = vmatprep.subr.bf16.mxu0 0
    %4127 = vmatpush1.bf16.msra.mxu0 %v4025
    %4128 = vmatprep.subr.bf16.mxu0 0
    %4129 = vmatpush1.bf16.msra.mxu0 %v4026
    %4130 = vmatprep.subr.bf16.mxu0 0
    %4131 = vmatpush1.bf16.msra.mxu0 %v4027
    %4132 = vmatprep.mubr.bf16.mxu0 %v3798
    %4133 = vmatmul.mubr.bf16.gmra.mrb[0].mxu0 %v3797
    %v4134 = vpop.f32.mrb[0].mxu0
    %v4135 = vadd.f32 %v4095, %v4134
    %v4136 = vpop.f32.mrb[0].mxu0
    %v4137 = vpop.f32.mrb[0].mxu0
    %v4138 = vpop.f32.mrb[0].mxu0
    %4139 = vdwg.mxu0
    %v4140 = vmax.f32 %v4135, 0.0
    %v4141 = vld [vmem:[%s3] sm:$0xf]
    %v4142 = vld [vmem:[%s3 + $0x4] sm:$0xf]
    %v4143 = vld [vmem:[%s3 + $0x8] sm:$0xf]
    %v4144 = vld [vmem:[%s3 + $0xc] sm:$0xf]
    %v4145 = vld [vmem:[%s3 + $0x10] sm:$0xf]
    %v4146 = vld [vmem:[%s3 + $0x14] sm:$0xf]
    %v4147 = vld [vmem:[%s3 + $0x18] sm:$0xf]
    %v4148 = vld [vmem:[%s3 + $0x1c] sm:$0xf]
    %v4149 = vld [vmem:[#allocation9] sm:$0xf]
    %v4150 = vld [vmem:[#allocation9 + $0x4] sm:$0xf]
    %v4151 = vld [vmem:[#allocation9 + $0x8] sm:$0xf]
    %v4152 = vld [vmem:[#allocation9 + $0xc] sm:$0xf]
    %v4153 = vld [vmem:[#allocation9 + $0x10] sm:$0xf]
    %v4154 = vld [vmem:[#allocation9 + $0x14] sm:$0xf]
    %v4155 = vld [vmem:[#allocation9 + $0x18] sm:$0xf]
    %v4156 = vld [vmem:[#allocation9 + $0x1c] sm:$0xf]
    %v4157 = vld [vmem:[#allocation9 + $0x20] sm:$0xf]
    %v4158 = vld [vmem:[#allocation9 + $0x24] sm:$0xf]
    %v4159 = vld [vmem:[#allocation9 + $0x28] sm:$0xf]
    %v4160 = vld [vmem:[#allocation9 + $0x2c] sm:$0xf]
    %v4161 = vld [vmem:[#allocation9 + $0x30] sm:$0xf]
    %v4162 = vld [vmem:[#allocation9 + $0x34] sm:$0xf]
    %v4163 = vld [vmem:[#allocation9 + $0x38] sm:$0xf]
    %v4164 = vld [vmem:[#allocation9 + $0x3c] sm:$0xf]
    %v4173 = vunpack.c.l.b16 %v4141
    %v4174 = vunpack.c.l.b16 %v4142
    %v4175 = vunpack.c.l.b16 %v4143
    %v4176 = vunpack.c.l.b16 %v4144
    %v4177 = vunpack.c.l.b16 %v4145
    %v4178 = vunpack.c.l.b16 %v4146
    %v4179 = vunpack.c.l.b16 %v4147
    %v4180 = vunpack.c.l.b16 %v4148
    %v4181 = vpack.c.b16 %v4174, %v4173
    %v4182 = vpack.c.b16 %v4176, %v4175
    %v4183 = vpack.c.b16 %v4178, %v4177
    %v4184 = vpack.c.b16 %v4180, %v4179
    %v4205 = vunpack.c.l.b16 %v4149
    %v4206 = vunpack.c.l.b16 %v4150
    %v4207 = vunpack.c.l.b16 %v4151
    %v4208 = vunpack.c.l.b16 %v4152
    %v4209 = vunpack.c.l.b16 %v4153
    %v4210 = vunpack.c.l.b16 %v4154
    %v4211 = vunpack.c.l.b16 %v4155
    %v4212 = vunpack.c.l.b16 %v4156
    %v4213 = vunpack.c.l.b16 %v4157
    %v4214 = vunpack.c.l.b16 %v4158
    %v4215 = vunpack.c.l.b16 %v4159
    %v4216 = vunpack.c.l.b16 %v4160
    %v4217 = vunpack.c.l.b16 %v4161
    %v4218 = vunpack.c.l.b16 %v4162
    %v4219 = vunpack.c.l.b16 %v4163
    %v4220 = vunpack.c.l.b16 %v4164
    %v4221 = vpack.c.b16 %v4206, %v4205
    %v4222 = vpack.c.b16 %v4208, %v4207
    %v4223 = vpack.c.b16 %v4210, %v4209
    %v4224 = vpack.c.b16 %v4212, %v4211
    %v4225 = vpack.c.b16 %v4214, %v4213
    %v4226 = vpack.c.b16 %v4216, %v4215
    %v4227 = vpack.c.b16 %v4218, %v4217
    %v4228 = vpack.c.b16 %v4220, %v4219
    %4237 = vmatprep.subr.bf16.mxu0 0
    %4238 = vmatpush1.bf16.msra.mxu0 %v4221
    %4239 = vmatprep.subr.bf16.mxu0 0
    %4240 = vmatpush1.bf16.msra.mxu0 %v4222
    %4241 = vmatprep.subr.bf16.mxu0 0
    %4242 = vmatpush1.bf16.msra.mxu0 %v4223
    %4243 = vmatprep.subr.bf16.mxu0 0
    %4244 = vmatpush1.bf16.msra.mxu0 %v4224
    %4245 = vmatprep.subr.bf16.mxu0 0
    %4246 = vmatpush1.bf16.msra.mxu0 %v4225
    %4247 = vmatprep.subr.bf16.mxu0 0
    %4248 = vmatpush1.bf16.msra.mxu0 %v4226
    %4249 = vmatprep.subr.bf16.mxu0 0
    %4250 = vmatpush1.bf16.msra.mxu0 %v4227
    %4251 = vmatprep.subr.bf16.mxu0 0
    %4252 = vmatpush1.bf16.msra.mxu0 %v4228
    %4253 = vmatprep.subr.bf16.mxu0 0
    %4254 = vmatpush1.bf16.msra.mxu0 0
    %4255 = vmatprep.subr.bf16.mxu0 0
    %4256 = vmatpush1.bf16.msra.mxu0 0
    %4257 = vmatprep.subr.bf16.mxu0 0
    %4258 = vmatpush1.bf16.msra.mxu0 0
    %4259 = vmatprep.subr.bf16.mxu0 0
    %4260 = vmatpush1.bf16.msra.mxu0 0
    %4261 = vmatprep.subr.bf16.mxu0 0
    %4262 = vmatpush1.bf16.msra.mxu0 0
    %4263 = vmatprep.subr.bf16.mxu0 0
    %4264 = vmatpush1.bf16.msra.mxu0 0
    %4265 = vmatprep.subr.bf16.mxu0 0
    %4266 = vmatpush1.bf16.msra.mxu0 0
    %4267 = vmatprep.subr.bf16.mxu0 0
    %4268 = vmatpush1.bf16.msra.mxu0 0
    %4269 = vmatprep.mubr.bf16.mxu0 0
    %4270 = vmatmul.mubr.bf16.gmra.mrb[0].mxu0 %v4181
    %v4271 = vpop.f32.mrb[0].mxu0
    %v4272 = vadd.f32 0.0, %v4271
    %v4273 = vpop.f32.mrb[0].mxu0
    %v4274 = vpop.f32.mrb[0].mxu0
    %v4275 = vadd.f32 0.0, %v4274
    %v4276 = vpop.f32.mrb[0].mxu0
    %4277 = vmatprep.mubr.bf16.mxu0 0
    %4278 = vmatmul.mubr.bf16.gmra.mrb[0].mxu0 %v4182
    %v4279 = vpop.f32.mrb[0].mxu0
    %v4280 = vadd.f32 0.0, %v4279
    %v4281 = vpop.f32.mrb[0].mxu0
    %v4282 = vpop.f32.mrb[0].mxu0
    %v4283 = vadd.f32 0.0, %v4282
    %v4284 = vpop.f32.mrb[0].mxu0
    %4285 = vmatprep.mubr.bf16.mxu0 0
    %4286 = vmatmul.mubr.bf16.gmra.mrb[0].mxu0 %v4183
    %v4287 = vpop.f32.mrb[0].mxu0
    %v4288 = vadd.f32 0.0, %v4287
    %v4289 = vpop.f32.mrb[0].mxu0
    %v4290 = vpop.f32.mrb[0].mxu0
    %v4291 = vadd.f32 0.0, %v4290
    %v4292 = vpop.f32.mrb[0].mxu0
    %4293 = vmatprep.mubr.bf16.mxu0 0
    %4294 = vmatmul.mubr.bf16.gmra.mrb[0].mxu0 %v4184
    %v4295 = vpop.f32.mrb[0].mxu0
    %v4296 = vadd.f32 0.0, %v4295
    %v4297 = vpop.f32.mrb[0].mxu0
    %v4298 = vpop.f32.mrb[0].mxu0
    %v4299 = vadd.f32 0.0, %v4298
    %v4300 = vpop.f32.mrb[0].mxu0
    %4301 = vdwg.mxu0
    %v4302 = vld [vmem:[#allocation9 + $0x40] sm:$0xf]
    %v4303 = vld [vmem:[#allocation9 + $0x44] sm:$0xf]
    %v4304 = vld [vmem:[#allocation9 + $0x48] sm:$0xf]
    %v4305 = vld [vmem:[#allocation9 + $0x4c] sm:$0xf]
    %v4306 = vld [vmem:[#allocation9 + $0x50] sm:$0xf]
    %v4307 = vld [vmem:[#allocation9 + $0x54] sm:$0xf]
    %v4308 = vld [vmem:[#allocation9 + $0x58] sm:$0xf]
    %v4309 = vld [vmem:[#allocation9 + $0x5c] sm:$0xf]
    %v4310 = vld [vmem:[#allocation9 + $0x60] sm:$0xf]
    %v4311 = vld [vmem:[#allocation9 + $0x64] sm:$0xf]
    %v4312 = vld [vmem:[#allocation9 + $0x68] sm:$0xf]
    %v4313 = vld [vmem:[#allocation9 + $0x6c] sm:$0xf]
    %v4314 = vld [vmem:[#allocation9 + $0x70] sm:$0xf]
    %v4315 = vld [vmem:[#allocation9 + $0x74] sm:$0xf]
    %v4316 = vld [vmem:[#allocation9 + $0x78] sm:$0xf]
    %v4317 = vld [vmem:[#allocation9 + $0x7c] sm:$0xf]
    %v4334 = vunpack.c.l.b16 %v4302
    %v4335 = vunpack.c.l.b16 %v4303
    %v4336 = vunpack.c.l.b16 %v4304
    %v4337 = vunpack.c.l.b16 %v4305
    %v4338 = vunpack.c.l.b16 %v4306
    %v4339 = vunpack.c.l.b16 %v4307
    %v4340 = vunpack.c.l.b16 %v4308
    %v4341 = vunpack.c.l.b16 %v4309
    %v4342 = vunpack.c.l.b16 %v4310
    %v4343 = vunpack.c.l.b16 %v4311
    %v4344 = vunpack.c.l.b16 %v4312
    %v4345 = vunpack.c.l.b16 %v4313
    %v4346 = vunpack.c.l.b16 %v4314
    %v4347 = vunpack.c.l.b16 %v4315
    %v4348 = vunpack.c.l.b16 %v4316
    %v4349 = vunpack.c.l.b16 %v4317
    %v4350 = vpack.c.b16 %v4335, %v4334
    %v4351 = vpack.c.b16 %v4337, %v4336
    %v4352 = vpack.c.b16 %v4339, %v4338
    %v4353 = vpack.c.b16 %v4341, %v4340
    %v4354 = vpack.c.b16 %v4343, %v4342
    %v4355 = vpack.c.b16 %v4345, %v4344
    %v4356 = vpack.c.b16 %v4347, %v4346
    %v4357 = vpack.c.b16 %v4349, %v4348
    %4366 = vmatprep.subr.bf16.mxu0 0
    %4367 = vmatpush1.bf16.msra.mxu0 %v4350
    %4368 = vmatprep.subr.bf16.mxu0 0
    %4369 = vmatpush1.bf16.msra.mxu0 %v4351
    %4370 = vmatprep.subr.bf16.mxu0 0
    %4371 = vmatpush1.bf16.msra.mxu0 %v4352
    %4372 = vmatprep.subr.bf16.mxu0 0
    %4373 = vmatpush1.bf16.msra.mxu0 %v4353
    %4374 = vmatprep.subr.bf16.mxu0 0
    %4375 = vmatpush1.bf16.msra.mxu0 %v4354
    %4376 = vmatprep.subr.bf16.mxu0 0
    %4377 = vmatpush1.bf16.msra.mxu0 %v4355
    %4378 = vmatprep.subr.bf16.mxu0 0
    %4379 = vmatpush1.bf16.msra.mxu0 %v4356
    %4380 = vmatprep.subr.bf16.mxu0 0
    %4381 = vmatpush1.bf16.msra.mxu0 %v4357
    %4382 = vmatprep.subr.bf16.mxu0 0
    %4383 = vmatpush1.bf16.msra.mxu0 0
    %4384 = vmatprep.subr.bf16.mxu0 0
    %4385 = vmatpush1.bf16.msra.mxu0 0
    %4386 = vmatprep.subr.bf16.mxu0 0
    %4387 = vmatpush1.bf16.msra.mxu0 0
    %4388 = vmatprep.subr.bf16.mxu0 0
    %4389 = vmatpush1.bf16.msra.mxu0 0
    %4390 = vmatprep.subr.bf16.mxu0 0
    %4391 = vmatpush1.bf16.msra.mxu0 0
    %4392 = vmatprep.subr.bf16.mxu0 0
    %4393 = vmatpush1.bf16.msra.mxu0 0
    %4394 = vmatprep.subr.bf16.mxu0 0
    %4395 = vmatpush1.bf16.msra.mxu0 0
    %4396 = vmatprep.subr.bf16.mxu0 0
    %4397 = vmatpush1.bf16.msra.mxu0 0
    %4398 = vmatprep.mubr.bf16.mxu0 0
    %4399 = vmatmul.mubr.bf16.gmra.mrb[0].mxu0 %v4181
    %v4400 = vpop.f32.mrb[0].mxu0
    %v4401 = vadd.f32 0.0, %v4400
    %v4402 = vpop.f32.mrb[0].mxu0
    %v4403 = vpop.f32.mrb[0].mxu0
    %v4404 = vadd.f32 0.0, %v4403
    %v4405 = vpop.f32.mrb[0].mxu0
    %4406 = vmatprep.mubr.bf16.mxu0 0
    %4407 = vmatmul.mubr.bf16.gmra.mrb[0].mxu0 %v4182
    %v4408 = vpop.f32.mrb[0].mxu0
    %v4409 = vadd.f32 0.0, %v4408
    %v4410 = vpop.f32.mrb[0].mxu0
    %v4411 = vpop.f32.mrb[0].mxu0
    %v4412 = vadd.f32 0.0, %v4411
    %v4413 = vpop.f32.mrb[0].mxu0
    %4414 = vmatprep.mubr.bf16.mxu0 0
    %4415 = vmatmul.mubr.bf16.gmra.mrb[0].mxu0 %v4183
    %v4416 = vpop.f32.mrb[0].mxu0
    %v4417 = vadd.f32 0.0, %v4416
    %v4418 = vpop.f32.mrb[0].mxu0
    %v4419 = vpop.f32.mrb[0].mxu0
    %v4420 = vadd.f32 0.0, %v4419
    %v4421 = vpop.f32.mrb[0].mxu0
    %4422 = vmatprep.mubr.bf16.mxu0 0
    %4423 = vmatmul.mubr.bf16.gmra.mrb[0].mxu0 %v4184
    %v4424 = vpop.f32.mrb[0].mxu0
    %v4425 = vadd.f32 0.0, %v4424
    %v4426 = vpop.f32.mrb[0].mxu0
    %v4427 = vpop.f32.mrb[0].mxu0
    %v4428 = vadd.f32 0.0, %v4427
    %v4429 = vpop.f32.mrb[0].mxu0
    %4430 = vdwg.mxu0
    %v4439 = vrot.slane %v4401, 1
    %v4440 = vrot.slane %v4404, 1
    %v4441 = vrot.slane %v4409, 1
    %v4442 = vrot.slane %v4412, 1
    %v4443 = vrot.slane %v4417, 1
    %v4444 = vrot.slane %v4420, 1
    %v4445 = vrot.slane %v4425, 1
    %v4446 = vrot.slane %v4428, 1
    %v4455 = vadd.f32 %v4272, %v4439
    %v4456 = vadd.f32 %v4275, %v4440
    %v4457 = vadd.f32 %v4280, %v4441
    %v4458 = vadd.f32 %v4283, %v4442
    %v4459 = vadd.f32 %v4288, %v4443
    %v4460 = vadd.f32 %v4291, %v4444
    %v4461 = vadd.f32 %v4296, %v4445
    %v4462 = vadd.f32 %v4299, %v4446
    %v4463 = vld [vmem:[#allocation19 + $0x2] sm:$0x1]
    %v4464 = vlaneseq
    %v4465 = vshrl.u32 %v4464, 7
    %v4466 = vsub.s32 0, %v4465
    %v4467 = vrot.slane %v4463, %v4466
    %v4468 = vadd.f32 %v4455, %v4467
    %v4469 = vadd.f32 %v4456, %v4467
    %v4470 = vadd.f32 %v4457, %v4467
    %v4471 = vadd.f32 %v4458, %v4467
    %v4472 = vadd.f32 %v4459, %v4467
    %v4473 = vadd.f32 %v4460, %v4467
    %v4474 = vadd.f32 %v4461, %v4467
    %v4475 = vadd.f32 %v4462, %v4467
    %v4476 = vmax.f32 %v4468, 0.0
    %v4477 = vmax.f32 %v4469, 0.0
    %v4478 = vmax.f32 %v4470, 0.0
    %v4479 = vmax.f32 %v4471, 0.0
    %v4480 = vmax.f32 %v4472, 0.0
    %v4481 = vmax.f32 %v4473, 0.0
    %v4482 = vmax.f32 %v4474, 0.0
    %v4483 = vmax.f32 %v4475, 0.0
    %4492 = vrot.lane.b32.xlu0 %v4476, 64
    %v4493 = vpop.permute.xlu0 %4492
    %4494 = vrot.lane.b32.xlu0 %v4477, 64
    %v4495 = vpop.permute.xlu0 %4494
    %4496 = vrot.lane.b32.xlu0 %v4478, 64
    %v4497 = vpop.permute.xlu0 %4496
    %4498 = vrot.lane.b32.xlu0 %v4479, 64
    %v4499 = vpop.permute.xlu0 %4498
    %4500 = vrot.lane.b32.xlu0 %v4480, 64
    %v4501 = vpop.permute.xlu0 %4500
    %4502 = vrot.lane.b32.xlu0 %v4481, 64
    %v4503 = vpop.permute.xlu0 %4502
    %4504 = vrot.lane.b32.xlu0 %v4482, 64
    %v4505 = vpop.permute.xlu0 %4504
    %4506 = vrot.lane.b32.xlu0 %v4483, 64
    %v4507 = vpop.permute.xlu0 %4506
    %v4516 = vmax.f32 %v4476, %v4493
    %v4517 = vmax.f32 %v4477, %v4495
    %v4518 = vmax.f32 %v4478, %v4497
    %v4519 = vmax.f32 %v4479, %v4499
    %v4520 = vmax.f32 %v4480, %v4501
    %v4521 = vmax.f32 %v4481, %v4503
    %v4522 = vmax.f32 %v4482, %v4505
    %v4523 = vmax.f32 %v4483, %v4507
    %v4524 = vpack.c.bf16 %v4516, %v4516
    %v4525 = vpack.c.bf16 %v4517, %v4517
    %v4526 = vpack.c.bf16 %v4518, %v4518
    %v4527 = vpack.c.bf16 %v4519, %v4519
    %v4528 = vpack.c.bf16 %v4520, %v4520
    %v4529 = vpack.c.bf16 %v4521, %v4521
    %v4530 = vpack.c.bf16 %v4522, %v4522
    %v4531 = vpack.c.bf16 %v4523, %v4523
    %v4541 = vunpack.c.l.s4 1966171168
    %v4542 = vunpack.c.0.s8 %v4541
    %v4543 = vlaneseq
    %v4544 = vshrl.u32 %v4543, 7
    %v4545 = vsub.s32 %v4542, %v4544
    %v4546 = vrot.slane %v4524, %v4545
    %v4547 = vcombine.high %v4546, %v4546
    %v4549 = vunpack.c.l.s4 1966171168
    %v4550 = vunpack.c.0.s8 %v4549
    %v4551 = vlaneseq
    %v4552 = vshrl.u32 %v4551, 7
    %v4553 = vsub.s32 %v4550, %v4552
    %v4554 = vrot.slane %v4546, %v4553
    %v4556 = vunpack.c.l.s4 1966171168
    %v4557 = vunpack.c.0.s8 %v4556
    %v4558 = vlaneseq
    %v4559 = vshrl.u32 %v4558, 7
    %v4560 = vsub.s32 %v4557, %v4559
    %v4561 = vrot.slane %v4547, %v4560
    %v4562 = vcombine.high %v4554, %v4554
    %v4563 = vcombine.high %v4561, %v4561
    %v4565 = vunpack.c.l.s4 1966171168
    %v4566 = vunpack.c.0.s8 %v4565
    %v4567 = vlaneseq
    %v4568 = vshrl.u32 %v4567, 7
    %v4569 = vsub.s32 %v4566, %v4568
    %v4570 = vrot.slane %v4525, %v4569
    %v4571 = vcombine.high %v4570, %v4570
    %v4573 = vunpack.c.l.s4 1966171168
    %v4574 = vunpack.c.0.s8 %v4573
    %v4575 = vlaneseq
    %v4576 = vshrl.u32 %v4575, 7
    %v4577 = vsub.s32 %v4574, %v4576
    %v4578 = vrot.slane %v4570, %v4577
    %v4580 = vunpack.c.l.s4 1966171168
    %v4581 = vunpack.c.0.s8 %v4580
    %v4582 = vlaneseq
    %v4583 = vshrl.u32 %v4582, 7
    %v4584 = vsub.s32 %v4581, %v4583
    %v4585 = vrot.slane %v4571, %v4584
    %v4586 = vcombine.high %v4578, %v4578
    %v4587 = vcombine.high %v4585, %v4585
    %v4589 = vunpack.c.l.s4 1966171168
    %v4590 = vunpack.c.0.s8 %v4589
    %v4591 = vlaneseq
    %v4592 = vshrl.u32 %v4591, 7
    %v4593 = vsub.s32 %v4590, %v4592
    %v4594 = vrot.slane %v4526, %v4593
    %v4595 = vcombine.high %v4594, %v4594
    %v4597 = vunpack.c.l.s4 1966171168
    %v4598 = vunpack.c.0.s8 %v4597
    %v4599 = vlaneseq
    %v4600 = vshrl.u32 %v4599, 7
    %v4601 = vsub.s32 %v4598, %v4600
    %v4602 = vrot.slane %v4594, %v4601
    %v4604 = vunpack.c.l.s4 1966171168
    %v4605 = vunpack.c.0.s8 %v4604
    %v4606 = vlaneseq
    %v4607 = vshrl.u32 %v4606, 7
    %v4608 = vsub.s32 %v4605, %v4607
    %v4609 = vrot.slane %v4595, %v4608
    %v4610 = vcombine.high %v4602, %v4602
    %v4611 = vcombine.high %v4609, %v4609
    %v4613 = vunpack.c.l.s4 1966171168
    %v4614 = vunpack.c.0.s8 %v4613
    %v4615 = vlaneseq
    %v4616 = vshrl.u32 %v4615, 7
    %v4617 = vsub.s32 %v4614, %v4616
    %v4618 = vrot.slane %v4527, %v4617
    %v4619 = vcombine.high %v4618, %v4618
    %v4621 = vunpack.c.l.s4 1966171168
    %v4622 = vunpack.c.0.s8 %v4621
    %v4623 = vlaneseq
    %v4624 = vshrl.u32 %v4623, 7
    %v4625 = vsub.s32 %v4622, %v4624
    %v4626 = vrot.slane %v4618, %v4625
    %v4628 = vunpack.c.l.s4 1966171168
    %v4629 = vunpack.c.0.s8 %v4628
    %v4630 = vlaneseq
    %v4631 = vshrl.u32 %v4630, 7
    %v4632 = vsub.s32 %v4629, %v4631
    %v4633 = vrot.slane %v4619, %v4632
    %v4634 = vcombine.high %v4626, %v4626
    %v4635 = vcombine.high %v4633, %v4633
    %v4637 = vunpack.c.l.s4 1966171168
    %v4638 = vunpack.c.0.s8 %v4637
    %v4639 = vlaneseq
    %v4640 = vshrl.u32 %v4639, 7
    %v4641 = vsub.s32 %v4638, %v4640
    %v4642 = vrot.slane %v4528, %v4641
    %v4643 = vcombine.high %v4642, %v4642
    %v4645 = vunpack.c.l.s4 1966171168
    %v4646 = vunpack.c.0.s8 %v4645
    %v4647 = vlaneseq
    %v4648 = vshrl.u32 %v4647, 7
    %v4649 = vsub.s32 %v4646, %v4648
    %v4650 = vrot.slane %v4642, %v4649
    %v4652 = vunpack.c.l.s4 1966171168
    %v4653 = vunpack.c.0.s8 %v4652
    %v4654 = vlaneseq
    %v4655 = vshrl.u32 %v4654, 7
    %v4656 = vsub.s32 %v4653, %v4655
    %v4657 = vrot.slane %v4643, %v4656
    %v4658 = vcombine.high %v4650, %v4650
    %v4659 = vcombine.high %v4657, %v4657
    %v4661 = vunpack.c.l.s4 1966171168
    %v4662 = vunpack.c.0.s8 %v4661
    %v4663 = vlaneseq
    %v4664 = vshrl.u32 %v4663, 7
    %v4665 = vsub.s32 %v4662, %v4664
    %v4666 = vrot.slane %v4529, %v4665
    %v4667 = vcombine.high %v4666, %v4666
    %v4669 = vunpack.c.l.s4 1966171168
    %v4670 = vunpack.c.0.s8 %v4669
    %v4671 = vlaneseq
    %v4672 = vshrl.u32 %v4671, 7
    %v4673 = vsub.s32 %v4670, %v4672
    %v4674 = vrot.slane %v4666, %v4673
    %v4676 = vunpack.c.l.s4 1966171168
    %v4677 = vunpack.c.0.s8 %v4676
    %v4678 = vlaneseq
    %v4679 = vshrl.u32 %v4678, 7
    %v4680 = vsub.s32 %v4677, %v4679
    %v4681 = vrot.slane %v4667, %v4680
    %v4682 = vcombine.high %v4674, %v4674
    %v4683 = vcombine.high %v4681, %v4681
    %v4685 = vunpack.c.l.s4 1966171168
    %v4686 = vunpack.c.0.s8 %v4685
    %v4687 = vlaneseq
    %v4688 = vshrl.u32 %v4687, 7
    %v4689 = vsub.s32 %v4686, %v4688
    %v4690 = vrot.slane %v4530, %v4689
    %v4691 = vcombine.high %v4690, %v4690
    %v4693 = vunpack.c.l.s4 1966171168
    %v4694 = vunpack.c.0.s8 %v4693
    %v4695 = vlaneseq
    %v4696 = vshrl.u32 %v4695, 7
    %v4697 = vsub.s32 %v4694, %v4696
    %v4698 = vrot.slane %v4690, %v4697
    %v4700 = vunpack.c.l.s4 1966171168
    %v4701 = vunpack.c.0.s8 %v4700
    %v4702 = vlaneseq
    %v4703 = vshrl.u32 %v4702, 7
    %v4704 = vsub.s32 %v4701, %v4703
    %v4705 = vrot.slane %v4691, %v4704
    %v4706 = vcombine.high %v4698, %v4698
    %v4707 = vcombine.high %v4705, %v4705
    %v4709 = vunpack.c.l.s4 1966171168
    %v4710 = vunpack.c.0.s8 %v4709
    %v4711 = vlaneseq
    %v4712 = vshrl.u32 %v4711, 7
    %v4713 = vsub.s32 %v4710, %v4712
    %v4714 = vrot.slane %v4531, %v4713
    %v4715 = vcombine.high %v4714, %v4714
    %v4717 = vunpack.c.l.s4 1966171168
    %v4718 = vunpack.c.0.s8 %v4717
    %v4719 = vlaneseq
    %v4720 = vshrl.u32 %v4719, 7
    %v4721 = vsub.s32 %v4718, %v4720
    %v4722 = vrot.slane %v4714, %v4721
    %v4724 = vunpack.c.l.s4 1966171168
    %v4725 = vunpack.c.0.s8 %v4724
    %v4726 = vlaneseq
    %v4727 = vshrl.u32 %v4726, 7
    %v4728 = vsub.s32 %v4725, %v4727
    %v4729 = vrot.slane %v4715, %v4728
    %v4730 = vcombine.high %v4722, %v4722
    %v4731 = vcombine.high %v4729, %v4729
    %v4732 = vunpack.i.l.s16 %v4554
    %v4733 = vunpack.i.h.s16 %v4554
    %v4734 = vunpack.i.l.s16 %v4561
    %v4735 = vunpack.i.h.s16 %v4561
    %v4736 = vunpack.i.l.s16 %v4562
    %v4737 = vunpack.i.h.s16 %v4562
    %v4738 = vunpack.i.l.s16 %v4563
    %v4739 = vunpack.i.l.s16 %v4578
    %v4740 = vunpack.i.h.s16 %v4578
    %v4741 = vunpack.i.l.s16 %v4585
    %v4742 = vunpack.i.h.s16 %v4585
    %v4743 = vunpack.i.l.s16 %v4586
    %v4744 = vunpack.i.h.s16 %v4586
    %v4745 = vunpack.i.l.s16 %v4587
    %v4746 = vunpack.i.l.s16 %v4602
    %v4747 = vunpack.i.h.s16 %v4602
    %v4748 = vunpack.i.l.s16 %v4609
    %v4749 = vunpack.i.h.s16 %v4609
    %v4750 = vunpack.i.l.s16 %v4610
    %v4751 = vunpack.i.h.s16 %v4610
    %v4752 = vunpack.i.l.s16 %v4611
    %v4753 = vunpack.i.l.s16 %v4626
    %v4754 = vunpack.i.h.s16 %v4626
    %v4755 = vunpack.i.l.s16 %v4633
    %v4756 = vunpack.i.h.s16 %v4633
    %v4757 = vunpack.i.l.s16 %v4634
    %v4758 = vunpack.i.h.s16 %v4634
    %v4759 = vunpack.i.l.s16 %v4635
    %v4760 = vunpack.i.l.s16 %v4650
    %v4761 = vunpack.i.h.s16 %v4650
    %v4762 = vunpack.i.l.s16 %v4657
    %v4763 = vunpack.i.h.s16 %v4657
    %v4764 = vunpack.i.l.s16 %v4658
    %v4765 = vunpack.i.h.s16 %v4658
    %v4766 = vunpack.i.l.s16 %v4659
    %v4767 = vunpack.i.l.s16 %v4674
    %v4768 = vunpack.i.h.s16 %v4674
    %v4769 = vunpack.i.l.s16 %v4681
    %v4770 = vunpack.i.h.s16 %v4681
    %v4771 = vunpack.i.l.s16 %v4682
    %v4772 = vunpack.i.h.s16 %v4682
    %v4773 = vunpack.i.l.s16 %v4683
    %v4774 = vunpack.i.l.s16 %v4698
    %v4775 = vunpack.i.h.s16 %v4698
    %v4776 = vunpack.i.l.s16 %v4705
    %v4777 = vunpack.i.h.s16 %v4705
    %v4778 = vunpack.i.l.s16 %v4706
    %v4779 = vunpack.i.h.s16 %v4706
    %v4780 = vunpack.i.l.s16 %v4707
    %v4781 = vunpack.i.l.s16 %v4722
    %v4782 = vunpack.i.h.s16 %v4722
    %v4783 = vunpack.i.l.s16 %v4729
    %v4784 = vunpack.i.h.s16 %v4729
    %v4785 = vunpack.i.l.s16 %v4730
    %v4786 = vunpack.i.h.s16 %v4730
    %v4787 = vunpack.i.l.s16 %v4731
    %v4788 = vld [vmem:[#allocation10] sm:$0xf]
    %v4789 = vld [vmem:[#allocation10 + $0x4] sm:$0xf]
    %v4790 = vld [vmem:[#allocation10 + $0x8] sm:$0xf]
    %v4791 = vld [vmem:[#allocation10 + $0xc] sm:$0xf]
    %v4792 = vld [vmem:[#allocation10 + $0x10] sm:$0xf]
    %v4793 = vld [vmem:[#allocation10 + $0x14] sm:$0xf]
    %v4794 = vld [vmem:[#allocation10 + $0x18] sm:$0xf]
    %v4795 = vld [vmem:[#allocation10 + $0x1c] sm:$0xf]
    %v4796 = vpack.i.b16 %v4733, %v4732
    %v4797 = vpack.i.b16 %v4735, %v4734
    %v4798 = vpack.i.b16 %v4737, %v4736
    %v4799 = vpack.i.b16 %v4739, %v4738
    %v4800 = vpack.i.b16 %v4741, %v4740
    %v4801 = vpack.i.b16 %v4743, %v4742
    %v4802 = vpack.i.b16 %v4745, %v4744
    %v4803 = vpack.i.b16 %v4747, %v4746
    %v4804 = vpack.i.b16 %v4749, %v4748
    %v4805 = vpack.i.b16 %v4751, %v4750
    %v4806 = vpack.i.b16 %v4753, %v4752
    %v4807 = vpack.i.b16 %v4755, %v4754
    %v4808 = vpack.i.b16 %v4757, %v4756
    %v4809 = vpack.i.b16 %v4759, %v4758
    %v4810 = vpack.i.b16 %v4761, %v4760
    %v4811 = vpack.i.b16 %v4763, %v4762
    %v4812 = vpack.i.b16 %v4765, %v4764
    %v4813 = vpack.i.b16 %v4767, %v4766
    %v4814 = vpack.i.b16 %v4769, %v4768
    %v4815 = vpack.i.b16 %v4771, %v4770
    %v4816 = vpack.i.b16 %v4773, %v4772
    %v4817 = vpack.i.b16 %v4775, %v4774
    %v4818 = vpack.i.b16 %v4777, %v4776
    %v4819 = vpack.i.b16 %v4779, %v4778
    %v4820 = vpack.i.b16 %v4781, %v4780
    %v4821 = vpack.i.b16 %v4783, %v4782
    %v4822 = vpack.i.b16 %v4785, %v4784
    %v4823 = vpack.i.b16 %v4787, %v4786
    %v4824 = vcombine.low %v4796, %v4797
    %v4825 = vcombine.low %v4798, %v4799
    %v4826 = vcombine.low %v4800, %v4801
    %v4827 = vcombine.low %v4802, %v4803
    %v4829 = vunpack.c.l.s4 1966171168
    %v4830 = vunpack.c.0.s8 %v4829
    %v4831 = vlaneseq
    %v4832 = vshrl.u32 %v4831, 7
    %v4833 = vsub.s32 %v4830, %v4832
    %v4834 = vrot.slane %v4824, %v4833
    %v4836 = vunpack.c.l.s4 1966171168
    %v4837 = vunpack.c.0.s8 %v4836
    %v4838 = vlaneseq
    %v4839 = vshrl.u32 %v4838, 7
    %v4840 = vsub.s32 %v4837, %v4839
    %v4841 = vrot.slane %v4825, %v4840
    %v4843 = vunpack.c.l.s4 1966171168
    %v4844 = vunpack.c.0.s8 %v4843
    %v4845 = vlaneseq
    %v4846 = vshrl.u32 %v4845, 7
    %v4847 = vsub.s32 %v4844, %v4846
    %v4848 = vrot.slane %v4826, %v4847
    %v4850 = vunpack.c.l.s4 1966171168
    %v4851 = vunpack.c.0.s8 %v4850
    %v4852 = vlaneseq
    %v4853 = vshrl.u32 %v4852, 7
    %v4854 = vsub.s32 %v4851, %v4853
    %v4855 = vrot.slane %v4827, %v4854
    %v4856 = vcombine.low %v4834, %v4841
    %v4857 = vcombine.low %v4848, %v4855
    %v4859 = vunpack.c.l.s4 1966171168
    %v4860 = vunpack.c.0.s8 %v4859
    %v4861 = vlaneseq
    %v4862 = vshrl.u32 %v4861, 7
    %v4863 = vsub.s32 %v4860, %v4862
    %v4864 = vrot.slane %v4856, %v4863
    %v4866 = vunpack.c.l.s4 1966171168
    %v4867 = vunpack.c.0.s8 %v4866
    %v4868 = vlaneseq
    %v4869 = vshrl.u32 %v4868, 7
    %v4870 = vsub.s32 %v4867, %v4869
    %v4871 = vrot.slane %v4857, %v4870
    %v4872 = vcombine.low %v4864, %v4871
    %v4873 = vcombine.low %v4804, %v4805
    %v4874 = vcombine.low %v4806, %v4807
    %v4875 = vcombine.low %v4808, %v4809
    %v4876 = vcombine.low %v4810, %v4811
    %v4878 = vunpack.c.l.s4 1966171168
    %v4879 = vunpack.c.0.s8 %v4878
    %v4880 = vlaneseq
    %v4881 = vshrl.u32 %v4880, 7
    %v4882 = vsub.s32 %v4879, %v4881
    %v4883 = vrot.slane %v4873, %v4882
    %v4885 = vunpack.c.l.s4 1966171168
    %v4886 = vunpack.c.0.s8 %v4885
    %v4887 = vlaneseq
    %v4888 = vshrl.u32 %v4887, 7
    %v4889 = vsub.s32 %v4886, %v4888
    %v4890 = vrot.slane %v4874, %v4889
    %v4892 = vunpack.c.l.s4 1966171168
    %v4893 = vunpack.c.0.s8 %v4892
    %v4894 = vlaneseq
    %v4895 = vshrl.u32 %v4894, 7
    %v4896 = vsub.s32 %v4893, %v4895
    %v4897 = vrot.slane %v4875, %v4896
    %v4899 = vunpack.c.l.s4 1966171168
    %v4900 = vunpack.c.0.s8 %v4899
    %v4901 = vlaneseq
    %v4902 = vshrl.u32 %v4901, 7
    %v4903 = vsub.s32 %v4900, %v4902
    %v4904 = vrot.slane %v4876, %v4903
    %v4905 = vcombine.low %v4883, %v4890
    %v4906 = vcombine.low %v4897, %v4904
    %v4908 = vunpack.c.l.s4 1966171168
    %v4909 = vunpack.c.0.s8 %v4908
    %v4910 = vlaneseq
    %v4911 = vshrl.u32 %v4910, 7
    %v4912 = vsub.s32 %v4909, %v4911
    %v4913 = vrot.slane %v4905, %v4912
    %v4915 = vunpack.c.l.s4 1966171168
    %v4916 = vunpack.c.0.s8 %v4915
    %v4917 = vlaneseq
    %v4918 = vshrl.u32 %v4917, 7
    %v4919 = vsub.s32 %v4916, %v4918
    %v4920 = vrot.slane %v4906, %v4919
    %v4921 = vcombine.low %v4913, %v4920
    %v4922 = vcombine.low %v4812, %v4813
    %v4923 = vcombine.low %v4814, %v4815
    %v4924 = vcombine.low %v4816, %v4817
    %v4925 = vcombine.low %v4818, %v4819
    %v4927 = vunpack.c.l.s4 1966171168
    %v4928 = vunpack.c.0.s8 %v4927
    %v4929 = vlaneseq
    %v4930 = vshrl.u32 %v4929, 7
    %v4931 = vsub.s32 %v4928, %v4930
    %v4932 = vrot.slane %v4922, %v4931
    %v4934 = vunpack.c.l.s4 1966171168
    %v4935 = vunpack.c.0.s8 %v4934
    %v4936 = vlaneseq
    %v4937 = vshrl.u32 %v4936, 7
    %v4938 = vsub.s32 %v4935, %v4937
    %v4939 = vrot.slane %v4923, %v4938
    %v4941 = vunpack.c.l.s4 1966171168
    %v4942 = vunpack.c.0.s8 %v4941
    %v4943 = vlaneseq
    %v4944 = vshrl.u32 %v4943, 7
    %v4945 = vsub.s32 %v4942, %v4944
    %v4946 = vrot.slane %v4924, %v4945
    %v4948 = vunpack.c.l.s4 1966171168
    %v4949 = vunpack.c.0.s8 %v4948
    %v4950 = vlaneseq
    %v4951 = vshrl.u32 %v4950, 7
    %v4952 = vsub.s32 %v4949, %v4951
    %v4953 = vrot.slane %v4925, %v4952
    %v4954 = vcombine.low %v4932, %v4939
    %v4955 = vcombine.low %v4946, %v4953
    %v4957 = vunpack.c.l.s4 1966171168
    %v4958 = vunpack.c.0.s8 %v4957
    %v4959 = vlaneseq
    %v4960 = vshrl.u32 %v4959, 7
    %v4961 = vsub.s32 %v4958, %v4960
    %v4962 = vrot.slane %v4954, %v4961
    %v4964 = vunpack.c.l.s4 1966171168
    %v4965 = vunpack.c.0.s8 %v4964
    %v4966 = vlaneseq
    %v4967 = vshrl.u32 %v4966, 7
    %v4968 = vsub.s32 %v4965, %v4967
    %v4969 = vrot.slane %v4955, %v4968
    %v4970 = vcombine.low %v4962, %v4969
    %v4971 = vcombine.low %v4820, %v4821
    %v4972 = vcombine.low %v4822, %v4823
    %v4974 = vunpack.c.l.s4 1966171168
    %v4975 = vunpack.c.0.s8 %v4974
    %v4976 = vlaneseq
    %v4977 = vshrl.u32 %v4976, 7
    %v4978 = vsub.s32 %v4975, %v4977
    %v4979 = vrot.slane %v4971, %v4978
    %v4981 = vunpack.c.l.s4 1966171168
    %v4982 = vunpack.c.0.s8 %v4981
    %v4983 = vlaneseq
    %v4984 = vshrl.u32 %v4983, 7
    %v4985 = vsub.s32 %v4982, %v4984
    %v4986 = vrot.slane %v4972, %v4985
    %v4987 = vcombine.low %v4979, %v4986
    %v4989 = vunpack.c.l.s4 1966171168
    %v4990 = vunpack.c.0.s8 %v4989
    %v4991 = vlaneseq
    %v4992 = vshrl.u32 %v4991, 7
    %v4993 = vsub.s32 %v4990, %v4992
    %v4994 = vrot.slane %v4987, %v4993
    %v5003 = vunpack.c.l.b16 %v4788
    %v5004 = vunpack.c.l.b16 %v4789
    %v5005 = vunpack.c.l.b16 %v4790
    %v5006 = vunpack.c.l.b16 %v4791
    %v5007 = vunpack.c.l.b16 %v4792
    %v5008 = vunpack.c.l.b16 %v4793
    %v5009 = vunpack.c.l.b16 %v4794
    %v5010 = vunpack.c.l.b16 %v4795
    %v5011 = vpack.c.b16 %v5004, %v5003
    %v5012 = vpack.c.b16 %v5006, %v5005
    %v5013 = vpack.c.b16 %v5008, %v5007
    %v5014 = vpack.c.b16 %v5010, %v5009
    %vm5019 = vcmask 523264
    %v5021 = vsel %vm5019, %v4872, 0
    %v5024 = vsel %vm5019, %v4921, 0
    %v5027 = vsel %vm5019, %v4970, 0
    %v5030 = vsel %vm5019, %v4994, 0
    %5032 = vmatprep.subr.bf16.mxu0 0
    %5033 = vmatpush1.bf16.msra.mxu0 %v5011
    %5034 = vmatprep.subr.bf16.mxu0 0
    %5035 = vmatpush1.bf16.msra.mxu0 %v5012
    %5036 = vmatprep.subr.bf16.mxu0 0
    %5037 = vmatpush1.bf16.msra.mxu0 %v5013
    %5038 = vmatprep.subr.bf16.mxu0 0
    %5039 = vmatpush1.bf16.msra.mxu0 %v5014
    %5040 = vmatprep.subr.bf16.mxu0 0
    %5041 = vmatpush1.bf16.msra.mxu0 0
    %5042 = vmatprep.subr.bf16.mxu0 0
    %5043 = vmatpush1.bf16.msra.mxu0 0
    %5044 = vmatprep.subr.bf16.mxu0 0
    %5045 = vmatpush1.bf16.msra.mxu0 0
    %5046 = vmatprep.subr.bf16.mxu0 0
    %5047 = vmatpush1.bf16.msra.mxu0 0
    %5048 = vmatprep.subr.bf16.mxu0 0
    %5049 = vmatpush1.bf16.msra.mxu0 0
    %5050 = vmatprep.subr.bf16.mxu0 0
    %5051 = vmatpush1.bf16.msra.mxu0 0
    %5052 = vmatprep.subr.bf16.mxu0 0
    %5053 = vmatpush1.bf16.msra.mxu0 0
    %5054 = vmatprep.subr.bf16.mxu0 0
    %5055 = vmatpush1.bf16.msra.mxu0 0
    %5056 = vmatprep.subr.bf16.mxu0 0
    %5057 = vmatpush1.bf16.msra.mxu0 0
    %5058 = vmatprep.subr.bf16.mxu0 0
    %5059 = vmatpush1.bf16.msra.mxu0 0
    %5060 = vmatprep.subr.bf16.mxu0 0
    %5061 = vmatpush1.bf16.msra.mxu0 0
    %5062 = vmatprep.subr.bf16.mxu0 0
    %5063 = vmatpush1.bf16.msra.mxu0 0
    %5064 = vmatprep.mubr.bf16.mxu0 0
    %5065 = vmatmul.mubr.bf16.gmra.mrb[0].mxu0 %v5021
    %v5066 = vpop.f32.mrb[0].mxu0
    %v5067 = vadd.f32 0.0, %v5066
    %v5068 = vpop.f32.mrb[0].mxu0
    %v5069 = vpop.f32.mrb[0].mxu0
    %v5070 = vadd.f32 0.0, %v5069
    %v5071 = vpop.f32.mrb[0].mxu0
    %5072 = vmatprep.mubr.bf16.mxu0 0
    %5073 = vmatmul.mubr.bf16.gmra.mrb[0].mxu0 %v5024
    %v5074 = vpop.f32.mrb[0].mxu0
    %v5075 = vadd.f32 0.0, %v5074
    %v5076 = vpop.f32.mrb[0].mxu0
    %v5077 = vpop.f32.mrb[0].mxu0
    %v5078 = vadd.f32 0.0, %v5077
    %v5079 = vpop.f32.mrb[0].mxu0
    %5080 = vmatprep.mubr.bf16.mxu0 0
    %5081 = vmatmul.mubr.bf16.gmra.mrb[0].mxu0 %v5027
    %v5082 = vpop.f32.mrb[0].mxu0
    %v5083 = vadd.f32 0.0, %v5082
    %v5084 = vpop.f32.mrb[0].mxu0
    %v5085 = vpop.f32.mrb[0].mxu0
    %v5086 = vadd.f32 0.0, %v5085
    %v5087 = vpop.f32.mrb[0].mxu0
    %5088 = vmatprep.mubr.bf16.mxu0 0
    %5089 = vmatmul.mubr.bf16.gmra.mrb[0].mxu0 %v5030
    %v5090 = vpop.f32.mrb[0].mxu0
    %v5091 = vadd.f32 0.0, %v5090
    %v5092 = vpop.f32.mrb[0].mxu0
    %v5093 = vpop.f32.mrb[0].mxu0
    %v5094 = vpop.f32.mrb[0].mxu0
    %5095 = vdwg.mxu0
    %v5103 = vcombine.high %v5067, %v5067
    %v5105 = vunpack.c.l.s4 1966171168
    %v5106 = vunpack.c.0.s8 %v5105
    %v5107 = vlaneseq
    %v5108 = vshrl.u32 %v5107, 7
    %v5109 = vsub.s32 %v5106, %v5108
    %v5110 = vrot.slane %v5067, %v5109
    %v5112 = vunpack.c.l.s4 1966171168
    %v5113 = vunpack.c.0.s8 %v5112
    %v5114 = vlaneseq
    %v5115 = vshrl.u32 %v5114, 7
    %v5116 = vsub.s32 %v5113, %v5115
    %v5117 = vrot.slane %v5103, %v5116
    %v5118 = vcombine.high %v5110, %v5110
    %v5119 = vcombine.high %v5117, %v5117
    %v5121 = vunpack.c.l.s4 1966171168
    %v5122 = vunpack.c.0.s8 %v5121
    %v5123 = vlaneseq
    %v5124 = vshrl.u32 %v5123, 7
    %v5125 = vsub.s32 %v5122, %v5124
    %v5126 = vrot.slane %v5110, %v5125
    %v5128 = vunpack.c.l.s4 1966171168
    %v5129 = vunpack.c.0.s8 %v5128
    %v5130 = vlaneseq
    %v5131 = vshrl.u32 %v5130, 7
    %v5132 = vsub.s32 %v5129, %v5131
    %v5133 = vrot.slane %v5117, %v5132
    %v5135 = vunpack.c.l.s4 1966171168
    %v5136 = vunpack.c.0.s8 %v5135
    %v5137 = vlaneseq
    %v5138 = vshrl.u32 %v5137, 7
    %v5139 = vsub.s32 %v5136, %v5138
    %v5140 = vrot.slane %v5118, %v5139
    %v5142 = vunpack.c.l.s4 1966171168
    %v5143 = vunpack.c.0.s8 %v5142
    %v5144 = vlaneseq
    %v5145 = vshrl.u32 %v5144, 7
    %v5146 = vsub.s32 %v5143, %v5145
    %v5147 = vrot.slane %v5119, %v5146
    %v5148 = vcombine.high %v5126, %v5126
    %v5149 = vcombine.high %v5140, %v5140
    %v5150 = vcombine.high %v5147, %v5147
    %v5151 = vcombine.high %v5070, %v5070
    %v5153 = vunpack.c.l.s4 1966171168
    %v5154 = vunpack.c.0.s8 %v5153
    %v5155 = vlaneseq
    %v5156 = vshrl.u32 %v5155, 7
    %v5157 = vsub.s32 %v5154, %v5156
    %v5158 = vrot.slane %v5070, %v5157
    %v5160 = vunpack.c.l.s4 1966171168
    %v5161 = vunpack.c.0.s8 %v5160
    %v5162 = vlaneseq
    %v5163 = vshrl.u32 %v5162, 7
    %v5164 = vsub.s32 %v5161, %v5163
    %v5165 = vrot.slane %v5151, %v5164
    %v5166 = vcombine.high %v5158, %v5158
    %v5167 = vcombine.high %v5165, %v5165
    %v5169 = vunpack.c.l.s4 1966171168
    %v5170 = vunpack.c.0.s8 %v5169
    %v5171 = vlaneseq
    %v5172 = vshrl.u32 %v5171, 7
    %v5173 = vsub.s32 %v5170, %v5172
    %v5174 = vrot.slane %v5158, %v5173
    %v5176 = vunpack.c.l.s4 1966171168
    %v5177 = vunpack.c.0.s8 %v5176
    %v5178 = vlaneseq
    %v5179 = vshrl.u32 %v5178, 7
    %v5180 = vsub.s32 %v5177, %v5179
    %v5181 = vrot.slane %v5165, %v5180
    %v5183 = vunpack.c.l.s4 1966171168
    %v5184 = vunpack.c.0.s8 %v5183
    %v5185 = vlaneseq
    %v5186 = vshrl.u32 %v5185, 7
    %v5187 = vsub.s32 %v5184, %v5186
    %v5188 = vrot.slane %v5166, %v5187
    %v5190 = vunpack.c.l.s4 1966171168
    %v5191 = vunpack.c.0.s8 %v5190
    %v5192 = vlaneseq
    %v5193 = vshrl.u32 %v5192, 7
    %v5194 = vsub.s32 %v5191, %v5193
    %v5195 = vrot.slane %v5167, %v5194
    %v5196 = vcombine.high %v5174, %v5174
    %v5197 = vcombine.high %v5181, %v5181
    %v5198 = vcombine.high %v5188, %v5188
    %v5199 = vcombine.high %v5195, %v5195
    %v5200 = vcombine.high %v5075, %v5075
    %v5202 = vunpack.c.l.s4 1966171168
    %v5203 = vunpack.c.0.s8 %v5202
    %v5204 = vlaneseq
    %v5205 = vshrl.u32 %v5204, 7
    %v5206 = vsub.s32 %v5203, %v5205
    %v5207 = vrot.slane %v5075, %v5206
    %v5209 = vunpack.c.l.s4 1966171168
    %v5210 = vunpack.c.0.s8 %v5209
    %v5211 = vlaneseq
    %v5212 = vshrl.u32 %v5211, 7
    %v5213 = vsub.s32 %v5210, %v5212
    %v5214 = vrot.slane %v5200, %v5213
    %v5215 = vcombine.high %v5207, %v5207
    %v5216 = vcombine.high %v5214, %v5214
    %v5218 = vunpack.c.l.s4 1966171168
    %v5219 = vunpack.c.0.s8 %v5218
    %v5220 = vlaneseq
    %v5221 = vshrl.u32 %v5220, 7
    %v5222 = vsub.s32 %v5219, %v5221
    %v5223 = vrot.slane %v5207, %v5222
    %v5225 = vunpack.c.l.s4 1966171168
    %v5226 = vunpack.c.0.s8 %v5225
    %v5227 = vlaneseq
    %v5228 = vshrl.u32 %v5227, 7
    %v5229 = vsub.s32 %v5226, %v5228
    %v5230 = vrot.slane %v5214, %v5229
    %v5232 = vunpack.c.l.s4 1966171168
    %v5233 = vunpack.c.0.s8 %v5232
    %v5234 = vlaneseq
    %v5235 = vshrl.u32 %v5234, 7
    %v5236 = vsub.s32 %v5233, %v5235
    %v5237 = vrot.slane %v5215, %v5236
    %v5239 = vunpack.c.l.s4 1966171168
    %v5240 = vunpack.c.0.s8 %v5239
    %v5241 = vlaneseq
    %v5242 = vshrl.u32 %v5241, 7
    %v5243 = vsub.s32 %v5240, %v5242
    %v5244 = vrot.slane %v5216, %v5243
    %v5245 = vcombine.high %v5223, %v5223
    %v5246 = vcombine.high %v5230, %v5230
    %v5247 = vcombine.high %v5244, %v5244
    %v5248 = vcombine.high %v5078, %v5078
    %v5250 = vunpack.c.l.s4 1966171168
    %v5251 = vunpack.c.0.s8 %v5250
    %v5252 = vlaneseq
    %v5253 = vshrl.u32 %v5252, 7
    %v5254 = vsub.s32 %v5251, %v5253
    %v5255 = vrot.slane %v5078, %v5254
    %v5257 = vunpack.c.l.s4 1966171168
    %v5258 = vunpack.c.0.s8 %v5257
    %v5259 = vlaneseq
    %v5260 = vshrl.u32 %v5259, 7
    %v5261 = vsub.s32 %v5258, %v5260
    %v5262 = vrot.slane %v5248, %v5261
    %v5263 = vcombine.high %v5255, %v5255
    %v5264 = vcombine.high %v5262, %v5262
    %v5266 = vunpack.c.l.s4 1966171168
    %v5267 = vunpack.c.0.s8 %v5266
    %v5268 = vlaneseq
    %v5269 = vshrl.u32 %v5268, 7
    %v5270 = vsub.s32 %v5267, %v5269
    %v5271 = vrot.slane %v5255, %v5270
    %v5273 = vunpack.c.l.s4 1966171168
    %v5274 = vunpack.c.0.s8 %v5273
    %v5275 = vlaneseq
    %v5276 = vshrl.u32 %v5275, 7
    %v5277 = vsub.s32 %v5274, %v5276
    %v5278 = vrot.slane %v5262, %v5277
    %v5280 = vunpack.c.l.s4 1966171168
    %v5281 = vunpack.c.0.s8 %v5280
    %v5282 = vlaneseq
    %v5283 = vshrl.u32 %v5282, 7
    %v5284 = vsub.s32 %v5281, %v5283
    %v5285 = vrot.slane %v5263, %v5284
    %v5287 = vunpack.c.l.s4 1966171168
    %v5288 = vunpack.c.0.s8 %v5287
    %v5289 = vlaneseq
    %v5290 = vshrl.u32 %v5289, 7
    %v5291 = vsub.s32 %v5288, %v5290
    %v5292 = vrot.slane %v5264, %v5291
    %v5293 = vcombine.high %v5278, %v5278
    %v5294 = vcombine.high %v5292, %v5292
    %v5295 = vcombine.high %v5083, %v5083
    %v5297 = vunpack.c.l.s4 1966171168
    %v5298 = vunpack.c.0.s8 %v5297
    %v5299 = vlaneseq
    %v5300 = vshrl.u32 %v5299, 7
    %v5301 = vsub.s32 %v5298, %v5300
    %v5302 = vrot.slane %v5083, %v5301
    %v5304 = vunpack.c.l.s4 1966171168
    %v5305 = vunpack.c.0.s8 %v5304
    %v5306 = vlaneseq
    %v5307 = vshrl.u32 %v5306, 7
    %v5308 = vsub.s32 %v5305, %v5307
    %v5309 = vrot.slane %v5295, %v5308
    %v5310 = vcombine.high %v5302, %v5302
    %v5311 = vcombine.high %v5309, %v5309
    %v5313 = vunpack.c.l.s4 1966171168
    %v5314 = vunpack.c.0.s8 %v5313
    %v5315 = vlaneseq
    %v5316 = vshrl.u32 %v5315, 7
    %v5317 = vsub.s32 %v5314, %v5316
    %v5318 = vrot.slane %v5302, %v5317
    %v5320 = vunpack.c.l.s4 1966171168
    %v5321 = vunpack.c.0.s8 %v5320
    %v5322 = vlaneseq
    %v5323 = vshrl.u32 %v5322, 7
    %v5324 = vsub.s32 %v5321, %v5323
    %v5325 = vrot.slane %v5309, %v5324
    %v5327 = vunpack.c.l.s4 1966171168
    %v5328 = vunpack.c.0.s8 %v5327
    %v5329 = vlaneseq
    %v5330 = vshrl.u32 %v5329, 7
    %v5331 = vsub.s32 %v5328, %v5330
    %v5332 = vrot.slane %v5310, %v5331
    %v5334 = vunpack.c.l.s4 1966171168
    %v5335 = vunpack.c.0.s8 %v5334
    %v5336 = vlaneseq
    %v5337 = vshrl.u32 %v5336, 7
    %v5338 = vsub.s32 %v5335, %v5337
    %v5339 = vrot.slane %v5311, %v5338
    %v5340 = vcombine.high %v5325, %v5325
    %v5341 = vcombine.high %v5332, %v5332
    %v5342 = vcombine.high %v5339, %v5339
    %v5343 = vcombine.high %v5086, %v5086
    %v5345 = vunpack.c.l.s4 1966171168
    %v5346 = vunpack.c.0.s8 %v5345
    %v5347 = vlaneseq
    %v5348 = vshrl.u32 %v5347, 7
    %v5349 = vsub.s32 %v5346, %v5348
    %v5350 = vrot.slane %v5086, %v5349
    %v5352 = vunpack.c.l.s4 1966171168
    %v5353 = vunpack.c.0.s8 %v5352
    %v5354 = vlaneseq
    %v5355 = vshrl.u32 %v5354, 7
    %v5356 = vsub.s32 %v5353, %v5355
    %v5357 = vrot.slane %v5343, %v5356
    %v5358 = vcombine.high %v5350, %v5350
    %v5359 = vcombine.high %v5357, %v5357
    %v5361 = vunpack.c.l.s4 1966171168
    %v5362 = vunpack.c.0.s8 %v5361
    %v5363 = vlaneseq
    %v5364 = vshrl.u32 %v5363, 7
    %v5365 = vsub.s32 %v5362, %v5364
    %v5366 = vrot.slane %v5350, %v5365
    %v5368 = vunpack.c.l.s4 1966171168
    %v5369 = vunpack.c.0.s8 %v5368
    %v5370 = vlaneseq
    %v5371 = vshrl.u32 %v5370, 7
    %v5372 = vsub.s32 %v5369, %v5371
    %v5373 = vrot.slane %v5357, %v5372
    %v5375 = vunpack.c.l.s4 1966171168
    %v5376 = vunpack.c.0.s8 %v5375
    %v5377 = vlaneseq
    %v5378 = vshrl.u32 %v5377, 7
    %v5379 = vsub.s32 %v5376, %v5378
    %v5380 = vrot.slane %v5358, %v5379
    %v5382 = vunpack.c.l.s4 1966171168
    %v5383 = vunpack.c.0.s8 %v5382
    %v5384 = vlaneseq
    %v5385 = vshrl.u32 %v5384, 7
    %v5386 = vsub.s32 %v5383, %v5385
    %v5387 = vrot.slane %v5359, %v5386
    %v5388 = vcombine.high %v5366, %v5366
    %v5389 = vcombine.high %v5373, %v5373
    %v5390 = vcombine.high %v5380, %v5380
    %v5391 = vcombine.high %v5091, %v5091
    %v5393 = vunpack.c.l.s4 1966171168
    %v5394 = vunpack.c.0.s8 %v5393
    %v5395 = vlaneseq
    %v5396 = vshrl.u32 %v5395, 7
    %v5397 = vsub.s32 %v5394, %v5396
    %v5398 = vrot.slane %v5091, %v5397
    %v5400 = vunpack.c.l.s4 1966171168
    %v5401 = vunpack.c.0.s8 %v5400
    %v5402 = vlaneseq
    %v5403 = vshrl.u32 %v5402, 7
    %v5404 = vsub.s32 %v5401, %v5403
    %v5405 = vrot.slane %v5391, %v5404
    %v5406 = vcombine.high %v5398, %v5398
    %v5407 = vcombine.high %v5405, %v5405
    %v5409 = vunpack.c.l.s4 1966171168
    %v5410 = vunpack.c.0.s8 %v5409
    %v5411 = vlaneseq
    %v5412 = vshrl.u32 %v5411, 7
    %v5413 = vsub.s32 %v5410, %v5412
    %v5414 = vrot.slane %v5398, %v5413
    %v5416 = vunpack.c.l.s4 1966171168
    %v5417 = vunpack.c.0.s8 %v5416
    %v5418 = vlaneseq
    %v5419 = vshrl.u32 %v5418, 7
    %v5420 = vsub.s32 %v5417, %v5419
    %v5421 = vrot.slane %v5405, %v5420
    %v5423 = vunpack.c.l.s4 1966171168
    %v5424 = vunpack.c.0.s8 %v5423
    %v5425 = vlaneseq
    %v5426 = vshrl.u32 %v5425, 7
    %v5427 = vsub.s32 %v5424, %v5426
    %v5428 = vrot.slane %v5406, %v5427
    %v5430 = vunpack.c.l.s4 1966171168
    %v5431 = vunpack.c.0.s8 %v5430
    %v5432 = vlaneseq
    %v5433 = vshrl.u32 %v5432, 7
    %v5434 = vsub.s32 %v5431, %v5433
    %v5435 = vrot.slane %v5407, %v5434
    %v5436 = vcombine.high %v5414, %v5414
    %v5437 = vcombine.high %v5428, %v5428
    %v5478 = vld [vmem:[#allocation10 + $0x20] sm:$0xf]
    %v5479 = vld [vmem:[#allocation10 + $0x24] sm:$0xf]
    %v5480 = vld [vmem:[#allocation10 + $0x28] sm:$0xf]
    %v5481 = vld [vmem:[#allocation10 + $0x2c] sm:$0xf]
    %v5482 = vld [vmem:[#allocation10 + $0x30] sm:$0xf]
    %v5483 = vld [vmem:[#allocation10 + $0x34] sm:$0xf]
    %v5484 = vld [vmem:[#allocation10 + $0x38] sm:$0xf]
    %v5485 = vld [vmem:[#allocation10 + $0x3c] sm:$0xf]
    %v5494 = vunpack.c.l.b16 %v5478
    %v5495 = vunpack.c.l.b16 %v5479
    %v5496 = vunpack.c.l.b16 %v5480
    %v5497 = vunpack.c.l.b16 %v5481
    %v5498 = vunpack.c.l.b16 %v5482
    %v5499 = vunpack.c.l.b16 %v5483
    %v5500 = vunpack.c.l.b16 %v5484
    %v5501 = vunpack.c.l.b16 %v5485
    %v5502 = vpack.c.b16 %v5495, %v5494
    %v5503 = vpack.c.b16 %v5497, %v5496
    %v5504 = vpack.c.b16 %v5499, %v5498
    %v5505 = vpack.c.b16 %v5501, %v5500
    %5510 = vmatprep.subr.bf16.mxu0 0
    %5511 = vmatpush1.bf16.msra.mxu0 %v5502
    %5512 = vmatprep.subr.bf16.mxu0 0
    %5513 = vmatpush1.bf16.msra.mxu0 %v5503
    %5514 = vmatprep.subr.bf16.mxu0 0
    %5515 = vmatpush1.bf16.msra.mxu0 %v5504
    %5516 = vmatprep.subr.bf16.mxu0 0
    %5517 = vmatpush1.bf16.msra.mxu0 %v5505
    %5518 = vmatprep.subr.bf16.mxu0 0
    %5519 = vmatpush1.bf16.msra.mxu0 0
    %5520 = vmatprep.subr.bf16.mxu0 0
    %5521 = vmatpush1.bf16.msra.mxu0 0
    %5522 = vmatprep.subr.bf16.mxu0 0
    %5523 = vmatpush1.bf16.msra.mxu0 0
    %5524 = vmatprep.subr.bf16.mxu0 0
    %5525 = vmatpush1.bf16.msra.mxu0 0
    %5526 = vmatprep.subr.bf16.mxu0 0
    %5527 = vmatpush1.bf16.msra.mxu0 0
    %5528 = vmatprep.subr.bf16.mxu0 0
    %5529 = vmatpush1.bf16.msra.mxu0 0
    %5530 = vmatprep.subr.bf16.mxu0 0
    %5531 = vmatpush1.bf16.msra.mxu0 0
    %5532 = vmatprep.subr.bf16.mxu0 0
    %5533 = vmatpush1.bf16.msra.mxu0 0
    %5534 = vmatprep.subr.bf16.mxu0 0
    %5535 = vmatpush1.bf16.msra.mxu0 0
    %5536 = vmatprep.subr.bf16.mxu0 0
    %5537 = vmatpush1.bf16.msra.mxu0 0
    %5538 = vmatprep.subr.bf16.mxu0 0
    %5539 = vmatpush1.bf16.msra.mxu0 0
    %5540 = vmatprep.subr.bf16.mxu0 0
    %5541 = vmatpush1.bf16.msra.mxu0 0
    %5542 = vmatprep.mubr.bf16.mxu0 0
    %5543 = vmatmul.mubr.bf16.gmra.mrb[0].mxu0 %v5021
    %v5544 = vpop.f32.mrb[0].mxu0
    %v5545 = vadd.f32 0.0, %v5544
    %v5546 = vpop.f32.mrb[0].mxu0
    %v5547 = vpop.f32.mrb[0].mxu0
    %v5548 = vadd.f32 0.0, %v5547
    %v5549 = vpop.f32.mrb[0].mxu0
    %5550 = vmatprep.mubr.bf16.mxu0 0
    %5551 = vmatmul.mubr.bf16.gmra.mrb[0].mxu0 %v5024
    %v5552 = vpop.f32.mrb[0].mxu0
    %v5553 = vadd.f32 0.0, %v5552
    %v5554 = vpop.f32.mrb[0].mxu0
    %v5555 = vpop.f32.mrb[0].mxu0
    %v5556 = vadd.f32 0.0, %v5555
    %v5557 = vpop.f32.mrb[0].mxu0
    %5558 = vmatprep.mubr.bf16.mxu0 0
    %5559 = vmatmul.mubr.bf16.gmra.mrb[0].mxu0 %v5027
    %v5560 = vpop.f32.mrb[0].mxu0
    %v5561 = vadd.f32 0.0, %v5560
    %v5562 = vpop.f32.mrb[0].mxu0
    %v5563 = vpop.f32.mrb[0].mxu0
    %v5564 = vadd.f32 0.0, %v5563
    %v5565 = vpop.f32.mrb[0].mxu0
    %5566 = vmatprep.mubr.bf16.mxu0 0
    %5567 = vmatmul.mubr.bf16.gmra.mrb[0].mxu0 %v5030
    %v5568 = vpop.f32.mrb[0].mxu0
    %v5569 = vadd.f32 0.0, %v5568
    %v5570 = vpop.f32.mrb[0].mxu0
    %v5571 = vpop.f32.mrb[0].mxu0
    %v5572 = vpop.f32.mrb[0].mxu0
    %5573 = vdwg.mxu0
    %v5581 = vcombine.high %v5545, %v5545
    %v5583 = vunpack.c.l.s4 1966171168
    %v5584 = vunpack.c.0.s8 %v5583
    %v5585 = vlaneseq
    %v5586 = vshrl.u32 %v5585, 7
    %v5587 = vsub.s32 %v5584, %v5586
    %v5588 = vrot.slane %v5545, %v5587
    %v5590 = vunpack.c.l.s4 1966171168
    %v5591 = vunpack.c.0.s8 %v5590
    %v5592 = vlaneseq
    %v5593 = vshrl.u32 %v5592, 7
    %v5594 = vsub.s32 %v5591, %v5593
    %v5595 = vrot.slane %v5581, %v5594
    %v5596 = vcombine.high %v5588, %v5588
    %v5597 = vcombine.high %v5595, %v5595
    %v5599 = vunpack.c.l.s4 1966171168
    %v5600 = vunpack.c.0.s8 %v5599
    %v5601 = vlaneseq
    %v5602 = vshrl.u32 %v5601, 7
    %v5603 = vsub.s32 %v5600, %v5602
    %v5604 = vrot.slane %v5588, %v5603
    %v5606 = vunpack.c.l.s4 1966171168
    %v5607 = vunpack.c.0.s8 %v5606
    %v5608 = vlaneseq
    %v5609 = vshrl.u32 %v5608, 7
    %v5610 = vsub.s32 %v5607, %v5609
    %v5611 = vrot.slane %v5595, %v5610
    %v5613 = vunpack.c.l.s4 1966171168
    %v5614 = vunpack.c.0.s8 %v5613
    %v5615 = vlaneseq
    %v5616 = vshrl.u32 %v5615, 7
    %v5617 = vsub.s32 %v5614, %v5616
    %v5618 = vrot.slane %v5596, %v5617
    %v5620 = vunpack.c.l.s4 1966171168
    %v5621 = vunpack.c.0.s8 %v5620
    %v5622 = vlaneseq
    %v5623 = vshrl.u32 %v5622, 7
    %v5624 = vsub.s32 %v5621, %v5623
    %v5625 = vrot.slane %v5597, %v5624
    %v5626 = vcombine.high %v5604, %v5604
    %v5627 = vcombine.high %v5618, %v5618
    %v5628 = vcombine.high %v5548, %v5548
    %v5630 = vunpack.c.l.s4 1966171168
    %v5631 = vunpack.c.0.s8 %v5630
    %v5632 = vlaneseq
    %v5633 = vshrl.u32 %v5632, 7
    %v5634 = vsub.s32 %v5631, %v5633
    %v5635 = vrot.slane %v5548, %v5634
    %v5637 = vunpack.c.l.s4 1966171168
    %v5638 = vunpack.c.0.s8 %v5637
    %v5639 = vlaneseq
    %v5640 = vshrl.u32 %v5639, 7
    %v5641 = vsub.s32 %v5638, %v5640
    %v5642 = vrot.slane %v5628, %v5641
    %v5643 = vcombine.high %v5635, %v5635
    %v5644 = vcombine.high %v5642, %v5642
    %v5646 = vunpack.c.l.s4 1966171168
    %v5647 = vunpack.c.0.s8 %v5646
    %v5648 = vlaneseq
    %v5649 = vshrl.u32 %v5648, 7
    %v5650 = vsub.s32 %v5647, %v5649
    %v5651 = vrot.slane %v5635, %v5650
    %v5653 = vunpack.c.l.s4 1966171168
    %v5654 = vunpack.c.0.s8 %v5653
    %v5655 = vlaneseq
    %v5656 = vshrl.u32 %v5655, 7
    %v5657 = vsub.s32 %v5654, %v5656
    %v5658 = vrot.slane %v5642, %v5657
    %v5660 = vunpack.c.l.s4 1966171168
    %v5661 = vunpack.c.0.s8 %v5660
    %v5662 = vlaneseq
    %v5663 = vshrl.u32 %v5662, 7
    %v5664 = vsub.s32 %v5661, %v5663
    %v5665 = vrot.slane %v5643, %v5664
    %v5667 = vunpack.c.l.s4 1966171168
    %v5668 = vunpack.c.0.s8 %v5667
    %v5669 = vlaneseq
    %v5670 = vshrl.u32 %v5669, 7
    %v5671 = vsub.s32 %v5668, %v5670
    %v5672 = vrot.slane %v5644, %v5671
    %v5673 = vcombine.high %v5651, %v5651
    %v5674 = vcombine.high %v5665, %v5665
    %v5675 = vcombine.high %v5672, %v5672
    %v5676 = vcombine.high %v5553, %v5553
    %v5678 = vunpack.c.l.s4 1966171168
    %v5679 = vunpack.c.0.s8 %v5678
    %v5680 = vlaneseq
    %v5681 = vshrl.u32 %v5680, 7
    %v5682 = vsub.s32 %v5679, %v5681
    %v5683 = vrot.slane %v5553, %v5682
    %v5685 = vunpack.c.l.s4 1966171168
    %v5686 = vunpack.c.0.s8 %v5685
    %v5687 = vlaneseq
    %v5688 = vshrl.u32 %v5687, 7
    %v5689 = vsub.s32 %v5686, %v5688
    %v5690 = vrot.slane %v5676, %v5689
    %v5691 = vcombine.high %v5683, %v5683
    %v5692 = vcombine.high %v5690, %v5690
    %v5694 = vunpack.c.l.s4 1966171168
    %v5695 = vunpack.c.0.s8 %v5694
    %v5696 = vlaneseq
    %v5697 = vshrl.u32 %v5696, 7
    %v5698 = vsub.s32 %v5695, %v5697
    %v5699 = vrot.slane %v5683, %v5698
    %v5701 = vunpack.c.l.s4 1966171168
    %v5702 = vunpack.c.0.s8 %v5701
    %v5703 = vlaneseq
    %v5704 = vshrl.u32 %v5703, 7
    %v5705 = vsub.s32 %v5702, %v5704
    %v5706 = vrot.slane %v5690, %v5705
    %v5708 = vunpack.c.l.s4 1966171168
    %v5709 = vunpack.c.0.s8 %v5708
    %v5710 = vlaneseq
    %v5711 = vshrl.u32 %v5710, 7
    %v5712 = vsub.s32 %v5709, %v5711
    %v5713 = vrot.slane %v5691, %v5712
    %v5715 = vunpack.c.l.s4 1966171168
    %v5716 = vunpack.c.0.s8 %v5715
    %v5717 = vlaneseq
    %v5718 = vshrl.u32 %v5717, 7
    %v5719 = vsub.s32 %v5716, %v5718
    %v5720 = vrot.slane %v5692, %v5719
    %v5721 = vcombine.high %v5699, %v5699
    %v5722 = vcombine.high %v5706, %v5706
    %v5723 = vcombine.high %v5713, %v5713
    %v5724 = vcombine.high %v5720, %v5720
    %v5725 = vcombine.high %v5556, %v5556
    %v5727 = vunpack.c.l.s4 1966171168
    %v5728 = vunpack.c.0.s8 %v5727
    %v5729 = vlaneseq
    %v5730 = vshrl.u32 %v5729, 7
    %v5731 = vsub.s32 %v5728, %v5730
    %v5732 = vrot.slane %v5556, %v5731
    %v5734 = vunpack.c.l.s4 1966171168
    %v5735 = vunpack.c.0.s8 %v5734
    %v5736 = vlaneseq
    %v5737 = vshrl.u32 %v5736, 7
    %v5738 = vsub.s32 %v5735, %v5737
    %v5739 = vrot.slane %v5725, %v5738
    %v5740 = vcombine.high %v5732, %v5732
    %v5741 = vcombine.high %v5739, %v5739
    %v5743 = vunpack.c.l.s4 1966171168
    %v5744 = vunpack.c.0.s8 %v5743
    %v5745 = vlaneseq
    %v5746 = vshrl.u32 %v5745, 7
    %v5747 = vsub.s32 %v5744, %v5746
    %v5748 = vrot.slane %v5732, %v5747
    %v5750 = vunpack.c.l.s4 1966171168
    %v5751 = vunpack.c.0.s8 %v5750
    %v5752 = vlaneseq
    %v5753 = vshrl.u32 %v5752, 7
    %v5754 = vsub.s32 %v5751, %v5753
    %v5755 = vrot.slane %v5739, %v5754
    %v5757 = vunpack.c.l.s4 1966171168
    %v5758 = vunpack.c.0.s8 %v5757
    %v5759 = vlaneseq
    %v5760 = vshrl.u32 %v5759, 7
    %v5761 = vsub.s32 %v5758, %v5760
    %v5762 = vrot.slane %v5740, %v5761
    %v5764 = vunpack.c.l.s4 1966171168
    %v5765 = vunpack.c.0.s8 %v5764
    %v5766 = vlaneseq
    %v5767 = vshrl.u32 %v5766, 7
    %v5768 = vsub.s32 %v5765, %v5767
    %v5769 = vrot.slane %v5741, %v5768
    %v5770 = vcombine.high %v5748, %v5748
    %v5771 = vcombine.high %v5755, %v5755
    %v5772 = vcombine.high %v5769, %v5769
    %v5773 = vcombine.high %v5561, %v5561
    %v5775 = vunpack.c.l.s4 1966171168
    %v5776 = vunpack.c.0.s8 %v5775
    %v5777 = vlaneseq
    %v5778 = vshrl.u32 %v5777, 7
    %v5779 = vsub.s32 %v5776, %v5778
    %v5780 = vrot.slane %v5561, %v5779
    %v5782 = vunpack.c.l.s4 1966171168
    %v5783 = vunpack.c.0.s8 %v5782
    %v5784 = vlaneseq
    %v5785 = vshrl.u32 %v5784, 7
    %v5786 = vsub.s32 %v5783, %v5785
    %v5787 = vrot.slane %v5773, %v5786
    %v5788 = vcombine.high %v5780, %v5780
    %v5789 = vcombine.high %v5787, %v5787
    %v5791 = vunpack.c.l.s4 1966171168
    %v5792 = vunpack.c.0.s8 %v5791
    %v5793 = vlaneseq
    %v5794 = vshrl.u32 %v5793, 7
    %v5795 = vsub.s32 %v5792, %v5794
    %v5796 = vrot.slane %v5780, %v5795
    %v5798 = vunpack.c.l.s4 1966171168
    %v5799 = vunpack.c.0.s8 %v5798
    %v5800 = vlaneseq
    %v5801 = vshrl.u32 %v5800, 7
    %v5802 = vsub.s32 %v5799, %v5801
    %v5803 = vrot.slane %v5787, %v5802
    %v5805 = vunpack.c.l.s4 1966171168
    %v5806 = vunpack.c.0.s8 %v5805
    %v5807 = vlaneseq
    %v5808 = vshrl.u32 %v5807, 7
    %v5809 = vsub.s32 %v5806, %v5808
    %v5810 = vrot.slane %v5788, %v5809
    %v5812 = vunpack.c.l.s4 1966171168
    %v5813 = vunpack.c.0.s8 %v5812
    %v5814 = vlaneseq
    %v5815 = vshrl.u32 %v5814, 7
    %v5816 = vsub.s32 %v5813, %v5815
    %v5817 = vrot.slane %v5789, %v5816
    %v5818 = vcombine.high %v5803, %v5803
    %v5819 = vcombine.high %v5817, %v5817
    %v5820 = vcombine.high %v5564, %v5564
    %v5822 = vunpack.c.l.s4 1966171168
    %v5823 = vunpack.c.0.s8 %v5822
    %v5824 = vlaneseq
    %v5825 = vshrl.u32 %v5824, 7
    %v5826 = vsub.s32 %v5823, %v5825
    %v5827 = vrot.slane %v5564, %v5826
    %v5829 = vunpack.c.l.s4 1966171168
    %v5830 = vunpack.c.0.s8 %v5829
    %v5831 = vlaneseq
    %v5832 = vshrl.u32 %v5831, 7
    %v5833 = vsub.s32 %v5830, %v5832
    %v5834 = vrot.slane %v5820, %v5833
    %v5835 = vcombine.high %v5827, %v5827
    %v5836 = vcombine.high %v5834, %v5834
    %v5838 = vunpack.c.l.s4 1966171168
    %v5839 = vunpack.c.0.s8 %v5838
    %v5840 = vlaneseq
    %v5841 = vshrl.u32 %v5840, 7
    %v5842 = vsub.s32 %v5839, %v5841
    %v5843 = vrot.slane %v5827, %v5842
    %v5845 = vunpack.c.l.s4 1966171168
    %v5846 = vunpack.c.0.s8 %v5845
    %v5847 = vlaneseq
    %v5848 = vshrl.u32 %v5847, 7
    %v5849 = vsub.s32 %v5846, %v5848
    %v5850 = vrot.slane %v5834, %v5849
    %v5852 = vunpack.c.l.s4 1966171168
    %v5853 = vunpack.c.0.s8 %v5852
    %v5854 = vlaneseq
    %v5855 = vshrl.u32 %v5854, 7
    %v5856 = vsub.s32 %v5853, %v5855
    %v5857 = vrot.slane %v5835, %v5856
    %v5859 = vunpack.c.l.s4 1966171168
    %v5860 = vunpack.c.0.s8 %v5859
    %v5861 = vlaneseq
    %v5862 = vshrl.u32 %v5861, 7
    %v5863 = vsub.s32 %v5860, %v5862
    %v5864 = vrot.slane %v5836, %v5863
    %v5865 = vcombine.high %v5850, %v5850
    %v5866 = vcombine.high %v5857, %v5857
    %v5867 = vcombine.high %v5864, %v5864
    %v5868 = vcombine.high %v5569, %v5569
    %v5870 = vunpack.c.l.s4 1966171168
    %v5871 = vunpack.c.0.s8 %v5870
    %v5872 = vlaneseq
    %v5873 = vshrl.u32 %v5872, 7
    %v5874 = vsub.s32 %v5871, %v5873
    %v5875 = vrot.slane %v5569, %v5874
    %v5877 = vunpack.c.l.s4 1966171168
    %v5878 = vunpack.c.0.s8 %v5877
    %v5879 = vlaneseq
    %v5880 = vshrl.u32 %v5879, 7
    %v5881 = vsub.s32 %v5878, %v5880
    %v5882 = vrot.slane %v5868, %v5881
    %v5883 = vcombine.high %v5875, %v5875
    %v5884 = vcombine.high %v5882, %v5882
    %v5886 = vunpack.c.l.s4 1966171168
    %v5887 = vunpack.c.0.s8 %v5886
    %v5888 = vlaneseq
    %v5889 = vshrl.u32 %v5888, 7
    %v5890 = vsub.s32 %v5887, %v5889
    %v5891 = vrot.slane %v5875, %v5890
    %v5893 = vunpack.c.l.s4 1966171168
    %v5894 = vunpack.c.0.s8 %v5893
    %v5895 = vlaneseq
    %v5896 = vshrl.u32 %v5895, 7
    %v5897 = vsub.s32 %v5894, %v5896
    %v5898 = vrot.slane %v5882, %v5897
    %v5900 = vunpack.c.l.s4 1966171168
    %v5901 = vunpack.c.0.s8 %v5900
    %v5902 = vlaneseq
    %v5903 = vshrl.u32 %v5902, 7
    %v5904 = vsub.s32 %v5901, %v5903
    %v5905 = vrot.slane %v5883, %v5904
    %v5907 = vunpack.c.l.s4 1966171168
    %v5908 = vunpack.c.0.s8 %v5907
    %v5909 = vlaneseq
    %v5910 = vshrl.u32 %v5909, 7
    %v5911 = vsub.s32 %v5908, %v5910
    %v5912 = vrot.slane %v5884, %v5911
    %v5913 = vcombine.high %v5891, %v5891
    %v5914 = vcombine.high %v5898, %v5898
    %v5915 = vcombine.high %v5905, %v5905
    %v5956 = vld [vmem:[#allocation10 + $0x40] sm:$0xf]
    %v5957 = vld [vmem:[#allocation10 + $0x44] sm:$0xf]
    %v5958 = vld [vmem:[#allocation10 + $0x48] sm:$0xf]
    %v5959 = vld [vmem:[#allocation10 + $0x4c] sm:$0xf]
    %v5960 = vld [vmem:[#allocation10 + $0x50] sm:$0xf]
    %v5961 = vld [vmem:[#allocation10 + $0x54] sm:$0xf]
    %v5962 = vld [vmem:[#allocation10 + $0x58] sm:$0xf]
    %v5963 = vld [vmem:[#allocation10 + $0x5c] sm:$0xf]
    %v5972 = vunpack.c.l.b16 %v5956
    %v5973 = vunpack.c.l.b16 %v5957
    %v5974 = vunpack.c.l.b16 %v5958
    %v5975 = vunpack.c.l.b16 %v5959
    %v5976 = vunpack.c.l.b16 %v5960
    %v5977 = vunpack.c.l.b16 %v5961
    %v5978 = vunpack.c.l.b16 %v5962
    %v5979 = vunpack.c.l.b16 %v5963
    %v5980 = vpack.c.b16 %v5973, %v5972
    %v5981 = vpack.c.b16 %v5975, %v5974
    %v5982 = vpack.c.b16 %v5977, %v5976
    %v5983 = vpack.c.b16 %v5979, %v5978
    %5988 = vmatprep.subr.bf16.mxu0 0
    %5989 = vmatpush1.bf16.msra.mxu0 %v5980
    %5990 = vmatprep.subr.bf16.mxu0 0
    %5991 = vmatpush1.bf16.msra.mxu0 %v5981
    %5992 = vmatprep.subr.bf16.mxu0 0
    %5993 = vmatpush1.bf16.msra.mxu0 %v5982
    %5994 = vmatprep.subr.bf16.mxu0 0
    %5995 = vmatpush1.bf16.msra.mxu0 %v5983
    %5996 = vmatprep.subr.bf16.mxu0 0
    %5997 = vmatpush1.bf16.msra.mxu0 0
    %5998 = vmatprep.subr.bf16.mxu0 0
    %5999 = vmatpush1.bf16.msra.mxu0 0
    %6000 = vmatprep.subr.bf16.mxu0 0
    %6001 = vmatpush1.bf16.msra.mxu0 0
    %6002 = vmatprep.subr.bf16.mxu0 0
    %6003 = vmatpush1.bf16.msra.mxu0 0
    %6004 = vmatprep.subr.bf16.mxu0 0
    %6005 = vmatpush1.bf16.msra.mxu0 0
    %6006 = vmatprep.subr.bf16.mxu0 0
    %6007 = vmatpush1.bf16.msra.mxu0 0
    %6008 = vmatprep.subr.bf16.mxu0 0
    %6009 = vmatpush1.bf16.msra.mxu0 0
    %6010 = vmatprep.subr.bf16.mxu0 0
    %6011 = vmatpush1.bf16.msra.mxu0 0
    %6012 = vmatprep.subr.bf16.mxu0 0
    %6013 = vmatpush1.bf16.msra.mxu0 0
    %6014 = vmatprep.subr.bf16.mxu0 0
    %6015 = vmatpush1.bf16.msra.mxu0 0
    %6016 = vmatprep.subr.bf16.mxu0 0
    %6017 = vmatpush1.bf16.msra.mxu0 0
    %6018 = vmatprep.subr.bf16.mxu0 0
    %6019 = vmatpush1.bf16.msra.mxu0 0
    %6020 = vmatprep.mubr.bf16.mxu0 0
    %6021 = vmatmul.mubr.bf16.gmra.mrb[0].mxu0 %v5021
    %v6022 = vpop.f32.mrb[0].mxu0
    %v6023 = vadd.f32 0.0, %v6022
    %v6024 = vpop.f32.mrb[0].mxu0
    %v6025 = vpop.f32.mrb[0].mxu0
    %v6026 = vadd.f32 0.0, %v6025
    %v6027 = vpop.f32.mrb[0].mxu0
    %6028 = vmatprep.mubr.bf16.mxu0 0
    %6029 = vmatmul.mubr.bf16.gmra.mrb[0].mxu0 %v5024
    %v6030 = vpop.f32.mrb[0].mxu0
    %v6031 = vadd.f32 0.0, %v6030
    %v6032 = vpop.f32.mrb[0].mxu0
    %v6033 = vpop.f32.mrb[0].mxu0
    %v6034 = vadd.f32 0.0, %v6033
    %v6035 = vpop.f32.mrb[0].mxu0
    %6036 = vmatprep.mubr.bf16.mxu0 0
    %6037 = vmatmul.mubr.bf16.gmra.mrb[0].mxu0 %v5027
    %v6038 = vpop.f32.mrb[0].mxu0
    %v6039 = vadd.f32 0.0, %v6038
    %v6040 = vpop.f32.mrb[0].mxu0
    %v6041 = vpop.f32.mrb[0].mxu0
    %v6042 = vadd.f32 0.0, %v6041
    %v6043 = vpop.f32.mrb[0].mxu0
    %6044 = vmatprep.mubr.bf16.mxu0 0
    %6045 = vmatmul.mubr.bf16.gmra.mrb[0].mxu0 %v5030
    %v6046 = vpop.f32.mrb[0].mxu0
    %v6047 = vadd.f32 0.0, %v6046
    %v6048 = vpop.f32.mrb[0].mxu0
    %v6049 = vpop.f32.mrb[0].mxu0
    %v6050 = vpop.f32.mrb[0].mxu0
    %6051 = vdwg.mxu0
    %v6059 = vcombine.high %v6023, %v6023
    %v6061 = vunpack.c.l.s4 1966171168
    %v6062 = vunpack.c.0.s8 %v6061
    %v6063 = vlaneseq
    %v6064 = vshrl.u32 %v6063, 7
    %v6065 = vsub.s32 %v6062, %v6064
    %v6066 = vrot.slane %v6023, %v6065
    %v6068 = vunpack.c.l.s4 1966171168
    %v6069 = vunpack.c.0.s8 %v6068
    %v6070 = vlaneseq
    %v6071 = vshrl.u32 %v6070, 7
    %v6072 = vsub.s32 %v6069, %v6071
    %v6073 = vrot.slane %v6059, %v6072
    %v6074 = vcombine.high %v6066, %v6066
    %v6075 = vcombine.high %v6073, %v6073
    %v6077 = vunpack.c.l.s4 1966171168
    %v6078 = vunpack.c.0.s8 %v6077
    %v6079 = vlaneseq
    %v6080 = vshrl.u32 %v6079, 7
    %v6081 = vsub.s32 %v6078, %v6080
    %v6082 = vrot.slane %v6066, %v6081
    %v6084 = vunpack.c.l.s4 1966171168
    %v6085 = vunpack.c.0.s8 %v6084
    %v6086 = vlaneseq
    %v6087 = vshrl.u32 %v6086, 7
    %v6088 = vsub.s32 %v6085, %v6087
    %v6089 = vrot.slane %v6073, %v6088
    %v6091 = vunpack.c.l.s4 1966171168
    %v6092 = vunpack.c.0.s8 %v6091
    %v6093 = vlaneseq
    %v6094 = vshrl.u32 %v6093, 7
    %v6095 = vsub.s32 %v6092, %v6094
    %v6096 = vrot.slane %v6074, %v6095
    %v6098 = vunpack.c.l.s4 1966171168
    %v6099 = vunpack.c.0.s8 %v6098
    %v6100 = vlaneseq
    %v6101 = vshrl.u32 %v6100, 7
    %v6102 = vsub.s32 %v6099, %v6101
    %v6103 = vrot.slane %v6075, %v6102
    %v6104 = vcombine.high %v6082, %v6082
    %v6105 = vcombine.high %v6089, %v6089
    %v6106 = vcombine.high %v6096, %v6096
    %v6107 = vcombine.high %v6026, %v6026
    %v6109 = vunpack.c.l.s4 1966171168
    %v6110 = vunpack.c.0.s8 %v6109
    %v6111 = vlaneseq
    %v6112 = vshrl.u32 %v6111, 7
    %v6113 = vsub.s32 %v6110, %v6112
    %v6114 = vrot.slane %v6026, %v6113
    %v6116 = vunpack.c.l.s4 1966171168
    %v6117 = vunpack.c.0.s8 %v6116
    %v6118 = vlaneseq
    %v6119 = vshrl.u32 %v6118, 7
    %v6120 = vsub.s32 %v6117, %v6119
    %v6121 = vrot.slane %v6107, %v6120
    %v6122 = vcombine.high %v6114, %v6114
    %v6123 = vcombine.high %v6121, %v6121
    %v6125 = vunpack.c.l.s4 1966171168
    %v6126 = vunpack.c.0.s8 %v6125
    %v6127 = vlaneseq
    %v6128 = vshrl.u32 %v6127, 7
    %v6129 = vsub.s32 %v6126, %v6128
    %v6130 = vrot.slane %v6114, %v6129
    %v6132 = vunpack.c.l.s4 1966171168
    %v6133 = vunpack.c.0.s8 %v6132
    %v6134 = vlaneseq
    %v6135 = vshrl.u32 %v6134, 7
    %v6136 = vsub.s32 %v6133, %v6135
    %v6137 = vrot.slane %v6121, %v6136
    %v6139 = vunpack.c.l.s4 1966171168
    %v6140 = vunpack.c.0.s8 %v6139
    %v6141 = vlaneseq
    %v6142 = vshrl.u32 %v6141, 7
    %v6143 = vsub.s32 %v6140, %v6142
    %v6144 = vrot.slane %v6122, %v6143
    %v6146 = vunpack.c.l.s4 1966171168
    %v6147 = vunpack.c.0.s8 %v6146
    %v6148 = vlaneseq
    %v6149 = vshrl.u32 %v6148, 7
    %v6150 = vsub.s32 %v6147, %v6149
    %v6151 = vrot.slane %v6123, %v6150
    %v6152 = vcombine.high %v6130, %v6130
    %v6153 = vcombine.high %v6144, %v6144
    %v6154 = vcombine.high %v6031, %v6031
    %v6156 = vunpack.c.l.s4 1966171168
    %v6157 = vunpack.c.0.s8 %v6156
    %v6158 = vlaneseq
    %v6159 = vshrl.u32 %v6158, 7
    %v6160 = vsub.s32 %v6157, %v6159
    %v6161 = vrot.slane %v6031, %v6160
    %v6163 = vunpack.c.l.s4 1966171168
    %v6164 = vunpack.c.0.s8 %v6163
    %v6165 = vlaneseq
    %v6166 = vshrl.u32 %v6165, 7
    %v6167 = vsub.s32 %v6164, %v6166
    %v6168 = vrot.slane %v6154, %v6167
    %v6169 = vcombine.high %v6161, %v6161
    %v6170 = vcombine.high %v6168, %v6168
    %v6172 = vunpack.c.l.s4 1966171168
    %v6173 = vunpack.c.0.s8 %v6172
    %v6174 = vlaneseq
    %v6175 = vshrl.u32 %v6174, 7
    %v6176 = vsub.s32 %v6173, %v6175
    %v6177 = vrot.slane %v6161, %v6176
    %v6179 = vunpack.c.l.s4 1966171168
    %v6180 = vunpack.c.0.s8 %v6179
    %v6181 = vlaneseq
    %v6182 = vshrl.u32 %v6181, 7
    %v6183 = vsub.s32 %v6180, %v6182
    %v6184 = vrot.slane %v6168, %v6183
    %v6186 = vunpack.c.l.s4 1966171168
    %v6187 = vunpack.c.0.s8 %v6186
    %v6188 = vlaneseq
    %v6189 = vshrl.u32 %v6188, 7
    %v6190 = vsub.s32 %v6187, %v6189
    %v6191 = vrot.slane %v6169, %v6190
    %v6193 = vunpack.c.l.s4 1966171168
    %v6194 = vunpack.c.0.s8 %v6193
    %v6195 = vlaneseq
    %v6196 = vshrl.u32 %v6195, 7
    %v6197 = vsub.s32 %v6194, %v6196
    %v6198 = vrot.slane %v6170, %v6197
    %v6199 = vcombine.high %v6177, %v6177
    %v6200 = vcombine.high %v6191, %v6191
    %v6201 = vcombine.high %v6198, %v6198
    %v6202 = vcombine.high %v6034, %v6034
    %v6204 = vunpack.c.l.s4 1966171168
    %v6205 = vunpack.c.0.s8 %v6204
    %v6206 = vlaneseq
    %v6207 = vshrl.u32 %v6206, 7
    %v6208 = vsub.s32 %v6205, %v6207
    %v6209 = vrot.slane %v6034, %v6208
    %v6211 = vunpack.c.l.s4 1966171168
    %v6212 = vunpack.c.0.s8 %v6211
    %v6213 = vlaneseq
    %v6214 = vshrl.u32 %v6213, 7
    %v6215 = vsub.s32 %v6212, %v6214
    %v6216 = vrot.slane %v6202, %v6215
    %v6217 = vcombine.high %v6209, %v6209
    %v6218 = vcombine.high %v6216, %v6216
    %v6220 = vunpack.c.l.s4 1966171168
    %v6221 = vunpack.c.0.s8 %v6220
    %v6222 = vlaneseq
    %v6223 = vshrl.u32 %v6222, 7
    %v6224 = vsub.s32 %v6221, %v6223
    %v6225 = vrot.slane %v6209, %v6224
    %v6227 = vunpack.c.l.s4 1966171168
    %v6228 = vunpack.c.0.s8 %v6227
    %v6229 = vlaneseq
    %v6230 = vshrl.u32 %v6229, 7
    %v6231 = vsub.s32 %v6228, %v6230
    %v6232 = vrot.slane %v6216, %v6231
    %v6234 = vunpack.c.l.s4 1966171168
    %v6235 = vunpack.c.0.s8 %v6234
    %v6236 = vlaneseq
    %v6237 = vshrl.u32 %v6236, 7
    %v6238 = vsub.s32 %v6235, %v6237
    %v6239 = vrot.slane %v6217, %v6238
    %v6241 = vunpack.c.l.s4 1966171168
    %v6242 = vunpack.c.0.s8 %v6241
    %v6243 = vlaneseq
    %v6244 = vshrl.u32 %v6243, 7
    %v6245 = vsub.s32 %v6242, %v6244
    %v6246 = vrot.slane %v6218, %v6245
    %v6247 = vcombine.high %v6225, %v6225
    %v6248 = vcombine.high %v6232, %v6232
    %v6249 = vcombine.high %v6239, %v6239
    %v6250 = vcombine.high %v6246, %v6246
    %v6251 = vcombine.high %v6039, %v6039
    %v6253 = vunpack.c.l.s4 1966171168
    %v6254 = vunpack.c.0.s8 %v6253
    %v6255 = vlaneseq
    %v6256 = vshrl.u32 %v6255, 7
    %v6257 = vsub.s32 %v6254, %v6256
    %v6258 = vrot.slane %v6039, %v6257
    %v6260 = vunpack.c.l.s4 1966171168
    %v6261 = vunpack.c.0.s8 %v6260
    %v6262 = vlaneseq
    %v6263 = vshrl.u32 %v6262, 7
    %v6264 = vsub.s32 %v6261, %v6263
    %v6265 = vrot.slane %v6251, %v6264
    %v6266 = vcombine.high %v6258, %v6258
    %v6267 = vcombine.high %v6265, %v6265
    %v6269 = vunpack.c.l.s4 1966171168
    %v6270 = vunpack.c.0.s8 %v6269
    %v6271 = vlaneseq
    %v6272 = vshrl.u32 %v6271, 7
    %v6273 = vsub.s32 %v6270, %v6272
    %v6274 = vrot.slane %v6258, %v6273
    %v6276 = vunpack.c.l.s4 1966171168
    %v6277 = vunpack.c.0.s8 %v6276
    %v6278 = vlaneseq
    %v6279 = vshrl.u32 %v6278, 7
    %v6280 = vsub.s32 %v6277, %v6279
    %v6281 = vrot.slane %v6265, %v6280
    %v6283 = vunpack.c.l.s4 1966171168
    %v6284 = vunpack.c.0.s8 %v6283
    %v6285 = vlaneseq
    %v6286 = vshrl.u32 %v6285, 7
    %v6287 = vsub.s32 %v6284, %v6286
    %v6288 = vrot.slane %v6266, %v6287
    %v6290 = vunpack.c.l.s4 1966171168
    %v6291 = vunpack.c.0.s8 %v6290
    %v6292 = vlaneseq
    %v6293 = vshrl.u32 %v6292, 7
    %v6294 = vsub.s32 %v6291, %v6293
    %v6295 = vrot.slane %v6267, %v6294
    %v6296 = vcombine.high %v6274, %v6274
    %v6297 = vcombine.high %v6281, %v6281
    %v6298 = vcombine.high %v6295, %v6295
    %v6299 = vcombine.high %v6042, %v6042
    %v6301 = vunpack.c.l.s4 1966171168
    %v6302 = vunpack.c.0.s8 %v6301
    %v6303 = vlaneseq
    %v6304 = vshrl.u32 %v6303, 7
    %v6305 = vsub.s32 %v6302, %v6304
    %v6306 = vrot.slane %v6042, %v6305
    %v6308 = vunpack.c.l.s4 1966171168
    %v6309 = vunpack.c.0.s8 %v6308
    %v6310 = vlaneseq
    %v6311 = vshrl.u32 %v6310, 7
    %v6312 = vsub.s32 %v6309, %v6311
    %v6313 = vrot.slane %v6299, %v6312
    %v6314 = vcombine.high %v6306, %v6306
    %v6315 = vcombine.high %v6313, %v6313
    %v6317 = vunpack.c.l.s4 1966171168
    %v6318 = vunpack.c.0.s8 %v6317
    %v6319 = vlaneseq
    %v6320 = vshrl.u32 %v6319, 7
    %v6321 = vsub.s32 %v6318, %v6320
    %v6322 = vrot.slane %v6306, %v6321
    %v6324 = vunpack.c.l.s4 1966171168
    %v6325 = vunpack.c.0.s8 %v6324
    %v6326 = vlaneseq
    %v6327 = vshrl.u32 %v6326, 7
    %v6328 = vsub.s32 %v6325, %v6327
    %v6329 = vrot.slane %v6313, %v6328
    %v6331 = vunpack.c.l.s4 1966171168
    %v6332 = vunpack.c.0.s8 %v6331
    %v6333 = vlaneseq
    %v6334 = vshrl.u32 %v6333, 7
    %v6335 = vsub.s32 %v6332, %v6334
    %v6336 = vrot.slane %v6314, %v6335
    %v6338 = vunpack.c.l.s4 1966171168
    %v6339 = vunpack.c.0.s8 %v6338
    %v6340 = vlaneseq
    %v6341 = vshrl.u32 %v6340, 7
    %v6342 = vsub.s32 %v6339, %v6341
    %v6343 = vrot.slane %v6315, %v6342
    %v6344 = vcombine.high %v6329, %v6329
    %v6345 = vcombine.high %v6343, %v6343
    %v6346 = vcombine.high %v6047, %v6047
    %v6348 = vunpack.c.l.s4 1966171168
    %v6349 = vunpack.c.0.s8 %v6348
    %v6350 = vlaneseq
    %v6351 = vshrl.u32 %v6350, 7
    %v6352 = vsub.s32 %v6349, %v6351
    %v6353 = vrot.slane %v6047, %v6352
    %v6355 = vunpack.c.l.s4 1966171168
    %v6356 = vunpack.c.0.s8 %v6355
    %v6357 = vlaneseq
    %v6358 = vshrl.u32 %v6357, 7
    %v6359 = vsub.s32 %v6356, %v6358
    %v6360 = vrot.slane %v6346, %v6359
    %v6361 = vcombine.high %v6353, %v6353
    %v6362 = vcombine.high %v6360, %v6360
    %v6364 = vunpack.c.l.s4 1966171168
    %v6365 = vunpack.c.0.s8 %v6364
    %v6366 = vlaneseq
    %v6367 = vshrl.u32 %v6366, 7
    %v6368 = vsub.s32 %v6365, %v6367
    %v6369 = vrot.slane %v6353, %v6368
    %v6371 = vunpack.c.l.s4 1966171168
    %v6372 = vunpack.c.0.s8 %v6371
    %v6373 = vlaneseq
    %v6374 = vshrl.u32 %v6373, 7
    %v6375 = vsub.s32 %v6372, %v6374
    %v6376 = vrot.slane %v6360, %v6375
    %v6378 = vunpack.c.l.s4 1966171168
    %v6379 = vunpack.c.0.s8 %v6378
    %v6380 = vlaneseq
    %v6381 = vshrl.u32 %v6380, 7
    %v6382 = vsub.s32 %v6379, %v6381
    %v6383 = vrot.slane %v6361, %v6382
    %v6385 = vunpack.c.l.s4 1966171168
    %v6386 = vunpack.c.0.s8 %v6385
    %v6387 = vlaneseq
    %v6388 = vshrl.u32 %v6387, 7
    %v6389 = vsub.s32 %v6386, %v6388
    %v6390 = vrot.slane %v6362, %v6389
    %v6391 = vcombine.high %v6376, %v6376
    %v6392 = vcombine.high %v6383, %v6383
    %v6393 = vcombine.high %v6390, %v6390
    %v6434 = vadd.f32 %v5126, %v5618
    %v6435 = vadd.f32 %v5140, %v5626
    %v6436 = vadd.f32 %v5148, %v5627
    %v6437 = vadd.f32 %v5149, %v5611
    %v6438 = vadd.f32 %v5133, %v5625
    %v6439 = vadd.f32 %v5150, %v5651
    %v6440 = vadd.f32 %v5174, %v5665
    %v6441 = vadd.f32 %v5188, %v5673
    %v6442 = vadd.f32 %v5196, %v5674
    %v6443 = vadd.f32 %v5198, %v5658
    %v6444 = vadd.f32 %v5197, %v5675
    %v6445 = vadd.f32 %v5199, %v5699
    %v6446 = vadd.f32 %v5223, %v5713
    %v6447 = vadd.f32 %v5237, %v5721
    %v6448 = vadd.f32 %v5245, %v5723
    %v6449 = vadd.f32 %v5244, %v5722
    %v6450 = vadd.f32 %v5246, %v5724
    %v6451 = vadd.f32 %v5247, %v5748
    %v6452 = vadd.f32 %v5271, %v5762
    %v6453 = vadd.f32 %v5285, %v5770
    %v6454 = vadd.f32 %v5278, %v5769
    %v6455 = vadd.f32 %v5292, %v5771
    %v6456 = vadd.f32 %v5293, %v5772
    %v6457 = vadd.f32 %v5294, %v5796
    %v6458 = vadd.f32 %v5318, %v5810
    %v6459 = vadd.f32 %v5341, %v5803
    %v6460 = vadd.f32 %v5325, %v5817
    %v6461 = vadd.f32 %v5339, %v5818
    %v6462 = vadd.f32 %v5340, %v5819
    %v6463 = vadd.f32 %v5342, %v5843
    %v6464 = vadd.f32 %v5388, %v5866
    %v6465 = vadd.f32 %v5390, %v5850
    %v6466 = vadd.f32 %v5373, %v5864
    %v6467 = vadd.f32 %v5387, %v5865
    %v6468 = vadd.f32 %v5389, %v5867
    %v6469 = vadd.f32 %v5428, %v5913
    %v6470 = vadd.f32 %v5436, %v5915
    %v6471 = vadd.f32 %v5437, %v5898
    %v6472 = vadd.f32 %v5421, %v5912
    %v6473 = vadd.f32 %v5435, %v5914
    %v6474 = vadd.f32 %v6434, %v6104
    %v6475 = vadd.f32 %v6435, %v6106
    %v6476 = vadd.f32 %v6436, %v6089
    %v6477 = vadd.f32 %v6437, %v6103
    %v6478 = vadd.f32 %v6438, %v6105
    %v6479 = vadd.f32 %v6439, %v6144
    %v6480 = vadd.f32 %v6440, %v6152
    %v6481 = vadd.f32 %v6441, %v6153
    %v6482 = vadd.f32 %v6442, %v6137
    %v6483 = vadd.f32 %v6443, %v6151
    %v6484 = vadd.f32 %v6444, %v6177
    %v6485 = vadd.f32 %v6445, %v6191
    %v6486 = vadd.f32 %v6446, %v6199
    %v6487 = vadd.f32 %v6447, %v6200
    %v6488 = vadd.f32 %v6448, %v6184
    %v6489 = vadd.f32 %v6449, %v6201
    %v6490 = vadd.f32 %v6450, %v6225
    %v6491 = vadd.f32 %v6451, %v6239
    %v6492 = vadd.f32 %v6452, %v6247
    %v6493 = vadd.f32 %v6453, %v6249
    %v6494 = vadd.f32 %v6454, %v6248
    %v6495 = vadd.f32 %v6455, %v6250
    %v6496 = vadd.f32 %v6456, %v6274
    %v6497 = vadd.f32 %v6457, %v6288
    %v6498 = vadd.f32 %v6458, %v6296
    %v6499 = vadd.f32 %v6459, %v6295
    %v6500 = vadd.f32 %v6460, %v6297
    %v6501 = vadd.f32 %v6461, %v6298
    %v6502 = vadd.f32 %v6462, %v6322
    %v6503 = vadd.f32 %v6463, %v6336
    %v6504 = vadd.f32 %v6464, %v6329
    %v6505 = vadd.f32 %v6465, %v6343
    %v6506 = vadd.f32 %v6466, %v6344
    %v6507 = vadd.f32 %v6467, %v6345
    %v6508 = vadd.f32 %v6468, %v6369
    %v6509 = vadd.f32 %v6469, %v6392
    %v6510 = vadd.f32 %v6470, %v6376
    %v6511 = vadd.f32 %v6471, %v6390
    %v6512 = vadd.f32 %v6472, %v6391
    %v6513 = vadd.f32 %v6473, %v6393
    %v6514 = vld [vmem:[#allocation19 + $0x3] sm:$0x1]
    %v6515 = vlaneseq
    %v6516 = vshrl.u32 %v6515, 7
    %v6517 = vsub.s32 0, %v6516
    %v6518 = vrot.slane %v6514, %v6517
    %v6520 = vcombine.high %v6518, %v6518
    %v6522 = vunpack.c.l.s4 1966171168
    %v6523 = vunpack.c.0.s8 %v6522
    %v6524 = vlaneseq
    %v6525 = vshrl.u32 %v6524, 7
    %v6526 = vsub.s32 %v6523, %v6525
    %v6527 = vrot.slane %v6518, %v6526
    %v6529 = vunpack.c.l.s4 1966171168
    %v6530 = vunpack.c.0.s8 %v6529
    %v6531 = vlaneseq
    %v6532 = vshrl.u32 %v6531, 7
    %v6533 = vsub.s32 %v6530, %v6532
    %v6534 = vrot.slane %v6520, %v6533
    %v6535 = vcombine.high %v6527, %v6527
    %v6537 = vunpack.c.l.s4 1966171168
    %v6538 = vunpack.c.0.s8 %v6537
    %v6539 = vlaneseq
    %v6540 = vshrl.u32 %v6539, 7
    %v6541 = vsub.s32 %v6538, %v6540
    %v6542 = vrot.slane %v6527, %v6541
    %v6544 = vunpack.c.l.s4 1966171168
    %v6545 = vunpack.c.0.s8 %v6544
    %v6546 = vlaneseq
    %v6547 = vshrl.u32 %v6546, 7
    %v6548 = vsub.s32 %v6545, %v6547
    %v6549 = vrot.slane %v6534, %v6548
    %v6551 = vunpack.c.l.s4 1966171168
    %v6552 = vunpack.c.0.s8 %v6551
    %v6553 = vlaneseq
    %v6554 = vshrl.u32 %v6553, 7
    %v6555 = vsub.s32 %v6552, %v6554
    %v6556 = vrot.slane %v6535, %v6555
    %v6557 = vcombine.high %v6542, %v6542
    %v6558 = vcombine.high %v6556, %v6556
    %v6564 = vadd.f32 %v6474, %v6542
    %v6565 = vadd.f32 %v6475, %v6556
    %v6566 = vadd.f32 %v6476, %v6557
    %v6567 = vadd.f32 %v6477, %v6558
    %v6568 = vadd.f32 %v6478, %v6549
    %v6569 = vadd.f32 %v6479, %v6542
    %v6570 = vadd.f32 %v6480, %v6556
    %v6571 = vadd.f32 %v6481, %v6557
    %v6572 = vadd.f32 %v6482, %v6558
    %v6573 = vadd.f32 %v6483, %v6549
    %v6574 = vadd.f32 %v6484, %v6542
    %v6575 = vadd.f32 %v6485, %v6556
    %v6576 = vadd.f32 %v6486, %v6557
    %v6577 = vadd.f32 %v6487, %v6558
    %v6578 = vadd.f32 %v6488, %v6549
    %v6579 = vadd.f32 %v6489, %v6542
    %v6580 = vadd.f32 %v6490, %v6556
    %v6581 = vadd.f32 %v6491, %v6557
    %v6582 = vadd.f32 %v6492, %v6558
    %v6583 = vadd.f32 %v6493, %v6549
    %v6584 = vadd.f32 %v6494, %v6542
    %v6585 = vadd.f32 %v6495, %v6556
    %v6586 = vadd.f32 %v6496, %v6557
    %v6587 = vadd.f32 %v6497, %v6558
    %v6588 = vadd.f32 %v6498, %v6549
    %v6589 = vadd.f32 %v6499, %v6542
    %v6590 = vadd.f32 %v6500, %v6556
    %v6591 = vadd.f32 %v6501, %v6557
    %v6592 = vadd.f32 %v6502, %v6558
    %v6593 = vadd.f32 %v6503, %v6549
    %v6594 = vadd.f32 %v6504, %v6542
    %v6595 = vadd.f32 %v6505, %v6556
    %v6596 = vadd.f32 %v6506, %v6557
    %v6597 = vadd.f32 %v6507, %v6558
    %v6598 = vadd.f32 %v6508, %v6549
    %v6599 = vadd.f32 %v6509, %v6542
    %v6600 = vadd.f32 %v6510, %v6556
    %v6601 = vadd.f32 %v6511, %v6557
    %v6602 = vadd.f32 %v6512, %v6558
    %v6603 = vadd.f32 %v6513, %v6549
    %v6604 = vmax.f32 %v6564, 0.0
    %v6605 = vmax.f32 %v6565, 0.0
    %v6606 = vmax.f32 %v6566, 0.0
    %v6607 = vmax.f32 %v6567, 0.0
    %v6608 = vmax.f32 %v6568, 0.0
    %v6609 = vmax.f32 %v6569, 0.0
    %v6610 = vmax.f32 %v6570, 0.0
    %v6611 = vmax.f32 %v6571, 0.0
    %v6612 = vmax.f32 %v6572, 0.0
    %v6613 = vmax.f32 %v6573, 0.0
    %v6614 = vmax.f32 %v6574, 0.0
    %v6615 = vmax.f32 %v6575, 0.0
    %v6616 = vmax.f32 %v6576, 0.0
    %v6617 = vmax.f32 %v6577, 0.0
    %v6618 = vmax.f32 %v6578, 0.0
    %v6619 = vmax.f32 %v6579, 0.0
    %v6620 = vmax.f32 %v6580, 0.0
    %v6621 = vmax.f32 %v6581, 0.0
    %v6622 = vmax.f32 %v6582, 0.0
    %v6623 = vmax.f32 %v6583, 0.0
    %v6624 = vmax.f32 %v6584, 0.0
    %v6625 = vmax.f32 %v6585, 0.0
    %v6626 = vmax.f32 %v6586, 0.0
    %v6627 = vmax.f32 %v6587, 0.0
    %v6628 = vmax.f32 %v6588, 0.0
    %v6629 = vmax.f32 %v6589, 0.0
    %v6630 = vmax.f32 %v6590, 0.0
    %v6631 = vmax.f32 %v6591, 0.0
    %v6632 = vmax.f32 %v6592, 0.0
    %v6633 = vmax.f32 %v6593, 0.0
    %v6634 = vmax.f32 %v6594, 0.0
    %v6635 = vmax.f32 %v6595, 0.0
    %v6636 = vmax.f32 %v6596, 0.0
    %v6637 = vmax.f32 %v6597, 0.0
    %v6638 = vmax.f32 %v6598, 0.0
    %v6639 = vmax.f32 %v6599, 0.0
    %v6640 = vmax.f32 %v6600, 0.0
    %v6641 = vmax.f32 %v6601, 0.0
    %v6642 = vmax.f32 %v6602, 0.0
    %v6643 = vmax.f32 %v6603, 0.0
    %v6684 = vcombine.low %v6604, %v6605
    %v6685 = vcombine.low %v6606, %v6607
    %v6687 = vunpack.c.l.s4 1966171168
    %v6688 = vunpack.c.0.s8 %v6687
    %v6689 = vlaneseq
    %v6690 = vshrl.u32 %v6689, 7
    %v6691 = vsub.s32 %v6688, %v6690
    %v6692 = vrot.slane %v6684, %v6691
    %v6694 = vunpack.c.l.s4 1966171168
    %v6695 = vunpack.c.0.s8 %v6694
    %v6696 = vlaneseq
    %v6697 = vshrl.u32 %v6696, 7
    %v6698 = vsub.s32 %v6695, %v6697
    %v6699 = vrot.slane %v6685, %v6698
    %v6701 = vunpack.c.l.s4 1966171168
    %v6702 = vunpack.c.0.s8 %v6701
    %v6703 = vlaneseq
    %v6704 = vshrl.u32 %v6703, 7
    %v6705 = vsub.s32 %v6702, %v6704
    %v6706 = vrot.slane %v6608, %v6705
    %v6707 = vcombine.low %v6692, %v6699
    %v6709 = vunpack.c.l.s4 1966171168
    %v6710 = vunpack.c.0.s8 %v6709
    %v6711 = vlaneseq
    %v6712 = vshrl.u32 %v6711, 7
    %v6713 = vsub.s32 %v6710, %v6712
    %v6714 = vrot.slane %v6707, %v6713
    %v6716 = vunpack.c.l.s4 1966171168
    %v6717 = vunpack.c.0.s8 %v6716
    %v6718 = vlaneseq
    %v6719 = vshrl.u32 %v6718, 7
    %v6720 = vsub.s32 %v6717, %v6719
    %v6721 = vrot.slane %v6706, %v6720
    %v6722 = vcombine.low %v6714, %v6721
    %v6723 = vcombine.low %v6609, %v6610
    %v6724 = vcombine.low %v6611, %v6612
    %v6726 = vunpack.c.l.s4 1966171168
    %v6727 = vunpack.c.0.s8 %v6726
    %v6728 = vlaneseq
    %v6729 = vshrl.u32 %v6728, 7
    %v6730 = vsub.s32 %v6727, %v6729
    %v6731 = vrot.slane %v6723, %v6730
    %v6733 = vunpack.c.l.s4 1966171168
    %v6734 = vunpack.c.0.s8 %v6733
    %v6735 = vlaneseq
    %v6736 = vshrl.u32 %v6735, 7
    %v6737 = vsub.s32 %v6734, %v6736
    %v6738 = vrot.slane %v6724, %v6737
    %v6740 = vunpack.c.l.s4 1966171168
    %v6741 = vunpack.c.0.s8 %v6740
    %v6742 = vlaneseq
    %v6743 = vshrl.u32 %v6742, 7
    %v6744 = vsub.s32 %v6741, %v6743
    %v6745 = vrot.slane %v6613, %v6744
    %v6746 = vcombine.low %v6731, %v6738
    %v6748 = vunpack.c.l.s4 1966171168
    %v6749 = vunpack.c.0.s8 %v6748
    %v6750 = vlaneseq
    %v6751 = vshrl.u32 %v6750, 7
    %v6752 = vsub.s32 %v6749, %v6751
    %v6753 = vrot.slane %v6746, %v6752
    %v6755 = vunpack.c.l.s4 1966171168
    %v6756 = vunpack.c.0.s8 %v6755
    %v6757 = vlaneseq
    %v6758 = vshrl.u32 %v6757, 7
    %v6759 = vsub.s32 %v6756, %v6758
    %v6760 = vrot.slane %v6745, %v6759
    %v6761 = vcombine.low %v6753, %v6760
    %v6762 = vcombine.low %v6614, %v6615
    %v6763 = vcombine.low %v6616, %v6617
    %v6765 = vunpack.c.l.s4 1966171168
    %v6766 = vunpack.c.0.s8 %v6765
    %v6767 = vlaneseq
    %v6768 = vshrl.u32 %v6767, 7
    %v6769 = vsub.s32 %v6766, %v6768
    %v6770 = vrot.slane %v6762, %v6769
    %v6772 = vunpack.c.l.s4 1966171168
    %v6773 = vunpack.c.0.s8 %v6772
    %v6774 = vlaneseq
    %v6775 = vshrl.u32 %v6774, 7
    %v6776 = vsub.s32 %v6773, %v6775
    %v6777 = vrot.slane %v6763, %v6776
    %v6779 = vunpack.c.l.s4 1966171168
    %v6780 = vunpack.c.0.s8 %v6779
    %v6781 = vlaneseq
    %v6782 = vshrl.u32 %v6781, 7
    %v6783 = vsub.s32 %v6780, %v6782
    %v6784 = vrot.slane %v6618, %v6783
    %v6785 = vcombine.low %v6770, %v6777
    %v6787 = vunpack.c.l.s4 1966171168
    %v6788 = vunpack.c.0.s8 %v6787
    %v6789 = vlaneseq
    %v6790 = vshrl.u32 %v6789, 7
    %v6791 = vsub.s32 %v6788, %v6790
    %v6792 = vrot.slane %v6785, %v6791
    %v6794 = vunpack.c.l.s4 1966171168
    %v6795 = vunpack.c.0.s8 %v6794
    %v6796 = vlaneseq
    %v6797 = vshrl.u32 %v6796, 7
    %v6798 = vsub.s32 %v6795, %v6797
    %v6799 = vrot.slane %v6784, %v6798
    %v6800 = vcombine.low %v6792, %v6799
    %v6801 = vcombine.low %v6619, %v6620
    %v6802 = vcombine.low %v6621, %v6622
    %v6804 = vunpack.c.l.s4 1966171168
    %v6805 = vunpack.c.0.s8 %v6804
    %v6806 = vlaneseq
    %v6807 = vshrl.u32 %v6806, 7
    %v6808 = vsub.s32 %v6805, %v6807
    %v6809 = vrot.slane %v6801, %v6808
    %v6811 = vunpack.c.l.s4 1966171168
    %v6812 = vunpack.c.0.s8 %v6811
    %v6813 = vlaneseq
    %v6814 = vshrl.u32 %v6813, 7
    %v6815 = vsub.s32 %v6812, %v6814
    %v6816 = vrot.slane %v6802, %v6815
    %v6818 = vunpack.c.l.s4 1966171168
    %v6819 = vunpack.c.0.s8 %v6818
    %v6820 = vlaneseq
    %v6821 = vshrl.u32 %v6820, 7
    %v6822 = vsub.s32 %v6819, %v6821
    %v6823 = vrot.slane %v6623, %v6822
    %v6824 = vcombine.low %v6809, %v6816
    %v6826 = vunpack.c.l.s4 1966171168
    %v6827 = vunpack.c.0.s8 %v6826
    %v6828 = vlaneseq
    %v6829 = vshrl.u32 %v6828, 7
    %v6830 = vsub.s32 %v6827, %v6829
    %v6831 = vrot.slane %v6824, %v6830
    %v6833 = vunpack.c.l.s4 1966171168
    %v6834 = vunpack.c.0.s8 %v6833
    %v6835 = vlaneseq
    %v6836 = vshrl.u32 %v6835, 7
    %v6837 = vsub.s32 %v6834, %v6836
    %v6838 = vrot.slane %v6823, %v6837
    %v6839 = vcombine.low %v6831, %v6838
    %v6840 = vcombine.low %v6624, %v6625
    %v6841 = vcombine.low %v6626, %v6627
    %v6843 = vunpack.c.l.s4 1966171168
    %v6844 = vunpack.c.0.s8 %v6843
    %v6845 = vlaneseq
    %v6846 = vshrl.u32 %v6845, 7
    %v6847 = vsub.s32 %v6844, %v6846
    %v6848 = vrot.slane %v6840, %v6847
    %v6850 = vunpack.c.l.s4 1966171168
    %v6851 = vunpack.c.0.s8 %v6850
    %v6852 = vlaneseq
    %v6853 = vshrl.u32 %v6852, 7
    %v6854 = vsub.s32 %v6851, %v6853
    %v6855 = vrot.slane %v6841, %v6854
    %v6857 = vunpack.c.l.s4 1966171168
    %v6858 = vunpack.c.0.s8 %v6857
    %v6859 = vlaneseq
    %v6860 = vshrl.u32 %v6859, 7
    %v6861 = vsub.s32 %v6858, %v6860
    %v6862 = vrot.slane %v6628, %v6861
    %v6863 = vcombine.low %v6848, %v6855
    %v6865 = vunpack.c.l.s4 1966171168
    %v6866 = vunpack.c.0.s8 %v6865
    %v6867 = vlaneseq
    %v6868 = vshrl.u32 %v6867, 7
    %v6869 = vsub.s32 %v6866, %v6868
    %v6870 = vrot.slane %v6863, %v6869
    %v6872 = vunpack.c.l.s4 1966171168
    %v6873 = vunpack.c.0.s8 %v6872
    %v6874 = vlaneseq
    %v6875 = vshrl.u32 %v6874, 7
    %v6876 = vsub.s32 %v6873, %v6875
    %v6877 = vrot.slane %v6862, %v6876
    %v6878 = vcombine.low %v6870, %v6877
    %v6879 = vcombine.low %v6629, %v6630
    %v6880 = vcombine.low %v6631, %v6632
    %v6882 = vunpack.c.l.s4 1966171168
    %v6883 = vunpack.c.0.s8 %v6882
    %v6884 = vlaneseq
    %v6885 = vshrl.u32 %v6884, 7
    %v6886 = vsub.s32 %v6883, %v6885
    %v6887 = vrot.slane %v6879, %v6886
    %v6889 = vunpack.c.l.s4 1966171168
    %v6890 = vunpack.c.0.s8 %v6889
    %v6891 = vlaneseq
    %v6892 = vshrl.u32 %v6891, 7
    %v6893 = vsub.s32 %v6890, %v6892
    %v6894 = vrot.slane %v6880, %v6893
    %v6896 = vunpack.c.l.s4 1966171168
    %v6897 = vunpack.c.0.s8 %v6896
    %v6898 = vlaneseq
    %v6899 = vshrl.u32 %v6898, 7
    %v6900 = vsub.s32 %v6897, %v6899
    %v6901 = vrot.slane %v6633, %v6900
    %v6902 = vcombine.low %v6887, %v6894
    %v6904 = vunpack.c.l.s4 1966171168
    %v6905 = vunpack.c.0.s8 %v6904
    %v6906 = vlaneseq
    %v6907 = vshrl.u32 %v6906, 7
    %v6908 = vsub.s32 %v6905, %v6907
    %v6909 = vrot.slane %v6902, %v6908
    %v6911 = vunpack.c.l.s4 1966171168
    %v6912 = vunpack.c.0.s8 %v6911
    %v6913 = vlaneseq
    %v6914 = vshrl.u32 %v6913, 7
    %v6915 = vsub.s32 %v6912, %v6914
    %v6916 = vrot.slane %v6901, %v6915
    %v6917 = vcombine.low %v6909, %v6916
    %v6918 = vcombine.low %v6634, %v6635
    %v6919 = vcombine.low %v6636, %v6637
    %v6921 = vunpack.c.l.s4 1966171168
    %v6922 = vunpack.c.0.s8 %v6921
    %v6923 = vlaneseq
    %v6924 = vshrl.u32 %v6923, 7
    %v6925 = vsub.s32 %v6922, %v6924
    %v6926 = vrot.slane %v6918, %v6925
    %v6928 = vunpack.c.l.s4 1966171168
    %v6929 = vunpack.c.0.s8 %v6928
    %v6930 = vlaneseq
    %v6931 = vshrl.u32 %v6930, 7
    %v6932 = vsub.s32 %v6929, %v6931
    %v6933 = vrot.slane %v6919, %v6932
    %v6935 = vunpack.c.l.s4 1966171168
    %v6936 = vunpack.c.0.s8 %v6935
    %v6937 = vlaneseq
    %v6938 = vshrl.u32 %v6937, 7
    %v6939 = vsub.s32 %v6936, %v6938
    %v6940 = vrot.slane %v6638, %v6939
    %v6941 = vcombine.low %v6926, %v6933
    %v6943 = vunpack.c.l.s4 1966171168
    %v6944 = vunpack.c.0.s8 %v6943
    %v6945 = vlaneseq
    %v6946 = vshrl.u32 %v6945, 7
    %v6947 = vsub.s32 %v6944, %v6946
    %v6948 = vrot.slane %v6941, %v6947
    %v6950 = vunpack.c.l.s4 1966171168
    %v6951 = vunpack.c.0.s8 %v6950
    %v6952 = vlaneseq
    %v6953 = vshrl.u32 %v6952, 7
    %v6954 = vsub.s32 %v6951, %v6953
    %v6955 = vrot.slane %v6940, %v6954
    %v6956 = vcombine.low %v6948, %v6955
    %v6957 = vcombine.low %v6639, %v6640
    %v6958 = vcombine.low %v6641, %v6642
    %v6960 = vunpack.c.l.s4 1966171168
    %v6961 = vunpack.c.0.s8 %v6960
    %v6962 = vlaneseq
    %v6963 = vshrl.u32 %v6962, 7
    %v6964 = vsub.s32 %v6961, %v6963
    %v6965 = vrot.slane %v6957, %v6964
    %v6967 = vunpack.c.l.s4 1966171168
    %v6968 = vunpack.c.0.s8 %v6967
    %v6969 = vlaneseq
    %v6970 = vshrl.u32 %v6969, 7
    %v6971 = vsub.s32 %v6968, %v6970
    %v6972 = vrot.slane %v6958, %v6971
    %v6974 = vunpack.c.l.s4 1966171168
    %v6975 = vunpack.c.0.s8 %v6974
    %v6976 = vlaneseq
    %v6977 = vshrl.u32 %v6976, 7
    %v6978 = vsub.s32 %v6975, %v6977
    %v6979 = vrot.slane %v6643, %v6978
    %v6980 = vcombine.low %v6965, %v6972
    %v6982 = vunpack.c.l.s4 1966171168
    %v6983 = vunpack.c.0.s8 %v6982
    %v6984 = vlaneseq
    %v6985 = vshrl.u32 %v6984, 7
    %v6986 = vsub.s32 %v6983, %v6985
    %v6987 = vrot.slane %v6980, %v6986
    %v6989 = vunpack.c.l.s4 1966171168
    %v6990 = vunpack.c.0.s8 %v6989
    %v6991 = vlaneseq
    %v6992 = vshrl.u32 %v6991, 7
    %v6993 = vsub.s32 %v6990, %v6992
    %v6994 = vrot.slane %v6979, %v6993
    %v6995 = vcombine.low %v6987, %v6994
    %vm7004 = vcmask 1044480
    %v7005 = vsel %vm7004, %v6722, 0.0
    %v7006 = vrot.slane %v7005, 4
    %v7007 = vadd.f32 %v7005, %v7006
    %v7008 = vrot.slane %v7007, 2
    %v7009 = vadd.f32 %v7007, %v7008
    %v7010 = vrot.slane %v7009, 1
    %v7011 = vadd.f32 %v7009, %v7010
    %v7012 = vsel %vm7004, %v6761, 0.0
    %v7013 = vrot.slane %v7012, 4
    %v7014 = vadd.f32 %v7012, %v7013
    %v7015 = vrot.slane %v7014, 2
    %v7016 = vadd.f32 %v7014, %v7015
    %v7017 = vrot.slane %v7016, 1
    %v7018 = vadd.f32 %v7016, %v7017
    %v7019 = vsel %vm7004, %v6800, 0.0
    %v7020 = vrot.slane %v7019, 4
    %v7021 = vadd.f32 %v7019, %v7020
    %v7022 = vrot.slane %v7021, 2
    %v7023 = vadd.f32 %v7021, %v7022
    %v7024 = vrot.slane %v7023, 1
    %v7025 = vadd.f32 %v7023, %v7024
    %v7026 = vsel %vm7004, %v6839, 0.0
    %v7027 = vrot.slane %v7026, 4
    %v7028 = vadd.f32 %v7026, %v7027
    %v7029 = vrot.slane %v7028, 2
    %v7030 = vadd.f32 %v7028, %v7029
    %v7031 = vrot.slane %v7030, 1
    %v7032 = vadd.f32 %v7030, %v7031
    %v7033 = vsel %vm7004, %v6878, 0.0
    %v7034 = vrot.slane %v7033, 4
    %v7035 = vadd.f32 %v7033, %v7034
    %v7036 = vrot.slane %v7035, 2
    %v7037 = vadd.f32 %v7035, %v7036
    %v7038 = vrot.slane %v7037, 1
    %v7039 = vadd.f32 %v7037, %v7038
    %v7040 = vsel %vm7004, %v6917, 0.0
    %v7041 = vrot.slane %v7040, 4
    %v7042 = vadd.f32 %v7040, %v7041
    %v7043 = vrot.slane %v7042, 2
    %v7044 = vadd.f32 %v7042, %v7043
    %v7045 = vrot.slane %v7044, 1
    %v7046 = vadd.f32 %v7044, %v7045
    %v7047 = vsel %vm7004, %v6956, 0.0
    %v7048 = vrot.slane %v7047, 4
    %v7049 = vadd.f32 %v7047, %v7048
    %v7050 = vrot.slane %v7049, 2
    %v7051 = vadd.f32 %v7049, %v7050
    %v7052 = vrot.slane %v7051, 1
    %v7053 = vadd.f32 %v7051, %v7052
    %v7054 = vsel %vm7004, %v6995, 0.0
    %v7055 = vrot.slane %v7054, 4
    %v7056 = vadd.f32 %v7054, %v7055
    %v7057 = vrot.slane %v7056, 2
    %v7058 = vadd.f32 %v7056, %v7057
    %v7059 = vrot.slane %v7058, 1
    %v7060 = vadd.f32 %v7058, %v7059
    %v7061 = vrcp.pop 5.0
    %v7062 = vmul.f32 %v7011, %v7061
    %v7063 = vmul.f32 %v7018, %v7061
    %v7064 = vmul.f32 %v7025, %v7061
    %v7065 = vmul.f32 %v7032, %v7061
    %v7066 = vmul.f32 %v7039, %v7061
    %v7067 = vmul.f32 %v7046, %v7061
    %v7068 = vmul.f32 %v7053, %v7061
    %v7069 = vmul.f32 %v7060, %v7061
    %v7070 = vpack.c.bf16 %v7062, %v7062
    %v7071 = vpack.c.bf16 %v7063, %v7063
    %v7072 = vpack.c.bf16 %v7064, %v7064
    %v7073 = vpack.c.bf16 %v7065, %v7065
    %v7074 = vpack.c.bf16 %v7066, %v7066
    %v7075 = vpack.c.bf16 %v7067, %v7067
    %v7076 = vpack.c.bf16 %v7068, %v7068
    %v7077 = vpack.c.bf16 %v7069, %v7069
    %v7078 = vld [vmem:[#allocation12] sm:$0xf]
    %v7079 = vld [vmem:[#allocation12 + $0x4] sm:$0xf]
    %v7080 = vld [vmem:[#allocation12 + $0x8] sm:$0xf]
    %v7081 = vld [vmem:[#allocation12 + $0xc] sm:$0xf]
    %v7082 = vld [vmem:[#allocation12 + $0x10] sm:$0xf]
    %v7083 = vld [vmem:[#allocation12 + $0x14] sm:$0xf]
    %v7084 = vld [vmem:[#allocation12 + $0x18] sm:$0xf]
    %v7085 = vld [vmem:[#allocation12 + $0x1c] sm:$0xf]
    %v7086 = vld [vmem:[#allocation12 + $0x20] sm:$0xf]
    %v7087 = vld [vmem:[#allocation12 + $0x24] sm:$0xf]
    %v7088 = vld [vmem:[#allocation12 + $0x28] sm:$0xf]
    %v7089 = vld [vmem:[#allocation12 + $0x2c] sm:$0xf]
    %v7090 = vld [vmem:[#allocation12 + $0x30] sm:$0xf]
    %v7091 = vld [vmem:[#allocation12 + $0x34] sm:$0xf]
    %v7092 = vld [vmem:[#allocation12 + $0x38] sm:$0xf]
    %v7093 = vld [vmem:[#allocation12 + $0x3c] sm:$0xf]
    %v7094 = vld [vmem:[#allocation19 + $0x4] sm:$0x1]
    %v7095 = vlaneseq
    %v7096 = vshrl.u32 %v7095, 7
    %v7097 = vsub.s32 0, %v7096
    %v7098 = vrot.slane %v7094, %v7097
    %v7107 = vunpack.c.l.b16 %v7070
    %v7108 = vunpack.c.l.b16 %v7071
    %v7109 = vunpack.c.l.b16 %v7072
    %v7110 = vunpack.c.l.b16 %v7073
    %v7111 = vunpack.c.l.b16 %v7074
    %v7112 = vunpack.c.l.b16 %v7075
    %v7113 = vunpack.c.l.b16 %v7076
    %v7114 = vunpack.c.l.b16 %v7077
    %v7115 = vsel %vm1215, %v7108, %v7107
    %v7116 = vsel %vm1218, %v7109, %v7115
    %v7117 = vsel %vm1221, %v7110, %v7116
    %v7118 = vsel %vm1224, %v7111, %v7117
    %v7119 = vsel %vm1227, %v7112, %v7118
    %v7120 = vsel %vm1230, %v7113, %v7119
    %v7121 = vsel %vm1233, %v7114, %v7120
    %v7122 = vpack.c.b16 %v7121, %v7121
    %v7140 = vunpack.c.l.b16 %v7078
    %v7141 = vunpack.c.l.b16 %v7079
    %v7142 = vunpack.c.l.b16 %v7080
    %v7143 = vunpack.c.l.b16 %v7081
    %v7144 = vunpack.c.l.b16 %v7082
    %v7145 = vunpack.c.l.b16 %v7083
    %v7146 = vunpack.c.l.b16 %v7084
    %v7147 = vunpack.c.l.b16 %v7085
    %v7148 = vunpack.c.l.b16 %v7086
    %v7149 = vunpack.c.l.b16 %v7087
    %v7150 = vunpack.c.l.b16 %v7088
    %v7151 = vunpack.c.l.b16 %v7089
    %v7152 = vunpack.c.l.b16 %v7090
    %v7153 = vunpack.c.l.b16 %v7091
    %v7154 = vunpack.c.l.b16 %v7092
    %v7155 = vunpack.c.l.b16 %v7093
    %v7156 = vpack.c.b16 %v7141, %v7140
    %v7157 = vpack.c.b16 %v7143, %v7142
    %v7158 = vpack.c.b16 %v7145, %v7144
    %v7159 = vpack.c.b16 %v7147, %v7146
    %v7160 = vpack.c.b16 %v7149, %v7148
    %v7161 = vpack.c.b16 %v7151, %v7150
    %v7162 = vpack.c.b16 %v7153, %v7152
    %v7163 = vpack.c.b16 %v7155, %v7154
    %7172 = vmatprep.subr.bf16.mxu0 0
    %7173 = vmatpush1.bf16.msra.mxu0 %v7156
    %7174 = vmatprep.subr.bf16.mxu0 0
    %7175 = vmatpush1.bf16.msra.mxu0 %v7157
    %7176 = vmatprep.subr.bf16.mxu0 0
    %7177 = vmatpush1.bf16.msra.mxu0 %v7158
    %7178 = vmatprep.subr.bf16.mxu0 0
    %7179 = vmatpush1.bf16.msra.mxu0 %v7159
    %7180 = vmatprep.subr.bf16.mxu0 0
    %7181 = vmatpush1.bf16.msra.mxu0 %v7160
    %7182 = vmatprep.subr.bf16.mxu0 0
    %7183 = vmatpush1.bf16.msra.mxu0 %v7161
    %7184 = vmatprep.subr.bf16.mxu0 0
    %7185 = vmatpush1.bf16.msra.mxu0 %v7162
    %7186 = vmatprep.subr.bf16.mxu0 0
    %7187 = vmatpush1.bf16.msra.mxu0 %v7163
    %7188 = vmatprep.subr.bf16.mxu0 0
    %7189 = vmatpush1.bf16.msra.mxu0 0
    %7190 = vmatprep.subr.bf16.mxu0 0
    %7191 = vmatpush1.bf16.msra.mxu0 0
    %7192 = vmatprep.subr.bf16.mxu0 0
    %7193 = vmatpush1.bf16.msra.mxu0 0
    %7194 = vmatprep.subr.bf16.mxu0 0
    %7195 = vmatpush1.bf16.msra.mxu0 0
    %7196 = vmatprep.subr.bf16.mxu0 0
    %7197 = vmatpush1.bf16.msra.mxu0 0
    %7198 = vmatprep.subr.bf16.mxu0 0
    %7199 = vmatpush1.bf16.msra.mxu0 0
    %7200 = vmatprep.subr.bf16.mxu0 0
    %7201 = vmatpush1.bf16.msra.mxu0 0
    %7202 = vmatprep.subr.bf16.mxu0 0
    %7203 = vmatpush1.bf16.msra.mxu0 0
    %7204 = vmatprep.mubr.bf16.mxu0 0
    %7205 = vmatmul.mubr.bf16.gmra.mrb[0].mxu0 %v7122
    %v7206 = vpop.f32.mrb[0].mxu0
    %v7207 = vadd.f32 %v7098, %v7206
    %v7208 = vpop.f32.mrb[0].mxu0
    %v7209 = vpop.f32.mrb[0].mxu0
    %v7210 = vpop.f32.mrb[0].mxu0
    %7211 = vdwg.mxu0
    %v7212 = vmax.f32 %v7207, 0.0
    %v7213 = vpack.c.bf16 %v3642, %v3642
    %v7214 = vld [vmem:[#allocation13] sm:$0xff]
    %v7215 = vld [vmem:[#allocation13 + $0x8] sm:$0xff]
    %v7216 = vld [vmem:[#allocation13 + $0x10] sm:$0xff]
    %v7217 = vld [vmem:[#allocation13 + $0x18] sm:$0xff]
    %v7218 = vld [vmem:[#allocation13 + $0x20] sm:$0xff]
    %v7219 = vld [vmem:[#allocation13 + $0x28] sm:$0xff]
    %v7220 = vld [vmem:[#allocation13 + $0x30] sm:$0xff]
    %v7221 = vld [vmem:[#allocation13 + $0x38] sm:$0xff]
    %v7222 = vld [vmem:[#allocation13 + $0x40] sm:$0xff]
    %v7223 = vld [vmem:[#allocation13 + $0x48] sm:$0xff]
    %v7224 = vld [vmem:[#allocation13 + $0x50] sm:$0xff]
    %v7225 = vld [vmem:[#allocation13 + $0x58] sm:$0xff]
    %v7226 = vld [vmem:[#allocation13 + $0x60] sm:$0xff]
    %v7227 = vld [vmem:[#allocation13 + $0x68] sm:$0xff]
    %v7228 = vld [vmem:[#allocation13 + $0x70] sm:$0xff]
    %v7229 = vld [vmem:[#allocation13 + $0x78] sm:$0xff]
    %v7230 = vpack.c.bf16 %v4140, %v4140
    %v7231 = vld [vmem:[#allocation13 + $0x80] sm:$0xff]
    %v7232 = vld [vmem:[#allocation13 + $0x88] sm:$0xff]
    %v7233 = vld [vmem:[#allocation13 + $0x90] sm:$0xff]
    %v7234 = vld [vmem:[#allocation13 + $0x98] sm:$0xff]
    %v7235 = vld [vmem:[#allocation13 + $0xa0] sm:$0xff]
    %v7236 = vld [vmem:[#allocation13 + $0xa8] sm:$0xff]
    %v7237 = vld [vmem:[#allocation13 + $0xb0] sm:$0xff]
    %v7238 = vld [vmem:[#allocation13 + $0xb8] sm:$0xff]
    %v7239 = vld [vmem:[#allocation13 + $0xc0] sm:$0xff]
    %v7240 = vld [vmem:[#allocation13 + $0xc8] sm:$0xff]
    %v7241 = vld [vmem:[#allocation13 + $0xd0] sm:$0xff]
    %v7242 = vld [vmem:[#allocation13 + $0xd8] sm:$0xff]
    %v7243 = vld [vmem:[#allocation13 + $0xe0] sm:$0xff]
    %v7244 = vld [vmem:[#allocation13 + $0xe8] sm:$0xff]
    %v7245 = vld [vmem:[#allocation13 + $0xf0] sm:$0xff]
    %v7246 = vld [vmem:[#allocation13 + $0xf8] sm:$0xff]
    %v7263 = vunpack.c.l.b16 %v7231
    %v7264 = vunpack.c.h.b16 %v7231
    %v7265 = vunpack.c.l.b16 %v7232
    %v7266 = vunpack.c.h.b16 %v7232
    %v7267 = vunpack.c.l.b16 %v7233
    %v7268 = vunpack.c.h.b16 %v7233
    %v7269 = vunpack.c.l.b16 %v7234
    %v7270 = vunpack.c.h.b16 %v7234
    %v7271 = vunpack.c.l.b16 %v7235
    %v7272 = vunpack.c.h.b16 %v7235
    %v7273 = vunpack.c.l.b16 %v7236
    %v7274 = vunpack.c.h.b16 %v7236
    %v7275 = vunpack.c.l.b16 %v7237
    %v7276 = vunpack.c.h.b16 %v7237
    %v7277 = vunpack.c.l.b16 %v7238
    %v7278 = vunpack.c.h.b16 %v7238
    %v7279 = vunpack.c.l.b16 %v7239
    %v7280 = vunpack.c.h.b16 %v7239
    %v7281 = vunpack.c.l.b16 %v7240
    %v7282 = vunpack.c.h.b16 %v7240
    %v7283 = vunpack.c.l.b16 %v7241
    %v7284 = vunpack.c.h.b16 %v7241
    %v7285 = vunpack.c.l.b16 %v7242
    %v7286 = vunpack.c.h.b16 %v7242
    %v7287 = vunpack.c.l.b16 %v7243
    %v7288 = vunpack.c.h.b16 %v7243
    %v7289 = vunpack.c.l.b16 %v7244
    %v7290 = vunpack.c.h.b16 %v7244
    %v7291 = vunpack.c.l.b16 %v7245
    %v7292 = vunpack.c.h.b16 %v7245
    %v7293 = vunpack.c.l.b16 %v7246
    %v7294 = vunpack.c.h.b16 %v7246
    %v7295 = vpack.c.b16 %v7265, %v7263
    %v7296 = vpack.c.b16 %v7266, %v7264
    %v7297 = vpack.c.b16 %v7269, %v7267
    %v7298 = vpack.c.b16 %v7270, %v7268
    %v7299 = vpack.c.b16 %v7273, %v7271
    %v7300 = vpack.c.b16 %v7274, %v7272
    %v7301 = vpack.c.b16 %v7277, %v7275
    %v7302 = vpack.c.b16 %v7278, %v7276
    %v7303 = vpack.c.b16 %v7281, %v7279
    %v7304 = vpack.c.b16 %v7282, %v7280
    %v7305 = vpack.c.b16 %v7285, %v7283
    %v7306 = vpack.c.b16 %v7286, %v7284
    %v7307 = vpack.c.b16 %v7289, %v7287
    %v7308 = vpack.c.b16 %v7290, %v7288
    %v7309 = vpack.c.b16 %v7293, %v7291
    %v7310 = vpack.c.b16 %v7294, %v7292
    %7327 = vmatprep.subr.bf16.mxu0 %v7296
    %7328 = vmatpush1.bf16.msra.mxu0 %v7295
    %7329 = vmatprep.subr.bf16.mxu0 %v7298
    %7330 = vmatpush1.bf16.msra.mxu0 %v7297
    %7331 = vmatprep.subr.bf16.mxu0 %v7300
    %7332 = vmatpush1.bf16.msra.mxu0 %v7299
    %7333 = vmatprep.subr.bf16.mxu0 %v7302
    %7334 = vmatpush1.bf16.msra.mxu0 %v7301
    %7335 = vmatprep.subr.bf16.mxu0 %v7304
    %7336 = vmatpush1.bf16.msra.mxu0 %v7303
    %7337 = vmatprep.subr.bf16.mxu0 %v7306
    %7338 = vmatpush1.bf16.msra.mxu0 %v7305
    %7339 = vmatprep.subr.bf16.mxu0 %v7308
    %7340 = vmatpush1.bf16.msra.mxu0 %v7307
    %7341 = vmatprep.subr.bf16.mxu0 %v7310
    %7342 = vmatpush1.bf16.msra.mxu0 %v7309
    %7343 = vmatprep.subr.bf16.mxu0 0
    %7344 = vmatpush1.bf16.msra.mxu0 0
    %7345 = vmatprep.subr.bf16.mxu0 0
    %7346 = vmatpush1.bf16.msra.mxu0 0
    %7347 = vmatprep.subr.bf16.mxu0 0
    %7348 = vmatpush1.bf16.msra.mxu0 0
    %7349 = vmatprep.subr.bf16.mxu0 0
    %7350 = vmatpush1.bf16.msra.mxu0 0
    %7351 = vmatprep.subr.bf16.mxu0 0
    %7352 = vmatpush1.bf16.msra.mxu0 0
    %7353 = vmatprep.subr.bf16.mxu0 0
    %7354 = vmatpush1.bf16.msra.mxu0 0
    %7355 = vmatprep.subr.bf16.mxu0 0
    %7356 = vmatpush1.bf16.msra.mxu0 0
    %7357 = vmatprep.subr.bf16.mxu0 0
    %7358 = vmatpush1.bf16.msra.mxu0 0
    %7359 = vmatprep.mubr.bf16.mxu0 0
    %7360 = vmatmul.mubr.bf16.gmra.mrb[0].mxu0 %v7230
    %v7361 = vpop.f32.mrb[0].mxu0
    %v7362 = vadd.f32 0.0, %v7361
    %v7363 = vpop.f32.mrb[0].mxu0
    %v7364 = vadd.f32 0.0, %v7363
    %v7365 = vpop.f32.mrb[0].mxu0
    %v7366 = vpop.f32.mrb[0].mxu0
    %7367 = vdwg.mxu0
    %v7384 = vunpack.c.l.b16 %v7214
    %v7385 = vunpack.c.h.b16 %v7214
    %v7386 = vunpack.c.l.b16 %v7215
    %v7387 = vunpack.c.h.b16 %v7215
    %v7388 = vunpack.c.l.b16 %v7216
    %v7389 = vunpack.c.h.b16 %v7216
    %v7390 = vunpack.c.l.b16 %v7217
    %v7391 = vunpack.c.h.b16 %v7217
    %v7392 = vunpack.c.l.b16 %v7218
    %v7393 = vunpack.c.h.b16 %v7218
    %v7394 = vunpack.c.l.b16 %v7219
    %v7395 = vunpack.c.h.b16 %v7219
    %v7396 = vunpack.c.l.b16 %v7220
    %v7397 = vunpack.c.h.b16 %v7220
    %v7398 = vunpack.c.l.b16 %v7221
    %v7399 = vunpack.c.h.b16 %v7221
    %v7400 = vunpack.c.l.b16 %v7222
    %v7401 = vunpack.c.h.b16 %v7222
    %v7402 = vunpack.c.l.b16 %v7223
    %v7403 = vunpack.c.h.b16 %v7223
    %v7404 = vunpack.c.l.b16 %v7224
    %v7405 = vunpack.c.h.b16 %v7224
    %v7406 = vunpack.c.l.b16 %v7225
    %v7407 = vunpack.c.h.b16 %v7225
    %v7408 = vunpack.c.l.b16 %v7226
    %v7409 = vunpack.c.h.b16 %v7226
    %v7410 = vunpack.c.l.b16 %v7227
    %v7411 = vunpack.c.h.b16 %v7227
    %v7412 = vunpack.c.l.b16 %v7228
    %v7413 = vunpack.c.h.b16 %v7228
    %v7414 = vunpack.c.l.b16 %v7229
    %v7415 = vunpack.c.h.b16 %v7229
    %v7416 = vpack.c.b16 %v7386, %v7384
    %v7417 = vpack.c.b16 %v7387, %v7385
    %v7418 = vpack.c.b16 %v7390, %v7388
    %v7419 = vpack.c.b16 %v7391, %v7389
    %v7420 = vpack.c.b16 %v7394, %v7392
    %v7421 = vpack.c.b16 %v7395, %v7393
    %v7422 = vpack.c.b16 %v7398, %v7396
    %v7423 = vpack.c.b16 %v7399, %v7397
    %v7424 = vpack.c.b16 %v7402, %v7400
    %v7425 = vpack.c.b16 %v7403, %v7401
    %v7426 = vpack.c.b16 %v7406, %v7404
    %v7427 = vpack.c.b16 %v7407, %v7405
    %v7428 = vpack.c.b16 %v7410, %v7408
    %v7429 = vpack.c.b16 %v7411, %v7409
    %v7430 = vpack.c.b16 %v7414, %v7412
    %v7431 = vpack.c.b16 %v7415, %v7413
    %7448 = vmatprep.subr.bf16.mxu0 %v7417
    %7449 = vmatpush1.bf16.msra.mxu0 %v7416
    %7450 = vmatprep.subr.bf16.mxu0 %v7419
    %7451 = vmatpush1.bf16.msra.mxu0 %v7418
    %7452 = vmatprep.subr.bf16.mxu0 %v7421
    %7453 = vmatpush1.bf16.msra.mxu0 %v7420
    %7454 = vmatprep.subr.bf16.mxu0 %v7423
    %7455 = vmatpush1.bf16.msra.mxu0 %v7422
    %7456 = vmatprep.subr.bf16.mxu0 %v7425
    %7457 = vmatpush1.bf16.msra.mxu0 %v7424
    %7458 = vmatprep.subr.bf16.mxu0 %v7427
    %7459 = vmatpush1.bf16.msra.mxu0 %v7426
    %7460 = vmatprep.subr.bf16.mxu0 %v7429
    %7461 = vmatpush1.bf16.msra.mxu0 %v7428
    %7462 = vmatprep.subr.bf16.mxu0 %v7431
    %7463 = vmatpush1.bf16.msra.mxu0 %v7430
    %7464 = vmatprep.subr.bf16.mxu0 0
    %7465 = vmatpush1.bf16.msra.mxu0 0
    %7466 = vmatprep.subr.bf16.mxu0 0
    %7467 = vmatpush1.bf16.msra.mxu0 0
    %7468 = vmatprep.subr.bf16.mxu0 0
    %7469 = vmatpush1.bf16.msra.mxu0 0
    %7470 = vmatprep.subr.bf16.mxu0 0
    %7471 = vmatpush1.bf16.msra.mxu0 0
    %7472 = vmatprep.subr.bf16.mxu0 0
    %7473 = vmatpush1.bf16.msra.mxu0 0
    %7474 = vmatprep.subr.bf16.mxu0 0
    %7475 = vmatpush1.bf16.msra.mxu0 0
    %7476 = vmatprep.subr.bf16.mxu0 0
    %7477 = vmatpush1.bf16.msra.mxu0 0
    %7478 = vmatprep.subr.bf16.mxu0 0
    %7479 = vmatpush1.bf16.msra.mxu0 0
    %7480 = vmatprep.mubr.bf16.mxu0 0
    %7481 = vmatmul.mubr.bf16.gmra.mrb[0].mxu0 %v7213
    %v7482 = vpop.f32.mrb[0].mxu0
    %v7483 = vadd.f32 %v7362, %v7482
    %v7484 = vpop.f32.mrb[0].mxu0
    %v7485 = vadd.f32 %v7364, %v7484
    %v7486 = vpop.f32.mrb[0].mxu0
    %v7487 = vpop.f32.mrb[0].mxu0
    %7488 = vdwg.mxu0
    %v7489 = vpack.c.bf16 %v7212, %v7212
    %v7490 = vld [vmem:[#allocation13 + $0x100] sm:$0xff]
    %v7491 = vld [vmem:[#allocation13 + $0x108] sm:$0xff]
    %v7492 = vld [vmem:[#allocation13 + $0x110] sm:$0xff]
    %v7493 = vld [vmem:[#allocation13 + $0x118] sm:$0xff]
    %v7494 = vld [vmem:[#allocation13 + $0x120] sm:$0xff]
    %v7495 = vld [vmem:[#allocation13 + $0x128] sm:$0xff]
    %v7496 = vld [vmem:[#allocation13 + $0x130] sm:$0xff]
    %v7497 = vld [vmem:[#allocation13 + $0x138] sm:$0xff]
    %v7498 = vld [vmem:[#allocation13 + $0x140] sm:$0xff]
    %v7499 = vld [vmem:[#allocation13 + $0x148] sm:$0xff]
    %v7500 = vld [vmem:[#allocation13 + $0x150] sm:$0xff]
    %v7501 = vld [vmem:[#allocation13 + $0x158] sm:$0xff]
    %v7502 = vld [vmem:[#allocation13 + $0x160] sm:$0xff]
    %v7503 = vld [vmem:[#allocation13 + $0x168] sm:$0xff]
    %v7504 = vld [vmem:[#allocation13 + $0x170] sm:$0xff]
    %v7505 = vld [vmem:[#allocation13 + $0x178] sm:$0xff]
    %v7522 = vunpack.c.l.b16 %v7490
    %v7523 = vunpack.c.h.b16 %v7490
    %v7524 = vunpack.c.l.b16 %v7491
    %v7525 = vunpack.c.h.b16 %v7491
    %v7526 = vunpack.c.l.b16 %v7492
    %v7527 = vunpack.c.h.b16 %v7492
    %v7528 = vunpack.c.l.b16 %v7493
    %v7529 = vunpack.c.h.b16 %v7493
    %v7530 = vunpack.c.l.b16 %v7494
    %v7531 = vunpack.c.h.b16 %v7494
    %v7532 = vunpack.c.l.b16 %v7495
    %v7533 = vunpack.c.h.b16 %v7495
    %v7534 = vunpack.c.l.b16 %v7496
    %v7535 = vunpack.c.h.b16 %v7496
    %v7536 = vunpack.c.l.b16 %v7497
    %v7537 = vunpack.c.h.b16 %v7497
    %v7538 = vunpack.c.l.b16 %v7498
    %v7539 = vunpack.c.h.b16 %v7498
    %v7540 = vunpack.c.l.b16 %v7499
    %v7541 = vunpack.c.h.b16 %v7499
    %v7542 = vunpack.c.l.b16 %v7500
    %v7543 = vunpack.c.h.b16 %v7500
    %v7544 = vunpack.c.l.b16 %v7501
    %v7545 = vunpack.c.h.b16 %v7501
    %v7546 = vunpack.c.l.b16 %v7502
    %v7547 = vunpack.c.h.b16 %v7502
    %v7548 = vunpack.c.l.b16 %v7503
    %v7549 = vunpack.c.h.b16 %v7503
    %v7550 = vunpack.c.l.b16 %v7504
    %v7551 = vunpack.c.h.b16 %v7504
    %v7552 = vunpack.c.l.b16 %v7505
    %v7553 = vunpack.c.h.b16 %v7505
    %v7554 = vpack.c.b16 %v7524, %v7522
    %v7555 = vpack.c.b16 %v7525, %v7523
    %v7556 = vpack.c.b16 %v7528, %v7526
    %v7557 = vpack.c.b16 %v7529, %v7527
    %v7558 = vpack.c.b16 %v7532, %v7530
    %v7559 = vpack.c.b16 %v7533, %v7531
    %v7560 = vpack.c.b16 %v7536, %v7534
    %v7561 = vpack.c.b16 %v7537, %v7535
    %v7562 = vpack.c.b16 %v7540, %v7538
    %v7563 = vpack.c.b16 %v7541, %v7539
    %v7564 = vpack.c.b16 %v7544, %v7542
    %v7565 = vpack.c.b16 %v7545, %v7543
    %v7566 = vpack.c.b16 %v7548, %v7546
    %v7567 = vpack.c.b16 %v7549, %v7547
    %v7568 = vpack.c.b16 %v7552, %v7550
    %v7569 = vpack.c.b16 %v7553, %v7551
    %7586 = vmatprep.subr.bf16.mxu0 %v7555
    %7587 = vmatpush1.bf16.msra.mxu0 %v7554
    %7588 = vmatprep.subr.bf16.mxu0 %v7557
    %7589 = vmatpush1.bf16.msra.mxu0 %v7556
    %7590 = vmatprep.subr.bf16.mxu0 %v7559
    %7591 = vmatpush1.bf16.msra.mxu0 %v7558
    %7592 = vmatprep.subr.bf16.mxu0 %v7561
    %7593 = vmatpush1.bf16.msra.mxu0 %v7560
    %7594 = vmatprep.subr.bf16.mxu0 %v7563
    %7595 = vmatpush1.bf16.msra.mxu0 %v7562
    %7596 = vmatprep.subr.bf16.mxu0 %v7565
    %7597 = vmatpush1.bf16.msra.mxu0 %v7564
    %7598 = vmatprep.subr.bf16.mxu0 %v7567
    %7599 = vmatpush1.bf16.msra.mxu0 %v7566
    %7600 = vmatprep.subr.bf16.mxu0 %v7569
    %7601 = vmatpush1.bf16.msra.mxu0 %v7568
    %7602 = vmatprep.subr.bf16.mxu0 0
    %7603 = vmatpush1.bf16.msra.mxu0 0
    %7604 = vmatprep.subr.bf16.mxu0 0
    %7605 = vmatpush1.bf16.msra.mxu0 0
    %7606 = vmatprep.subr.bf16.mxu0 0
    %7607 = vmatpush1.bf16.msra.mxu0 0
    %7608 = vmatprep.subr.bf16.mxu0 0
    %7609 = vmatpush1.bf16.msra.mxu0 0
    %7610 = vmatprep.subr.bf16.mxu0 0
    %7611 = vmatpush1.bf16.msra.mxu0 0
    %7612 = vmatprep.subr.bf16.mxu0 0
    %7613 = vmatpush1.bf16.msra.mxu0 0
    %7614 = vmatprep.subr.bf16.mxu0 0
    %7615 = vmatpush1.bf16.msra.mxu0 0
    %7616 = vmatprep.subr.bf16.mxu0 0
    %7617 = vmatpush1.bf16.msra.mxu0 0
    %7618 = vmatprep.mubr.bf16.mxu0 0
    %7619 = vmatmul.mubr.bf16.gmra.mrb[0].mxu0 %v7489
    %v7620 = vpop.f32.mrb[0].mxu0
    %v7621 = vadd.f32 0.0, %v7620
    %v7622 = vpop.f32.mrb[0].mxu0
    %v7623 = vadd.f32 0.0, %v7622
    %v7624 = vpop.f32.mrb[0].mxu0
    %v7625 = vpop.f32.mrb[0].mxu0
    %7626 = vdwg.mxu0
    %v7627 = vadd.f32 %v7483, %v7621
    %v7628 = vadd.f32 %v7485, %v7623
    %s7629 = scalar_lea.vmem [#allocation18], 2
    %v7630 = vld [vmem:[%s7629] ss:$8 sm:$0x3]
    %v7632 = vlaneseq
    %v7633 = vshrl.u32 %v7632, 7
    %v7634 = vsub.s32 0, %v7633
    %v7635 = vrot.slane %v7630, %v7634
    %v7636 = vlaneseq
    %v7637 = vshrl.u32 %v7636, 7
    %v7638 = vsub.s32 1, %v7637
    %v7639 = vrot.slane %v7630, %v7638
    %v7642 = vadd.f32 %v7627, %v7635
    %v7643 = vadd.f32 %v7628, %v7639
    %v7644 = vmax.f32 %v7642, 0.0
    %v7645 = vmax.f32 %v7643, 0.0
    %v7646 = vpack.c.bf16 %v7644, %v7644
    %v7647 = vpack.c.bf16 %v7645, %v7645
    %v7648 = vld [vmem:[#allocation15] sm:$0xf]
    %v7649 = vld [vmem:[#allocation15 + $0x4] sm:$0xf]
    %v7650 = vld [vmem:[#allocation15 + $0x8] sm:$0xf]
    %v7651 = vld [vmem:[#allocation15 + $0xc] sm:$0xf]
    %v7652 = vld [vmem:[#allocation15 + $0x10] sm:$0xf]
    %v7653 = vld [vmem:[#allocation15 + $0x14] sm:$0xf]
    %v7654 = vld [vmem:[#allocation15 + $0x18] sm:$0xf]
    %v7655 = vld [vmem:[#allocation15 + $0x1c] sm:$0xf]
    %v7656 = vld [vmem:[#allocation15 + $0x20] sm:$0xf]
    %v7657 = vld [vmem:[#allocation15 + $0x24] sm:$0xf]
    %v7658 = vld [vmem:[#allocation15 + $0x28] sm:$0xf]
    %v7659 = vld [vmem:[#allocation15 + $0x2c] sm:$0xf]
    %v7660 = vld [vmem:[#allocation15 + $0x30] sm:$0xf]
    %v7661 = vld [vmem:[#allocation15 + $0x34] sm:$0xf]
    %v7662 = vld [vmem:[#allocation15 + $0x38] sm:$0xf]
    %v7663 = vld [vmem:[#allocation15 + $0x3c] sm:$0xf]
    %v7664 = vld [vmem:[#allocation15 + $0x40] sm:$0xf]
    %v7665 = vld [vmem:[#allocation15 + $0x44] sm:$0xf]
    %v7666 = vld [vmem:[#allocation15 + $0x48] sm:$0xf]
    %v7667 = vld [vmem:[#allocation15 + $0x4c] sm:$0xf]
    %v7668 = vld [vmem:[#allocation15 + $0x50] sm:$0xf]
    %v7669 = vld [vmem:[#allocation15 + $0x54] sm:$0xf]
    %v7670 = vld [vmem:[#allocation15 + $0x58] sm:$0xf]
    %v7671 = vld [vmem:[#allocation15 + $0x5c] sm:$0xf]
    %v7672 = vld [vmem:[#allocation15 + $0x60] sm:$0xf]
    %v7673 = vld [vmem:[#allocation15 + $0x64] sm:$0xf]
    %v7674 = vld [vmem:[#allocation15 + $0x68] sm:$0xf]
    %v7675 = vld [vmem:[#allocation15 + $0x6c] sm:$0xf]
    %v7676 = vld [vmem:[#allocation15 + $0x70] sm:$0xf]
    %v7677 = vld [vmem:[#allocation15 + $0x74] sm:$0xf]
    %v7678 = vld [vmem:[#allocation15 + $0x78] sm:$0xf]
    %v7679 = vld [vmem:[#allocation15 + $0x7c] sm:$0xf]
    %v7680 = vld [vmem:[#allocation19 + $0x5] sm:$0x1]
    %v7681 = vlaneseq
    %v7682 = vshrl.u32 %v7681, 7
    %v7683 = vsub.s32 0, %v7682
    %v7684 = vrot.slane %v7680, %v7683
    %v7717 = vunpack.c.l.b16 %v7648
    %v7718 = vunpack.c.l.b16 %v7649
    %v7719 = vunpack.c.l.b16 %v7650
    %v7720 = vunpack.c.l.b16 %v7651
    %v7721 = vunpack.c.l.b16 %v7652
    %v7722 = vunpack.c.l.b16 %v7653
    %v7723 = vunpack.c.l.b16 %v7654
    %v7724 = vunpack.c.l.b16 %v7655
    %v7725 = vunpack.c.l.b16 %v7656
    %v7726 = vunpack.c.l.b16 %v7657
    %v7727 = vunpack.c.l.b16 %v7658
    %v7728 = vunpack.c.l.b16 %v7659
    %v7729 = vunpack.c.l.b16 %v7660
    %v7730 = vunpack.c.l.b16 %v7661
    %v7731 = vunpack.c.l.b16 %v7662
    %v7732 = vunpack.c.l.b16 %v7663
    %v7733 = vunpack.c.l.b16 %v7664
    %v7734 = vunpack.c.l.b16 %v7665
    %v7735 = vunpack.c.l.b16 %v7666
    %v7736 = vunpack.c.l.b16 %v7667
    %v7737 = vunpack.c.l.b16 %v7668
    %v7738 = vunpack.c.l.b16 %v7669
    %v7739 = vunpack.c.l.b16 %v7670
    %v7740 = vunpack.c.l.b16 %v7671
    %v7741 = vunpack.c.l.b16 %v7672
    %v7742 = vunpack.c.l.b16 %v7673
    %v7743 = vunpack.c.l.b16 %v7674
    %v7744 = vunpack.c.l.b16 %v7675
    %v7745 = vunpack.c.l.b16 %v7676
    %v7746 = vunpack.c.l.b16 %v7677
    %v7747 = vunpack.c.l.b16 %v7678
    %v7748 = vunpack.c.l.b16 %v7679
    %v7749 = vpack.c.b16 %v7718, %v7717
    %v7750 = vpack.c.b16 %v7720, %v7719
    %v7751 = vpack.c.b16 %v7722, %v7721
    %v7752 = vpack.c.b16 %v7724, %v7723
    %v7753 = vpack.c.b16 %v7726, %v7725
    %v7754 = vpack.c.b16 %v7728, %v7727
    %v7755 = vpack.c.b16 %v7730, %v7729
    %v7756 = vpack.c.b16 %v7732, %v7731
    %v7757 = vpack.c.b16 %v7734, %v7733
    %v7758 = vpack.c.b16 %v7736, %v7735
    %v7759 = vpack.c.b16 %v7738, %v7737
    %v7760 = vpack.c.b16 %v7740, %v7739
    %v7761 = vpack.c.b16 %v7742, %v7741
    %v7762 = vpack.c.b16 %v7744, %v7743
    %v7763 = vpack.c.b16 %v7746, %v7745
    %v7764 = vpack.c.b16 %v7748, %v7747
    %7781 = vmatprep.subr.bf16.mxu0 0
    %7782 = vmatpush1.bf16.msra.mxu0 %v7749
    %7783 = vmatprep.subr.bf16.mxu0 0
    %7784 = vmatpush1.bf16.msra.mxu0 %v7750
    %7785 = vmatprep.subr.bf16.mxu0 0
    %7786 = vmatpush1.bf16.msra.mxu0 %v7751
    %7787 = vmatprep.subr.bf16.mxu0 0
    %7788 = vmatpush1.bf16.msra.mxu0 %v7752
    %7789 = vmatprep.subr.bf16.mxu0 0
    %7790 = vmatpush1.bf16.msra.mxu0 %v7753
    %7791 = vmatprep.subr.bf16.mxu0 0
    %7792 = vmatpush1.bf16.msra.mxu0 %v7754
    %7793 = vmatprep.subr.bf16.mxu0 0
    %7794 = vmatpush1.bf16.msra.mxu0 %v7755
    %7795 = vmatprep.subr.bf16.mxu0 0
    %7796 = vmatpush1.bf16.msra.mxu0 %v7756
    %7797 = vmatprep.subr.bf16.mxu0 0
    %7798 = vmatpush1.bf16.msra.mxu0 %v7757
    %7799 = vmatprep.subr.bf16.mxu0 0
    %7800 = vmatpush1.bf16.msra.mxu0 %v7758
    %7801 = vmatprep.subr.bf16.mxu0 0
    %7802 = vmatpush1.bf16.msra.mxu0 %v7759
    %7803 = vmatprep.subr.bf16.mxu0 0
    %7804 = vmatpush1.bf16.msra.mxu0 %v7760
    %7805 = vmatprep.subr.bf16.mxu0 0
    %7806 = vmatpush1.bf16.msra.mxu0 %v7761
    %7807 = vmatprep.subr.bf16.mxu0 0
    %7808 = vmatpush1.bf16.msra.mxu0 %v7762
    %7809 = vmatprep.subr.bf16.mxu0 0
    %7810 = vmatpush1.bf16.msra.mxu0 %v7763
    %7811 = vmatprep.subr.bf16.mxu0 0
    %7812 = vmatpush1.bf16.msra.mxu0 %v7764
    %7813 = vmatprep.mubr.bf16.mxu0 %v7647
    %7814 = vmatmul.mubr.bf16.gmra.mrb[0].mxu0 %v7646
    %v7815 = vpop.f32.mrb[0].mxu0
    %v7816 = vadd.f32 %v7684, %v7815
    %v7817 = vpop.f32.mrb[0].mxu0
    %v7818 = vpop.f32.mrb[0].mxu0
    %v7819 = vpop.f32.mrb[0].mxu0
    %7820 = vdwg.mxu0
    %v7821 = vmax.f32 %v7816, 0.0
    %v7822 = vpack.c.bf16 %v7821, %v7821
    %v7823 = vld [vmem:[#allocation16] sm:$0xf]
    %v7824 = vld [vmem:[#allocation16 + $0x4] sm:$0xf]
    %v7825 = vld [vmem:[#allocation16 + $0x8] sm:$0xf]
    %v7826 = vld [vmem:[#allocation16 + $0xc] sm:$0xf]
    %v7827 = vld [vmem:[#allocation16 + $0x10] sm:$0xf]
    %v7828 = vld [vmem:[#allocation16 + $0x14] sm:$0xf]
    %v7829 = vld [vmem:[#allocation16 + $0x18] sm:$0xf]
    %v7830 = vld [vmem:[#allocation16 + $0x1c] sm:$0xf]
    %v7831 = vld [vmem:[#allocation16 + $0x20] sm:$0xf]
    %v7832 = vld [vmem:[#allocation16 + $0x24] sm:$0xf]
    %v7833 = vld [vmem:[#allocation16 + $0x28] sm:$0xf]
    %v7834 = vld [vmem:[#allocation16 + $0x2c] sm:$0xf]
    %v7835 = vld [vmem:[#allocation16 + $0x30] sm:$0xf]
    %v7836 = vld [vmem:[#allocation16 + $0x34] sm:$0xf]
    %v7837 = vld [vmem:[#allocation16 + $0x38] sm:$0xf]
    %v7838 = vld [vmem:[#allocation16 + $0x3c] sm:$0xf]
    %v7839 = vld [vmem:[#allocation19 + $0x6] sm:$0x1]
    %v7840 = vlaneseq
    %v7841 = vshrl.u32 %v7840, 7
    %v7842 = vsub.s32 0, %v7841
    %v7843 = vrot.slane %v7839, %v7842
    %v7860 = vunpack.c.l.b16 %v7823
    %v7861 = vunpack.c.l.b16 %v7824
    %v7862 = vunpack.c.l.b16 %v7825
    %v7863 = vunpack.c.l.b16 %v7826
    %v7864 = vunpack.c.l.b16 %v7827
    %v7865 = vunpack.c.l.b16 %v7828
    %v7866 = vunpack.c.l.b16 %v7829
    %v7867 = vunpack.c.l.b16 %v7830
    %v7868 = vunpack.c.l.b16 %v7831
    %v7869 = vunpack.c.l.b16 %v7832
    %v7870 = vunpack.c.l.b16 %v7833
    %v7871 = vunpack.c.l.b16 %v7834
    %v7872 = vunpack.c.l.b16 %v7835
    %v7873 = vunpack.c.l.b16 %v7836
    %v7874 = vunpack.c.l.b16 %v7837
    %v7875 = vunpack.c.l.b16 %v7838
    %v7876 = vpack.c.b16 %v7861, %v7860
    %v7877 = vpack.c.b16 %v7863, %v7862
    %v7878 = vpack.c.b16 %v7865, %v7864
    %v7879 = vpack.c.b16 %v7867, %v7866
    %v7880 = vpack.c.b16 %v7869, %v7868
    %v7881 = vpack.c.b16 %v7871, %v7870
    %v7882 = vpack.c.b16 %v7873, %v7872
    %v7883 = vpack.c.b16 %v7875, %v7874
    %7892 = vmatprep.subr.bf16.mxu0 0
    %7893 = vmatpush1.bf16.msra.mxu0 %v7876
    %7894 = vmatprep.subr.bf16.mxu0 0
    %7895 = vmatpush1.bf16.msra.mxu0 %v7877
    %7896 = vmatprep.subr.bf16.mxu0 0
    %7897 = vmatpush1.bf16.msra.mxu0 %v7878
    %7898 = vmatprep.subr.bf16.mxu0 0
    %7899 = vmatpush1.bf16.msra.mxu0 %v7879
    %7900 = vmatprep.subr.bf16.mxu0 0
    %7901 = vmatpush1.bf16.msra.mxu0 %v7880
    %7902 = vmatprep.subr.bf16.mxu0 0
    %7903 = vmatpush1.bf16.msra.mxu0 %v7881
    %7904 = vmatprep.subr.bf16.mxu0 0
    %7905 = vmatpush1.bf16.msra.mxu0 %v7882
    %7906 = vmatprep.subr.bf16.mxu0 0
    %7907 = vmatpush1.bf16.msra.mxu0 %v7883
    %7908 = vmatprep.subr.bf16.mxu0 0
    %7909 = vmatpush1.bf16.msra.mxu0 0
    %7910 = vmatprep.subr.bf16.mxu0 0
    %7911 = vmatpush1.bf16.msra.mxu0 0
    %7912 = vmatprep.subr.bf16.mxu0 0
    %7913 = vmatpush1.bf16.msra.mxu0 0
    %7914 = vmatprep.subr.bf16.mxu0 0
    %7915 = vmatpush1.bf16.msra.mxu0 0
    %7916 = vmatprep.subr.bf16.mxu0 0
    %7917 = vmatpush1.bf16.msra.mxu0 0
    %7918 = vmatprep.subr.bf16.mxu0 0
    %7919 = vmatpush1.bf16.msra.mxu0 0
    %7920 = vmatprep.subr.bf16.mxu0 0
    %7921 = vmatpush1.bf16.msra.mxu0 0
    %7922 = vmatprep.subr.bf16.mxu0 0
    %7923 = vmatpush1.bf16.msra.mxu0 0
    %7924 = vmatprep.mubr.bf16.mxu0 0
    %7925 = vmatmul.mubr.bf16.gmra.mrb[0].mxu0 %v7822
    %v7926 = vpop.f32.mrb[0].mxu0
    %v7927 = vadd.f32 %v7843, %v7926
    %v7928 = vpop.f32.mrb[0].mxu0
    %v7929 = vpop.f32.mrb[0].mxu0
    %v7930 = vpop.f32.mrb[0].mxu0
    %7931 = vdwg.mxu0
    %7932 = vst [vmem:[%s16] sm:$0xff] %v7927
    // Predicated region
    $region114: #{multimodal_forward.1} parent=1 // pred_check
      _
    $region115: #{multimodal_forward.1} parent=1 // pred_check_branch
      %7934 = sbr.rel (0) target = $region117
    $region116: #{multimodal_forward.1} parent=1 // pred_region
      _
    $region117: #{multimodal_forward.1} parent=1 // pred_fallthru
      _
    // Predicated region
    $region118: #{multimodal_forward.1} parent=1 // pred_check
      _
    $region119: #{multimodal_forward.1} parent=1 // pred_check_branch
      %7936 = sbr.rel (0) target = $region121
    $region120: #{multimodal_forward.1} parent=1 // pred_region
      _
    $region121: #{multimodal_forward.1} parent=1 // pred_fallthru
      _
    %7937 = vsyncpa [#allocation3], 1
    %7938 = vsyncpa [#allocation5], 1
    %7939 = vsyncpa [#allocation8], 1
    %7940 = vsyncpa [#allocation11], 1
    %7941 = vsyncpa [#allocation14], 1
    %7942 = vsyncpa [#allocation17], 1
    %7943 = vsyncpa [#allocation20], 1

</llo_original>
